<compile_context>
chip_gen: v7x
topology: tpu7x:2x2x1
jax: 0.10.0
libtpu: 0.0.40
codegen_flags: <defaults>
</compile_context>

<pallas_src>
import functools

import numpy as np
import jax
import jax.numpy as jnp
from jax.experimental import pallas as pl
from jax.experimental.pallas import tpu as pltpu


# ----------------------------- helpers ---------------------------------------

def _round_up(x, m):
    return (x + m - 1) // m * m


def _pad2(x, m, n):
    return jnp.pad(x, ((0, m - x.shape[0]), (0, n - x.shape[1])))


def _conv_out_hw(h, w, k, s, p):
    return (h + 2 * p - k) // s + 1, (w + 2 * p - k) // s + 1


def _default_vmem_limit():
    # 64 MiB scoped on 128-MiB-VMEM parts (v5e/v6e), 32 MiB on v7x; safe fallback.
    try:
        cap = getattr(pltpu.get_tpu_info(), "vmem_capacity_bytes", None)
        if cap:
            return int(min(max(cap // 2, 32 * 1024 * 1024), 96 * 1024 * 1024))
    except Exception:
        pass
    return 32 * 1024 * 1024


_VMEM_LIMIT = _default_vmem_limit()


# ----------------------------- matmul kernels ---------------------------------

def _mm_bias_kernel(a_ref, b_ref, bias_ref, o_ref, *, relu):
    """out = A @ B + bias (+ReLU); single K block, no scratch round-trip."""
    out = jnp.dot(a_ref[...], b_ref[...], preferred_element_type=jnp.float32)
    out = out + bias_ref[...]
    if relu:
        out = jnp.maximum(out, 0.0)
    o_ref[...] = out.astype(o_ref.dtype)


def _mm_bias_acc_kernel(a_ref, b_ref, bias_ref, o_ref, acc_ref, *, relu):
    """K-tiled variant: f32 VMEM accumulator, init/finalize via pl.when."""
    @pl.when(pl.program_id(1) == 0)
    def _():
        acc_ref[...] = jnp.zeros_like(acc_ref)

    acc_ref[...] += jnp.dot(a_ref[...], b_ref[...],
                            preferred_element_type=jnp.float32)

    @pl.when(pl.program_id(1) == pl.num_programs(1) - 1)
    def _():
        out = acc_ref[...] + bias_ref[...]
        if relu:
            out = jnp.maximum(out, 0.0)
        o_ref[...] = out.astype(o_ref.dtype)


def _tiles(M, K):
    TM = min(512, _round_up(M, 8))
    Mp = _round_up(M, TM)
    Kp = _round_up(K, 128)
    if Kp > 8192:                 # keep typical weights untiled / VMEM-resident
        TK = 2048
        Kp = _round_up(Kp, TK)
    else:
        TK = Kp
    return TM, Mp, TK, Kp


def pallas_linear(a, w_t, bias, relu=False, out_dtype=jnp.bfloat16):
    """a:(M,K) @ w_t:(K,N) + bias (+ReLU).  bf16 operands, f32 accumulation.

    Emits `out_dtype` (bf16 default) so the next Pallas layer consumes it with
    no XLA re-cast pass.  K stays untiled unless it exceeds 8192 padded cols.
    """
    M, K = a.shape
    N = w_t.shape[1]
    TM, Mp, TK, Kp = _tiles(M, K)
    Np = _round_up(N, 128)
    nm, nk = Mp // TM, Kp // TK

    a_p = _pad2(a, Mp, Kp).astype(jnp.bfloat16)
    w_p = _pad2(w_t, Kp, Np).astype(jnp.bfloat16)
    b_p = jnp.pad(bias.astype(jnp.float32), (0, Np - N)).reshape(1, Np)

    if nk == 1:
        out = pl.pallas_call(
            functools.partial(_mm_bias_kernel, relu=relu),
            out_shape=jax.ShapeDtypeStruct((Mp, Np), out_dtype),
            grid=(nm,),
            in_specs=[pl.BlockSpec((TM, Kp), lambda i: (i, 0)),
                      pl.BlockSpec((Kp, Np), lambda i: (0, 0)),
                      pl.BlockSpec((1, Np), lambda i: (0, 0))],
            out_specs=pl.BlockSpec((TM, Np), lambda i: (i, 0)),
            compiler_params=pltpu.CompilerParams(
                dimension_semantics=("parallel",),
                vmem_limit_bytes=_VMEM_LIMIT),
        )(a_p, w_p, b_p)
        return out[:M, :N]

    out = pl.pallas_call(
        functools.partial(_mm_bias_acc_kernel, relu=relu),
        out_shape=jax.ShapeDtypeStruct((Mp, Np), out_dtype),
        grid=(nm, nk),
        in_specs=[pl.BlockSpec((TM, TK), lambda i, k: (i, k)),
                  pl.BlockSpec((TK, Np), lambda i, k: (k, 0)),
                  pl.BlockSpec((1, Np), lambda i, k: (0, 0))],
        out_specs=pl.BlockSpec((TM, Np), lambda i, k: (i, 0)),
        scratch_shapes=[pltpu.VMEM((TM, Np), jnp.float32)],
        compiler_params=pltpu.CompilerParams(
            dimension_semantics=("parallel", "arbitrary"),
            vmem_limit_bytes=_VMEM_LIMIT),
    )(a_p, w_p, b_p)
    return out[:M, :N]


# ------------------ fused 3x3 residual block (conv3 + conv4) ------------------

def _res33_kernel(x_ref, w3_ref, b3_ref, w4_ref, b4_ref, mask_ref,
                  out_ref, a3_ref, *, wp2, g):
    """Fused   pre3 = conv3(c2)+c2 ; act3 = relu(pre3) ;
               act4 = relu(conv4(act3)+pre3)
    on a row-flattened padded grid.  Each 3x3 tap is a constant-row-offset 2D
    slice of the flattened input -> 9 shifted MXU matmuls, accumulated in f32.
    Border rows of the padded grid are garbage (masked for the act3 reuse,
    discarded by the wrapper)."""
    M, C = out_ref.shape

    acc3 = jnp.zeros((M, C), jnp.float32)
    for di in range(3):
        for dj in range(3):
            off = g + (di - 1) * wp2 + (dj - 1)
            acc3 = acc3 + jnp.dot(x_ref[off:off + M, :], w3_ref[di * 3 + dj],
                                  preferred_element_type=jnp.float32)
    # skip: c2 at the output position == input at the center tap (offset 0).
    pre3 = acc3 + b3_ref[...] + x_ref[g:g + M, :].astype(jnp.float32)
    act3 = jnp.maximum(pre3, 0.0) * mask_ref[...]        # zero the pad border

    a3_ref[...] = jnp.zeros(a3_ref.shape, a3_ref.dtype)  # zero guard rows
    a3_ref[g:g + M, :] = act3.astype(a3_ref.dtype)

    acc4 = jnp.zeros((M, C), jnp.float32)
    for di in range(3):
        for dj in range(3):
            off = g + (di - 1) * wp2 + (dj - 1)
            acc4 = acc4 + jnp.dot(a3_ref[off:off + M, :], w4_ref[di * 3 + dj],
                                  preferred_element_type=jnp.float32)
    pre4 = acc4 + b4_ref[...] + pre3
    out_ref[...] = jnp.maximum(pre4, 0.0).astype(out_ref.dtype)


def pallas_res_block33(x_nhwc, w3, b3, w4, b4):
    """x_nhwc: (N,H,W,C) bf16.  Returns act4 (N,H,W,OC) bf16 (stride1, pad1)."""
    N, H, W, C = x_nhwc.shape
    OC = w3.shape[0]
    wp2 = W + 2
    P = (H + 2) * wp2                       # rows per padded image
    G = W + 3                               # max |tap row offset|
    M = N * P

    # conv padding=1 done once; rows flattened; guard rows so every tap slice
    # is in-bounds (guard / cross-image reads only feed discarded border rows).
    xp = jnp.pad(x_nhwc, ((0, 0), (1, 1), (1, 1), (0, 0))).reshape(M, C)
    xg = jnp.pad(xp, ((G, G), (0, 0))).astype(jnp.bfloat16)

    w3_t = w3.transpose(2, 3, 1, 0).reshape(9, C, OC).astype(jnp.bfloat16)
    w4_t = w4.transpose(2, 3, 1, 0).reshape(9, C, OC).astype(jnp.bfloat16)
    b3_p = b3.astype(jnp.float32).reshape(1, OC)
    b4_p = b4.astype(jnp.float32).reshape(1, OC)

    # interior (non-border) mask over the flattened padded grid, trace-time const.
    ii = np.arange(H + 2)[:, None]
    jj = np.arange(wp2)[None, :]
    m2 = (ii >= 1) & (ii <= H) & (jj >= 1) & (jj <= W)
    mask = jnp.asarray(np.tile(m2.reshape(1, P), (N, 1))
                       .reshape(M, 1).astype(np.float32))

    # TODO(synk): tile over batch blocks (per-block guard rows) for very large T*B.
    out = pl.pallas_call(
        functools.partial(_res33_kernel, wp2=wp2, g=G),
        out_shape=jax.ShapeDtypeStruct((M, OC), jnp.bfloat16),
        scratch_shapes=[pltpu.VMEM((M + 2 * G, OC), jnp.bfloat16)],
        compiler_params=pltpu.CompilerParams(vmem_limit_bytes=_VMEM_LIMIT),
    )(xg, w3_t, b3_p, w4_t, b4_p, mask)

    out = out.reshape(N, H + 2, wp2, OC)[:, 1:H + 1, 1:W + 1, :]
    return out


# ----------------------------- LSTM kernel ------------------------------------

def _lstm_kernel(gx_ref, whh_ref, h0_ref, c0_ref, out_ref, hn_ref, cn_ref,
                 h_sc, c_sc, *, hp, t_total, tt):
    """T-chunked LSTM.  Gate k owns lanes [k*hp,(k+1)*hp); h/c carried in f32
    VMEM scratch across chunks; W_hh / h hit the MXU in bf16."""
    chunk = pl.program_id(0)

    @pl.when(chunk == 0)
    def _():
        h_sc[...] = h0_ref[...]
        c_sc[...] = c0_ref[...]

    whh = whh_ref[...]                      # (HP, 4*HP) bf16, VMEM-resident

    def step(t, carry):
        h, c = carry
        gates = gx_ref[t].astype(jnp.float32) + jnp.dot(
            h.astype(jnp.bfloat16), whh, preferred_element_type=jnp.float32)
        i = jax.nn.sigmoid(gates[:, 0 * hp:1 * hp])
        f = jax.nn.sigmoid(gates[:, 1 * hp:2 * hp])
        g = jnp.tanh(gates[:, 2 * hp:3 * hp])
        o = jax.nn.sigmoid(gates[:, 3 * hp:4 * hp])
        c = f * c + i * g
        h = o * jnp.tanh(c)
        out_ref[t] = h.astype(out_ref.dtype)   # lane-dense (Bp, HP) store
        return h, c

    if t_total % tt == 0:
        n_valid = tt                           # static trip count
    else:
        n_valid = jnp.minimum(tt, t_total - chunk * tt)

    h, c = jax.lax.fori_loop(0, n_valid, step, (h_sc[...], c_sc[...]))
    h_sc[...] = h
    c_sc[...] = c

    @pl.when(chunk == pl.num_programs(0) - 1)
    def _():
        hn_ref[...] = h
        cn_ref[...] = c


def pallas_lstm(gx, whh_blk, h0, c0):
    """gx: (T, B, 4*HP) bf16 with gate-blocked lanes (input projection + both
    biases already applied); whh_blk: (HP, 4*HP) gate-blocked recurrent weight."""
    T, B, G4 = gx.shape
    HP = G4 // 4
    H = h0.shape[-1]
    Bp = _round_up(B, 8)
    TT = min(T, 32)
    Tp = _round_up(T, TT)
    nchunks = Tp // TT

    gxp = jnp.pad(gx, ((0, Tp - T), (0, Bp - B), (0, 0)))
    h0p = _pad2(h0.astype(jnp.float32), Bp, HP)
    c0p = _pad2(c0.astype(jnp.float32), Bp, HP)
    whh = whh_blk.astype(jnp.bfloat16)

    # TODO(synk): on v7x split Bp across the two TensorCores (leading "parallel"
    # grid axis) when B is large; the recurrence is independent per batch row.
    out, hn, cn = pl.pallas_call(
        functools.partial(_lstm_kernel, hp=HP, t_total=T, tt=TT),
        out_shape=(jax.ShapeDtypeStruct((Tp, Bp, HP), jnp.bfloat16),
                   jax.ShapeDtypeStruct((Bp, HP), jnp.float32),
                   jax.ShapeDtypeStruct((Bp, HP), jnp.float32)),
        grid=(nchunks,),
        in_specs=[pl.BlockSpec((TT, Bp, G4), lambda c: (c, 0, 0)),
                  pl.BlockSpec((HP, G4), lambda c: (0, 0)),
                  pl.BlockSpec((Bp, HP), lambda c: (0, 0)),
                  pl.BlockSpec((Bp, HP), lambda c: (0, 0))],
        out_specs=(pl.BlockSpec((TT, Bp, HP), lambda c: (c, 0, 0)),
                   pl.BlockSpec((Bp, HP), lambda c: (0, 0)),
                   pl.BlockSpec((Bp, HP), lambda c: (0, 0))),
        scratch_shapes=[pltpu.VMEM((Bp, HP), jnp.float32),
                        pltpu.VMEM((Bp, HP), jnp.float32)],
        compiler_params=pltpu.CompilerParams(
            dimension_semantics=("arbitrary",),
            vmem_limit_bytes=_VMEM_LIMIT),
    )(gxp, whh, h0p, c0p)

    return out[:T, :B, :H], hn[:B, :H], cn[:B, :H]


# ----------------------------- pi / v head ------------------------------------

def _head_kernel(x1_ref, x2_ref, w_ref, b_ref, pi_ref, v_ref, *, out_size):
    """(lstm_out + fc1) @ W + b -> masked softmax(pi) and value (in-kernel)."""
    x = x1_ref[...] + x2_ref[...]                        # bf16
    logits = jnp.dot(x, w_ref[...], preferred_element_type=jnp.float32)
    logits = logits + b_ref[...]
    v_ref[...] = logits[:, out_size:out_size + 1]        # value column, no slab
    col = jax.lax.broadcasted_iota(jnp.int32, logits.shape, 1)
    masked = jnp.where(col < out_size, logits, -1e30)    # exclude padded logits
    m = jnp.max(masked, axis=-1, keepdims=True)
    e = jnp.exp(masked - m)
    denom = jnp.sum(e, axis=-1, keepdims=True)
    pi_ref[...] = e * pl.reciprocal(denom, approx=True)  # EUP slot


def pallas_head(lstm_flat, fc1, w_t, bias, out_size):
    M, Hd = lstm_flat.shape
    N = w_t.shape[1]                         # out_size + 1
    Np = _round_up(N, 128)
    TM = min(512, _round_up(M, 8))
    Mp = _round_up(M, TM)
    nm = Mp // TM

    x1 = _pad2(lstm_flat, Mp, Hd).astype(jnp.bfloat16)
    x2 = _pad2(fc1, Mp, Hd).astype(jnp.bfloat16)
    w_p = _pad2(w_t, Hd, Np).astype(jnp.bfloat16)
    b_p = jnp.pad(bias.astype(jnp.float32), (0, Np - N)).reshape(1, Np)

    x_spec = pl.BlockSpec((TM, Hd), lambda i: (i, 0))
    pi_p, v_p = pl.pallas_call(
        functools.partial(_head_kernel, out_size=out_size),
        out_shape=(jax.ShapeDtypeStruct((Mp, Np), jnp.float32),
                   jax.ShapeDtypeStruct((Mp, 1), jnp.float32)),
        grid=(nm,),
        in_specs=[x_spec, x_spec,
                  pl.BlockSpec((Hd, Np), lambda i: (0, 0)),
                  pl.BlockSpec((1, Np), lambda i: (0, 0))],
        out_specs=(pl.BlockSpec((TM, Np), lambda i: (i, 0)),
                   pl.BlockSpec((TM, 1), lambda i: (i, 0))),
        compiler_params=pltpu.CompilerParams(
            dimension_semantics=("parallel",),
            vmem_limit_bytes=_VMEM_LIMIT),
    )(x1, x2, w_p, b_p)

    return pi_p[:M, :out_size], v_p[:M, 0]


# ----------------------------- strided convs (im2col) --------------------------

def _im2col_nhwc(x, kh, kw, stride, pad):
    """x: (N,H,W,C) -> (N*OH*OW, kh*kw*C), feature order (kh, kw, C)."""
    if pad > 0:
        x = jnp.pad(x, ((0, 0), (pad, pad), (pad, pad), (0, 0)))
    N, H, W, C = x.shape
    OH = (H - kh) // stride + 1
    OW = (W - kw) // stride + 1
    cols = []
    for i in range(kh):
        for j in range(kw):
            cols.append(x[:, i:i + stride * (OH - 1) + 1:stride,
                          j:j + stride * (OW - 1) + 1:stride, :])
    p = jnp.stack(cols, axis=3)              # (N, OH, OW, kh*kw, C)
    return p.reshape(N * OH * OW, kh * kw * C), OH, OW


def conv2d_layer(x_nhwc, w, b, stride, pad, relu=True):
    N = x_nhwc.shape[0]
    OC, IC, KH, KW = w.shape
    patches, OH, OW = _im2col_nhwc(x_nhwc, KH, KW, stride, pad)
    w_t = w.transpose(2, 3, 1, 0).reshape(KH * KW * IC, OC)   # (kh,kw,C) order
    out = pallas_linear(patches, w_t, b, relu=relu)
    return out.reshape(N, OH, OW, OC)


# ----------------------------- full model forward ------------------------------

def dmlab_pg_lstm_forward(params, observation, prev_action, prev_reward,
                          init_rnn_state):
    T, B, C, H, W = observation.shape
    TB = T * B

    # uint8 obs: cast straight to bf16 (exact for 0..255); fold 1/255 into conv1_w.
    if observation.dtype == jnp.uint8:
        w1 = params['conv1_w'] * (1.0 / 255.0)
    else:
        w1 = params['conv1_w']
    x = observation.astype(jnp.bfloat16).reshape(TB, C, H, W).transpose(0, 2, 3, 1)

    c1 = conv2d_layer(x, w1, params['conv1_b'], 4, 0, relu=True)
    c2 = conv2d_layer(c1, params['conv2_w'], params['conv2_b'], 2, 0, relu=True)
    act4 = pallas_res_block33(c2, params['conv3_w'], params['conv3_b'],
                              params['conv4_w'], params['conv4_b'])

    OHc, OWc = act4.shape[1], act4.shape[2]
    conv_flat = act4.reshape(TB, OHc * OWc * 64)

    # fc1 weight columns permuted once (NCHW flatten -> NHWC flatten).
    L = params['fc1_w'].shape[0]
    fc1_w_t = params['fc1_w'].reshape(L, 64, OHc, OWc)
    fc1_w_t = fc1_w_t.transpose(2, 3, 1, 0).reshape(OHc * OWc * 64, L)
    fc1 = pallas_linear(conv_flat, fc1_w_t, params['fc1_b'], relu=True)   # bf16

    lstm_size = L
    out_size = params['pi_v_b'].shape[0] - 1
    HP = _round_up(lstm_size, 128)

    lstm_in = jnp.concatenate(
        [fc1.reshape(T, B, lstm_size),
         prev_action.reshape(T, B, -1).astype(jnp.bfloat16),
         prev_reward.reshape(T, B, 1).astype(jnp.bfloat16)], axis=2)
    D = lstm_in.shape[-1]

    # Gate-blocked / lane-padded LSTM weights (trace-time permutation): gate k
    # of the input projection lands in lanes [k*HP,(k+1)*HP) directly.
    w_ih_blk = jnp.pad(params['lstm_w_ih'].T.reshape(D, 4, lstm_size),
                       ((0, 0), (0, 0), (0, HP - lstm_size))).reshape(D, 4 * HP)
    b_blk = jnp.pad((params['lstm_b_ih'] + params['lstm_b_hh']).reshape(4, lstm_size),
                    ((0, 0), (0, HP - lstm_size))).reshape(4 * HP)
    whh_blk = jnp.pad(params['lstm_w_hh'].T.reshape(lstm_size, 4, lstm_size),
                      ((0, HP - lstm_size), (0, 0),
                       (0, HP - lstm_size))).reshape(HP, 4 * HP)

    gates_x = pallas_linear(lstm_in.reshape(TB, D), w_ih_blk, b_blk,
                            relu=False)                       # (TB, 4*HP) bf16

    if init_rnn_state is None:
        h0 = jnp.zeros((B, lstm_size), jnp.float32)
        c0 = jnp.zeros((B, lstm_size), jnp.float32)
    else:
        h0 = init_rnn_state[0].reshape(B, lstm_size).astype(jnp.float32)
        c0 = init_rnn_state[1].reshape(B, lstm_size).astype(jnp.float32)

    lstm_out, hn, cn = pallas_lstm(gates_x.reshape(T, B, 4 * HP), whh_blk, h0, c0)

    pi_flat, v_flat = pallas_head(lstm_out.reshape(TB, lstm_size), fc1,
                                  params['pi_v_w'].T, params['pi_v_b'], out_size)

    pi = pi_flat.reshape(T, B, out_size)
    v = v_flat.reshape(T, B)
    # Single NCHW transpose only for the returned conv tensor (PyTorch parity).
    conv_ret = act4.astype(jnp.float32).transpose(0, 3, 1, 2).reshape(T, B, 64, OHc, OWc)
    next_rnn_state = (hn[None], cn[None])       # RnnState(h=..., c=...), each (1,B,H)
    return pi, v, next_rnn_state, conv_ret


# ----------------------------- deterministic params ---------------------------

def init_params(key, image_shape, output_size, lstm_size):
    c, h, w = image_shape
    keys = jax.random.split(key, 12)

    def kaiming(k, shape):           # kaiming_normal_, fan_in, relu; zero bias
        fan_in = int(np.prod(shape[1:]))
        return jax.random.normal(k, shape, jnp.float32) * np.sqrt(2.0 / fan_in)

    params = {
        'conv1_w': kaiming(keys[0], (32, c, 8, 8)), 'conv1_b': jnp.zeros((32,), jnp.float32),
        'conv2_w': kaiming(keys[1], (64, 32, 4, 4)), 'conv2_b': jnp.zeros((64,), jnp.float32),
        'conv3_w': kaiming(keys[2], (64, 64, 3, 3)), 'conv3_b': jnp.zeros((64,), jnp.float32),
        'conv4_w': kaiming(keys[3], (64, 64, 3, 3)), 'conv4_b': jnp.zeros((64,), jnp.float32),
    }
    h1, w1 = _conv_out_hw(h, w, 8, 4, 0)
    h2, w2 = _conv_out_hw(h1, w1, 4, 2, 0)
    conv_out_size = 64 * h2 * w2
    params['fc1_w'] = kaiming(keys[4], (lstm_size, conv_out_size))
    params['fc1_b'] = jnp.zeros((lstm_size,), jnp.float32)

    kk = 1.0 / np.sqrt(lstm_size)                  # default torch.nn.LSTM init
    D = lstm_size + output_size + 1
    params['lstm_w_ih'] = jax.random.uniform(keys[5], (4 * lstm_size, D), jnp.float32, -kk, kk)
    params['lstm_w_hh'] = jax.random.uniform(keys[6], (4 * lstm_size, lstm_size), jnp.float32, -kk, kk)
    params['lstm_b_ih'] = jax.random.uniform(keys[7], (4 * lstm_size,), jnp.float32, -kk, kk)
    params['lstm_b_hh'] = jax.random.uniform(keys[8], (4 * lstm_size,), jnp.float32, -kk, kk)

    params['pi_v_w'] = kaiming(keys[9], (output_size + 1, lstm_size))
    params['pi_v_b'] = jnp.zeros((output_size + 1,), jnp.float32)
    return params


# ----------------------------- main -------------------------------------------

if __name__ == "__main__":
    key = jax.random.PRNGKey(0)
    T, B = 4, 2
    image_shape = (3, 32, 32)      # (c, h, w) -> conv out (64, 2, 2), conv_out_size 256
    output_size = 6
    lstm_size = 32

    pkey, okey, akey, rkey = jax.random.split(key, 4)
    params = init_params(pkey, image_shape, output_size, lstm_size)

    observation = jax.random.randint(okey, (T, B) + image_shape, 0, 256).astype(jnp.uint8)
    prev_action = jax.nn.one_hot(
        jax.random.randint(akey, (T, B), 0, output_size), output_size, dtype=jnp.float32)
    prev_reward = jax.random.normal(rkey, (T, B), jnp.float32)
    init_rnn_state = (jnp.zeros((1, B, lstm_size), jnp.float32),
                      jnp.zeros((1, B, lstm_size), jnp.float32))

    fwd = jax.jit(dmlab_pg_lstm_forward)
    pi, v, (hn, cn), conv = fwd(params, observation, prev_action, prev_reward,
                                init_rnn_state)
    jax.block_until_ready((pi, v, hn, cn, conv))

    assert pi.shape == (T, B, output_size)
    assert v.shape == (T, B)
    assert hn.shape == (1, B, lstm_size) and cn.shape == (1, B, lstm_size)
    assert conv.shape == (T, B, 64, 2, 2)
    pi_np = np.asarray(pi)
    assert np.all(pi_np >= 0.0)
    # approx=True reciprocal in the softmax denominator -> slightly looser tol.
    assert np.allclose(pi_np.sum(-1), 1.0, atol=1e-2)
    assert np.all(np.isfinite(np.asarray(v)))
    print("KERNEL_OK")
</pallas_src>

<mosaic_0001>
module attributes {stable_mosaic.version = 11 : i64} {
  func.func @_mm_bias_kernel(%arg0: i32, %arg1: memref<392x256xbf16, #tpu.memory_space<vmem>>, %arg2: memref<256x128xbf16, #tpu.memory_space<vmem>>, %arg3: memref<1x128xf32, #tpu.memory_space<vmem>>, %arg4: memref<392x128xbf16, #tpu.memory_space<vmem>>) attributes {dimension_semantics = [#tpu.dimension_semantics<parallel>], iteration_bounds = array<i64: 1>, scalar_prefetch = 0 : i64, scratch_operands = 0 : i64, tpu.core_type = #tpu.core_type<tc>, window_params = [{transform_indices = @transform_0, window_bounds = array<i64: 392, 256>}, {pipeline_mode = #tpu.pipeline_mode<synchronous>, transform_indices = @transform_1, window_bounds = array<i64: 256, 128>}, {pipeline_mode = #tpu.pipeline_mode<synchronous>, transform_indices = @transform_2, window_bounds = array<i64: 1, 128>}, {transform_indices = @transform_3, window_bounds = array<i64: 392, 128>}]} {
    %c0 = arith.constant 0 : index
    %c0_0 = arith.constant 0 : index
    %0 = vector.load %arg1[%c0, %c0_0] : memref<392x256xbf16, #tpu.memory_space<vmem>>, vector<392x256xbf16>
    %c0_1 = arith.constant 0 : index
    %c0_2 = arith.constant 0 : index
    %1 = vector.load %arg2[%c0_1, %c0_2] : memref<256x128xbf16, #tpu.memory_space<vmem>>, vector<256x128xbf16>
    %cst = arith.constant dense<0.000000e+00> : vector<392x128xf32>
    %2 = tpu.matmul %0, %1, %cst {dimension_numbers = #tpu.dot_dimension_numbers<[1], [0], [0], [1], [0, 0, 1, 1], [], []>} : vector<392x256xbf16>, vector<256x128xbf16>, vector<392x128xf32> -> vector<392x128xf32>
    %c0_3 = arith.constant 0 : index
    %c0_4 = arith.constant 0 : index
    %3 = vector.load %arg3[%c0_3, %c0_4] : memref<1x128xf32, #tpu.memory_space<vmem>>, vector<1x128xf32>
    %4 = vector.broadcast %3 : vector<1x128xf32> to vector<392x128xf32>
    %5 = arith.addf %2, %4 : vector<392x128xf32>
    %cst_5 = arith.constant 0.000000e+00 : f32
    %6 = vector.broadcast %cst_5 : f32 to vector<392x128xf32>
    %7 = arith.maximumf %5, %6 : vector<392x128xf32>
    %8 = arith.truncf %7 : vector<392x128xf32> to vector<392x128xbf16>
    %c0_6 = arith.constant 0 : index
    %c0_7 = arith.constant 0 : index
    %9 = vector.load %arg4[%c0_6, %c0_7] : memref<392x128xbf16, #tpu.memory_space<vmem>>, vector<392x128xbf16>
    tpu.vector_store %arg4[%c0_6, %c0_7], %8 {strides = array<i32>} : memref<392x128xbf16, #tpu.memory_space<vmem>>, vector<392x128xbf16>,
    return
  }
  func.func @transform_0(%arg0: i32) -> (i32, i32) {
    %c0_i32 = arith.constant 0 : i32
    %c0_i32_0 = arith.constant 0 : i32
    return %arg0, %c0_i32 : i32, i32
  }
  func.func @transform_1(%arg0: i32) -> (i32, i32) {
    %c0_i32 = arith.constant 0 : i32
    %c0_i32_0 = arith.constant 0 : i32
    %c0_i32_1 = arith.constant 0 : i32
    return %c0_i32, %c0_i32_0 : i32, i32
  }
  func.func @transform_2(%arg0: i32) -> (i32, i32) {
    %c0_i32 = arith.constant 0 : i32
    %c0_i32_0 = arith.constant 0 : i32
    %c0_i32_1 = arith.constant 0 : i32
    return %c0_i32, %c0_i32_0 : i32, i32
  }
  func.func @transform_3(%arg0: i32) -> (i32, i32) {
    %c0_i32 = arith.constant 0 : i32
    %c0_i32_0 = arith.constant 0 : i32
    return %arg0, %c0_i32 : i32, i32
  }
}

module attributes {stable_mosaic.version = 11 : i64} {
  func.func @_mm_bias_kernel(%arg0: i32, %arg1: memref<32x512xbf16, #tpu.memory_space<vmem>>, %arg2: memref<512x128xbf16, #tpu.memory_space<vmem>>, %arg3: memref<1x128xf32, #tpu.memory_space<vmem>>, %arg4: memref<32x128xbf16, #tpu.memory_space<vmem>>) attributes {dimension_semantics = [#tpu.dimension_semantics<parallel>], iteration_bounds = array<i64: 1>, scalar_prefetch = 0 : i64, scratch_operands = 0 : i64, tpu.core_type = #tpu.core_type<tc>, window_params = [{transform_indices = @transform_0, window_bounds = array<i64: 32, 512>}, {pipeline_mode = #tpu.pipeline_mode<synchronous>, transform_indices = @transform_1, window_bounds = array<i64: 512, 128>}, {pipeline_mode = #tpu.pipeline_mode<synchronous>, transform_indices = @transform_2, window_bounds = array<i64: 1, 128>}, {transform_indices = @transform_3, window_bounds = array<i64: 32, 128>}]} {
    %c0 = arith.constant 0 : index
    %c0_0 = arith.constant 0 : index
    %0 = vector.load %arg1[%c0, %c0_0] : memref<32x512xbf16, #tpu.memory_space<vmem>>, vector<32x512xbf16>
    %c0_1 = arith.constant 0 : index
    %c0_2 = arith.constant 0 : index
    %1 = vector.load %arg2[%c0_1, %c0_2] : memref<512x128xbf16, #tpu.memory_space<vmem>>, vector<512x128xbf16>
    %cst = arith.constant dense<0.000000e+00> : vector<32x128xf32>
    %2 = tpu.matmul %0, %1, %cst {dimension_numbers = #tpu.dot_dimension_numbers<[1], [0], [0], [1], [0, 0, 1, 1], [], []>} : vector<32x512xbf16>, vector<512x128xbf16>, vector<32x128xf32> -> vector<32x128xf32>
    %c0_3 = arith.constant 0 : index
    %c0_4 = arith.constant 0 : index
    %3 = vector.load %arg3[%c0_3, %c0_4] : memref<1x128xf32, #tpu.memory_space<vmem>>, vector<1x128xf32>
    %4 = vector.broadcast %3 : vector<1x128xf32> to vector<32x128xf32>
    %5 = arith.addf %2, %4 : vector<32x128xf32>
    %cst_5 = arith.constant 0.000000e+00 : f32
    %6 = vector.broadcast %cst_5 : f32 to vector<32x128xf32>
    %7 = arith.maximumf %5, %6 : vector<32x128xf32>
    %8 = arith.truncf %7 : vector<32x128xf32> to vector<32x128xbf16>
    %c0_6 = arith.constant 0 : index
    %c0_7 = arith.constant 0 : index
    %9 = vector.load %arg4[%c0_6, %c0_7] : memref<32x128xbf16, #tpu.memory_space<vmem>>, vector<32x128xbf16>
    tpu.vector_store %arg4[%c0_6, %c0_7], %8 {strides = array<i32>} : memref<32x128xbf16, #tpu.memory_space<vmem>>, vector<32x128xbf16>,
    return
  }
  func.func @transform_0(%arg0: i32) -> (i32, i32) {
    %c0_i32 = arith.constant 0 : i32
    %c0_i32_0 = arith.constant 0 : i32
    return %arg0, %c0_i32 : i32, i32
  }
  func.func @transform_1(%arg0: i32) -> (i32, i32) {
    %c0_i32 = arith.constant 0 : i32
    %c0_i32_0 = arith.constant 0 : i32
    %c0_i32_1 = arith.constant 0 : i32
    return %c0_i32, %c0_i32_0 : i32, i32
  }
  func.func @transform_2(%arg0: i32) -> (i32, i32) {
    %c0_i32 = arith.constant 0 : i32
    %c0_i32_0 = arith.constant 0 : i32
    %c0_i32_1 = arith.constant 0 : i32
    return %c0_i32, %c0_i32_0 : i32, i32
  }
  func.func @transform_3(%arg0: i32) -> (i32, i32) {
    %c0_i32 = arith.constant 0 : i32
    %c0_i32_0 = arith.constant 0 : i32
    return %arg0, %c0_i32 : i32, i32
  }
}

module attributes {stable_mosaic.version = 11 : i64} {
  func.func @_res33_kernel(%arg0: memref<138x64xbf16, #tpu.memory_space<vmem>>, %arg1: memref<9x64x64xbf16, #tpu.memory_space<vmem>>, %arg2: memref<1x64xf32, #tpu.memory_space<vmem>>, %arg3: memref<9x64x64xbf16, #tpu.memory_space<vmem>>, %arg4: memref<1x64xf32, #tpu.memory_space<vmem>>, %arg5: memref<128x1xf32, #tpu.memory_space<vmem>>, %arg6: memref<128x64xbf16, #tpu.memory_space<vmem>>, %arg7: memref<138x64xbf16, #tpu.memory_space<vmem>>) attributes {dimension_semantics = [], scalar_prefetch = 0 : i64, scratch_operands = 1 : i64, tpu.core_type = #tpu.core_type<tc>} {
    %cst = arith.constant 0.000000e+00 : f32
    %0 = vector.broadcast %cst : f32 to vector<128x64xf32>
    %c0 = arith.constant 0 : index
    %c0_0 = arith.constant 0 : index
    %1 = vector.load %arg0[%c0, %c0_0] : memref<138x64xbf16, #tpu.memory_space<vmem>>, vector<128x64xbf16>
    %c0_1 = arith.constant 0 : index
    %c0_2 = arith.constant 0 : index
    %c0_3 = arith.constant 0 : index
    %2 = vector.load %arg1[%c0_1, %c0_2, %c0_3] : memref<9x64x64xbf16, #tpu.memory_space<vmem>>, vector<1x64x64xbf16>
    %3 = vector.shape_cast %2 : vector<1x64x64xbf16> to vector<64x64xbf16>
    %cst_4 = arith.constant dense<0.000000e+00> : vector<128x64xf32>
    %4 = tpu.matmul %1, %3, %cst_4 {dimension_numbers = #tpu.dot_dimension_numbers<[1], [0], [0], [1], [0, 0, 1, 1], [], []>} : vector<128x64xbf16>, vector<64x64xbf16>, vector<128x64xf32> -> vector<128x64xf32>
    %5 = arith.addf %0, %4 : vector<128x64xf32>
    %c1 = arith.constant 1 : index
    %c0_5 = arith.constant 0 : index
    %6 = vector.load %arg0[%c1, %c0_5] : memref<138x64xbf16, #tpu.memory_space<vmem>>, vector<128x64xbf16>
    %c1_6 = arith.constant 1 : index
    %c0_7 = arith.constant 0 : index
    %c0_8 = arith.constant 0 : index
    %7 = vector.load %arg1[%c1_6, %c0_7, %c0_8] : memref<9x64x64xbf16, #tpu.memory_space<vmem>>, vector<1x64x64xbf16>
    %8 = vector.shape_cast %7 : vector<1x64x64xbf16> to vector<64x64xbf16>
    %cst_9 = arith.constant dense<0.000000e+00> : vector<128x64xf32>
    %9 = tpu.matmul %6, %8, %cst_9 {dimension_numbers = #tpu.dot_dimension_numbers<[1], [0], [0], [1], [0, 0, 1, 1], [], []>} : vector<128x64xbf16>, vector<64x64xbf16>, vector<128x64xf32> -> vector<128x64xf32>
    %10 = arith.addf %5, %9 : vector<128x64xf32>
    %c2 = arith.constant 2 : index
    %c0_10 = arith.constant 0 : index
    %11 = vector.load %arg0[%c2, %c0_10] : memref<138x64xbf16, #tpu.memory_space<vmem>>, vector<128x64xbf16>
    %c2_11 = arith.constant 2 : index
    %c0_12 = arith.constant 0 : index
    %c0_13 = arith.constant 0 : index
    %12 = vector.load %arg1[%c2_11, %c0_12, %c0_13] : memref<9x64x64xbf16, #tpu.memory_space<vmem>>, vector<1x64x64xbf16>
    %13 = vector.shape_cast %12 : vector<1x64x64xbf16> to vector<64x64xbf16>
    %cst_14 = arith.constant dense<0.000000e+00> : vector<128x64xf32>
    %14 = tpu.matmul %11, %13, %cst_14 {dimension_numbers = #tpu.dot_dimension_numbers<[1], [0], [0], [1], [0, 0, 1, 1], [], []>} : vector<128x64xbf16>, vector<64x64xbf16>, vector<128x64xf32> -> vector<128x64xf32>
    %15 = arith.addf %10, %14 : vector<128x64xf32>
    %c4 = arith.constant 4 : index
    %c0_15 = arith.constant 0 : index
    %16 = vector.load %arg0[%c4, %c0_15] : memref<138x64xbf16, #tpu.memory_space<vmem>>, vector<128x64xbf16>
    %c3 = arith.constant 3 : index
    %c0_16 = arith.constant 0 : index
    %c0_17 = arith.constant 0 : index
    %17 = vector.load %arg1[%c3, %c0_16, %c0_17] : memref<9x64x64xbf16, #tpu.memory_space<vmem>>, vector<1x64x64xbf16>
    %18 = vector.shape_cast %17 : vector<1x64x64xbf16> to vector<64x64xbf16>
    %cst_18 = arith.constant dense<0.000000e+00> : vector<128x64xf32>
    %19 = tpu.matmul %16, %18, %cst_18 {dimension_numbers = #tpu.dot_dimension_numbers<[1], [0], [0], [1], [0, 0, 1, 1], [], []>} : vector<128x64xbf16>, vector<64x64xbf16>, vector<128x64xf32> -> vector<128x64xf32>
    %20 = arith.addf %15, %19 : vector<128x64xf32>
    %c5 = arith.constant 5 : index
    %c0_19 = arith.constant 0 : index
    %21 = vector.load %arg0[%c5, %c0_19] : memref<138x64xbf16, #tpu.memory_space<vmem>>, vector<128x64xbf16>
    %c4_20 = arith.constant 4 : index
    %c0_21 = arith.constant 0 : index
    %c0_22 = arith.constant 0 : index
    %22 = vector.load %arg1[%c4_20, %c0_21, %c0_22] : memref<9x64x64xbf16, #tpu.memory_space<vmem>>, vector<1x64x64xbf16>
    %23 = vector.shape_cast %22 : vector<1x64x64xbf16> to vector<64x64xbf16>
    %cst_23 = arith.constant dense<0.000000e+00> : vector<128x64xf32>
    %24 = tpu.matmul %21, %23, %cst_23 {dimension_numbers = #tpu.dot_dimension_numbers<[1], [0], [0], [1], [0, 0, 1, 1], [], []>} : vector<128x64xbf16>, vector<64x64xbf16>, vector<128x64xf32> -> vector<128x64xf32>
    %25 = arith.addf %20, %24 : vector<128x64xf32>
    %c6 = arith.constant 6 : index
    %c0_24 = arith.constant 0 : index
    %26 = vector.load %arg0[%c6, %c0_24] : memref<138x64xbf16, #tpu.memory_space<vmem>>, vector<128x64xbf16>
    %c5_25 = arith.constant 5 : index
    %c0_26 = arith.constant 0 : index
    %c0_27 = arith.constant 0 : index
    %27 = vector.load %arg1[%c5_25, %c0_26, %c0_27] : memref<9x64x64xbf16, #tpu.memory_space<vmem>>, vector<1x64x64xbf16>
    %28 = vector.shape_cast %27 : vector<1x64x64xbf16> to vector<64x64xbf16>
    %cst_28 = arith.constant dense<0.000000e+00> : vector<128x64xf32>
    %29 = tpu.matmul %26, %28, %cst_28 {dimension_numbers = #tpu.dot_dimension_numbers<[1], [0], [0], [1], [0, 0, 1, 1], [], []>} : vector<128x64xbf16>, vector<64x64xbf16>, vector<128x64xf32> -> vector<128x64xf32>
    %30 = arith.addf %25, %29 : vector<128x64xf32>
    %c8 = arith.constant 8 : index
    %c0_29 = arith.constant 0 : index
    %31 = vector.load %arg0[%c8, %c0_29] : memref<138x64xbf16, #tpu.memory_space<vmem>>, vector<128x64xbf16>
    %c6_30 = arith.constant 6 : index
    %c0_31 = arith.constant 0 : index
    %c0_32 = arith.constant 0 : index
    %32 = vector.load %arg1[%c6_30, %c0_31, %c0_32] : memref<9x64x64xbf16, #tpu.memory_space<vmem>>, vector<1x64x64xbf16>
    %33 = vector.shape_cast %32 : vector<1x64x64xbf16> to vector<64x64xbf16>
    %cst_33 = arith.constant dense<0.000000e+00> : vector<128x64xf32>
    %34 = tpu.matmul %31, %33, %cst_33 {dimension_numbers = #tpu.dot_dimension_numbers<[1], [0], [0], [1], [0, 0, 1, 1], [], []>} : vector<128x64xbf16>, vector<64x64xbf16>, vector<128x64xf32> -> vector<128x64xf32>
    %35 = arith.addf %30, %34 : vector<128x64xf32>
    %c9 = arith.constant 9 : index
    %c0_34 = arith.constant 0 : index
    %36 = vector.load %arg0[%c9, %c0_34] : memref<138x64xbf16, #tpu.memory_space<vmem>>, vector<128x64xbf16>
    %c7 = arith.constant 7 : index
    %c0_35 = arith.constant 0 : index
    %c0_36 = arith.constant 0 : index
    %37 = vector.load %arg1[%c7, %c0_35, %c0_36] : memref<9x64x64xbf16, #tpu.memory_space<vmem>>, vector<1x64x64xbf16>
    %38 = vector.shape_cast %37 : vector<1x64x64xbf16> to vector<64x64xbf16>
    %cst_37 = arith.constant dense<0.000000e+00> : vector<128x64xf32>
    %39 = tpu.matmul %36, %38, %cst_37 {dimension_numbers = #tpu.dot_dimension_numbers<[1], [0], [0], [1], [0, 0, 1, 1], [], []>} : vector<128x64xbf16>, vector<64x64xbf16>, vector<128x64xf32> -> vector<128x64xf32>
    %40 = arith.addf %35, %39 : vector<128x64xf32>
    %c10 = arith.constant 10 : index
    %c0_38 = arith.constant 0 : index
    %41 = vector.load %arg0[%c10, %c0_38] : memref<138x64xbf16, #tpu.memory_space<vmem>>, vector<128x64xbf16>
    %c8_39 = arith.constant 8 : index
    %c0_40 = arith.constant 0 : index
    %c0_41 = arith.constant 0 : index
    %42 = vector.load %arg1[%c8_39, %c0_40, %c0_41] : memref<9x64x64xbf16, #tpu.memory_space<vmem>>, vector<1x64x64xbf16>
    %43 = vector.shape_cast %42 : vector<1x64x64xbf16> to vector<64x64xbf16>
    %cst_42 = arith.constant dense<0.000000e+00> : vector<128x64xf32>
    %44 = tpu.matmul %41, %43, %cst_42 {dimension_numbers = #tpu.dot_dimension_numbers<[1], [0], [0], [1], [0, 0, 1, 1], [], []>} : vector<128x64xbf16>, vector<64x64xbf16>, vector<128x64xf32> -> vector<128x64xf32>
    %45 = arith.addf %40, %44 : vector<128x64xf32>
    %c0_43 = arith.constant 0 : index
    %c0_44 = arith.constant 0 : index
    %46 = vector.load %arg2[%c0_43, %c0_44] : memref<1x64xf32, #tpu.memory_space<vmem>>, vector<1x64xf32>
    %47 = vector.broadcast %46 : vector<1x64xf32> to vector<128x64xf32>
    %48 = arith.addf %45, %47 : vector<128x64xf32>
    %c5_45 = arith.constant 5 : index
    %c0_46 = arith.constant 0 : index
    %49 = vector.load %arg0[%c5_45, %c0_46] : memref<138x64xbf16, #tpu.memory_space<vmem>>, vector<128x64xbf16>
    %50 = arith.extf %49 : vector<128x64xbf16> to vector<128x64xf32>
    %51 = arith.addf %48, %50 : vector<128x64xf32>
    %cst_47 = arith.constant 0.000000e+00 : f32
    %52 = vector.broadcast %cst_47 : f32 to vector<128x64xf32>
    %53 = arith.maximumf %51, %52 : vector<128x64xf32>
    %c0_48 = arith.constant 0 : index
    %c0_49 = arith.constant 0 : index
    %54 = vector.load %arg5[%c0_48, %c0_49] : memref<128x1xf32, #tpu.memory_space<vmem>>, vector<128x1xf32>
    %55 = vector.broadcast %54 : vector<128x1xf32> to vector<128x64xf32>
    %56 = arith.mulf %53, %55 : vector<128x64xf32>
    %cst_50 = arith.constant 0.000000e+00 : bf16
    %57 = vector.broadcast %cst_50 : bf16 to vector<138x64xbf16>
    %c0_51 = arith.constant 0 : index
    %c0_52 = arith.constant 0 : index
    %58 = vector.load %arg7[%c0_51, %c0_52] : memref<138x64xbf16, #tpu.memory_space<vmem>>, vector<138x64xbf16>
    tpu.vector_store %arg7[%c0_51, %c0_52], %57 {strides = array<i32>} : memref<138x64xbf16, #tpu.memory_space<vmem>>, vector<138x64xbf16>,
    %59 = arith.truncf %56 : vector<128x64xf32> to vector<128x64xbf16>
    %c5_53 = arith.constant 5 : index
    %c0_54 = arith.constant 0 : index
    %60 = vector.load %arg7[%c5_53, %c0_54] : memref<138x64xbf16, #tpu.memory_space<vmem>>, vector<128x64xbf16>
    tpu.vector_store %arg7[%c5_53, %c0_54], %59 {strides = array<i32>} : memref<138x64xbf16, #tpu.memory_space<vmem>>, vector<128x64xbf16>,
    %cst_55 = arith.constant 0.000000e+00 : f32
    %61 = vector.broadcast %cst_55 : f32 to vector<128x64xf32>
    %c0_56 = arith.constant 0 : index
    %c0_57 = arith.constant 0 : index
    %62 = vector.load %arg7[%c0_56, %c0_57] : memref<138x64xbf16, #tpu.memory_space<vmem>>, vector<128x64xbf16>
    %c0_58 = arith.constant 0 : index
    %c0_59 = arith.constant 0 : index
    %c0_60 = arith.constant 0 : index
    %63 = vector.load %arg3[%c0_58, %c0_59, %c0_60] : memref<9x64x64xbf16, #tpu.memory_space<vmem>>, vector<1x64x64xbf16>
    %64 = vector.shape_cast %63 : vector<1x64x64xbf16> to vector<64x64xbf16>
    %cst_61 = arith.constant dense<0.000000e+00> : vector<128x64xf32>
    %65 = tpu.matmul %62, %64, %cst_61 {dimension_numbers = #tpu.dot_dimension_numbers<[1], [0], [0], [1], [0, 0, 1, 1], [], []>} : vector<128x64xbf16>, vector<64x64xbf16>, vector<128x64xf32> -> vector<128x64xf32>
    %66 = arith.addf %61, %65 : vector<128x64xf32>
    %c1_62 = arith.constant 1 : index
    %c0_63 = arith.constant 0 : index
    %67 = vector.load %arg7[%c1_62, %c0_63] : memref<138x64xbf16, #tpu.memory_space<vmem>>, vector<128x64xbf16>
    %c1_64 = arith.constant 1 : index
    %c0_65 = arith.constant 0 : index
    %c0_66 = arith.constant 0 : index
    %68 = vector.load %arg3[%c1_64, %c0_65, %c0_66] : memref<9x64x64xbf16, #tpu.memory_space<vmem>>, vector<1x64x64xbf16>
    %69 = vector.shape_cast %68 : vector<1x64x64xbf16> to vector<64x64xbf16>
    %cst_67 = arith.constant dense<0.000000e+00> : vector<128x64xf32>
    %70 = tpu.matmul %67, %69, %cst_67 {dimension_numbers = #tpu.dot_dimension_numbers<[1], [0], [0], [1], [0, 0, 1, 1], [], []>} : vector<128x64xbf16>, vector<64x64xbf16>, vector<128x64xf32> -> vector<128x64xf32>
    %71 = arith.addf %66, %70 : vector<128x64xf32>
    %c2_68 = arith.constant 2 : index
    %c0_69 = arith.constant 0 : index
    %72 = vector.load %arg7[%c2_68, %c0_69] : memref<138x64xbf16, #tpu.memory_space<vmem>>, vector<128x64xbf16>
    %c2_70 = arith.constant 2 : index
    %c0_71 = arith.constant 0 : index
    %c0_72 = arith.constant 0 : index
    %73 = vector.load %arg3[%c2_70, %c0_71, %c0_72] : memref<9x64x64xbf16, #tpu.memory_space<vmem>>, vector<1x64x64xbf16>
    %74 = vector.shape_cast %73 : vector<1x64x64xbf16> to vector<64x64xbf16>
    %cst_73 = arith.constant dense<0.000000e+00> : vector<128x64xf32>
    %75 = tpu.matmul %72, %74, %cst_73 {dimension_numbers = #tpu.dot_dimension_numbers<[1], [0], [0], [1], [0, 0, 1, 1], [], []>} : vector<128x64xbf16>, vector<64x64xbf16>, vector<128x64xf32> -> vector<128x64xf32>
    %76 = arith.addf %71, %75 : vector<128x64xf32>
    %c4_74 = arith.constant 4 : index
    %c0_75 = arith.constant 0 : index
    %77 = vector.load %arg7[%c4_74, %c0_75] : memref<138x64xbf16, #tpu.memory_space<vmem>>, vector<128x64xbf16>
    %c3_76 = arith.constant 3 : index
    %c0_77 = arith.constant 0 : index
    %c0_78 = arith.constant 0 : index
    %78 = vector.load %arg3[%c3_76, %c0_77, %c0_78] : memref<9x64x64xbf16, #tpu.memory_space<vmem>>, vector<1x64x64xbf16>
    %79 = vector.shape_cast %78 : vector<1x64x64xbf16> to vector<64x64xbf16>
    %cst_79 = arith.constant dense<0.000000e+00> : vector<128x64xf32>
    %80 = tpu.matmul %77, %79, %cst_79 {dimension_numbers = #tpu.dot_dimension_numbers<[1], [0], [0], [1], [0, 0, 1, 1], [], []>} : vector<128x64xbf16>, vector<64x64xbf16>, vector<128x64xf32> -> vector<128x64xf32>
    %81 = arith.addf %76, %80 : vector<128x64xf32>
    %c5_80 = arith.constant 5 : index
    %c0_81 = arith.constant 0 : index
    %82 = vector.load %arg7[%c5_80, %c0_81] : memref<138x64xbf16, #tpu.memory_space<vmem>>, vector<128x64xbf16>
    %c4_82 = arith.constant 4 : index
    %c0_83 = arith.constant 0 : index
    %c0_84 = arith.constant 0 : index
    %83 = vector.load %arg3[%c4_82, %c0_83, %c0_84] : memref<9x64x64xbf16, #tpu.memory_space<vmem>>, vector<1x64x64xbf16>
    %84 = vector.shape_cast %83 : vector<1x64x64xbf16> to vector<64x64xbf16>
    %cst_85 = arith.constant dense<0.000000e+00> : vector<128x64xf32>
    %85 = tpu.matmul %82, %84, %cst_85 {dimension_numbers = #tpu.dot_dimension_numbers<[1], [0], [0], [1], [0, 0, 1, 1], [], []>} : vector<128x64xbf16>, vector<64x64xbf16>, vector<128x64xf32> -> vector<128x64xf32>
    %86 = arith.addf %81, %85 : vector<128x64xf32>
    %c6_86 = arith.constant 6 : index
    %c0_87 = arith.constant 0 : index
    %87 = vector.load %arg7[%c6_86, %c0_87] : memref<138x64xbf16, #tpu.memory_space<vmem>>, vector<128x64xbf16>
    %c5_88 = arith.constant 5 : index
    %c0_89 = arith.constant 0 : index
    %c0_90 = arith.constant 0 : index
    %88 = vector.load %arg3[%c5_88, %c0_89, %c0_90] : memref<9x64x64xbf16, #tpu.memory_space<vmem>>, vector<1x64x64xbf16>
    %89 = vector.shape_cast %88 : vector<1x64x64xbf16> to vector<64x64xbf16>
    %cst_91 = arith.constant dense<0.000000e+00> : vector<128x64xf32>
    %90 = tpu.matmul %87, %89, %cst_91 {dimension_numbers = #tpu.dot_dimension_numbers<[1], [0], [0], [1], [0, 0, 1, 1], [], []>} : vector<128x64xbf16>, vector<64x64xbf16>, vector<128x64xf32> -> vector<128x64xf32>
    %91 = arith.addf %86, %90 : vector<128x64xf32>
    %c8_92 = arith.constant 8 : index
    %c0_93 = arith.constant 0 : index
    %92 = vector.load %arg7[%c8_92, %c0_93] : memref<138x64xbf16, #tpu.memory_space<vmem>>, vector<128x64xbf16>
    %c6_94 = arith.constant 6 : index
    %c0_95 = arith.constant 0 : index
    %c0_96 = arith.constant 0 : index
    %93 = vector.load %arg3[%c6_94, %c0_95, %c0_96] : memref<9x64x64xbf16, #tpu.memory_space<vmem>>, vector<1x64x64xbf16>
    %94 = vector.shape_cast %93 : vector<1x64x64xbf16> to vector<64x64xbf16>
    %cst_97 = arith.constant dense<0.000000e+00> : vector<128x64xf32>
    %95 = tpu.matmul %92, %94, %cst_97 {dimension_numbers = #tpu.dot_dimension_numbers<[1], [0], [0], [1], [0, 0, 1, 1], [], []>} : vector<128x64xbf16>, vector<64x64xbf16>, vector<128x64xf32> -> vector<128x64xf32>
    %96 = arith.addf %91, %95 : vector<128x64xf32>
    %c9_98 = arith.constant 9 : index
    %c0_99 = arith.constant 0 : index
    %97 = vector.load %arg7[%c9_98, %c0_99] : memref<138x64xbf16, #tpu.memory_space<vmem>>, vector<128x64xbf16>
    %c7_100 = arith.constant 7 : index
    %c0_101 = arith.constant 0 : index
    %c0_102 = arith.constant 0 : index
    %98 = vector.load %arg3[%c7_100, %c0_101, %c0_102] : memref<9x64x64xbf16, #tpu.memory_space<vmem>>, vector<1x64x64xbf16>
    %99 = vector.shape_cast %98 : vector<1x64x64xbf16> to vector<64x64xbf16>
    %cst_103 = arith.constant dense<0.000000e+00> : vector<128x64xf32>
    %100 = tpu.matmul %97, %99, %cst_103 {dimension_numbers = #tpu.dot_dimension_numbers<[1], [0], [0], [1], [0, 0, 1, 1], [], []>} : vector<128x64xbf16>, vector<64x64xbf16>, vector<128x64xf32> -> vector<128x64xf32>
    %101 = arith.addf %96, %100 : vector<128x64xf32>
    %c10_104 = arith.constant 10 : index
    %c0_105 = arith.constant 0 : index
    %102 = vector.load %arg7[%c10_104, %c0_105] : memref<138x64xbf16, #tpu.memory_space<vmem>>, vector<128x64xbf16>
    %c8_106 = arith.constant 8 : index
    %c0_107 = arith.constant 0 : index
    %c0_108 = arith.constant 0 : index
    %103 = vector.load %arg3[%c8_106, %c0_107, %c0_108] : memref<9x64x64xbf16, #tpu.memory_space<vmem>>, vector<1x64x64xbf16>
    %104 = vector.shape_cast %103 : vector<1x64x64xbf16> to vector<64x64xbf16>
    %cst_109 = arith.constant dense<0.000000e+00> : vector<128x64xf32>
    %105 = tpu.matmul %102, %104, %cst_109 {dimension_numbers = #tpu.dot_dimension_numbers<[1], [0], [0], [1], [0, 0, 1, 1], [], []>} : vector<128x64xbf16>, vector<64x64xbf16>, vector<128x64xf32> -> vector<128x64xf32>
    %106 = arith.addf %101, %105 : vector<128x64xf32>
    %c0_110 = arith.constant 0 : index
    %c0_111 = arith.constant 0 : index
    %107 = vector.load %arg4[%c0_110, %c0_111] : memref<1x64xf32, #tpu.memory_space<vmem>>, vector<1x64xf32>
    %108 = vector.broadcast %107 : vector<1x64xf32> to vector<128x64xf32>
    %109 = arith.addf %106, %108 : vector<128x64xf32>
    %110 = arith.addf %109, %51 : vector<128x64xf32>
    %cst_112 = arith.constant 0.000000e+00 : f32
    %111 = vector.broadcast %cst_112 : f32 to vector<128x64xf32>
    %112 = arith.maximumf %110, %111 : vector<128x64xf32>
    %113 = arith.truncf %112 : vector<128x64xf32> to vector<128x64xbf16>
    %c0_113 = arith.constant 0 : index
    %c0_114 = arith.constant 0 : index
    %114 = vector.load %arg6[%c0_113, %c0_114] : memref<128x64xbf16, #tpu.memory_space<vmem>>, vector<128x64xbf16>
    tpu.vector_store %arg6[%c0_113, %c0_114], %113 {strides = array<i32>} : memref<128x64xbf16, #tpu.memory_space<vmem>>, vector<128x64xbf16>,
    return
  }
}

module attributes {stable_mosaic.version = 11 : i64} {
  func.func @_mm_bias_kernel(%arg0: i32, %arg1: memref<8x256xbf16, #tpu.memory_space<vmem>>, %arg2: memref<256x128xbf16, #tpu.memory_space<vmem>>, %arg3: memref<1x128xf32, #tpu.memory_space<vmem>>, %arg4: memref<8x128xbf16, #tpu.memory_space<vmem>>) attributes {dimension_semantics = [#tpu.dimension_semantics<parallel>], iteration_bounds = array<i64: 1>, scalar_prefetch = 0 : i64, scratch_operands = 0 : i64, tpu.core_type = #tpu.core_type<tc>, window_params = [{transform_indices = @transform_0, window_bounds = array<i64: 8, 256>}, {pipeline_mode = #tpu.pipeline_mode<synchronous>, transform_indices = @transform_1, window_bounds = array<i64: 256, 128>}, {pipeline_mode = #tpu.pipeline_mode<synchronous>, transform_indices = @transform_2, window_bounds = array<i64: 1, 128>}, {transform_indices = @transform_3, window_bounds = array<i64: 8, 128>}]} {
    %c0 = arith.constant 0 : index
    %c0_0 = arith.constant 0 : index
    %0 = vector.load %arg1[%c0, %c0_0] : memref<8x256xbf16, #tpu.memory_space<vmem>>, vector<8x256xbf16>
    %c0_1 = arith.constant 0 : index
    %c0_2 = arith.constant 0 : index
    %1 = vector.load %arg2[%c0_1, %c0_2] : memref<256x128xbf16, #tpu.memory_space<vmem>>, vector<256x128xbf16>
    %cst = arith.constant dense<0.000000e+00> : vector<8x128xf32>
    %2 = tpu.matmul %0, %1, %cst {dimension_numbers = #tpu.dot_dimension_numbers<[1], [0], [0], [1], [0, 0, 1, 1], [], []>} : vector<8x256xbf16>, vector<256x128xbf16>, vector<8x128xf32> -> vector<8x128xf32>
    %c0_3 = arith.constant 0 : index
    %c0_4 = arith.constant 0 : index
    %3 = vector.load %arg3[%c0_3, %c0_4] : memref<1x128xf32, #tpu.memory_space<vmem>>, vector<1x128xf32>
    %4 = vector.broadcast %3 : vector<1x128xf32> to vector<8x128xf32>
    %5 = arith.addf %2, %4 : vector<8x128xf32>
    %cst_5 = arith.constant 0.000000e+00 : f32
    %6 = vector.broadcast %cst_5 : f32 to vector<8x128xf32>
    %7 = arith.maximumf %5, %6 : vector<8x128xf32>
    %8 = arith.truncf %7 : vector<8x128xf32> to vector<8x128xbf16>
    %c0_6 = arith.constant 0 : index
    %c0_7 = arith.constant 0 : index
    %9 = vector.load %arg4[%c0_6, %c0_7] : memref<8x128xbf16, #tpu.memory_space<vmem>>, vector<8x128xbf16>
    tpu.vector_store %arg4[%c0_6, %c0_7], %8 {strides = array<i32>} : memref<8x128xbf16, #tpu.memory_space<vmem>>, vector<8x128xbf16>,
    return
  }
  func.func @transform_0(%arg0: i32) -> (i32, i32) {
    %c0_i32 = arith.constant 0 : i32
    %c0_i32_0 = arith.constant 0 : i32
    return %arg0, %c0_i32 : i32, i32
  }
  func.func @transform_1(%arg0: i32) -> (i32, i32) {
    %c0_i32 = arith.constant 0 : i32
    %c0_i32_0 = arith.constant 0 : i32
    %c0_i32_1 = arith.constant 0 : i32
    return %c0_i32, %c0_i32_0 : i32, i32
  }
  func.func @transform_2(%arg0: i32) -> (i32, i32) {
    %c0_i32 = arith.constant 0 : i32
    %c0_i32_0 = arith.constant 0 : i32
    %c0_i32_1 = arith.constant 0 : i32
    return %c0_i32, %c0_i32_0 : i32, i32
  }
  func.func @transform_3(%arg0: i32) -> (i32, i32) {
    %c0_i32 = arith.constant 0 : i32
    %c0_i32_0 = arith.constant 0 : i32
    return %arg0, %c0_i32 : i32, i32
  }
}

module attributes {stable_mosaic.version = 11 : i64} {
  func.func @_mm_bias_kernel(%arg0: i32, %arg1: memref<8x128xbf16, #tpu.memory_space<vmem>>, %arg2: memref<128x512xbf16, #tpu.memory_space<vmem>>, %arg3: memref<1x512xf32, #tpu.memory_space<vmem>>, %arg4: memref<8x512xbf16, #tpu.memory_space<vmem>>) attributes {dimension_semantics = [#tpu.dimension_semantics<parallel>], iteration_bounds = array<i64: 1>, scalar_prefetch = 0 : i64, scratch_operands = 0 : i64, tpu.core_type = #tpu.core_type<tc>, window_params = [{transform_indices = @transform_0, window_bounds = array<i64: 8, 128>}, {pipeline_mode = #tpu.pipeline_mode<synchronous>, transform_indices = @transform_1, window_bounds = array<i64: 128, 512>}, {pipeline_mode = #tpu.pipeline_mode<synchronous>, transform_indices = @transform_2, window_bounds = array<i64: 1, 512>}, {transform_indices = @transform_3, window_bounds = array<i64: 8, 512>}]} {
    %c0 = arith.constant 0 : index
    %c0_0 = arith.constant 0 : index
    %0 = vector.load %arg1[%c0, %c0_0] : memref<8x128xbf16, #tpu.memory_space<vmem>>, vector<8x128xbf16>
    %c0_1 = arith.constant 0 : index
    %c0_2 = arith.constant 0 : index
    %1 = vector.load %arg2[%c0_1, %c0_2] : memref<128x512xbf16, #tpu.memory_space<vmem>>, vector<128x512xbf16>
    %cst = arith.constant dense<0.000000e+00> : vector<8x512xf32>
    %2 = tpu.matmul %0, %1, %cst {dimension_numbers = #tpu.dot_dimension_numbers<[1], [0], [0], [1], [0, 0, 1, 1], [], []>} : vector<8x128xbf16>, vector<128x512xbf16>, vector<8x512xf32> -> vector<8x512xf32>
    %c0_3 = arith.constant 0 : index
    %c0_4 = arith.constant 0 : index
    %3 = vector.load %arg3[%c0_3, %c0_4] : memref<1x512xf32, #tpu.memory_space<vmem>>, vector<1x512xf32>
    %4 = vector.broadcast %3 : vector<1x512xf32> to vector<8x512xf32>
    %5 = arith.addf %2, %4 : vector<8x512xf32>
    %6 = arith.truncf %5 : vector<8x512xf32> to vector<8x512xbf16>
    %c0_5 = arith.constant 0 : index
    %c0_6 = arith.constant 0 : index
    %7 = vector.load %arg4[%c0_5, %c0_6] : memref<8x512xbf16, #tpu.memory_space<vmem>>, vector<8x512xbf16>
    tpu.vector_store %arg4[%c0_5, %c0_6], %6 {strides = array<i32>} : memref<8x512xbf16, #tpu.memory_space<vmem>>, vector<8x512xbf16>,
    return
  }
  func.func @transform_0(%arg0: i32) -> (i32, i32) {
    %c0_i32 = arith.constant 0 : i32
    %c0_i32_0 = arith.constant 0 : i32
    return %arg0, %c0_i32 : i32, i32
  }
  func.func @transform_1(%arg0: i32) -> (i32, i32) {
    %c0_i32 = arith.constant 0 : i32
    %c0_i32_0 = arith.constant 0 : i32
    %c0_i32_1 = arith.constant 0 : i32
    return %c0_i32, %c0_i32_0 : i32, i32
  }
  func.func @transform_2(%arg0: i32) -> (i32, i32) {
    %c0_i32 = arith.constant 0 : i32
    %c0_i32_0 = arith.constant 0 : i32
    %c0_i32_1 = arith.constant 0 : i32
    return %c0_i32, %c0_i32_0 : i32, i32
  }
  func.func @transform_3(%arg0: i32) -> (i32, i32) {
    %c0_i32 = arith.constant 0 : i32
    %c0_i32_0 = arith.constant 0 : i32
    return %arg0, %c0_i32 : i32, i32
  }
}

module attributes {stable_mosaic.version = 11 : i64} {
  func.func @_lstm_kernel(%arg0: i32, %arg1: memref<4x8x512xbf16, #tpu.memory_space<vmem>>, %arg2: memref<128x512xbf16, #tpu.memory_space<vmem>>, %arg3: memref<8x128xf32, #tpu.memory_space<vmem>>, %arg4: memref<8x128xf32, #tpu.memory_space<vmem>>, %arg5: memref<4x8x128xbf16, #tpu.memory_space<vmem>>, %arg6: memref<8x128xf32, #tpu.memory_space<vmem>>, %arg7: memref<8x128xf32, #tpu.memory_space<vmem>>, %arg8: memref<8x128xf32, #tpu.memory_space<vmem>>, %arg9: memref<8x128xf32, #tpu.memory_space<vmem>>) attributes {dimension_semantics = [#tpu.dimension_semantics<arbitrary>], iteration_bounds = array<i64: 1>, scalar_prefetch = 0 : i64, scratch_operands = 2 : i64, tpu.core_type = #tpu.core_type<tc>, window_params = [{transform_indices = @transform_0, window_bounds = array<i64: 4, 8, 512>}, {pipeline_mode = #tpu.pipeline_mode<synchronous>, transform_indices = @transform_1, window_bounds = array<i64: 128, 512>}, {pipeline_mode = #tpu.pipeline_mode<synchronous>, transform_indices = @transform_2, window_bounds = array<i64: 8, 128>}, {pipeline_mode = #tpu.pipeline_mode<synchronous>, transform_indices = @transform_3, window_bounds = array<i64: 8, 128>}, {transform_indices = @transform_4, window_bounds = array<i64: 4, 8, 128>}, {pipeline_mode = #tpu.pipeline_mode<synchronous>, transform_indices = @transform_5, window_bounds = array<i64: 8, 128>}, {pipeline_mode = #tpu.pipeline_mode<synchronous>, transform_indices = @transform_6, window_bounds = array<i64: 8, 128>}]} {
    %c0_i32 = arith.constant 0 : i32
    %0 = arith.cmpi eq, %arg0, %c0_i32 : i32
    %1 = arith.extui %0 : i1 to i32
    %c0_i32_0 = arith.constant 0 : i32
    %2 = arith.cmpi ne, %1, %c0_i32_0 : i32
    scf.if %2 {
      %c0_14 = arith.constant 0 : index
      %c0_15 = arith.constant 0 : index
      %13 = vector.load %arg3[%c0_14, %c0_15] : memref<8x128xf32, #tpu.memory_space<vmem>>, vector<8x128xf32>
      %c0_16 = arith.constant 0 : index
      %c0_17 = arith.constant 0 : index
      %14 = vector.load %arg8[%c0_16, %c0_17] : memref<8x128xf32, #tpu.memory_space<vmem>>, vector<8x128xf32>
      tpu.vector_store %arg8[%c0_16, %c0_17], %13 {strides = array<i32>} : memref<8x128xf32, #tpu.memory_space<vmem>>, vector<8x128xf32>,
      %c0_18 = arith.constant 0 : index
      %c0_19 = arith.constant 0 : index
      %15 = vector.load %arg4[%c0_18, %c0_19] : memref<8x128xf32, #tpu.memory_space<vmem>>, vector<8x128xf32>
      %c0_20 = arith.constant 0 : index
      %c0_21 = arith.constant 0 : index
      %16 = vector.load %arg9[%c0_20, %c0_21] : memref<8x128xf32, #tpu.memory_space<vmem>>, vector<8x128xf32>
      tpu.vector_store %arg9[%c0_20, %c0_21], %15 {strides = array<i32>} : memref<8x128xf32, #tpu.memory_space<vmem>>, vector<8x128xf32>,
    } else {
    }
    %c0 = arith.constant 0 : index
    %c0_1 = arith.constant 0 : index
    %3 = vector.load %arg2[%c0, %c0_1] : memref<128x512xbf16, #tpu.memory_space<vmem>>, vector<128x512xbf16>
    %c0_2 = arith.constant 0 : index
    %c0_3 = arith.constant 0 : index
    %4 = vector.load %arg8[%c0_2, %c0_3] : memref<8x128xf32, #tpu.memory_space<vmem>>, vector<8x128xf32>
    %c0_4 = arith.constant 0 : index
    %c0_5 = arith.constant 0 : index
    %5 = vector.load %arg9[%c0_4, %c0_5] : memref<8x128xf32, #tpu.memory_space<vmem>>, vector<8x128xf32>
    %c0_i32_6 = arith.constant 0 : i32
    %c4_i32 = arith.constant 4 : i32
    %6 = arith.addi %c0_i32_6, %c4_i32 : i32
    %c1_i32 = arith.constant 1 : i32
    %7:2 = scf.for %arg10 = %c0_i32_6 to %6 step %c1_i32 iter_args(%arg11 = %4, %arg12 = %5) -> (vector<8x128xf32>, vector<8x128xf32>)  : i32 {
      %13 = arith.index_cast %arg10 : i32 to index
      %c0_14 = arith.constant 0 : index
      %c0_15 = arith.constant 0 : index
      %14 = vector.load %arg1[%13, %c0_14, %c0_15] : memref<4x8x512xbf16, #tpu.memory_space<vmem>>, vector<1x8x512xbf16>
      %15 = vector.shape_cast %14 : vector<1x8x512xbf16> to vector<8x512xbf16>
      %16 = arith.extf %15 : vector<8x512xbf16> to vector<8x512xf32>
      %17 = arith.truncf %arg11 : vector<8x128xf32> to vector<8x128xbf16>
      %cst = arith.constant dense<0.000000e+00> : vector<8x512xf32>
      %18 = tpu.matmul %17, %3, %cst {dimension_numbers = #tpu.dot_dimension_numbers<[1], [0], [0], [1], [0, 0, 1, 1], [], []>} : vector<8x128xbf16>, vector<128x512xbf16>, vector<8x512xf32> -> vector<8x512xf32>
      %19 = arith.addf %16, %18 : vector<8x512xf32>
      %20 = vector.extract_strided_slice %19 {offsets = [0, 0], sizes = [8, 128], strides = [1, 1]} : vector<8x512xf32> to vector<8x128xf32>
      %21 = arith.negf %20 : vector<8x128xf32>
      %22 = math.exp %21 : vector<8x128xf32>
      %cst_16 = arith.constant 1.000000e+00 : f32
      %23 = vector.broadcast %cst_16 : f32 to vector<8x128xf32>
      %24 = arith.addf %23, %22 : vector<8x128xf32>
      %25 = arith.divf %23, %24 : vector<8x128xf32>
      %26 = vector.extract_strided_slice %19 {offsets = [0, 128], sizes = [8, 128], strides = [1, 1]} : vector<8x512xf32> to vector<8x128xf32>
      %27 = arith.negf %26 : vector<8x128xf32>
      %28 = math.exp %27 : vector<8x128xf32>
      %cst_17 = arith.constant 1.000000e+00 : f32
      %29 = vector.broadcast %cst_17 : f32 to vector<8x128xf32>
      %30 = arith.addf %29, %28 : vector<8x128xf32>
      %31 = arith.divf %29, %30 : vector<8x128xf32>
      %32 = vector.extract_strided_slice %19 {offsets = [0, 256], sizes = [8, 128], strides = [1, 1]} : vector<8x512xf32> to vector<8x128xf32>
      %33 = math.tanh %32 : vector<8x128xf32>
      %34 = vector.extract_strided_slice %19 {offsets = [0, 384], sizes = [8, 128], strides = [1, 1]} : vector<8x512xf32> to vector<8x128xf32>
      %35 = arith.negf %34 : vector<8x128xf32>
      %36 = math.exp %35 : vector<8x128xf32>
      %cst_18 = arith.constant 1.000000e+00 : f32
      %37 = vector.broadcast %cst_18 : f32 to vector<8x128xf32>
      %38 = arith.addf %37, %36 : vector<8x128xf32>
      %39 = arith.divf %37, %38 : vector<8x128xf32>
      %40 = arith.mulf %31, %arg12 : vector<8x128xf32>
      %41 = arith.mulf %25, %33 : vector<8x128xf32>
      %42 = arith.addf %40, %41 : vector<8x128xf32>
      %43 = math.tanh %42 : vector<8x128xf32>
      %44 = arith.mulf %39, %43 : vector<8x128xf32>
      %45 = arith.truncf %44 : vector<8x128xf32> to vector<8x128xbf16>
      %46 = arith.index_cast %arg10 : i32 to index
      %c0_19 = arith.constant 0 : index
      %c0_20 = arith.constant 0 : index
      %47 = vector.load %arg5[%46, %c0_19, %c0_20] : memref<4x8x128xbf16, #tpu.memory_space<vmem>>, vector<1x8x128xbf16>
      %48 = vector.shape_cast %47 : vector<1x8x128xbf16> to vector<8x128xbf16>
      %49 = vector.shape_cast %45 : vector<8x128xbf16> to vector<1x8x128xbf16>
      tpu.vector_store %arg5[%46, %c0_19, %c0_20], %49 {strides = array<i32>} : memref<4x8x128xbf16, #tpu.memory_space<vmem>>, vector<1x8x128xbf16>,
      scf.yield %44, %42 : vector<8x128xf32>, vector<8x128xf32>
    }
    %c4_i32_7 = arith.constant 4 : i32
    %c0_8 = arith.constant 0 : index
    %c0_9 = arith.constant 0 : index
    %8 = vector.load %arg8[%c0_8, %c0_9] : memref<8x128xf32, #tpu.memory_space<vmem>>, vector<8x128xf32>
    tpu.vector_store %arg8[%c0_8, %c0_9], %7#0 {strides = array<i32>} : memref<8x128xf32, #tpu.memory_space<vmem>>, vector<8x128xf32>,
    %c0_10 = arith.constant 0 : index
    %c0_11 = arith.constant 0 : index
    %9 = vector.load %arg9[%c0_10, %c0_11] : memref<8x128xf32, #tpu.memory_space<vmem>>, vector<8x128xf32>
    tpu.vector_store %arg9[%c0_10, %c0_11], %7#1 {strides = array<i32>} : memref<8x128xf32, #tpu.memory_space<vmem>>, vector<8x128xf32>,
    %c0_i32_12 = arith.constant 0 : i32
    %10 = arith.cmpi eq, %arg0, %c0_i32_12 : i32
    %11 = arith.extui %10 : i1 to i32
    %c0_i32_13 = arith.constant 0 : i32
    %12 = arith.cmpi ne, %11, %c0_i32_13 : i32
    scf.if %12 {
      %c0_14 = arith.constant 0 : index
      %c0_15 = arith.constant 0 : index
      %13 = vector.load %arg6[%c0_14, %c0_15] : memref<8x128xf32, #tpu.memory_space<vmem>>, vector<8x128xf32>
      tpu.vector_store %arg6[%c0_14, %c0_15], %7#0 {strides = array<i32>} : memref<8x128xf32, #tpu.memory_space<vmem>>, vector<8x128xf32>,
      %c0_16 = arith.constant 0 : index
      %c0_17 = arith.constant 0 : index
      %14 = vector.load %arg7[%c0_16, %c0_17] : memref<8x128xf32, #tpu.memory_space<vmem>>, vector<8x128xf32>
      tpu.vector_store %arg7[%c0_16, %c0_17], %7#1 {strides = array<i32>} : memref<8x128xf32, #tpu.memory_space<vmem>>, vector<8x128xf32>,
    } else {
    }
    return
  }
  func.func @transform_0(%arg0: i32) -> (i32, i32, i32) {
    %c0_i32 = arith.constant 0 : i32
    %c0_i32_0 = arith.constant 0 : i32
    %c0_i32_1 = arith.constant 0 : i32
    return %arg0, %c0_i32, %c0_i32_0 : i32, i32, i32
  }
  func.func @transform_1(%arg0: i32) -> (i32, i32) {
    %c0_i32 = arith.constant 0 : i32
    %c0_i32_0 = arith.constant 0 : i32
    %c0_i32_1 = arith.constant 0 : i32
    return %c0_i32, %c0_i32_0 : i32, i32
  }
  func.func @transform_2(%arg0: i32) -> (i32, i32) {
    %c0_i32 = arith.constant 0 : i32
    %c0_i32_0 = arith.constant 0 : i32
    %c0_i32_1 = arith.constant 0 : i32
    return %c0_i32, %c0_i32_0 : i32, i32
  }
  func.func @transform_3(%arg0: i32) -> (i32, i32) {
    %c0_i32 = arith.constant 0 : i32
    %c0_i32_0 = arith.constant 0 : i32
    %c0_i32_1 = arith.constant 0 : i32
    return %c0_i32, %c0_i32_0 : i32, i32
  }
  func.func @transform_4(%arg0: i32) -> (i32, i32, i32) {
    %c0_i32 = arith.constant 0 : i32
    %c0_i32_0 = arith.constant 0 : i32
    %c0_i32_1 = arith.constant 0 : i32
    return %arg0, %c0_i32, %c0_i32_0 : i32, i32, i32
  }
  func.func @transform_5(%arg0: i32) -> (i32, i32) {
    %c0_i32 = arith.constant 0 : i32
    %c0_i32_0 = arith.constant 0 : i32
    %c0_i32_1 = arith.constant 0 : i32
    return %c0_i32, %c0_i32_0 : i32, i32
  }
  func.func @transform_6(%arg0: i32) -> (i32, i32) {
    %c0_i32 = arith.constant 0 : i32
    %c0_i32_0 = arith.constant 0 : i32
    %c0_i32_1 = arith.constant 0 : i32
    return %c0_i32, %c0_i32_0 : i32, i32
  }
}

module attributes {stable_mosaic.version = 11 : i64} {
  func.func @_head_kernel(%arg0: i32, %arg1: memref<8x32xbf16, #tpu.memory_space<vmem>>, %arg2: memref<8x32xbf16, #tpu.memory_space<vmem>>, %arg3: memref<32x128xbf16, #tpu.memory_space<vmem>>, %arg4: memref<1x128xf32, #tpu.memory_space<vmem>>, %arg5: memref<8x128xf32, #tpu.memory_space<vmem>>, %arg6: memref<8x1xf32, #tpu.memory_space<vmem>>) attributes {dimension_semantics = [#tpu.dimension_semantics<parallel>], iteration_bounds = array<i64: 1>, scalar_prefetch = 0 : i64, scratch_operands = 0 : i64, tpu.core_type = #tpu.core_type<tc>, window_params = [{transform_indices = @transform_0, window_bounds = array<i64: 8, 32>}, {transform_indices = @transform_1, window_bounds = array<i64: 8, 32>}, {pipeline_mode = #tpu.pipeline_mode<synchronous>, transform_indices = @transform_2, window_bounds = array<i64: 32, 128>}, {pipeline_mode = #tpu.pipeline_mode<synchronous>, transform_indices = @transform_3, window_bounds = array<i64: 1, 128>}, {transform_indices = @transform_4, window_bounds = array<i64: 8, 128>}, {transform_indices = @transform_5, window_bounds = array<i64: 8, 1>}]} {
    %c0 = arith.constant 0 : index
    %c0_0 = arith.constant 0 : index
    %0 = vector.load %arg1[%c0, %c0_0] : memref<8x32xbf16, #tpu.memory_space<vmem>>, vector<8x32xbf16>
    %c0_1 = arith.constant 0 : index
    %c0_2 = arith.constant 0 : index
    %1 = vector.load %arg2[%c0_1, %c0_2] : memref<8x32xbf16, #tpu.memory_space<vmem>>, vector<8x32xbf16>
    %2 = arith.addf %0, %1 : vector<8x32xbf16>
    %c0_3 = arith.constant 0 : index
    %c0_4 = arith.constant 0 : index
    %3 = vector.load %arg3[%c0_3, %c0_4] : memref<32x128xbf16, #tpu.memory_space<vmem>>, vector<32x128xbf16>
    %cst = arith.constant dense<0.000000e+00> : vector<8x128xf32>
    %4 = tpu.matmul %2, %3, %cst {dimension_numbers = #tpu.dot_dimension_numbers<[1], [0], [0], [1], [0, 0, 1, 1], [], []>} : vector<8x32xbf16>, vector<32x128xbf16>, vector<8x128xf32> -> vector<8x128xf32>
    %c0_5 = arith.constant 0 : index
    %c0_6 = arith.constant 0 : index
    %5 = vector.load %arg4[%c0_5, %c0_6] : memref<1x128xf32, #tpu.memory_space<vmem>>, vector<1x128xf32>
    %6 = vector.broadcast %5 : vector<1x128xf32> to vector<8x128xf32>
    %7 = arith.addf %4, %6 : vector<8x128xf32>
    %8 = vector.extract_strided_slice %7 {offsets = [0, 6], sizes = [8, 1], strides = [1, 1]} : vector<8x128xf32> to vector<8x1xf32>
    %c0_7 = arith.constant 0 : index
    %c0_8 = arith.constant 0 : index
    %9 = vector.load %arg6[%c0_7, %c0_8] : memref<8x1xf32, #tpu.memory_space<vmem>>, vector<8x1xf32>
    tpu.vector_store %arg6[%c0_7, %c0_8], %8 {strides = array<i32>} : memref<8x1xf32, #tpu.memory_space<vmem>>, vector<8x1xf32>,
    %10 = tpu.iota {dimensions = array<i32: 1>} : vector<8x128xi32>
    %c6_i32 = arith.constant 6 : i32
    %11 = vector.broadcast %c6_i32 : i32 to vector<8x128xi32>
    %12 = arith.cmpi slt, %10, %11 : vector<8x128xi32>
    %cst_9 = arith.constant -1.000000e+30 : f32
    %13 = vector.broadcast %cst_9 : f32 to vector<8x128xf32>
    %14 = arith.select %12, %7, %13 : vector<8x128xi1>, vector<8x128xf32>
    %cst_10 = arith.constant dense<0xFF800000> : vector<8xf32>
    %15 = vector.multi_reduction <maximumf>, %14, %cst_10 [1] : vector<8x128xf32> to vector<8xf32>
    %16 = vector.shape_cast %15 : vector<8xf32> to vector<8x1xf32>
    %17 = vector.broadcast %16 : vector<8x1xf32> to vector<8x128xf32>
    %18 = arith.subf %14, %17 : vector<8x128xf32>
    %19 = math.exp %18 : vector<8x128xf32>
    %cst_11 = arith.constant dense<0.000000e+00> : vector<8xf32>
    %20 = vector.multi_reduction <add>, %19, %cst_11 [1] : vector<8x128xf32> to vector<8xf32>
    %21 = vector.shape_cast %20 : vector<8xf32> to vector<8x1xf32>
    %22 = tpu.reciprocal %21 {approx = true} : vector<8x1xf32> -> vector<8x1xf32>
    %23 = vector.broadcast %22 : vector<8x1xf32> to vector<8x128xf32>
    %24 = arith.mulf %19, %23 : vector<8x128xf32>
    %c0_12 = arith.constant 0 : index
    %c0_13 = arith.constant 0 : index
    %25 = vector.load %arg5[%c0_12, %c0_13] : memref<8x128xf32, #tpu.memory_space<vmem>>, vector<8x128xf32>
    tpu.vector_store %arg5[%c0_12, %c0_13], %24 {strides = array<i32>} : memref<8x128xf32, #tpu.memory_space<vmem>>, vector<8x128xf32>,
    return
  }
  func.func @transform_0(%arg0: i32) -> (i32, i32) {
    %c0_i32 = arith.constant 0 : i32
    %c0_i32_0 = arith.constant 0 : i32
    return %arg0, %c0_i32 : i32, i32
  }
  func.func @transform_1(%arg0: i32) -> (i32, i32) {
    %c0_i32 = arith.constant 0 : i32
    %c0_i32_0 = arith.constant 0 : i32
    return %arg0, %c0_i32 : i32, i32
  }
  func.func @transform_2(%arg0: i32) -> (i32, i32) {
    %c0_i32 = arith.constant 0 : i32
    %c0_i32_0 = arith.constant 0 : i32
    %c0_i32_1 = arith.constant 0 : i32
    return %c0_i32, %c0_i32_0 : i32, i32
  }
  func.func @transform_3(%arg0: i32) -> (i32, i32) {
    %c0_i32 = arith.constant 0 : i32
    %c0_i32_0 = arith.constant 0 : i32
    %c0_i32_1 = arith.constant 0 : i32
    return %c0_i32, %c0_i32_0 : i32, i32
  }
  func.func @transform_4(%arg0: i32) -> (i32, i32) {
    %c0_i32 = arith.constant 0 : i32
    %c0_i32_0 = arith.constant 0 : i32
    return %arg0, %c0_i32 : i32, i32
  }
  func.func @transform_5(%arg0: i32) -> (i32, i32) {
    %c0_i32 = arith.constant 0 : i32
    %c0_i32_0 = arith.constant 0 : i32
    return %arg0, %c0_i32 : i32, i32
  }
}

</mosaic_0001>

<llo_original>
// kernel: dmlab_pg_lstm_forward.7
$region0: #{dmlab_pg_lstm_forward.7}
  #allocation0 [shape = 'u32[]', space=smem, size = 0x4, offset = 0x4, fixed_abs, tag = 'smem constant byte address 0x4 - core index']
  #allocation1 [shape = 'u32[144,128]{1,0:T(1,128)}', space=vmem, size = 0x12000, scoped, tag = 'internal scratch']
  %s0 = inlined_call_operand.vmem [shape: bf16[392,256], index: 0, kind: input, shape index: {}]
  %s1 = inlined_call_operand.vmem [shape: bf16[256,128], index: 1, kind: input, shape index: {}]
  %s2 = inlined_call_operand.vmem [shape: f32[1,128], index: 2, kind: input, shape index: {}]
  %s3 = inlined_call_operand.vmem [shape: bf16[392,128], index: 3, kind: output, shape index: {}]
  %s4 = sld [smem:[#allocation0]]
  $region22: #{dmlab_pg_lstm_forward.7} parent=0
    _
  %s6 = ssub.s32 1, %s4
  %s7 = scalar_select 0, %s6, %s4
  // Predicated region
  $region2: #{dmlab_pg_lstm_forward.7} parent=0 // pred_check
    _
  $region3: #{dmlab_pg_lstm_forward.7} parent=0 // pred_check_branch
    %9 = sbr.rel (0) target = $region5
  $region4: #{dmlab_pg_lstm_forward.7} parent=0 // pred_region
    _
  $region5: #{dmlab_pg_lstm_forward.7} parent=0 // pred_fallthru
    _
  // Predicated region
  $region6: #{dmlab_pg_lstm_forward.7} parent=0 // pred_check
    _
  $region7: #{dmlab_pg_lstm_forward.7} parent=0 // pred_check_branch
    %11 = sbr.rel (0) target = $region9
  $region8: #{dmlab_pg_lstm_forward.7} parent=0 // pred_region
    _
  $region9: #{dmlab_pg_lstm_forward.7} parent=0 // pred_fallthru
    _
  // Predicated region
  $region10: #{dmlab_pg_lstm_forward.7} parent=0 // pred_check
    _
  $region11: #{dmlab_pg_lstm_forward.7} parent=0 // pred_check_branch
    %13 = sbr.rel (0) target = $region13
  $region12: #{dmlab_pg_lstm_forward.7} parent=0 // pred_region
    _
  $region13: #{dmlab_pg_lstm_forward.7} parent=0 // pred_fallthru
    _
  %v15 = vld [vmem:[%s0] sm:$0xff]
  %v16 = vld [vmem:[%s0 + $0x8] sm:$0xff]
  %v17 = vld [vmem:[%s0 + $0x10] sm:$0xff]
  %v18 = vld [vmem:[%s0 + $0x18] sm:$0xff]
  %v19 = vld [vmem:[%s0 + $0x20] sm:$0xff]
  %v20 = vld [vmem:[%s0 + $0x28] sm:$0xff]
  %v21 = vld [vmem:[%s0 + $0x30] sm:$0xff]
  %v22 = vld [vmem:[%s0 + $0x38] sm:$0xff]
  %v23 = vld [vmem:[%s0 + $0x40] sm:$0xff]
  %v24 = vld [vmem:[%s0 + $0x48] sm:$0xff]
  %v25 = vld [vmem:[%s0 + $0x50] sm:$0xff]
  %v26 = vld [vmem:[%s0 + $0x58] sm:$0xff]
  %v27 = vld [vmem:[%s0 + $0x60] sm:$0xff]
  %v28 = vld [vmem:[%s0 + $0x68] sm:$0xff]
  %v29 = vld [vmem:[%s0 + $0x70] sm:$0xff]
  %v30 = vld [vmem:[%s0 + $0x78] sm:$0xff]
  %v31 = vld [vmem:[%s0 + $0x80] sm:$0xff]
  %v32 = vld [vmem:[%s0 + $0x88] sm:$0xff]
  %v33 = vld [vmem:[%s0 + $0x90] sm:$0xff]
  %v34 = vld [vmem:[%s0 + $0x98] sm:$0xff]
  %v35 = vld [vmem:[%s0 + $0xa0] sm:$0xff]
  %v36 = vld [vmem:[%s0 + $0xa8] sm:$0xff]
  %v37 = vld [vmem:[%s0 + $0xb0] sm:$0xff]
  %v38 = vld [vmem:[%s0 + $0xb8] sm:$0xff]
  %v39 = vld [vmem:[%s0 + $0xc0] sm:$0xff]
  %v40 = vld [vmem:[%s0 + $0xc8] sm:$0xff]
  %v41 = vld [vmem:[%s0 + $0xd0] sm:$0xff]
  %v42 = vld [vmem:[%s0 + $0xd8] sm:$0xff]
  %v43 = vld [vmem:[%s0 + $0xe0] sm:$0xff]
  %v44 = vld [vmem:[%s0 + $0xe8] sm:$0xff]
  %v45 = vld [vmem:[%s0 + $0xf0] sm:$0xff]
  %v46 = vld [vmem:[%s0 + $0xf8] sm:$0xff]
  %v47 = vld [vmem:[%s0 + $0x100] sm:$0xff]
  %v48 = vld [vmem:[%s0 + $0x108] sm:$0xff]
  %v49 = vld [vmem:[%s0 + $0x110] sm:$0xff]
  %v50 = vld [vmem:[%s0 + $0x118] sm:$0xff]
  %v51 = vld [vmem:[%s0 + $0x120] sm:$0xff]
  %v52 = vld [vmem:[%s0 + $0x128] sm:$0xff]
  %v53 = vld [vmem:[%s0 + $0x130] sm:$0xff]
  %v54 = vld [vmem:[%s0 + $0x138] sm:$0xff]
  %v55 = vld [vmem:[%s0 + $0x140] sm:$0xff]
  %v56 = vld [vmem:[%s0 + $0x148] sm:$0xff]
  %v57 = vld [vmem:[%s0 + $0x150] sm:$0xff]
  %v58 = vld [vmem:[%s0 + $0x158] sm:$0xff]
  %v59 = vld [vmem:[%s0 + $0x160] sm:$0xff]
  %v60 = vld [vmem:[%s0 + $0x168] sm:$0xff]
  %v61 = vld [vmem:[%s0 + $0x170] sm:$0xff]
  %v62 = vld [vmem:[%s0 + $0x178] sm:$0xff]
  %v63 = vld [vmem:[%s0 + $0x180] sm:$0xff]
  %v64 = vld [vmem:[%s1] sm:$0xf]
  %v65 = vld [vmem:[%s1 + $0x4] sm:$0xf]
  %v66 = vld [vmem:[%s1 + $0x8] sm:$0xf]
  %v67 = vld [vmem:[%s1 + $0xc] sm:$0xf]
  %v68 = vld [vmem:[%s1 + $0x10] sm:$0xf]
  %v69 = vld [vmem:[%s1 + $0x14] sm:$0xf]
  %v70 = vld [vmem:[%s1 + $0x18] sm:$0xf]
  %v71 = vld [vmem:[%s1 + $0x1c] sm:$0xf]
  %v72 = vld [vmem:[%s1 + $0x20] sm:$0xf]
  %v73 = vld [vmem:[%s1 + $0x24] sm:$0xf]
  %v74 = vld [vmem:[%s1 + $0x28] sm:$0xf]
  %v75 = vld [vmem:[%s1 + $0x2c] sm:$0xf]
  %v76 = vld [vmem:[%s1 + $0x30] sm:$0xf]
  %v77 = vld [vmem:[%s1 + $0x34] sm:$0xf]
  %v78 = vld [vmem:[%s1 + $0x38] sm:$0xf]
  %v79 = vld [vmem:[%s1 + $0x3c] sm:$0xf]
  %v80 = vld [vmem:[%s1 + $0x40] sm:$0xf]
  %v81 = vld [vmem:[%s1 + $0x44] sm:$0xf]
  %v82 = vld [vmem:[%s1 + $0x48] sm:$0xf]
  %v83 = vld [vmem:[%s1 + $0x4c] sm:$0xf]
  %v84 = vld [vmem:[%s1 + $0x50] sm:$0xf]
  %v85 = vld [vmem:[%s1 + $0x54] sm:$0xf]
  %v86 = vld [vmem:[%s1 + $0x58] sm:$0xf]
  %v87 = vld [vmem:[%s1 + $0x5c] sm:$0xf]
  %v88 = vld [vmem:[%s1 + $0x60] sm:$0xf]
  %v89 = vld [vmem:[%s1 + $0x64] sm:$0xf]
  %v90 = vld [vmem:[%s1 + $0x68] sm:$0xf]
  %v91 = vld [vmem:[%s1 + $0x6c] sm:$0xf]
  %v92 = vld [vmem:[%s1 + $0x70] sm:$0xf]
  %v93 = vld [vmem:[%s1 + $0x74] sm:$0xf]
  %v94 = vld [vmem:[%s1 + $0x78] sm:$0xf]
  %v95 = vld [vmem:[%s1 + $0x7c] sm:$0xf]
  %v96 = vld [vmem:[%s2] sm:$0x1]
  %v98 = vlaneseq
  %v99 = vshrl.u32 %v98, 7
  %v100 = vsub.s32 0, %v99
  %v101 = vrot.slane %v96, %v100
  %v152 = vunpack.c.l.b16 %v15
  %v153 = vunpack.c.h.b16 %v15
  %v154 = vunpack.c.l.b16 %v16
  %v155 = vunpack.c.h.b16 %v16
  %v156 = vunpack.c.l.b16 %v17
  %v157 = vunpack.c.h.b16 %v17
  %v158 = vunpack.c.l.b16 %v18
  %v159 = vunpack.c.h.b16 %v18
  %v160 = vunpack.c.l.b16 %v19
  %v161 = vunpack.c.h.b16 %v19
  %v162 = vunpack.c.l.b16 %v20
  %v163 = vunpack.c.h.b16 %v20
  %v164 = vunpack.c.l.b16 %v21
  %v165 = vunpack.c.h.b16 %v21
  %v166 = vunpack.c.l.b16 %v22
  %v167 = vunpack.c.h.b16 %v22
  %v168 = vunpack.c.l.b16 %v23
  %v169 = vunpack.c.h.b16 %v23
  %v170 = vunpack.c.l.b16 %v24
  %v171 = vunpack.c.h.b16 %v24
  %v172 = vunpack.c.l.b16 %v25
  %v173 = vunpack.c.h.b16 %v25
  %v174 = vunpack.c.l.b16 %v26
  %v175 = vunpack.c.h.b16 %v26
  %v176 = vunpack.c.l.b16 %v27
  %v177 = vunpack.c.h.b16 %v27
  %v178 = vunpack.c.l.b16 %v28
  %v179 = vunpack.c.h.b16 %v28
  %v180 = vunpack.c.l.b16 %v29
  %v181 = vunpack.c.h.b16 %v29
  %v182 = vunpack.c.l.b16 %v30
  %v183 = vunpack.c.h.b16 %v30
  %v184 = vunpack.c.l.b16 %v31
  %v185 = vunpack.c.h.b16 %v31
  %v186 = vunpack.c.l.b16 %v32
  %v187 = vunpack.c.h.b16 %v32
  %v188 = vunpack.c.l.b16 %v33
  %v189 = vunpack.c.h.b16 %v33
  %v190 = vunpack.c.l.b16 %v34
  %v191 = vunpack.c.h.b16 %v34
  %v192 = vunpack.c.l.b16 %v35
  %v193 = vunpack.c.h.b16 %v35
  %v194 = vunpack.c.l.b16 %v36
  %v195 = vunpack.c.h.b16 %v36
  %v196 = vunpack.c.l.b16 %v37
  %v197 = vunpack.c.h.b16 %v37
  %v198 = vunpack.c.l.b16 %v38
  %v199 = vunpack.c.h.b16 %v38
  %v200 = vunpack.c.l.b16 %v39
  %v201 = vunpack.c.h.b16 %v39
  %v202 = vunpack.c.l.b16 %v40
  %v203 = vunpack.c.h.b16 %v40
  %v204 = vunpack.c.l.b16 %v41
  %v205 = vunpack.c.h.b16 %v41
  %v206 = vunpack.c.l.b16 %v42
  %v207 = vunpack.c.h.b16 %v42
  %v208 = vunpack.c.l.b16 %v43
  %v209 = vunpack.c.h.b16 %v43
  %v210 = vunpack.c.l.b16 %v44
  %v211 = vunpack.c.h.b16 %v44
  %v212 = vunpack.c.l.b16 %v45
  %v213 = vunpack.c.h.b16 %v45
  %v214 = vunpack.c.l.b16 %v46
  %v215 = vunpack.c.h.b16 %v46
  %v216 = vunpack.c.l.b16 %v47
  %v217 = vunpack.c.h.b16 %v47
  %v218 = vunpack.c.l.b16 %v48
  %v219 = vunpack.c.h.b16 %v48
  %v220 = vunpack.c.l.b16 %v49
  %v221 = vunpack.c.h.b16 %v49
  %v222 = vunpack.c.l.b16 %v50
  %v223 = vunpack.c.h.b16 %v50
  %v224 = vunpack.c.l.b16 %v51
  %v225 = vunpack.c.h.b16 %v51
  %v226 = vunpack.c.l.b16 %v52
  %v227 = vunpack.c.h.b16 %v52
  %v228 = vunpack.c.l.b16 %v53
  %v229 = vunpack.c.h.b16 %v53
  %v230 = vunpack.c.l.b16 %v54
  %v231 = vunpack.c.h.b16 %v54
  %v232 = vunpack.c.l.b16 %v55
  %v233 = vunpack.c.h.b16 %v55
  %v234 = vunpack.c.l.b16 %v56
  %v235 = vunpack.c.h.b16 %v56
  %v236 = vunpack.c.l.b16 %v57
  %v237 = vunpack.c.h.b16 %v57
  %v238 = vunpack.c.l.b16 %v58
  %v239 = vunpack.c.h.b16 %v58
  %v240 = vunpack.c.l.b16 %v59
  %v241 = vunpack.c.h.b16 %v59
  %v242 = vunpack.c.l.b16 %v60
  %v243 = vunpack.c.h.b16 %v60
  %v244 = vunpack.c.l.b16 %v61
  %v245 = vunpack.c.h.b16 %v61
  %v246 = vunpack.c.l.b16 %v62
  %v247 = vunpack.c.h.b16 %v62
  %v248 = vunpack.c.l.b16 %v63
  %v249 = vunpack.c.h.b16 %v63
  %v250 = vpack.c.b16 %v154, %v152
  %v251 = vpack.c.b16 %v155, %v153
  %v252 = vpack.c.b16 %v158, %v156
  %v253 = vpack.c.b16 %v159, %v157
  %v254 = vpack.c.b16 %v162, %v160
  %v255 = vpack.c.b16 %v163, %v161
  %v256 = vpack.c.b16 %v166, %v164
  %v257 = vpack.c.b16 %v167, %v165
  %v258 = vpack.c.b16 %v170, %v168
  %v259 = vpack.c.b16 %v171, %v169
  %v260 = vpack.c.b16 %v174, %v172
  %v261 = vpack.c.b16 %v175, %v173
  %v262 = vpack.c.b16 %v178, %v176
  %v263 = vpack.c.b16 %v179, %v177
  %v264 = vpack.c.b16 %v182, %v180
  %v265 = vpack.c.b16 %v183, %v181
  %v266 = vpack.c.b16 %v186, %v184
  %v267 = vpack.c.b16 %v187, %v185
  %v268 = vpack.c.b16 %v190, %v188
  %v269 = vpack.c.b16 %v191, %v189
  %v270 = vpack.c.b16 %v194, %v192
  %v271 = vpack.c.b16 %v195, %v193
  %v272 = vpack.c.b16 %v198, %v196
  %v273 = vpack.c.b16 %v199, %v197
  %v274 = vpack.c.b16 %v202, %v200
  %v275 = vpack.c.b16 %v203, %v201
  %v276 = vpack.c.b16 %v206, %v204
  %v277 = vpack.c.b16 %v207, %v205
  %v278 = vpack.c.b16 %v210, %v208
  %v279 = vpack.c.b16 %v211, %v209
  %v280 = vpack.c.b16 %v214, %v212
  %v281 = vpack.c.b16 %v215, %v213
  %v282 = vpack.c.b16 %v218, %v216
  %v283 = vpack.c.b16 %v219, %v217
  %v284 = vpack.c.b16 %v222, %v220
  %v285 = vpack.c.b16 %v223, %v221
  %v286 = vpack.c.b16 %v226, %v224
  %v287 = vpack.c.b16 %v227, %v225
  %v288 = vpack.c.b16 %v230, %v228
  %v289 = vpack.c.b16 %v231, %v229
  %v290 = vpack.c.b16 %v234, %v232
  %v291 = vpack.c.b16 %v235, %v233
  %v292 = vpack.c.b16 %v238, %v236
  %v293 = vpack.c.b16 %v239, %v237
  %v294 = vpack.c.b16 %v242, %v240
  %v295 = vpack.c.b16 %v243, %v241
  %v296 = vpack.c.b16 %v246, %v244
  %v297 = vpack.c.b16 %v247, %v245
  %v298 = vpack.c.b16 %v248, %v248
  %v299 = vpack.c.b16 %v249, %v249
  %v382 = vunpack.c.l.b16 %v64
  %v383 = vunpack.c.l.b16 %v65
  %v384 = vunpack.c.l.b16 %v66
  %v385 = vunpack.c.l.b16 %v67
  %v386 = vunpack.c.l.b16 %v68
  %v387 = vunpack.c.l.b16 %v69
  %v388 = vunpack.c.l.b16 %v70
  %v389 = vunpack.c.l.b16 %v71
  %v390 = vunpack.c.l.b16 %v72
  %v391 = vunpack.c.l.b16 %v73
  %v392 = vunpack.c.l.b16 %v74
  %v393 = vunpack.c.l.b16 %v75
  %v394 = vunpack.c.l.b16 %v76
  %v395 = vunpack.c.l.b16 %v77
  %v396 = vunpack.c.l.b16 %v78
  %v397 = vunpack.c.l.b16 %v79
  %v398 = vunpack.c.l.b16 %v80
  %v399 = vunpack.c.l.b16 %v81
  %v400 = vunpack.c.l.b16 %v82
  %v401 = vunpack.c.l.b16 %v83
  %v402 = vunpack.c.l.b16 %v84
  %v403 = vunpack.c.l.b16 %v85
  %v404 = vunpack.c.l.b16 %v86
  %v405 = vunpack.c.l.b16 %v87
  %v406 = vunpack.c.l.b16 %v88
  %v407 = vunpack.c.l.b16 %v89
  %v408 = vunpack.c.l.b16 %v90
  %v409 = vunpack.c.l.b16 %v91
  %v410 = vunpack.c.l.b16 %v92
  %v411 = vunpack.c.l.b16 %v93
  %v412 = vunpack.c.l.b16 %v94
  %v413 = vunpack.c.l.b16 %v95
  %v414 = vpack.c.b16 %v383, %v382
  %v415 = vpack.c.b16 %v385, %v384
  %v416 = vpack.c.b16 %v387, %v386
  %v417 = vpack.c.b16 %v389, %v388
  %v418 = vpack.c.b16 %v391, %v390
  %v419 = vpack.c.b16 %v393, %v392
  %v420 = vpack.c.b16 %v395, %v394
  %v421 = vpack.c.b16 %v397, %v396
  %v422 = vpack.c.b16 %v399, %v398
  %v423 = vpack.c.b16 %v401, %v400
  %v424 = vpack.c.b16 %v403, %v402
  %v425 = vpack.c.b16 %v405, %v404
  %v426 = vpack.c.b16 %v407, %v406
  %v427 = vpack.c.b16 %v409, %v408
  %v428 = vpack.c.b16 %v411, %v410
  %v429 = vpack.c.b16 %v413, %v412
  %446 = vmatprep.subr.bf16.mxu0 0
  %447 = vmatpush1.bf16.msra.mxu0 %v414
  %448 = vmatprep.subr.bf16.mxu0 0
  %449 = vmatpush1.bf16.msra.mxu0 %v415
  %450 = vmatprep.subr.bf16.mxu0 0
  %451 = vmatpush1.bf16.msra.mxu0 %v416
  %452 = vmatprep.subr.bf16.mxu0 0
  %453 = vmatpush1.bf16.msra.mxu0 %v417
  %454 = vmatprep.subr.bf16.mxu0 0
  %455 = vmatpush1.bf16.msra.mxu0 %v418
  %456 = vmatprep.subr.bf16.mxu0 0
  %457 = vmatpush1.bf16.msra.mxu0 %v419
  %458 = vmatprep.subr.bf16.mxu0 0
  %459 = vmatpush1.bf16.msra.mxu0 %v420
  %460 = vmatprep.subr.bf16.mxu0 0
  %461 = vmatpush1.bf16.msra.mxu0 %v421
  %462 = vmatprep.subr.bf16.mxu0 0
  %463 = vmatpush1.bf16.msra.mxu0 %v422
  %464 = vmatprep.subr.bf16.mxu0 0
  %465 = vmatpush1.bf16.msra.mxu0 %v423
  %466 = vmatprep.subr.bf16.mxu0 0
  %467 = vmatpush1.bf16.msra.mxu0 %v424
  %468 = vmatprep.subr.bf16.mxu0 0
  %469 = vmatpush1.bf16.msra.mxu0 %v425
  %470 = vmatprep.subr.bf16.mxu0 0
  %471 = vmatpush1.bf16.msra.mxu0 %v426
  %472 = vmatprep.subr.bf16.mxu0 0
  %473 = vmatpush1.bf16.msra.mxu0 %v427
  %474 = vmatprep.subr.bf16.mxu0 0
  %475 = vmatpush1.bf16.msra.mxu0 %v428
  %476 = vmatprep.subr.bf16.mxu0 0
  %477 = vmatpush1.bf16.msra.mxu0 %v429
  %478 = vmatprep.mubr.bf16.mxu0 %v251
  %479 = vmatmul.mubr.bf16.gmra.mrb[0].mxu0 %v250
  %v480 = vpop.f32.mrb[0].mxu0
  %v481 = vadd.f32 %v101, %v480
  %v482 = vpop.f32.mrb[0].mxu0
  %v483 = vpop.f32.mrb[0].mxu0
  %v484 = vadd.f32 %v101, %v483
  %v485 = vpop.f32.mrb[0].mxu0
  %486 = vmatprep.mubr.bf16.mxu0 %v253
  %487 = vmatmul.mubr.bf16.gmra.mrb[0].mxu0 %v252
  %v488 = vpop.f32.mrb[0].mxu0
  %v489 = vadd.f32 %v101, %v488
  %v490 = vpop.f32.mrb[0].mxu0
  %v491 = vpop.f32.mrb[0].mxu0
  %v492 = vadd.f32 %v101, %v491
  %v493 = vpop.f32.mrb[0].mxu0
  %494 = vmatprep.mubr.bf16.mxu0 %v255
  %495 = vmatmul.mubr.bf16.gmra.mrb[0].mxu0 %v254
  %v496 = vpop.f32.mrb[0].mxu0
  %v497 = vadd.f32 %v101, %v496
  %v498 = vpop.f32.mrb[0].mxu0
  %v499 = vpop.f32.mrb[0].mxu0
  %v500 = vadd.f32 %v101, %v499
  %v501 = vpop.f32.mrb[0].mxu0
  %502 = vmatprep.mubr.bf16.mxu0 %v257
  %503 = vmatmul.mubr.bf16.gmra.mrb[0].mxu0 %v256
  %v504 = vpop.f32.mrb[0].mxu0
  %v505 = vadd.f32 %v101, %v504
  %v506 = vpop.f32.mrb[0].mxu0
  %v507 = vpop.f32.mrb[0].mxu0
  %v508 = vadd.f32 %v101, %v507
  %v509 = vpop.f32.mrb[0].mxu0
  %510 = vmatprep.mubr.bf16.mxu0 %v259
  %511 = vmatmul.mubr.bf16.gmra.mrb[0].mxu0 %v258
  %v512 = vpop.f32.mrb[0].mxu0
  %v513 = vadd.f32 %v101, %v512
  %v514 = vpop.f32.mrb[0].mxu0
  %v515 = vpop.f32.mrb[0].mxu0
  %v516 = vadd.f32 %v101, %v515
  %v517 = vpop.f32.mrb[0].mxu0
  %518 = vmatprep.mubr.bf16.mxu0 %v261
  %519 = vmatmul.mubr.bf16.gmra.mrb[0].mxu0 %v260
  %v520 = vpop.f32.mrb[0].mxu0
  %v521 = vadd.f32 %v101, %v520
  %v522 = vpop.f32.mrb[0].mxu0
  %v523 = vpop.f32.mrb[0].mxu0
  %v524 = vadd.f32 %v101, %v523
  %v525 = vpop.f32.mrb[0].mxu0
  %526 = vmatprep.mubr.bf16.mxu0 %v263
  %527 = vmatmul.mubr.bf16.gmra.mrb[0].mxu0 %v262
  %v528 = vpop.f32.mrb[0].mxu0
  %v529 = vadd.f32 %v101, %v528
  %v530 = vpop.f32.mrb[0].mxu0
  %v531 = vpop.f32.mrb[0].mxu0
  %v532 = vadd.f32 %v101, %v531
  %v533 = vpop.f32.mrb[0].mxu0
  %534 = vmatprep.mubr.bf16.mxu0 %v265
  %535 = vmatmul.mubr.bf16.gmra.mrb[0].mxu0 %v264
  %v536 = vpop.f32.mrb[0].mxu0
  %v537 = vadd.f32 %v101, %v536
  %v538 = vpop.f32.mrb[0].mxu0
  %v539 = vpop.f32.mrb[0].mxu0
  %v540 = vadd.f32 %v101, %v539
  %v541 = vpop.f32.mrb[0].mxu0
  %542 = vmatprep.mubr.bf16.mxu0 %v267
  %543 = vmatmul.mubr.bf16.gmra.mrb[0].mxu0 %v266
  %v544 = vpop.f32.mrb[0].mxu0
  %v545 = vadd.f32 %v101, %v544
  %v546 = vpop.f32.mrb[0].mxu0
  %v547 = vpop.f32.mrb[0].mxu0
  %v548 = vadd.f32 %v101, %v547
  %v549 = vpop.f32.mrb[0].mxu0
  %550 = vmatprep.mubr.bf16.mxu0 %v269
  %551 = vmatmul.mubr.bf16.gmra.mrb[0].mxu0 %v268
  %v552 = vpop.f32.mrb[0].mxu0
  %v553 = vadd.f32 %v101, %v552
  %v554 = vpop.f32.mrb[0].mxu0
  %v555 = vpop.f32.mrb[0].mxu0
  %v556 = vadd.f32 %v101, %v555
  %v557 = vpop.f32.mrb[0].mxu0
  %558 = vmatprep.mubr.bf16.mxu0 %v271
  %559 = vmatmul.mubr.bf16.gmra.mrb[0].mxu0 %v270
  %v560 = vpop.f32.mrb[0].mxu0
  %v561 = vadd.f32 %v101, %v560
  %v562 = vpop.f32.mrb[0].mxu0
  %v563 = vpop.f32.mrb[0].mxu0
  %v564 = vadd.f32 %v101, %v563
  %v565 = vpop.f32.mrb[0].mxu0
  %566 = vmatprep.mubr.bf16.mxu0 %v273
  %567 = vmatmul.mubr.bf16.gmra.mrb[0].mxu0 %v272
  %v568 = vpop.f32.mrb[0].mxu0
  %v569 = vadd.f32 %v101, %v568
  %v570 = vpop.f32.mrb[0].mxu0
  %v571 = vpop.f32.mrb[0].mxu0
  %v572 = vadd.f32 %v101, %v571
  %v573 = vpop.f32.mrb[0].mxu0
  %574 = vmatprep.mubr.bf16.mxu0 %v275
  %575 = vmatmul.mubr.bf16.gmra.mrb[0].mxu0 %v274
  %v576 = vpop.f32.mrb[0].mxu0
  %v577 = vadd.f32 %v101, %v576
  %v578 = vpop.f32.mrb[0].mxu0
  %v579 = vpop.f32.mrb[0].mxu0
  %v580 = vadd.f32 %v101, %v579
  %v581 = vpop.f32.mrb[0].mxu0
  %582 = vmatprep.mubr.bf16.mxu0 %v277
  %583 = vmatmul.mubr.bf16.gmra.mrb[0].mxu0 %v276
  %v584 = vpop.f32.mrb[0].mxu0
  %v585 = vadd.f32 %v101, %v584
  %v586 = vpop.f32.mrb[0].mxu0
  %v587 = vpop.f32.mrb[0].mxu0
  %v588 = vadd.f32 %v101, %v587
  %v589 = vpop.f32.mrb[0].mxu0
  %590 = vmatprep.mubr.bf16.mxu0 %v279
  %591 = vmatmul.mubr.bf16.gmra.mrb[0].mxu0 %v278
  %v592 = vpop.f32.mrb[0].mxu0
  %v593 = vadd.f32 %v101, %v592
  %v594 = vpop.f32.mrb[0].mxu0
  %v595 = vpop.f32.mrb[0].mxu0
  %v596 = vadd.f32 %v101, %v595
  %v597 = vpop.f32.mrb[0].mxu0
  %598 = vmatprep.mubr.bf16.mxu0 %v281
  %599 = vmatmul.mubr.bf16.gmra.mrb[0].mxu0 %v280
  %v600 = vpop.f32.mrb[0].mxu0
  %v601 = vadd.f32 %v101, %v600
  %v602 = vpop.f32.mrb[0].mxu0
  %v603 = vpop.f32.mrb[0].mxu0
  %v604 = vadd.f32 %v101, %v603
  %v605 = vpop.f32.mrb[0].mxu0
  %606 = vmatprep.mubr.bf16.mxu0 %v283
  %607 = vmatmul.mubr.bf16.gmra.mrb[0].mxu0 %v282
  %v608 = vpop.f32.mrb[0].mxu0
  %v609 = vadd.f32 %v101, %v608
  %v610 = vpop.f32.mrb[0].mxu0
  %v611 = vpop.f32.mrb[0].mxu0
  %v612 = vadd.f32 %v101, %v611
  %v613 = vpop.f32.mrb[0].mxu0
  %614 = vmatprep.mubr.bf16.mxu0 %v285
  %615 = vmatmul.mubr.bf16.gmra.mrb[0].mxu0 %v284
  %v616 = vpop.f32.mrb[0].mxu0
  %v617 = vadd.f32 %v101, %v616
  %v618 = vpop.f32.mrb[0].mxu0
  %v619 = vpop.f32.mrb[0].mxu0
  %v620 = vadd.f32 %v101, %v619
  %v621 = vpop.f32.mrb[0].mxu0
  %622 = vmatprep.mubr.bf16.mxu0 %v287
  %623 = vmatmul.mubr.bf16.gmra.mrb[0].mxu0 %v286
  %v624 = vpop.f32.mrb[0].mxu0
  %v625 = vadd.f32 %v101, %v624
  %v626 = vpop.f32.mrb[0].mxu0
  %v627 = vpop.f32.mrb[0].mxu0
  %v628 = vadd.f32 %v101, %v627
  %v629 = vpop.f32.mrb[0].mxu0
  %630 = vmatprep.mubr.bf16.mxu0 %v289
  %631 = vmatmul.mubr.bf16.gmra.mrb[0].mxu0 %v288
  %v632 = vpop.f32.mrb[0].mxu0
  %v633 = vadd.f32 %v101, %v632
  %v634 = vpop.f32.mrb[0].mxu0
  %v635 = vpop.f32.mrb[0].mxu0
  %v636 = vadd.f32 %v101, %v635
  %v637 = vpop.f32.mrb[0].mxu0
  %638 = vmatprep.mubr.bf16.mxu0 %v291
  %639 = vmatmul.mubr.bf16.gmra.mrb[0].mxu0 %v290
  %v640 = vpop.f32.mrb[0].mxu0
  %v641 = vadd.f32 %v101, %v640
  %v642 = vpop.f32.mrb[0].mxu0
  %v643 = vpop.f32.mrb[0].mxu0
  %v644 = vadd.f32 %v101, %v643
  %v645 = vpop.f32.mrb[0].mxu0
  %646 = vmatprep.mubr.bf16.mxu0 %v293
  %647 = vmatmul.mubr.bf16.gmra.mrb[0].mxu0 %v292
  %v648 = vpop.f32.mrb[0].mxu0
  %v649 = vadd.f32 %v101, %v648
  %v650 = vpop.f32.mrb[0].mxu0
  %v651 = vpop.f32.mrb[0].mxu0
  %v652 = vadd.f32 %v101, %v651
  %v653 = vpop.f32.mrb[0].mxu0
  %654 = vmatprep.mubr.bf16.mxu0 %v295
  %655 = vmatmul.mubr.bf16.gmra.mrb[0].mxu0 %v294
  %v656 = vpop.f32.mrb[0].mxu0
  %v657 = vadd.f32 %v101, %v656
  %v658 = vpop.f32.mrb[0].mxu0
  %v659 = vpop.f32.mrb[0].mxu0
  %v660 = vadd.f32 %v101, %v659
  %v661 = vpop.f32.mrb[0].mxu0
  %662 = vmatprep.mubr.bf16.mxu0 %v297
  %663 = vmatmul.mubr.bf16.gmra.mrb[0].mxu0 %v296
  %v664 = vpop.f32.mrb[0].mxu0
  %v665 = vadd.f32 %v101, %v664
  %v666 = vpop.f32.mrb[0].mxu0
  %v667 = vpop.f32.mrb[0].mxu0
  %v668 = vadd.f32 %v101, %v667
  %v669 = vpop.f32.mrb[0].mxu0
  %670 = vmatprep.mubr.bf16.mxu0 %v299
  %671 = vmatmul.mubr.bf16.gmra.mrb[0].mxu0 %v298
  %v672 = vpop.f32.mrb[0].mxu0
  %v673 = vadd.f32 %v101, %v672
  %v674 = vpop.f32.mrb[0].mxu0
  %v675 = vpop.f32.mrb[0].mxu0
  %v676 = vpop.f32.mrb[0].mxu0
  %677 = vdwg.mxu0
  %v678 = vmax.f32 %v481, 0.0
  %v679 = vmax.f32 %v484, 0.0
  %v680 = vmax.f32 %v489, 0.0
  %v681 = vmax.f32 %v492, 0.0
  %v682 = vmax.f32 %v497, 0.0
  %v683 = vmax.f32 %v500, 0.0
  %v684 = vmax.f32 %v505, 0.0
  %v685 = vmax.f32 %v508, 0.0
  %v686 = vmax.f32 %v513, 0.0
  %v687 = vmax.f32 %v516, 0.0
  %v688 = vmax.f32 %v521, 0.0
  %v689 = vmax.f32 %v524, 0.0
  %v690 = vmax.f32 %v529, 0.0
  %v691 = vmax.f32 %v532, 0.0
  %v692 = vmax.f32 %v537, 0.0
  %v693 = vmax.f32 %v540, 0.0
  %v694 = vmax.f32 %v545, 0.0
  %v695 = vmax.f32 %v548, 0.0
  %v696 = vmax.f32 %v553, 0.0
  %v697 = vmax.f32 %v556, 0.0
  %v698 = vmax.f32 %v561, 0.0
  %v699 = vmax.f32 %v564, 0.0
  %v700 = vmax.f32 %v569, 0.0
  %v701 = vmax.f32 %v572, 0.0
  %v702 = vmax.f32 %v577, 0.0
  %v703 = vmax.f32 %v580, 0.0
  %v704 = vmax.f32 %v585, 0.0
  %v705 = vmax.f32 %v588, 0.0
  %v706 = vmax.f32 %v593, 0.0
  %v707 = vmax.f32 %v596, 0.0
  %v708 = vmax.f32 %v601, 0.0
  %v709 = vmax.f32 %v604, 0.0
  %v710 = vmax.f32 %v609, 0.0
  %v711 = vmax.f32 %v612, 0.0
  %v712 = vmax.f32 %v617, 0.0
  %v713 = vmax.f32 %v620, 0.0
  %v714 = vmax.f32 %v625, 0.0
  %v715 = vmax.f32 %v628, 0.0
  %v716 = vmax.f32 %v633, 0.0
  %v717 = vmax.f32 %v636, 0.0
  %v718 = vmax.f32 %v641, 0.0
  %v719 = vmax.f32 %v644, 0.0
  %v720 = vmax.f32 %v649, 0.0
  %v721 = vmax.f32 %v652, 0.0
  %v722 = vmax.f32 %v657, 0.0
  %v723 = vmax.f32 %v660, 0.0
  %v724 = vmax.f32 %v665, 0.0
  %v725 = vmax.f32 %v668, 0.0
  %v726 = vmax.f32 %v673, 0.0
  %v727 = vpack.c.bf16 %v679, %v678
  %v728 = vpack.c.bf16 %v681, %v680
  %v729 = vpack.c.bf16 %v683, %v682
  %v730 = vpack.c.bf16 %v685, %v684
  %v731 = vpack.c.bf16 %v687, %v686
  %v732 = vpack.c.bf16 %v689, %v688
  %v733 = vpack.c.bf16 %v691, %v690
  %v734 = vpack.c.bf16 %v693, %v692
  %v735 = vpack.c.bf16 %v695, %v694
  %v736 = vpack.c.bf16 %v697, %v696
  %v737 = vpack.c.bf16 %v699, %v698
  %v738 = vpack.c.bf16 %v701, %v700
  %v739 = vpack.c.bf16 %v703, %v702
  %v740 = vpack.c.bf16 %v705, %v704
  %v741 = vpack.c.bf16 %v707, %v706
  %v742 = vpack.c.bf16 %v709, %v708
  %v743 = vpack.c.bf16 %v711, %v710
  %v744 = vpack.c.bf16 %v713, %v712
  %v745 = vpack.c.bf16 %v715, %v714
  %v746 = vpack.c.bf16 %v717, %v716
  %v747 = vpack.c.bf16 %v719, %v718
  %v748 = vpack.c.bf16 %v721, %v720
  %v749 = vpack.c.bf16 %v723, %v722
  %v750 = vpack.c.bf16 %v725, %v724
  %v751 = vpack.c.bf16 %v726, %v726
  %v777 = vunpack.c.l.b16 %v727
  %v778 = vunpack.c.h.b16 %v727
  %v779 = vunpack.c.l.b16 %v728
  %v780 = vunpack.c.h.b16 %v728
  %v781 = vunpack.c.l.b16 %v729
  %v782 = vunpack.c.h.b16 %v729
  %v783 = vunpack.c.l.b16 %v730
  %v784 = vunpack.c.h.b16 %v730
  %v785 = vunpack.c.l.b16 %v731
  %v786 = vunpack.c.h.b16 %v731
  %v787 = vunpack.c.l.b16 %v732
  %v788 = vunpack.c.h.b16 %v732
  %v789 = vunpack.c.l.b16 %v733
  %v790 = vunpack.c.h.b16 %v733
  %v791 = vunpack.c.l.b16 %v734
  %v792 = vunpack.c.h.b16 %v734
  %v793 = vunpack.c.l.b16 %v735
  %v794 = vunpack.c.h.b16 %v735
  %v795 = vunpack.c.l.b16 %v736
  %v796 = vunpack.c.h.b16 %v736
  %v797 = vunpack.c.l.b16 %v737
  %v798 = vunpack.c.h.b16 %v737
  %v799 = vunpack.c.l.b16 %v738
  %v800 = vunpack.c.h.b16 %v738
  %v801 = vunpack.c.l.b16 %v739
  %v802 = vunpack.c.h.b16 %v739
  %v803 = vunpack.c.l.b16 %v740
  %v804 = vunpack.c.h.b16 %v740
  %v805 = vunpack.c.l.b16 %v741
  %v806 = vunpack.c.h.b16 %v741
  %v807 = vunpack.c.l.b16 %v742
  %v808 = vunpack.c.h.b16 %v742
  %v809 = vunpack.c.l.b16 %v743
  %v810 = vunpack.c.h.b16 %v743
  %v811 = vunpack.c.l.b16 %v744
  %v812 = vunpack.c.h.b16 %v744
  %v813 = vunpack.c.l.b16 %v745
  %v814 = vunpack.c.h.b16 %v745
  %v815 = vunpack.c.l.b16 %v746
  %v816 = vunpack.c.h.b16 %v746
  %v817 = vunpack.c.l.b16 %v747
  %v818 = vunpack.c.h.b16 %v747
  %v819 = vunpack.c.l.b16 %v748
  %v820 = vunpack.c.h.b16 %v748
  %v821 = vunpack.c.l.b16 %v749
  %v822 = vunpack.c.h.b16 %v749
  %v823 = vunpack.c.l.b16 %v750
  %v824 = vunpack.c.h.b16 %v750
  %v825 = vunpack.c.l.b16 %v751
  %v826 = vpack.c.b16 %v777, %v777
  %v827 = vpack.c.b16 %v778, %v778
  %v828 = vpack.c.b16 %v779, %v779
  %v829 = vpack.c.b16 %v780, %v780
  %v830 = vpack.c.b16 %v781, %v781
  %v831 = vpack.c.b16 %v782, %v782
  %v832 = vpack.c.b16 %v783, %v783
  %v833 = vpack.c.b16 %v784, %v784
  %v834 = vpack.c.b16 %v785, %v785
  %v835 = vpack.c.b16 %v786, %v786
  %v836 = vpack.c.b16 %v787, %v787
  %v837 = vpack.c.b16 %v788, %v788
  %v838 = vpack.c.b16 %v789, %v789
  %v839 = vpack.c.b16 %v790, %v790
  %v840 = vpack.c.b16 %v791, %v791
  %v841 = vpack.c.b16 %v792, %v792
  %v842 = vpack.c.b16 %v793, %v793
  %v843 = vpack.c.b16 %v794, %v794
  %v844 = vpack.c.b16 %v795, %v795
  %v845 = vpack.c.b16 %v796, %v796
  %v846 = vpack.c.b16 %v797, %v797
  %v847 = vpack.c.b16 %v798, %v798
  %v848 = vpack.c.b16 %v799, %v799
  %v849 = vpack.c.b16 %v800, %v800
  %v850 = vpack.c.b16 %v801, %v801
  %v851 = vpack.c.b16 %v802, %v802
  %v852 = vpack.c.b16 %v803, %v803
  %v853 = vpack.c.b16 %v804, %v804
  %v854 = vpack.c.b16 %v805, %v805
  %v855 = vpack.c.b16 %v806, %v806
  %v856 = vpack.c.b16 %v807, %v807
  %v857 = vpack.c.b16 %v808, %v808
  %v858 = vpack.c.b16 %v809, %v809
  %v859 = vpack.c.b16 %v810, %v810
  %v860 = vpack.c.b16 %v811, %v811
  %v861 = vpack.c.b16 %v812, %v812
  %v862 = vpack.c.b16 %v813, %v813
  %v863 = vpack.c.b16 %v814, %v814
  %v864 = vpack.c.b16 %v815, %v815
  %v865 = vpack.c.b16 %v816, %v816
  %v866 = vpack.c.b16 %v817, %v817
  %v867 = vpack.c.b16 %v818, %v818
  %v868 = vpack.c.b16 %v819, %v819
  %v869 = vpack.c.b16 %v820, %v820
  %v870 = vpack.c.b16 %v821, %v821
  %v871 = vpack.c.b16 %v822, %v822
  %v872 = vpack.c.b16 %v823, %v823
  %v873 = vpack.c.b16 %v824, %v824
  %v874 = vpack.c.b16 %v825, %v825
  %924 = vst [vmem:[%s3] sm:$0xf] %v826
  %925 = vst [vmem:[%s3 + $0x4] sm:$0xf] %v827
  %926 = vst [vmem:[%s3 + $0x8] sm:$0xf] %v828
  %927 = vst [vmem:[%s3 + $0xc] sm:$0xf] %v829
  %928 = vst [vmem:[%s3 + $0x10] sm:$0xf] %v830
  %929 = vst [vmem:[%s3 + $0x14] sm:$0xf] %v831
  %930 = vst [vmem:[%s3 + $0x18] sm:$0xf] %v832
  %931 = vst [vmem:[%s3 + $0x1c] sm:$0xf] %v833
  %932 = vst [vmem:[%s3 + $0x20] sm:$0xf] %v834
  %933 = vst [vmem:[%s3 + $0x24] sm:$0xf] %v835
  %934 = vst [vmem:[%s3 + $0x28] sm:$0xf] %v836
  %935 = vst [vmem:[%s3 + $0x2c] sm:$0xf] %v837
  %936 = vst [vmem:[%s3 + $0x30] sm:$0xf] %v838
  %937 = vst [vmem:[%s3 + $0x34] sm:$0xf] %v839
  %938 = vst [vmem:[%s3 + $0x38] sm:$0xf] %v840
  %939 = vst [vmem:[%s3 + $0x3c] sm:$0xf] %v841
  %940 = vst [vmem:[%s3 + $0x40] sm:$0xf] %v842
  %941 = vst [vmem:[%s3 + $0x44] sm:$0xf] %v843
  %942 = vst [vmem:[%s3 + $0x48] sm:$0xf] %v844
  %943 = vst [vmem:[%s3 + $0x4c] sm:$0xf] %v845
  %944 = vst [vmem:[%s3 + $0x50] sm:$0xf] %v846
  %945 = vst [vmem:[%s3 + $0x54] sm:$0xf] %v847
  %946 = vst [vmem:[%s3 + $0x58] sm:$0xf] %v848
  %947 = vst [vmem:[%s3 + $0x5c] sm:$0xf] %v849
  %948 = vst [vmem:[%s3 + $0x60] sm:$0xf] %v850
  %949 = vst [vmem:[%s3 + $0x64] sm:$0xf] %v851
  %950 = vst [vmem:[%s3 + $0x68] sm:$0xf] %v852
  %951 = vst [vmem:[%s3 + $0x6c] sm:$0xf] %v853
  %952 = vst [vmem:[%s3 + $0x70] sm:$0xf] %v854
  %953 = vst [vmem:[%s3 + $0x74] sm:$0xf] %v855
  %954 = vst [vmem:[%s3 + $0x78] sm:$0xf] %v856
  %955 = vst [vmem:[%s3 + $0x7c] sm:$0xf] %v857
  %956 = vst [vmem:[%s3 + $0x80] sm:$0xf] %v858
  %957 = vst [vmem:[%s3 + $0x84] sm:$0xf] %v859
  %958 = vst [vmem:[%s3 + $0x88] sm:$0xf] %v860
  %959 = vst [vmem:[%s3 + $0x8c] sm:$0xf] %v861
  %960 = vst [vmem:[%s3 + $0x90] sm:$0xf] %v862
  %961 = vst [vmem:[%s3 + $0x94] sm:$0xf] %v863
  %962 = vst [vmem:[%s3 + $0x98] sm:$0xf] %v864
  %963 = vst [vmem:[%s3 + $0x9c] sm:$0xf] %v865
  %964 = vst [vmem:[%s3 + $0xa0] sm:$0xf] %v866
  %965 = vst [vmem:[%s3 + $0xa4] sm:$0xf] %v867
  %966 = vst [vmem:[%s3 + $0xa8] sm:$0xf] %v868
  %967 = vst [vmem:[%s3 + $0xac] sm:$0xf] %v869
  %968 = vst [vmem:[%s3 + $0xb0] sm:$0xf] %v870
  %969 = vst [vmem:[%s3 + $0xb4] sm:$0xf] %v871
  %970 = vst [vmem:[%s3 + $0xb8] sm:$0xf] %v872
  %971 = vst [vmem:[%s3 + $0xbc] sm:$0xf] %v873
  %972 = vst [vmem:[%s3 + $0xc0] sm:$0xf] %v874
  // Predicated region
  $region14: #{dmlab_pg_lstm_forward.7} parent=0 // pred_check
    _
  $region15: #{dmlab_pg_lstm_forward.7} parent=0 // pred_check_branch
    %974 = sbr.rel (0) target = $region17
  $region16: #{dmlab_pg_lstm_forward.7} parent=0 // pred_region
    _
  $region17: #{dmlab_pg_lstm_forward.7} parent=0 // pred_fallthru
    _
  // Predicated region
  $region18: #{dmlab_pg_lstm_forward.7} parent=0 // pred_check
    _
  $region19: #{dmlab_pg_lstm_forward.7} parent=0 // pred_check_branch
    %976 = sbr.rel (0) target = $region21
  $region20: #{dmlab_pg_lstm_forward.7} parent=0 // pred_region
    _
  $region21: #{dmlab_pg_lstm_forward.7} parent=0 // pred_fallthru
    _

// kernel: dmlab_pg_lstm_forward.8
$region0: #{dmlab_pg_lstm_forward.8}
  #allocation0 [shape = 'u32[]', space=smem, size = 0x4, offset = 0x4, fixed_abs, tag = 'smem constant byte address 0x4 - core index']
  #allocation1 [shape = 'u32[144,128]{1,0:T(1,128)}', space=vmem, size = 0x12000, scoped, tag = 'internal scratch']
  %s0 = inlined_call_operand.vmem [shape: bf16[32,512], index: 0, kind: input, shape index: {}]
  %s1 = inlined_call_operand.vmem [shape: bf16[512,128], index: 1, kind: input, shape index: {}]
  %s2 = inlined_call_operand.vmem [shape: f32[1,128], index: 2, kind: input, shape index: {}]
  %s3 = inlined_call_operand.vmem [shape: bf16[32,128], index: 3, kind: output, shape index: {}]
  %s4 = sld [smem:[#allocation0]]
  $region22: #{dmlab_pg_lstm_forward.8} parent=0
    _
  %s6 = ssub.s32 1, %s4
  %s7 = scalar_select 0, %s6, %s4
  // Predicated region
  $region2: #{dmlab_pg_lstm_forward.8} parent=0 // pred_check
    _
  $region3: #{dmlab_pg_lstm_forward.8} parent=0 // pred_check_branch
    %9 = sbr.rel (0) target = $region5
  $region4: #{dmlab_pg_lstm_forward.8} parent=0 // pred_region
    _
  $region5: #{dmlab_pg_lstm_forward.8} parent=0 // pred_fallthru
    _
  // Predicated region
  $region6: #{dmlab_pg_lstm_forward.8} parent=0 // pred_check
    _
  $region7: #{dmlab_pg_lstm_forward.8} parent=0 // pred_check_branch
    %11 = sbr.rel (0) target = $region9
  $region8: #{dmlab_pg_lstm_forward.8} parent=0 // pred_region
    _
  $region9: #{dmlab_pg_lstm_forward.8} parent=0 // pred_fallthru
    _
  // Predicated region
  $region10: #{dmlab_pg_lstm_forward.8} parent=0 // pred_check
    _
  $region11: #{dmlab_pg_lstm_forward.8} parent=0 // pred_check_branch
    %13 = sbr.rel (0) target = $region13
  $region12: #{dmlab_pg_lstm_forward.8} parent=0 // pred_region
    _
  $region13: #{dmlab_pg_lstm_forward.8} parent=0 // pred_fallthru
    _
  %v15 = vld [vmem:[%s0] sm:$0xff]
  %v16 = vld [vmem:[%s0 + $0x8] sm:$0xff]
  %v17 = vld [vmem:[%s0 + $0x10] sm:$0xff]
  %v18 = vld [vmem:[%s0 + $0x18] sm:$0xff]
  %v19 = vld [vmem:[%s0 + $0x20] sm:$0xff]
  %v20 = vld [vmem:[%s0 + $0x28] sm:$0xff]
  %v21 = vld [vmem:[%s0 + $0x30] sm:$0xff]
  %v22 = vld [vmem:[%s0 + $0x38] sm:$0xff]
  %v23 = vld [vmem:[%s1] sm:$0xf]
  %v24 = vld [vmem:[%s1 + $0x4] sm:$0xf]
  %v25 = vld [vmem:[%s1 + $0x8] sm:$0xf]
  %v26 = vld [vmem:[%s1 + $0xc] sm:$0xf]
  %v27 = vld [vmem:[%s1 + $0x10] sm:$0xf]
  %v28 = vld [vmem:[%s1 + $0x14] sm:$0xf]
  %v29 = vld [vmem:[%s1 + $0x18] sm:$0xf]
  %v30 = vld [vmem:[%s1 + $0x1c] sm:$0xf]
  %v31 = vld [vmem:[%s1 + $0x20] sm:$0xf]
  %v32 = vld [vmem:[%s1 + $0x24] sm:$0xf]
  %v33 = vld [vmem:[%s1 + $0x28] sm:$0xf]
  %v34 = vld [vmem:[%s1 + $0x2c] sm:$0xf]
  %v35 = vld [vmem:[%s1 + $0x30] sm:$0xf]
  %v36 = vld [vmem:[%s1 + $0x34] sm:$0xf]
  %v37 = vld [vmem:[%s1 + $0x38] sm:$0xf]
  %v38 = vld [vmem:[%s1 + $0x3c] sm:$0xf]
  %v39 = vld [vmem:[%s1 + $0x40] sm:$0xf]
  %v40 = vld [vmem:[%s1 + $0x44] sm:$0xf]
  %v41 = vld [vmem:[%s1 + $0x48] sm:$0xf]
  %v42 = vld [vmem:[%s1 + $0x4c] sm:$0xf]
  %v43 = vld [vmem:[%s1 + $0x50] sm:$0xf]
  %v44 = vld [vmem:[%s1 + $0x54] sm:$0xf]
  %v45 = vld [vmem:[%s1 + $0x58] sm:$0xf]
  %v46 = vld [vmem:[%s1 + $0x5c] sm:$0xf]
  %v47 = vld [vmem:[%s1 + $0x60] sm:$0xf]
  %v48 = vld [vmem:[%s1 + $0x64] sm:$0xf]
  %v49 = vld [vmem:[%s1 + $0x68] sm:$0xf]
  %v50 = vld [vmem:[%s1 + $0x6c] sm:$0xf]
  %v51 = vld [vmem:[%s1 + $0x70] sm:$0xf]
  %v52 = vld [vmem:[%s1 + $0x74] sm:$0xf]
  %v53 = vld [vmem:[%s1 + $0x78] sm:$0xf]
  %v54 = vld [vmem:[%s1 + $0x7c] sm:$0xf]
  %v55 = vld [vmem:[%s1 + $0x80] sm:$0xf]
  %v56 = vld [vmem:[%s1 + $0x84] sm:$0xf]
  %v57 = vld [vmem:[%s1 + $0x88] sm:$0xf]
  %v58 = vld [vmem:[%s1 + $0x8c] sm:$0xf]
  %v59 = vld [vmem:[%s1 + $0x90] sm:$0xf]
  %v60 = vld [vmem:[%s1 + $0x94] sm:$0xf]
  %v61 = vld [vmem:[%s1 + $0x98] sm:$0xf]
  %v62 = vld [vmem:[%s1 + $0x9c] sm:$0xf]
  %v63 = vld [vmem:[%s1 + $0xa0] sm:$0xf]
  %v64 = vld [vmem:[%s1 + $0xa4] sm:$0xf]
  %v65 = vld [vmem:[%s1 + $0xa8] sm:$0xf]
  %v66 = vld [vmem:[%s1 + $0xac] sm:$0xf]
  %v67 = vld [vmem:[%s1 + $0xb0] sm:$0xf]
  %v68 = vld [vmem:[%s1 + $0xb4] sm:$0xf]
  %v69 = vld [vmem:[%s1 + $0xb8] sm:$0xf]
  %v70 = vld [vmem:[%s1 + $0xbc] sm:$0xf]
  %v71 = vld [vmem:[%s1 + $0xc0] sm:$0xf]
  %v72 = vld [vmem:[%s1 + $0xc4] sm:$0xf]
  %v73 = vld [vmem:[%s1 + $0xc8] sm:$0xf]
  %v74 = vld [vmem:[%s1 + $0xcc] sm:$0xf]
  %v75 = vld [vmem:[%s1 + $0xd0] sm:$0xf]
  %v76 = vld [vmem:[%s1 + $0xd4] sm:$0xf]
  %v77 = vld [vmem:[%s1 + $0xd8] sm:$0xf]
  %v78 = vld [vmem:[%s1 + $0xdc] sm:$0xf]
  %v79 = vld [vmem:[%s1 + $0xe0] sm:$0xf]
  %v80 = vld [vmem:[%s1 + $0xe4] sm:$0xf]
  %v81 = vld [vmem:[%s1 + $0xe8] sm:$0xf]
  %v82 = vld [vmem:[%s1 + $0xec] sm:$0xf]
  %v83 = vld [vmem:[%s1 + $0xf0] sm:$0xf]
  %v84 = vld [vmem:[%s1 + $0xf4] sm:$0xf]
  %v85 = vld [vmem:[%s1 + $0xf8] sm:$0xf]
  %v86 = vld [vmem:[%s1 + $0xfc] sm:$0xf]
  %v87 = vld [vmem:[%s2] sm:$0x1]
  %v89 = vlaneseq
  %v90 = vshrl.u32 %v89, 7
  %v91 = vsub.s32 0, %v90
  %v92 = vrot.slane %v87, %v91
  %v102 = vunpack.c.l.b16 %v15
  %v103 = vunpack.c.h.b16 %v15
  %v104 = vunpack.c.l.b16 %v16
  %v105 = vunpack.c.h.b16 %v16
  %v106 = vunpack.c.l.b16 %v17
  %v107 = vunpack.c.h.b16 %v17
  %v108 = vunpack.c.l.b16 %v18
  %v109 = vunpack.c.h.b16 %v18
  %v110 = vunpack.c.l.b16 %v19
  %v111 = vunpack.c.h.b16 %v19
  %v112 = vunpack.c.l.b16 %v20
  %v113 = vunpack.c.h.b16 %v20
  %v114 = vunpack.c.l.b16 %v21
  %v115 = vunpack.c.h.b16 %v21
  %v116 = vunpack.c.l.b16 %v22
  %v117 = vunpack.c.h.b16 %v22
  %v118 = vpack.c.b16 %v106, %v102
  %v119 = vpack.c.b16 %v107, %v103
  %v120 = vpack.c.b16 %v108, %v104
  %v121 = vpack.c.b16 %v109, %v105
  %v122 = vpack.c.b16 %v114, %v110
  %v123 = vpack.c.b16 %v115, %v111
  %v124 = vpack.c.b16 %v116, %v112
  %v125 = vpack.c.b16 %v117, %v113
  %v198 = vunpack.c.l.b16 %v23
  %v199 = vunpack.c.l.b16 %v24
  %v200 = vunpack.c.l.b16 %v25
  %v201 = vunpack.c.l.b16 %v26
  %v202 = vunpack.c.l.b16 %v27
  %v203 = vunpack.c.l.b16 %v28
  %v204 = vunpack.c.l.b16 %v29
  %v205 = vunpack.c.l.b16 %v30
  %v206 = vunpack.c.l.b16 %v31
  %v207 = vunpack.c.l.b16 %v32
  %v208 = vunpack.c.l.b16 %v33
  %v209 = vunpack.c.l.b16 %v34
  %v210 = vunpack.c.l.b16 %v35
  %v211 = vunpack.c.l.b16 %v36
  %v212 = vunpack.c.l.b16 %v37
  %v213 = vunpack.c.l.b16 %v38
  %v214 = vunpack.c.l.b16 %v39
  %v215 = vunpack.c.l.b16 %v40
  %v216 = vunpack.c.l.b16 %v41
  %v217 = vunpack.c.l.b16 %v42
  %v218 = vunpack.c.l.b16 %v43
  %v219 = vunpack.c.l.b16 %v44
  %v220 = vunpack.c.l.b16 %v45
  %v221 = vunpack.c.l.b16 %v46
  %v222 = vunpack.c.l.b16 %v47
  %v223 = vunpack.c.l.b16 %v48
  %v224 = vunpack.c.l.b16 %v49
  %v225 = vunpack.c.l.b16 %v50
  %v226 = vunpack.c.l.b16 %v51
  %v227 = vunpack.c.l.b16 %v52
  %v228 = vunpack.c.l.b16 %v53
  %v229 = vunpack.c.l.b16 %v54
  %v230 = vunpack.c.l.b16 %v55
  %v231 = vunpack.c.l.b16 %v56
  %v232 = vunpack.c.l.b16 %v57
  %v233 = vunpack.c.l.b16 %v58
  %v234 = vunpack.c.l.b16 %v59
  %v235 = vunpack.c.l.b16 %v60
  %v236 = vunpack.c.l.b16 %v61
  %v237 = vunpack.c.l.b16 %v62
  %v238 = vunpack.c.l.b16 %v63
  %v239 = vunpack.c.l.b16 %v64
  %v240 = vunpack.c.l.b16 %v65
  %v241 = vunpack.c.l.b16 %v66
  %v242 = vunpack.c.l.b16 %v67
  %v243 = vunpack.c.l.b16 %v68
  %v244 = vunpack.c.l.b16 %v69
  %v245 = vunpack.c.l.b16 %v70
  %v246 = vunpack.c.l.b16 %v71
  %v247 = vunpack.c.l.b16 %v72
  %v248 = vunpack.c.l.b16 %v73
  %v249 = vunpack.c.l.b16 %v74
  %v250 = vunpack.c.l.b16 %v75
  %v251 = vunpack.c.l.b16 %v76
  %v252 = vunpack.c.l.b16 %v77
  %v253 = vunpack.c.l.b16 %v78
  %v254 = vunpack.c.l.b16 %v79
  %v255 = vunpack.c.l.b16 %v80
  %v256 = vunpack.c.l.b16 %v81
  %v257 = vunpack.c.l.b16 %v82
  %v258 = vunpack.c.l.b16 %v83
  %v259 = vunpack.c.l.b16 %v84
  %v260 = vunpack.c.l.b16 %v85
  %v261 = vunpack.c.l.b16 %v86
  %v262 = vpack.c.b16 %v199, %v198
  %v263 = vpack.c.b16 %v201, %v200
  %v264 = vpack.c.b16 %v203, %v202
  %v265 = vpack.c.b16 %v205, %v204
  %v266 = vpack.c.b16 %v207, %v206
  %v267 = vpack.c.b16 %v209, %v208
  %v268 = vpack.c.b16 %v211, %v210
  %v269 = vpack.c.b16 %v213, %v212
  %v270 = vpack.c.b16 %v215, %v214
  %v271 = vpack.c.b16 %v217, %v216
  %v272 = vpack.c.b16 %v219, %v218
  %v273 = vpack.c.b16 %v221, %v220
  %v274 = vpack.c.b16 %v223, %v222
  %v275 = vpack.c.b16 %v225, %v224
  %v276 = vpack.c.b16 %v227, %v226
  %v277 = vpack.c.b16 %v229, %v228
  %v278 = vpack.c.b16 %v231, %v230
  %v279 = vpack.c.b16 %v233, %v232
  %v280 = vpack.c.b16 %v235, %v234
  %v281 = vpack.c.b16 %v237, %v236
  %v282 = vpack.c.b16 %v239, %v238
  %v283 = vpack.c.b16 %v241, %v240
  %v284 = vpack.c.b16 %v243, %v242
  %v285 = vpack.c.b16 %v245, %v244
  %v286 = vpack.c.b16 %v247, %v246
  %v287 = vpack.c.b16 %v249, %v248
  %v288 = vpack.c.b16 %v251, %v250
  %v289 = vpack.c.b16 %v253, %v252
  %v290 = vpack.c.b16 %v255, %v254
  %v291 = vpack.c.b16 %v257, %v256
  %v292 = vpack.c.b16 %v259, %v258
  %v293 = vpack.c.b16 %v261, %v260
  %326 = vmatprep.subr.bf16.mxu0 0
  %327 = vmatpush1.bf16.msra.mxu0 %v262
  %328 = vmatprep.subr.bf16.mxu0 0
  %329 = vmatpush1.bf16.msra.mxu0 %v263
  %330 = vmatprep.subr.bf16.mxu0 0
  %331 = vmatpush1.bf16.msra.mxu0 %v264
  %332 = vmatprep.subr.bf16.mxu0 0
  %333 = vmatpush1.bf16.msra.mxu0 %v265
  %334 = vmatprep.subr.bf16.mxu0 0
  %335 = vmatpush1.bf16.msra.mxu0 %v266
  %336 = vmatprep.subr.bf16.mxu0 0
  %337 = vmatpush1.bf16.msra.mxu0 %v267
  %338 = vmatprep.subr.bf16.mxu0 0
  %339 = vmatpush1.bf16.msra.mxu0 %v268
  %340 = vmatprep.subr.bf16.mxu0 0
  %341 = vmatpush1.bf16.msra.mxu0 %v269
  %342 = vmatprep.subr.bf16.mxu0 0
  %343 = vmatpush1.bf16.msra.mxu0 %v270
  %344 = vmatprep.subr.bf16.mxu0 0
  %345 = vmatpush1.bf16.msra.mxu0 %v271
  %346 = vmatprep.subr.bf16.mxu0 0
  %347 = vmatpush1.bf16.msra.mxu0 %v272
  %348 = vmatprep.subr.bf16.mxu0 0
  %349 = vmatpush1.bf16.msra.mxu0 %v273
  %350 = vmatprep.subr.bf16.mxu0 0
  %351 = vmatpush1.bf16.msra.mxu0 %v274
  %352 = vmatprep.subr.bf16.mxu0 0
  %353 = vmatpush1.bf16.msra.mxu0 %v275
  %354 = vmatprep.subr.bf16.mxu0 0
  %355 = vmatpush1.bf16.msra.mxu0 %v276
  %356 = vmatprep.subr.bf16.mxu0 0
  %357 = vmatpush1.bf16.msra.mxu0 %v277
  %358 = vmatprep.mubr.bf16.mxu0 %v119
  %359 = vmatmul.mubr.bf16.gmra.mrb[0].mxu0 %v118
  %v360 = vpop.f32.mrb[0].mxu0
  %v361 = vadd.f32 %v92, %v360
  %v362 = vpop.f32.mrb[0].mxu0
  %v363 = vpop.f32.mrb[0].mxu0
  %v364 = vadd.f32 %v92, %v363
  %v365 = vpop.f32.mrb[0].mxu0
  %366 = vmatprep.mubr.bf16.mxu0 %v123
  %367 = vmatmul.mubr.bf16.gmra.mrb[0].mxu0 %v122
  %v368 = vpop.f32.mrb[0].mxu0
  %v369 = vadd.f32 %v92, %v368
  %v370 = vpop.f32.mrb[0].mxu0
  %v371 = vpop.f32.mrb[0].mxu0
  %v372 = vadd.f32 %v92, %v371
  %v373 = vpop.f32.mrb[0].mxu0
  %374 = vdwg.mxu0
  %375 = vmatprep.subr.bf16.mxu0 0
  %376 = vmatpush1.bf16.msra.mxu0 %v278
  %377 = vmatprep.subr.bf16.mxu0 0
  %378 = vmatpush1.bf16.msra.mxu0 %v279
  %379 = vmatprep.subr.bf16.mxu0 0
  %380 = vmatpush1.bf16.msra.mxu0 %v280
  %381 = vmatprep.subr.bf16.mxu0 0
  %382 = vmatpush1.bf16.msra.mxu0 %v281
  %383 = vmatprep.subr.bf16.mxu0 0
  %384 = vmatpush1.bf16.msra.mxu0 %v282
  %385 = vmatprep.subr.bf16.mxu0 0
  %386 = vmatpush1.bf16.msra.mxu0 %v283
  %387 = vmatprep.subr.bf16.mxu0 0
  %388 = vmatpush1.bf16.msra.mxu0 %v284
  %389 = vmatprep.subr.bf16.mxu0 0
  %390 = vmatpush1.bf16.msra.mxu0 %v285
  %391 = vmatprep.subr.bf16.mxu0 0
  %392 = vmatpush1.bf16.msra.mxu0 %v286
  %393 = vmatprep.subr.bf16.mxu0 0
  %394 = vmatpush1.bf16.msra.mxu0 %v287
  %395 = vmatprep.subr.bf16.mxu0 0
  %396 = vmatpush1.bf16.msra.mxu0 %v288
  %397 = vmatprep.subr.bf16.mxu0 0
  %398 = vmatpush1.bf16.msra.mxu0 %v289
  %399 = vmatprep.subr.bf16.mxu0 0
  %400 = vmatpush1.bf16.msra.mxu0 %v290
  %401 = vmatprep.subr.bf16.mxu0 0
  %402 = vmatpush1.bf16.msra.mxu0 %v291
  %403 = vmatprep.subr.bf16.mxu0 0
  %404 = vmatpush1.bf16.msra.mxu0 %v292
  %405 = vmatprep.subr.bf16.mxu0 0
  %406 = vmatpush1.bf16.msra.mxu0 %v293
  %407 = vmatprep.mubr.bf16.mxu0 %v121
  %408 = vmatmul.mubr.bf16.gmra.mrb[0].mxu0 %v120
  %v409 = vpop.f32.mrb[0].mxu0
  %v410 = vadd.f32 %v361, %v409
  %v411 = vpop.f32.mrb[0].mxu0
  %v412 = vpop.f32.mrb[0].mxu0
  %v413 = vadd.f32 %v364, %v412
  %v414 = vpop.f32.mrb[0].mxu0
  %415 = vmatprep.mubr.bf16.mxu0 %v125
  %416 = vmatmul.mubr.bf16.gmra.mrb[0].mxu0 %v124
  %v417 = vpop.f32.mrb[0].mxu0
  %v418 = vadd.f32 %v369, %v417
  %v419 = vpop.f32.mrb[0].mxu0
  %v420 = vpop.f32.mrb[0].mxu0
  %v421 = vadd.f32 %v372, %v420
  %v422 = vpop.f32.mrb[0].mxu0
  %423 = vdwg.mxu0
  %v424 = vmax.f32 %v410, 0.0
  %v425 = vmax.f32 %v413, 0.0
  %v426 = vmax.f32 %v418, 0.0
  %v427 = vmax.f32 %v421, 0.0
  %v428 = vpack.c.bf16 %v425, %v424
  %v429 = vpack.c.bf16 %v427, %v426
  %v432 = vunpack.c.l.b16 %v428
  %v433 = vunpack.c.h.b16 %v428
  %v434 = vunpack.c.l.b16 %v429
  %v435 = vunpack.c.h.b16 %v429
  %v436 = vpack.c.b16 %v432, %v432
  %v437 = vpack.c.b16 %v433, %v433
  %v438 = vpack.c.b16 %v434, %v434
  %v439 = vpack.c.b16 %v435, %v435
  %444 = vst [vmem:[%s3] sm:$0xf] %v436
  %445 = vst [vmem:[%s3 + $0x4] sm:$0xf] %v437
  %446 = vst [vmem:[%s3 + $0x8] sm:$0xf] %v438
  %447 = vst [vmem:[%s3 + $0xc] sm:$0xf] %v439
  // Predicated region
  $region14: #{dmlab_pg_lstm_forward.8} parent=0 // pred_check
    _
  $region15: #{dmlab_pg_lstm_forward.8} parent=0 // pred_check_branch
    %449 = sbr.rel (0) target = $region17
  $region16: #{dmlab_pg_lstm_forward.8} parent=0 // pred_region
    _
  $region17: #{dmlab_pg_lstm_forward.8} parent=0 // pred_fallthru
    _
  // Predicated region
  $region18: #{dmlab_pg_lstm_forward.8} parent=0 // pred_check
    _
  $region19: #{dmlab_pg_lstm_forward.8} parent=0 // pred_check_branch
    %451 = sbr.rel (0) target = $region21
  $region20: #{dmlab_pg_lstm_forward.8} parent=0 // pred_region
    _
  $region21: #{dmlab_pg_lstm_forward.8} parent=0 // pred_fallthru
    _

// kernel: dmlab_pg_lstm_forward.10
$region0: #{dmlab_pg_lstm_forward.10}
  #allocation0 [shape = 'u32[]', space=smem, size = 0x4, offset = 0x4, fixed_abs, tag = 'smem constant byte address 0x4 - core index']
  #allocation1 [shape = 'u32[144,128]{1,0:T(1,128)}', space=vmem, size = 0x12000, scoped, tag = 'internal scratch']
  %s0 = inlined_call_operand.vmem [shape: bf16[8,256], index: 0, kind: input, shape index: {}]
  %s1 = inlined_call_operand.vmem [shape: bf16[256,128], index: 1, kind: input, shape index: {}]
  %s2 = inlined_call_operand.vmem [shape: f32[1,128], index: 2, kind: input, shape index: {}]
  %s3 = inlined_call_operand.vmem [shape: bf16[8,128], index: 3, kind: output, shape index: {}]
  %s4 = sld [smem:[#allocation0]]
  $region22: #{dmlab_pg_lstm_forward.10} parent=0
    _
  %s6 = ssub.s32 1, %s4
  %s7 = scalar_select 0, %s6, %s4
  // Predicated region
  $region2: #{dmlab_pg_lstm_forward.10} parent=0 // pred_check
    _
  $region3: #{dmlab_pg_lstm_forward.10} parent=0 // pred_check_branch
    %9 = sbr.rel (0) target = $region5
  $region4: #{dmlab_pg_lstm_forward.10} parent=0 // pred_region
    _
  $region5: #{dmlab_pg_lstm_forward.10} parent=0 // pred_fallthru
    _
  // Predicated region
  $region6: #{dmlab_pg_lstm_forward.10} parent=0 // pred_check
    _
  $region7: #{dmlab_pg_lstm_forward.10} parent=0 // pred_check_branch
    %11 = sbr.rel (0) target = $region9
  $region8: #{dmlab_pg_lstm_forward.10} parent=0 // pred_region
    _
  $region9: #{dmlab_pg_lstm_forward.10} parent=0 // pred_fallthru
    _
  // Predicated region
  $region10: #{dmlab_pg_lstm_forward.10} parent=0 // pred_check
    _
  $region11: #{dmlab_pg_lstm_forward.10} parent=0 // pred_check_branch
    %13 = sbr.rel (0) target = $region13
  $region12: #{dmlab_pg_lstm_forward.10} parent=0 // pred_region
    _
  $region13: #{dmlab_pg_lstm_forward.10} parent=0 // pred_fallthru
    _
  %v15 = vld [vmem:[%s0] sm:$0xff]
  %v16 = vld [vmem:[%s1] sm:$0xf]
  %v17 = vld [vmem:[%s1 + $0x4] sm:$0xf]
  %v18 = vld [vmem:[%s1 + $0x8] sm:$0xf]
  %v19 = vld [vmem:[%s1 + $0xc] sm:$0xf]
  %v20 = vld [vmem:[%s1 + $0x10] sm:$0xf]
  %v21 = vld [vmem:[%s1 + $0x14] sm:$0xf]
  %v22 = vld [vmem:[%s1 + $0x18] sm:$0xf]
  %v23 = vld [vmem:[%s1 + $0x1c] sm:$0xf]
  %v24 = vld [vmem:[%s1 + $0x20] sm:$0xf]
  %v25 = vld [vmem:[%s1 + $0x24] sm:$0xf]
  %v26 = vld [vmem:[%s1 + $0x28] sm:$0xf]
  %v27 = vld [vmem:[%s1 + $0x2c] sm:$0xf]
  %v28 = vld [vmem:[%s1 + $0x30] sm:$0xf]
  %v29 = vld [vmem:[%s1 + $0x34] sm:$0xf]
  %v30 = vld [vmem:[%s1 + $0x38] sm:$0xf]
  %v31 = vld [vmem:[%s1 + $0x3c] sm:$0xf]
  %v32 = vld [vmem:[%s1 + $0x40] sm:$0xf]
  %v33 = vld [vmem:[%s1 + $0x44] sm:$0xf]
  %v34 = vld [vmem:[%s1 + $0x48] sm:$0xf]
  %v35 = vld [vmem:[%s1 + $0x4c] sm:$0xf]
  %v36 = vld [vmem:[%s1 + $0x50] sm:$0xf]
  %v37 = vld [vmem:[%s1 + $0x54] sm:$0xf]
  %v38 = vld [vmem:[%s1 + $0x58] sm:$0xf]
  %v39 = vld [vmem:[%s1 + $0x5c] sm:$0xf]
  %v40 = vld [vmem:[%s1 + $0x60] sm:$0xf]
  %v41 = vld [vmem:[%s1 + $0x64] sm:$0xf]
  %v42 = vld [vmem:[%s1 + $0x68] sm:$0xf]
  %v43 = vld [vmem:[%s1 + $0x6c] sm:$0xf]
  %v44 = vld [vmem:[%s1 + $0x70] sm:$0xf]
  %v45 = vld [vmem:[%s1 + $0x74] sm:$0xf]
  %v46 = vld [vmem:[%s1 + $0x78] sm:$0xf]
  %v47 = vld [vmem:[%s1 + $0x7c] sm:$0xf]
  %v48 = vld [vmem:[%s2] sm:$0x1]
  %v50 = vlaneseq
  %v51 = vshrl.u32 %v50, 7
  %v52 = vsub.s32 0, %v51
  %v53 = vrot.slane %v48, %v52
  %v56 = vunpack.c.l.b16 %v15
  %v57 = vunpack.c.h.b16 %v15
  %v58 = vpack.c.b16 %v56, %v56
  %v59 = vpack.c.b16 %v57, %v57
  %v94 = vunpack.c.l.b16 %v16
  %v95 = vunpack.c.l.b16 %v17
  %v96 = vunpack.c.l.b16 %v18
  %v97 = vunpack.c.l.b16 %v19
  %v98 = vunpack.c.l.b16 %v20
  %v99 = vunpack.c.l.b16 %v21
  %v100 = vunpack.c.l.b16 %v22
  %v101 = vunpack.c.l.b16 %v23
  %v102 = vunpack.c.l.b16 %v24
  %v103 = vunpack.c.l.b16 %v25
  %v104 = vunpack.c.l.b16 %v26
  %v105 = vunpack.c.l.b16 %v27
  %v106 = vunpack.c.l.b16 %v28
  %v107 = vunpack.c.l.b16 %v29
  %v108 = vunpack.c.l.b16 %v30
  %v109 = vunpack.c.l.b16 %v31
  %v110 = vunpack.c.l.b16 %v32
  %v111 = vunpack.c.l.b16 %v33
  %v112 = vunpack.c.l.b16 %v34
  %v113 = vunpack.c.l.b16 %v35
  %v114 = vunpack.c.l.b16 %v36
  %v115 = vunpack.c.l.b16 %v37
  %v116 = vunpack.c.l.b16 %v38
  %v117 = vunpack.c.l.b16 %v39
  %v118 = vunpack.c.l.b16 %v40
  %v119 = vunpack.c.l.b16 %v41
  %v120 = vunpack.c.l.b16 %v42
  %v121 = vunpack.c.l.b16 %v43
  %v122 = vunpack.c.l.b16 %v44
  %v123 = vunpack.c.l.b16 %v45
  %v124 = vunpack.c.l.b16 %v46
  %v125 = vunpack.c.l.b16 %v47
  %v126 = vpack.c.b16 %v95, %v94
  %v127 = vpack.c.b16 %v97, %v96
  %v128 = vpack.c.b16 %v99, %v98
  %v129 = vpack.c.b16 %v101, %v100
  %v130 = vpack.c.b16 %v103, %v102
  %v131 = vpack.c.b16 %v105, %v104
  %v132 = vpack.c.b16 %v107, %v106
  %v133 = vpack.c.b16 %v109, %v108
  %v134 = vpack.c.b16 %v111, %v110
  %v135 = vpack.c.b16 %v113, %v112
  %v136 = vpack.c.b16 %v115, %v114
  %v137 = vpack.c.b16 %v117, %v116
  %v138 = vpack.c.b16 %v119, %v118
  %v139 = vpack.c.b16 %v121, %v120
  %v140 = vpack.c.b16 %v123, %v122
  %v141 = vpack.c.b16 %v125, %v124
  %158 = vmatprep.subr.bf16.mxu0 0
  %159 = vmatpush1.bf16.msra.mxu0 %v126
  %160 = vmatprep.subr.bf16.mxu0 0
  %161 = vmatpush1.bf16.msra.mxu0 %v127
  %162 = vmatprep.subr.bf16.mxu0 0
  %163 = vmatpush1.bf16.msra.mxu0 %v128
  %164 = vmatprep.subr.bf16.mxu0 0
  %165 = vmatpush1.bf16.msra.mxu0 %v129
  %166 = vmatprep.subr.bf16.mxu0 0
  %167 = vmatpush1.bf16.msra.mxu0 %v130
  %168 = vmatprep.subr.bf16.mxu0 0
  %169 = vmatpush1.bf16.msra.mxu0 %v131
  %170 = vmatprep.subr.bf16.mxu0 0
  %171 = vmatpush1.bf16.msra.mxu0 %v132
  %172 = vmatprep.subr.bf16.mxu0 0
  %173 = vmatpush1.bf16.msra.mxu0 %v133
  %174 = vmatprep.subr.bf16.mxu0 0
  %175 = vmatpush1.bf16.msra.mxu0 %v134
  %176 = vmatprep.subr.bf16.mxu0 0
  %177 = vmatpush1.bf16.msra.mxu0 %v135
  %178 = vmatprep.subr.bf16.mxu0 0
  %179 = vmatpush1.bf16.msra.mxu0 %v136
  %180 = vmatprep.subr.bf16.mxu0 0
  %181 = vmatpush1.bf16.msra.mxu0 %v137
  %182 = vmatprep.subr.bf16.mxu0 0
  %183 = vmatpush1.bf16.msra.mxu0 %v138
  %184 = vmatprep.subr.bf16.mxu0 0
  %185 = vmatpush1.bf16.msra.mxu0 %v139
  %186 = vmatprep.subr.bf16.mxu0 0
  %187 = vmatpush1.bf16.msra.mxu0 %v140
  %188 = vmatprep.subr.bf16.mxu0 0
  %189 = vmatpush1.bf16.msra.mxu0 %v141
  %190 = vmatprep.mubr.bf16.mxu0 %v59
  %191 = vmatmul.mubr.bf16.gmra.mrb[0].mxu0 %v58
  %v192 = vpop.f32.mrb[0].mxu0
  %v193 = vadd.f32 %v53, %v192
  %v194 = vpop.f32.mrb[0].mxu0
  %v195 = vpop.f32.mrb[0].mxu0
  %v196 = vpop.f32.mrb[0].mxu0
  %197 = vdwg.mxu0
  %v198 = vmax.f32 %v193, 0.0
  %v199 = vpack.c.bf16 %v198, %v198
  %200 = vst [vmem:[%s3] sm:$0xf] %v199
  // Predicated region
  $region14: #{dmlab_pg_lstm_forward.10} parent=0 // pred_check
    _
  $region15: #{dmlab_pg_lstm_forward.10} parent=0 // pred_check_branch
    %202 = sbr.rel (0) target = $region17
  $region16: #{dmlab_pg_lstm_forward.10} parent=0 // pred_region
    _
  $region17: #{dmlab_pg_lstm_forward.10} parent=0 // pred_fallthru
    _
  // Predicated region
  $region18: #{dmlab_pg_lstm_forward.10} parent=0 // pred_check
    _
  $region19: #{dmlab_pg_lstm_forward.10} parent=0 // pred_check_branch
    %204 = sbr.rel (0) target = $region21
  $region20: #{dmlab_pg_lstm_forward.10} parent=0 // pred_region
    _
  $region21: #{dmlab_pg_lstm_forward.10} parent=0 // pred_fallthru
    _

// kernel: dmlab_pg_lstm_forward.9
$region0: #{dmlab_pg_lstm_forward.9}
  #allocation0 [shape = 'u32[]', space=smem, size = 0x4, offset = 0x4, fixed_abs, tag = 'smem constant byte address 0x4 - core index']
  #allocation1 [shape = 'u32[144,128]{1,0:T(1,128)}', space=vmem, size = 0x12000, scoped, tag = 'internal scratch']
  #allocation2 [shape = 'bf16[138,64]{1,0:T(8,128)(2,1)}', space=vmem, size = 0x9000, scoped, tag = 'scratch operand']
  %s0 = inlined_call_operand.vmem [shape: bf16[138,64], index: 0, kind: input, shape index: {}]
  %s1 = inlined_call_operand.vmem [shape: bf16[9,64,64], index: 1, kind: input, shape index: {}]
  %s2 = inlined_call_operand.vmem [shape: f32[1,64], index: 2, kind: input, shape index: {}]
  %s3 = inlined_call_operand.vmem [shape: bf16[9,64,64], index: 3, kind: input, shape index: {}]
  %s4 = inlined_call_operand.vmem [shape: f32[1,64], index: 4, kind: input, shape index: {}]
  %s5 = inlined_call_operand.vmem [shape: f32[128,1], index: 5, kind: input, shape index: {}]
  %s6 = inlined_call_operand.vmem [shape: bf16[128,64], index: 6, kind: output, shape index: {}]
  %s7 = sld [smem:[#allocation0]]
  $region34: #{dmlab_pg_lstm_forward.9} parent=0
    _
  %s9 = ssub.s32 1, %s7
  %s10 = scalar_select 0, %s9, %s7
  // Predicated region
  $region2: #{dmlab_pg_lstm_forward.9} parent=0 // pred_check
    _
  $region3: #{dmlab_pg_lstm_forward.9} parent=0 // pred_check_branch
    %12 = sbr.rel (0) target = $region5
  $region4: #{dmlab_pg_lstm_forward.9} parent=0 // pred_region
    _
  $region5: #{dmlab_pg_lstm_forward.9} parent=0 // pred_fallthru
    _
  // Predicated region
  $region6: #{dmlab_pg_lstm_forward.9} parent=0 // pred_check
    _
  $region7: #{dmlab_pg_lstm_forward.9} parent=0 // pred_check_branch
    %14 = sbr.rel (0) target = $region9
  $region8: #{dmlab_pg_lstm_forward.9} parent=0 // pred_region
    _
  $region9: #{dmlab_pg_lstm_forward.9} parent=0 // pred_fallthru
    _
  // Predicated region
  $region10: #{dmlab_pg_lstm_forward.9} parent=0 // pred_check
    _
  $region11: #{dmlab_pg_lstm_forward.9} parent=0 // pred_check_branch
    %16 = sbr.rel (0) target = $region13
  $region12: #{dmlab_pg_lstm_forward.9} parent=0 // pred_region
    _
  $region13: #{dmlab_pg_lstm_forward.9} parent=0 // pred_fallthru
    _
  // Predicated region
  $region14: #{dmlab_pg_lstm_forward.9} parent=0 // pred_check
    _
  $region15: #{dmlab_pg_lstm_forward.9} parent=0 // pred_check_branch
    %18 = sbr.rel (0) target = $region17
  $region16: #{dmlab_pg_lstm_forward.9} parent=0 // pred_region
    _
  $region17: #{dmlab_pg_lstm_forward.9} parent=0 // pred_fallthru
    _
  // Predicated region
  $region18: #{dmlab_pg_lstm_forward.9} parent=0 // pred_check
    _
  $region19: #{dmlab_pg_lstm_forward.9} parent=0 // pred_check_branch
    %20 = sbr.rel (0) target = $region21
  $region20: #{dmlab_pg_lstm_forward.9} parent=0 // pred_region
    _
  $region21: #{dmlab_pg_lstm_forward.9} parent=0 // pred_fallthru
    _
  // Predicated region
  $region22: #{dmlab_pg_lstm_forward.9} parent=0 // pred_check
    _
  $region23: #{dmlab_pg_lstm_forward.9} parent=0 // pred_check_branch
    %22 = sbr.rel (0) target = $region25
  $region24: #{dmlab_pg_lstm_forward.9} parent=0 // pred_region
    _
  $region25: #{dmlab_pg_lstm_forward.9} parent=0 // pred_fallthru
    _
  %v24 = vld [vmem:[%s0] sm:$0xf]
  %v25 = vld [vmem:[%s0 + $0x4] sm:$0xf]
  %v26 = vld [vmem:[%s0 + $0x8] sm:$0xf]
  %v27 = vld [vmem:[%s0 + $0xc] sm:$0xf]
  %v28 = vld [vmem:[%s0 + $0x10] sm:$0xf]
  %v29 = vld [vmem:[%s0 + $0x14] sm:$0xf]
  %v30 = vld [vmem:[%s0 + $0x18] sm:$0xf]
  %v31 = vld [vmem:[%s0 + $0x1c] sm:$0xf]
  %v32 = vld [vmem:[%s0 + $0x20] sm:$0xf]
  %v33 = vld [vmem:[%s0 + $0x24] sm:$0xf]
  %v34 = vld [vmem:[%s0 + $0x28] sm:$0xf]
  %v35 = vld [vmem:[%s0 + $0x2c] sm:$0xf]
  %v36 = vld [vmem:[%s0 + $0x30] sm:$0xf]
  %v37 = vld [vmem:[%s0 + $0x34] sm:$0xf]
  %v38 = vld [vmem:[%s0 + $0x38] sm:$0xf]
  %v39 = vld [vmem:[%s0 + $0x3c] sm:$0xf]
  %v40 = vld [vmem:[%s1] sm:$0xf]
  %v41 = vld [vmem:[%s1 + $0x4] sm:$0xf]
  %v42 = vld [vmem:[%s1 + $0x8] sm:$0xf]
  %v43 = vld [vmem:[%s1 + $0xc] sm:$0xf]
  %v44 = vld [vmem:[%s1 + $0x10] sm:$0xf]
  %v45 = vld [vmem:[%s1 + $0x14] sm:$0xf]
  %v46 = vld [vmem:[%s1 + $0x18] sm:$0xf]
  %v47 = vld [vmem:[%s1 + $0x1c] sm:$0xf]
  %v48 = vld [vmem:[%s0 + $0x40] sm:$0x1]
  %s49 = scalar_lea.vmem %s1, 32
  %v50 = vld [vmem:[%s49] sm:$0xf]
  %v51 = vld [vmem:[%s49 + $0x4] sm:$0xf]
  %v52 = vld [vmem:[%s49 + $0x8] sm:$0xf]
  %v53 = vld [vmem:[%s49 + $0xc] sm:$0xf]
  %v54 = vld [vmem:[%s49 + $0x10] sm:$0xf]
  %v55 = vld [vmem:[%s49 + $0x14] sm:$0xf]
  %v56 = vld [vmem:[%s49 + $0x18] sm:$0xf]
  %v57 = vld [vmem:[%s49 + $0x1c] sm:$0xf]
  %v75 = vunpack.c.l.b16 %v24
  %v76 = vunpack.c.l.b16 %v25
  %v77 = vunpack.c.l.b16 %v26
  %v78 = vunpack.c.l.b16 %v27
  %v79 = vunpack.c.l.b16 %v28
  %v80 = vunpack.c.l.b16 %v29
  %v81 = vunpack.c.l.b16 %v30
  %v82 = vunpack.c.l.b16 %v31
  %v83 = vunpack.c.l.b16 %v32
  %v84 = vunpack.c.l.b16 %v33
  %v85 = vunpack.c.l.b16 %v34
  %v86 = vunpack.c.l.b16 %v35
  %v87 = vunpack.c.l.b16 %v36
  %v88 = vunpack.c.l.b16 %v37
  %v89 = vunpack.c.l.b16 %v38
  %v90 = vunpack.c.l.b16 %v39
  %v91 = vunpack.c.l.b16 %v48
  %v92 = vpack.c.b16 %v76, %v75
  %v93 = vpack.c.b16 %v78, %v77
  %v94 = vpack.c.b16 %v80, %v79
  %v95 = vpack.c.b16 %v82, %v81
  %v96 = vpack.c.b16 %v84, %v83
  %v97 = vpack.c.b16 %v86, %v85
  %v98 = vpack.c.b16 %v88, %v87
  %v99 = vpack.c.b16 %v90, %v89
  %v100 = vpack.c.b16 %v91, %v91
  %vm101 = vsmask.f32 7424
  %v103 = vshrl.u32 %v92, 16
  %v105 = vshll.u32 %v92, 16
  %v107 = vrot.slane %v105, 1
  %v108 = vor.u32 %v103, %v107
  %v110 = vshll.u32 %v93, 16
  %v112 = vrot.slane %v110, 1
  %v113 = vsel %vm101, %v108, %v112
  %v114 = vshrl.u32 %v93, 16
  %v116 = vor.u32 %v114, %v112
  %v118 = vshll.u32 %v94, 16
  %v120 = vrot.slane %v118, 1
  %v121 = vsel %vm101, %v116, %v120
  %v122 = vshrl.u32 %v94, 16
  %v124 = vor.u32 %v122, %v120
  %v126 = vshll.u32 %v95, 16
  %v128 = vrot.slane %v126, 1
  %v129 = vsel %vm101, %v124, %v128
  %v130 = vshrl.u32 %v95, 16
  %v132 = vor.u32 %v130, %v128
  %v134 = vshll.u32 %v96, 16
  %v136 = vrot.slane %v134, 1
  %v137 = vsel %vm101, %v132, %v136
  %v138 = vshrl.u32 %v96, 16
  %v140 = vor.u32 %v138, %v136
  %v142 = vshll.u32 %v97, 16
  %v144 = vrot.slane %v142, 1
  %v145 = vsel %vm101, %v140, %v144
  %v146 = vshrl.u32 %v97, 16
  %v148 = vor.u32 %v146, %v144
  %v150 = vshll.u32 %v98, 16
  %v152 = vrot.slane %v150, 1
  %v153 = vsel %vm101, %v148, %v152
  %v154 = vshrl.u32 %v98, 16
  %v156 = vor.u32 %v154, %v152
  %v158 = vshll.u32 %v99, 16
  %v160 = vrot.slane %v158, 1
  %v161 = vsel %vm101, %v156, %v160
  %v162 = vshrl.u32 %v99, 16
  %v164 = vor.u32 %v162, %v160
  %v166 = vshll.u32 %v100, 16
  %v168 = vrot.slane %v166, 1
  %v169 = vsel %vm101, %v164, %v168
  %v178 = vunpack.c.l.b16 %v50
  %v179 = vunpack.c.l.b16 %v51
  %v180 = vunpack.c.l.b16 %v52
  %v181 = vunpack.c.l.b16 %v53
  %v182 = vunpack.c.l.b16 %v54
  %v183 = vunpack.c.l.b16 %v55
  %v184 = vunpack.c.l.b16 %v56
  %v185 = vunpack.c.l.b16 %v57
  %v186 = vpack.c.b16 %v179, %v178
  %v187 = vpack.c.b16 %v181, %v180
  %v188 = vpack.c.b16 %v183, %v182
  %v189 = vpack.c.b16 %v185, %v184
  %vm194 = vcmask 523264
  %v196 = vsel %vm194, %v113, 0
  %v199 = vsel %vm194, %v121, 0
  %v202 = vsel %vm194, %v129, 0
  %v205 = vsel %vm194, %v137, 0
  %v208 = vsel %vm194, %v145, 0
  %v211 = vsel %vm194, %v153, 0
  %v214 = vsel %vm194, %v161, 0
  %v217 = vsel %vm194, %v169, 0
  %219 = vmatprep.subr.bf16.mxu0 0
  %220 = vmatpush1.bf16.msra.mxu0 %v186
  %221 = vmatprep.subr.bf16.mxu0 0
  %222 = vmatpush1.bf16.msra.mxu0 %v187
  %223 = vmatprep.subr.bf16.mxu0 0
  %224 = vmatpush1.bf16.msra.mxu0 %v188
  %225 = vmatprep.subr.bf16.mxu0 0
  %226 = vmatpush1.bf16.msra.mxu0 %v189
  %227 = vmatprep.subr.bf16.mxu0 0
  %228 = vmatpush1.bf16.msra.mxu0 0
  %229 = vmatprep.subr.bf16.mxu0 0
  %230 = vmatpush1.bf16.msra.mxu0 0
  %231 = vmatprep.subr.bf16.mxu0 0
  %232 = vmatpush1.bf16.msra.mxu0 0
  %233 = vmatprep.subr.bf16.mxu0 0
  %234 = vmatpush1.bf16.msra.mxu0 0
  %235 = vmatprep.subr.bf16.mxu0 0
  %236 = vmatpush1.bf16.msra.mxu0 0
  %237 = vmatprep.subr.bf16.mxu0 0
  %238 = vmatpush1.bf16.msra.mxu0 0
  %239 = vmatprep.subr.bf16.mxu0 0
  %240 = vmatpush1.bf16.msra.mxu0 0
  %241 = vmatprep.subr.bf16.mxu0 0
  %242 = vmatpush1.bf16.msra.mxu0 0
  %243 = vmatprep.subr.bf16.mxu0 0
  %244 = vmatpush1.bf16.msra.mxu0 0
  %245 = vmatprep.subr.bf16.mxu0 0
  %246 = vmatpush1.bf16.msra.mxu0 0
  %247 = vmatprep.subr.bf16.mxu0 0
  %248 = vmatpush1.bf16.msra.mxu0 0
  %249 = vmatprep.subr.bf16.mxu0 0
  %250 = vmatpush1.bf16.msra.mxu0 0
  %251 = vmatprep.mubr.bf16.mxu0 0
  %252 = vmatmul.mubr.bf16.gmra.mrb[0].mxu0 %v196
  %v253 = vpop.f32.mrb[0].mxu0
  %v254 = vadd.f32 0.0, %v253
  %v255 = vpop.f32.mrb[0].mxu0
  %v256 = vpop.f32.mrb[0].mxu0
  %v257 = vadd.f32 0.0, %v256
  %v258 = vpop.f32.mrb[0].mxu0
  %259 = vmatprep.mubr.bf16.mxu0 0
  %260 = vmatmul.mubr.bf16.gmra.mrb[0].mxu0 %v199
  %v261 = vpop.f32.mrb[0].mxu0
  %v262 = vadd.f32 0.0, %v261
  %v263 = vpop.f32.mrb[0].mxu0
  %v264 = vpop.f32.mrb[0].mxu0
  %v265 = vadd.f32 0.0, %v264
  %v266 = vpop.f32.mrb[0].mxu0
  %267 = vmatprep.mubr.bf16.mxu0 0
  %268 = vmatmul.mubr.bf16.gmra.mrb[0].mxu0 %v202
  %v269 = vpop.f32.mrb[0].mxu0
  %v270 = vadd.f32 0.0, %v269
  %v271 = vpop.f32.mrb[0].mxu0
  %v272 = vpop.f32.mrb[0].mxu0
  %v273 = vadd.f32 0.0, %v272
  %v274 = vpop.f32.mrb[0].mxu0
  %275 = vmatprep.mubr.bf16.mxu0 0
  %276 = vmatmul.mubr.bf16.gmra.mrb[0].mxu0 %v205
  %v277 = vpop.f32.mrb[0].mxu0
  %v278 = vadd.f32 0.0, %v277
  %v279 = vpop.f32.mrb[0].mxu0
  %v280 = vpop.f32.mrb[0].mxu0
  %v281 = vadd.f32 0.0, %v280
  %v282 = vpop.f32.mrb[0].mxu0
  %283 = vmatprep.mubr.bf16.mxu0 0
  %284 = vmatmul.mubr.bf16.gmra.mrb[0].mxu0 %v208
  %v285 = vpop.f32.mrb[0].mxu0
  %v286 = vadd.f32 0.0, %v285
  %v287 = vpop.f32.mrb[0].mxu0
  %v288 = vpop.f32.mrb[0].mxu0
  %v289 = vadd.f32 0.0, %v288
  %v290 = vpop.f32.mrb[0].mxu0
  %291 = vmatprep.mubr.bf16.mxu0 0
  %292 = vmatmul.mubr.bf16.gmra.mrb[0].mxu0 %v211
  %v293 = vpop.f32.mrb[0].mxu0
  %v294 = vadd.f32 0.0, %v293
  %v295 = vpop.f32.mrb[0].mxu0
  %v296 = vpop.f32.mrb[0].mxu0
  %v297 = vadd.f32 0.0, %v296
  %v298 = vpop.f32.mrb[0].mxu0
  %299 = vmatprep.mubr.bf16.mxu0 0
  %300 = vmatmul.mubr.bf16.gmra.mrb[0].mxu0 %v214
  %v301 = vpop.f32.mrb[0].mxu0
  %v302 = vadd.f32 0.0, %v301
  %v303 = vpop.f32.mrb[0].mxu0
  %v304 = vpop.f32.mrb[0].mxu0
  %v305 = vadd.f32 0.0, %v304
  %v306 = vpop.f32.mrb[0].mxu0
  %307 = vmatprep.mubr.bf16.mxu0 0
  %308 = vmatmul.mubr.bf16.gmra.mrb[0].mxu0 %v217
  %v309 = vpop.f32.mrb[0].mxu0
  %v310 = vadd.f32 0.0, %v309
  %v311 = vpop.f32.mrb[0].mxu0
  %v312 = vpop.f32.mrb[0].mxu0
  %v313 = vadd.f32 0.0, %v312
  %v314 = vpop.f32.mrb[0].mxu0
  %315 = vdwg.mxu0
  %v324 = vunpack.c.l.b16 %v40
  %v325 = vunpack.c.l.b16 %v41
  %v326 = vunpack.c.l.b16 %v42
  %v327 = vunpack.c.l.b16 %v43
  %v328 = vunpack.c.l.b16 %v44
  %v329 = vunpack.c.l.b16 %v45
  %v330 = vunpack.c.l.b16 %v46
  %v331 = vunpack.c.l.b16 %v47
  %v332 = vpack.c.b16 %v325, %v324
  %v333 = vpack.c.b16 %v327, %v326
  %v334 = vpack.c.b16 %v329, %v328
  %v335 = vpack.c.b16 %v331, %v330
  %v340 = vsel %vm194, %v92, 0
  %v342 = vsel %vm194, %v93, 0
  %v344 = vsel %vm194, %v94, 0
  %v346 = vsel %vm194, %v95, 0
  %v348 = vsel %vm194, %v96, 0
  %v350 = vsel %vm194, %v97, 0
  %v352 = vsel %vm194, %v98, 0
  %v354 = vsel %vm194, %v99, 0
  %356 = vmatprep.subr.bf16.mxu0 0
  %357 = vmatpush1.bf16.msra.mxu0 %v332
  %358 = vmatprep.subr.bf16.mxu0 0
  %359 = vmatpush1.bf16.msra.mxu0 %v333
  %360 = vmatprep.subr.bf16.mxu0 0
  %361 = vmatpush1.bf16.msra.mxu0 %v334
  %362 = vmatprep.subr.bf16.mxu0 0
  %363 = vmatpush1.bf16.msra.mxu0 %v335
  %364 = vmatprep.subr.bf16.mxu0 0
  %365 = vmatpush1.bf16.msra.mxu0 0
  %366 = vmatprep.subr.bf16.mxu0 0
  %367 = vmatpush1.bf16.msra.mxu0 0
  %368 = vmatprep.subr.bf16.mxu0 0
  %369 = vmatpush1.bf16.msra.mxu0 0
  %370 = vmatprep.subr.bf16.mxu0 0
  %371 = vmatpush1.bf16.msra.mxu0 0
  %372 = vmatprep.subr.bf16.mxu0 0
  %373 = vmatpush1.bf16.msra.mxu0 0
  %374 = vmatprep.subr.bf16.mxu0 0
  %375 = vmatpush1.bf16.msra.mxu0 0
  %376 = vmatprep.subr.bf16.mxu0 0
  %377 = vmatpush1.bf16.msra.mxu0 0
  %378 = vmatprep.subr.bf16.mxu0 0
  %379 = vmatpush1.bf16.msra.mxu0 0
  %380 = vmatprep.subr.bf16.mxu0 0
  %381 = vmatpush1.bf16.msra.mxu0 0
  %382 = vmatprep.subr.bf16.mxu0 0
  %383 = vmatpush1.bf16.msra.mxu0 0
  %384 = vmatprep.subr.bf16.mxu0 0
  %385 = vmatpush1.bf16.msra.mxu0 0
  %386 = vmatprep.subr.bf16.mxu0 0
  %387 = vmatpush1.bf16.msra.mxu0 0
  %388 = vmatprep.mubr.bf16.mxu0 0
  %389 = vmatmul.mubr.bf16.gmra.mrb[0].mxu0 %v340
  %v390 = vpop.f32.mrb[0].mxu0
  %v391 = vadd.f32 %v254, %v390
  %v392 = vpop.f32.mrb[0].mxu0
  %v393 = vpop.f32.mrb[0].mxu0
  %v394 = vadd.f32 %v257, %v393
  %v395 = vpop.f32.mrb[0].mxu0
  %396 = vmatprep.mubr.bf16.mxu0 0
  %397 = vmatmul.mubr.bf16.gmra.mrb[0].mxu0 %v342
  %v398 = vpop.f32.mrb[0].mxu0
  %v399 = vadd.f32 %v262, %v398
  %v400 = vpop.f32.mrb[0].mxu0
  %v401 = vpop.f32.mrb[0].mxu0
  %v402 = vadd.f32 %v265, %v401
  %v403 = vpop.f32.mrb[0].mxu0
  %404 = vmatprep.mubr.bf16.mxu0 0
  %405 = vmatmul.mubr.bf16.gmra.mrb[0].mxu0 %v344
  %v406 = vpop.f32.mrb[0].mxu0
  %v407 = vadd.f32 %v270, %v406
  %v408 = vpop.f32.mrb[0].mxu0
  %v409 = vpop.f32.mrb[0].mxu0
  %v410 = vadd.f32 %v273, %v409
  %v411 = vpop.f32.mrb[0].mxu0
  %412 = vmatprep.mubr.bf16.mxu0 0
  %413 = vmatmul.mubr.bf16.gmra.mrb[0].mxu0 %v346
  %v414 = vpop.f32.mrb[0].mxu0
  %v415 = vadd.f32 %v278, %v414
  %v416 = vpop.f32.mrb[0].mxu0
  %v417 = vpop.f32.mrb[0].mxu0
  %v418 = vadd.f32 %v281, %v417
  %v419 = vpop.f32.mrb[0].mxu0
  %420 = vmatprep.mubr.bf16.mxu0 0
  %421 = vmatmul.mubr.bf16.gmra.mrb[0].mxu0 %v348
  %v422 = vpop.f32.mrb[0].mxu0
  %v423 = vadd.f32 %v286, %v422
  %v424 = vpop.f32.mrb[0].mxu0
  %v425 = vpop.f32.mrb[0].mxu0
  %v426 = vadd.f32 %v289, %v425
  %v427 = vpop.f32.mrb[0].mxu0
  %428 = vmatprep.mubr.bf16.mxu0 0
  %429 = vmatmul.mubr.bf16.gmra.mrb[0].mxu0 %v350
  %v430 = vpop.f32.mrb[0].mxu0
  %v431 = vadd.f32 %v294, %v430
  %v432 = vpop.f32.mrb[0].mxu0
  %v433 = vpop.f32.mrb[0].mxu0
  %v434 = vadd.f32 %v297, %v433
  %v435 = vpop.f32.mrb[0].mxu0
  %436 = vmatprep.mubr.bf16.mxu0 0
  %437 = vmatmul.mubr.bf16.gmra.mrb[0].mxu0 %v352
  %v438 = vpop.f32.mrb[0].mxu0
  %v439 = vadd.f32 %v302, %v438
  %v440 = vpop.f32.mrb[0].mxu0
  %v441 = vpop.f32.mrb[0].mxu0
  %v442 = vadd.f32 %v305, %v441
  %v443 = vpop.f32.mrb[0].mxu0
  %444 = vmatprep.mubr.bf16.mxu0 0
  %445 = vmatmul.mubr.bf16.gmra.mrb[0].mxu0 %v354
  %v446 = vpop.f32.mrb[0].mxu0
  %v447 = vadd.f32 %v310, %v446
  %v448 = vpop.f32.mrb[0].mxu0
  %v449 = vpop.f32.mrb[0].mxu0
  %v450 = vadd.f32 %v313, %v449
  %v451 = vpop.f32.mrb[0].mxu0
  %452 = vdwg.mxu0
  %v453 = vld [vmem:[%s0] sm:$0xe]
  %s454 = scalar_lea.vmem %s1, 64
  %v455 = vld [vmem:[%s454] sm:$0xf]
  %v456 = vld [vmem:[%s454 + $0x4] sm:$0xf]
  %v457 = vld [vmem:[%s454 + $0x8] sm:$0xf]
  %v458 = vld [vmem:[%s454 + $0xc] sm:$0xf]
  %v459 = vld [vmem:[%s454 + $0x10] sm:$0xf]
  %v460 = vld [vmem:[%s454 + $0x14] sm:$0xf]
  %v461 = vld [vmem:[%s454 + $0x18] sm:$0xf]
  %v462 = vld [vmem:[%s454 + $0x1c] sm:$0xf]
  %v464 = vunpack.c.l.b16 %v453
  %v465 = vpack.c.b16 %v76, %v464
  %vm466 = vcmask 1046528
  %v467 = vrot.slane %v465, 1
  %v468 = vrot.slane %v93, 1
  %v469 = vsel %vm466, %v467, %v468
  %v470 = vrot.slane %v94, 1
  %v471 = vsel %vm466, %v468, %v470
  %v472 = vrot.slane %v95, 1
  %v473 = vsel %vm466, %v470, %v472
  %v474 = vrot.slane %v96, 1
  %v475 = vsel %vm466, %v472, %v474
  %v476 = vrot.slane %v97, 1
  %v477 = vsel %vm466, %v474, %v476
  %v478 = vrot.slane %v98, 1
  %v479 = vsel %vm466, %v476, %v478
  %v480 = vrot.slane %v99, 1
  %v481 = vsel %vm466, %v478, %v480
  %v482 = vrot.slane %v100, 1
  %v483 = vsel %vm466, %v480, %v482
  %v492 = vunpack.c.l.b16 %v455
  %v493 = vunpack.c.l.b16 %v456
  %v494 = vunpack.c.l.b16 %v457
  %v495 = vunpack.c.l.b16 %v458
  %v496 = vunpack.c.l.b16 %v459
  %v497 = vunpack.c.l.b16 %v460
  %v498 = vunpack.c.l.b16 %v461
  %v499 = vunpack.c.l.b16 %v462
  %v500 = vpack.c.b16 %v493, %v492
  %v501 = vpack.c.b16 %v495, %v494
  %v502 = vpack.c.b16 %v497, %v496
  %v503 = vpack.c.b16 %v499, %v498
  %v509 = vsel %vm194, %v469, 0
  %v512 = vsel %vm194, %v471, 0
  %v515 = vsel %vm194, %v473, 0
  %v518 = vsel %vm194, %v475, 0
  %v521 = vsel %vm194, %v477, 0
  %v524 = vsel %vm194, %v479, 0
  %v527 = vsel %vm194, %v481, 0
  %v530 = vsel %vm194, %v483, 0
  %532 = vmatprep.subr.bf16.mxu0 0
  %533 = vmatpush1.bf16.msra.mxu0 %v500
  %534 = vmatprep.subr.bf16.mxu0 0
  %535 = vmatpush1.bf16.msra.mxu0 %v501
  %536 = vmatprep.subr.bf16.mxu0 0
  %537 = vmatpush1.bf16.msra.mxu0 %v502
  %538 = vmatprep.subr.bf16.mxu0 0
  %539 = vmatpush1.bf16.msra.mxu0 %v503
  %540 = vmatprep.subr.bf16.mxu0 0
  %541 = vmatpush1.bf16.msra.mxu0 0
  %542 = vmatprep.subr.bf16.mxu0 0
  %543 = vmatpush1.bf16.msra.mxu0 0
  %544 = vmatprep.subr.bf16.mxu0 0
  %545 = vmatpush1.bf16.msra.mxu0 0
  %546 = vmatprep.subr.bf16.mxu0 0
  %547 = vmatpush1.bf16.msra.mxu0 0
  %548 = vmatprep.subr.bf16.mxu0 0
  %549 = vmatpush1.bf16.msra.mxu0 0
  %550 = vmatprep.subr.bf16.mxu0 0
  %551 = vmatpush1.bf16.msra.mxu0 0
  %552 = vmatprep.subr.bf16.mxu0 0
  %553 = vmatpush1.bf16.msra.mxu0 0
  %554 = vmatprep.subr.bf16.mxu0 0
  %555 = vmatpush1.bf16.msra.mxu0 0
  %556 = vmatprep.subr.bf16.mxu0 0
  %557 = vmatpush1.bf16.msra.mxu0 0
  %558 = vmatprep.subr.bf16.mxu0 0
  %559 = vmatpush1.bf16.msra.mxu0 0
  %560 = vmatprep.subr.bf16.mxu0 0
  %561 = vmatpush1.bf16.msra.mxu0 0
  %562 = vmatprep.subr.bf16.mxu0 0
  %563 = vmatpush1.bf16.msra.mxu0 0
  %564 = vmatprep.mubr.bf16.mxu0 0
  %565 = vmatmul.mubr.bf16.gmra.mrb[0].mxu0 %v509
  %v566 = vpop.f32.mrb[0].mxu0
  %v567 = vadd.f32 0.0, %v566
  %v568 = vpop.f32.mrb[0].mxu0
  %v569 = vpop.f32.mrb[0].mxu0
  %v570 = vadd.f32 0.0, %v569
  %v571 = vpop.f32.mrb[0].mxu0
  %572 = vmatprep.mubr.bf16.mxu0 0
  %573 = vmatmul.mubr.bf16.gmra.mrb[0].mxu0 %v512
  %v574 = vpop.f32.mrb[0].mxu0
  %v575 = vadd.f32 0.0, %v574
  %v576 = vpop.f32.mrb[0].mxu0
  %v577 = vpop.f32.mrb[0].mxu0
  %v578 = vadd.f32 0.0, %v577
  %v579 = vpop.f32.mrb[0].mxu0
  %580 = vmatprep.mubr.bf16.mxu0 0
  %581 = vmatmul.mubr.bf16.gmra.mrb[0].mxu0 %v515
  %v582 = vpop.f32.mrb[0].mxu0
  %v583 = vadd.f32 0.0, %v582
  %v584 = vpop.f32.mrb[0].mxu0
  %v585 = vpop.f32.mrb[0].mxu0
  %v586 = vadd.f32 0.0, %v585
  %v587 = vpop.f32.mrb[0].mxu0
  %588 = vmatprep.mubr.bf16.mxu0 0
  %589 = vmatmul.mubr.bf16.gmra.mrb[0].mxu0 %v518
  %v590 = vpop.f32.mrb[0].mxu0
  %v591 = vadd.f32 0.0, %v590
  %v592 = vpop.f32.mrb[0].mxu0
  %v593 = vpop.f32.mrb[0].mxu0
  %v594 = vadd.f32 0.0, %v593
  %v595 = vpop.f32.mrb[0].mxu0
  %596 = vmatprep.mubr.bf16.mxu0 0
  %597 = vmatmul.mubr.bf16.gmra.mrb[0].mxu0 %v521
  %v598 = vpop.f32.mrb[0].mxu0
  %v599 = vadd.f32 0.0, %v598
  %v600 = vpop.f32.mrb[0].mxu0
  %v601 = vpop.f32.mrb[0].mxu0
  %v602 = vadd.f32 0.0, %v601
  %v603 = vpop.f32.mrb[0].mxu0
  %604 = vmatprep.mubr.bf16.mxu0 0
  %605 = vmatmul.mubr.bf16.gmra.mrb[0].mxu0 %v524
  %v606 = vpop.f32.mrb[0].mxu0
  %v607 = vadd.f32 0.0, %v606
  %v608 = vpop.f32.mrb[0].mxu0
  %v609 = vpop.f32.mrb[0].mxu0
  %v610 = vadd.f32 0.0, %v609
  %v611 = vpop.f32.mrb[0].mxu0
  %612 = vmatprep.mubr.bf16.mxu0 0
  %613 = vmatmul.mubr.bf16.gmra.mrb[0].mxu0 %v527
  %v614 = vpop.f32.mrb[0].mxu0
  %v615 = vadd.f32 0.0, %v614
  %v616 = vpop.f32.mrb[0].mxu0
  %v617 = vpop.f32.mrb[0].mxu0
  %v618 = vadd.f32 0.0, %v617
  %v619 = vpop.f32.mrb[0].mxu0
  %620 = vmatprep.mubr.bf16.mxu0 0
  %621 = vmatmul.mubr.bf16.gmra.mrb[0].mxu0 %v530
  %v622 = vpop.f32.mrb[0].mxu0
  %v623 = vadd.f32 0.0, %v622
  %v624 = vpop.f32.mrb[0].mxu0
  %v625 = vpop.f32.mrb[0].mxu0
  %v626 = vadd.f32 0.0, %v625
  %v627 = vpop.f32.mrb[0].mxu0
  %628 = vdwg.mxu0
  %v629 = vadd.f32 %v391, %v567
  %v630 = vadd.f32 %v394, %v570
  %v631 = vadd.f32 %v399, %v575
  %v632 = vadd.f32 %v402, %v578
  %v633 = vadd.f32 %v407, %v583
  %v634 = vadd.f32 %v410, %v586
  %v635 = vadd.f32 %v415, %v591
  %v636 = vadd.f32 %v418, %v594
  %v637 = vadd.f32 %v423, %v599
  %v638 = vadd.f32 %v426, %v602
  %v639 = vadd.f32 %v431, %v607
  %v640 = vadd.f32 %v434, %v610
  %v641 = vadd.f32 %v439, %v615
  %v642 = vadd.f32 %v442, %v618
  %v643 = vadd.f32 %v447, %v623
  %v644 = vadd.f32 %v450, %v626
  %v645 = vld [vmem:[%s0] sm:$0xc]
  %v646 = vld [vmem:[%s0 + $0x40] sm:$0x3]
  %s647 = scalar_lea.vmem %s1, 96
  %v648 = vld [vmem:[%s647] sm:$0xf]
  %v649 = vld [vmem:[%s647 + $0x4] sm:$0xf]
  %v650 = vld [vmem:[%s647 + $0x8] sm:$0xf]
  %v651 = vld [vmem:[%s647 + $0xc] sm:$0xf]
  %v652 = vld [vmem:[%s647 + $0x10] sm:$0xf]
  %v653 = vld [vmem:[%s647 + $0x14] sm:$0xf]
  %v654 = vld [vmem:[%s647 + $0x18] sm:$0xf]
  %v655 = vld [vmem:[%s647 + $0x1c] sm:$0xf]
  %v658 = vunpack.c.l.b16 %v645
  %v659 = vunpack.c.l.b16 %v646
  %v660 = vpack.c.b16 %v76, %v658
  %v661 = vpack.c.b16 %v659, %v659
  %vm662 = vcmask 1045504
  %v663 = vrot.slane %v660, 2
  %v664 = vrot.slane %v93, 2
  %v665 = vsel %vm662, %v663, %v664
  %v666 = vrot.slane %v94, 2
  %v667 = vsel %vm662, %v664, %v666
  %v668 = vrot.slane %v95, 2
  %v669 = vsel %vm662, %v666, %v668
  %v670 = vrot.slane %v96, 2
  %v671 = vsel %vm662, %v668, %v670
  %v672 = vrot.slane %v97, 2
  %v673 = vsel %vm662, %v670, %v672
  %v674 = vrot.slane %v98, 2
  %v675 = vsel %vm662, %v672, %v674
  %v676 = vrot.slane %v99, 2
  %v677 = vsel %vm662, %v674, %v676
  %v678 = vrot.slane %v661, 2
  %v679 = vsel %vm662, %v676, %v678
  %v688 = vunpack.c.l.b16 %v648
  %v689 = vunpack.c.l.b16 %v649
  %v690 = vunpack.c.l.b16 %v650
  %v691 = vunpack.c.l.b16 %v651
  %v692 = vunpack.c.l.b16 %v652
  %v693 = vunpack.c.l.b16 %v653
  %v694 = vunpack.c.l.b16 %v654
  %v695 = vunpack.c.l.b16 %v655
  %v696 = vpack.c.b16 %v689, %v688
  %v697 = vpack.c.b16 %v691, %v690
  %v698 = vpack.c.b16 %v693, %v692
  %v699 = vpack.c.b16 %v695, %v694
  %v705 = vsel %vm194, %v665, 0
  %v708 = vsel %vm194, %v667, 0
  %v711 = vsel %vm194, %v669, 0
  %v714 = vsel %vm194, %v671, 0
  %v717 = vsel %vm194, %v673, 0
  %v720 = vsel %vm194, %v675, 0
  %v723 = vsel %vm194, %v677, 0
  %v726 = vsel %vm194, %v679, 0
  %728 = vmatprep.subr.bf16.mxu0 0
  %729 = vmatpush1.bf16.msra.mxu0 %v696
  %730 = vmatprep.subr.bf16.mxu0 0
  %731 = vmatpush1.bf16.msra.mxu0 %v697
  %732 = vmatprep.subr.bf16.mxu0 0
  %733 = vmatpush1.bf16.msra.mxu0 %v698
  %734 = vmatprep.subr.bf16.mxu0 0
  %735 = vmatpush1.bf16.msra.mxu0 %v699
  %736 = vmatprep.subr.bf16.mxu0 0
  %737 = vmatpush1.bf16.msra.mxu0 0
  %738 = vmatprep.subr.bf16.mxu0 0
  %739 = vmatpush1.bf16.msra.mxu0 0
  %740 = vmatprep.subr.bf16.mxu0 0
  %741 = vmatpush1.bf16.msra.mxu0 0
  %742 = vmatprep.subr.bf16.mxu0 0
  %743 = vmatpush1.bf16.msra.mxu0 0
  %744 = vmatprep.subr.bf16.mxu0 0
  %745 = vmatpush1.bf16.msra.mxu0 0
  %746 = vmatprep.subr.bf16.mxu0 0
  %747 = vmatpush1.bf16.msra.mxu0 0
  %748 = vmatprep.subr.bf16.mxu0 0
  %749 = vmatpush1.bf16.msra.mxu0 0
  %750 = vmatprep.subr.bf16.mxu0 0
  %751 = vmatpush1.bf16.msra.mxu0 0
  %752 = vmatprep.subr.bf16.mxu0 0
  %753 = vmatpush1.bf16.msra.mxu0 0
  %754 = vmatprep.subr.bf16.mxu0 0
  %755 = vmatpush1.bf16.msra.mxu0 0
  %756 = vmatprep.subr.bf16.mxu0 0
  %757 = vmatpush1.bf16.msra.mxu0 0
  %758 = vmatprep.subr.bf16.mxu0 0
  %759 = vmatpush1.bf16.msra.mxu0 0
  %760 = vmatprep.mubr.bf16.mxu0 0
  %761 = vmatmul.mubr.bf16.gmra.mrb[0].mxu0 %v705
  %v762 = vpop.f32.mrb[0].mxu0
  %v763 = vadd.f32 0.0, %v762
  %v764 = vpop.f32.mrb[0].mxu0
  %v765 = vpop.f32.mrb[0].mxu0
  %v766 = vadd.f32 0.0, %v765
  %v767 = vpop.f32.mrb[0].mxu0
  %768 = vmatprep.mubr.bf16.mxu0 0
  %769 = vmatmul.mubr.bf16.gmra.mrb[0].mxu0 %v708
  %v770 = vpop.f32.mrb[0].mxu0
  %v771 = vadd.f32 0.0, %v770
  %v772 = vpop.f32.mrb[0].mxu0
  %v773 = vpop.f32.mrb[0].mxu0
  %v774 = vadd.f32 0.0, %v773
  %v775 = vpop.f32.mrb[0].mxu0
  %776 = vmatprep.mubr.bf16.mxu0 0
  %777 = vmatmul.mubr.bf16.gmra.mrb[0].mxu0 %v711
  %v778 = vpop.f32.mrb[0].mxu0
  %v779 = vadd.f32 0.0, %v778
  %v780 = vpop.f32.mrb[0].mxu0
  %v781 = vpop.f32.mrb[0].mxu0
  %v782 = vadd.f32 0.0, %v781
  %v783 = vpop.f32.mrb[0].mxu0
  %784 = vmatprep.mubr.bf16.mxu0 0
  %785 = vmatmul.mubr.bf16.gmra.mrb[0].mxu0 %v714
  %v786 = vpop.f32.mrb[0].mxu0
  %v787 = vadd.f32 0.0, %v786
  %v788 = vpop.f32.mrb[0].mxu0
  %v789 = vpop.f32.mrb[0].mxu0
  %v790 = vadd.f32 0.0, %v789
  %v791 = vpop.f32.mrb[0].mxu0
  %792 = vmatprep.mubr.bf16.mxu0 0
  %793 = vmatmul.mubr.bf16.gmra.mrb[0].mxu0 %v717
  %v794 = vpop.f32.mrb[0].mxu0
  %v795 = vadd.f32 0.0, %v794
  %v796 = vpop.f32.mrb[0].mxu0
  %v797 = vpop.f32.mrb[0].mxu0
  %v798 = vadd.f32 0.0, %v797
  %v799 = vpop.f32.mrb[0].mxu0
  %800 = vmatprep.mubr.bf16.mxu0 0
  %801 = vmatmul.mubr.bf16.gmra.mrb[0].mxu0 %v720
  %v802 = vpop.f32.mrb[0].mxu0
  %v803 = vadd.f32 0.0, %v802
  %v804 = vpop.f32.mrb[0].mxu0
  %v805 = vpop.f32.mrb[0].mxu0
  %v806 = vadd.f32 0.0, %v805
  %v807 = vpop.f32.mrb[0].mxu0
  %808 = vmatprep.mubr.bf16.mxu0 0
  %809 = vmatmul.mubr.bf16.gmra.mrb[0].mxu0 %v723
  %v810 = vpop.f32.mrb[0].mxu0
  %v811 = vadd.f32 0.0, %v810
  %v812 = vpop.f32.mrb[0].mxu0
  %v813 = vpop.f32.mrb[0].mxu0
  %v814 = vadd.f32 0.0, %v813
  %v815 = vpop.f32.mrb[0].mxu0
  %816 = vmatprep.mubr.bf16.mxu0 0
  %817 = vmatmul.mubr.bf16.gmra.mrb[0].mxu0 %v726
  %v818 = vpop.f32.mrb[0].mxu0
  %v819 = vadd.f32 0.0, %v818
  %v820 = vpop.f32.mrb[0].mxu0
  %v821 = vpop.f32.mrb[0].mxu0
  %v822 = vadd.f32 0.0, %v821
  %v823 = vpop.f32.mrb[0].mxu0
  %824 = vdwg.mxu0
  %v825 = vadd.f32 %v629, %v763
  %v826 = vadd.f32 %v630, %v766
  %v827 = vadd.f32 %v631, %v771
  %v828 = vadd.f32 %v632, %v774
  %v829 = vadd.f32 %v633, %v779
  %v830 = vadd.f32 %v634, %v782
  %v831 = vadd.f32 %v635, %v787
  %v832 = vadd.f32 %v636, %v790
  %v833 = vadd.f32 %v637, %v795
  %v834 = vadd.f32 %v638, %v798
  %v835 = vadd.f32 %v639, %v803
  %v836 = vadd.f32 %v640, %v806
  %v837 = vadd.f32 %v641, %v811
  %v838 = vadd.f32 %v642, %v814
  %v839 = vadd.f32 %v643, %v819
  %v840 = vadd.f32 %v644, %v822
  %v841 = vld [vmem:[%s0 + $0x40] sm:$0x7]
  %s842 = scalar_lea.vmem %s1, 128
  %v843 = vld [vmem:[%s842] sm:$0xf]
  %v844 = vld [vmem:[%s842 + $0x4] sm:$0xf]
  %v845 = vld [vmem:[%s842 + $0x8] sm:$0xf]
  %v846 = vld [vmem:[%s842 + $0xc] sm:$0xf]
  %v847 = vld [vmem:[%s842 + $0x10] sm:$0xf]
  %v848 = vld [vmem:[%s842 + $0x14] sm:$0xf]
  %v849 = vld [vmem:[%s842 + $0x18] sm:$0xf]
  %v850 = vld [vmem:[%s842 + $0x1c] sm:$0xf]
  %v852 = vunpack.c.l.b16 %v841
  %v853 = vpack.c.b16 %v852, %v852
  %vm854 = vsmask.f32 5376
  %v856 = vshrl.u32 %v660, 16
  %v858 = vrot.slane %v856, 2
  %v859 = vshll.u32 %v660, 16
  %v861 = vrot.slane %v859, 3
  %v862 = vor.u32 %v858, %v861
  %v863 = vrot.slane %v114, 2
  %v864 = vrot.slane %v110, 3
  %v865 = vor.u32 %v863, %v864
  %v866 = vsel %vm854, %v862, %v865
  %v867 = vrot.slane %v122, 2
  %v868 = vrot.slane %v118, 3
  %v869 = vor.u32 %v867, %v868
  %v870 = vsel %vm854, %v865, %v869
  %v871 = vrot.slane %v130, 2
  %v872 = vrot.slane %v126, 3
  %v873 = vor.u32 %v871, %v872
  %v874 = vsel %vm854, %v869, %v873
  %v875 = vrot.slane %v138, 2
  %v876 = vrot.slane %v134, 3
  %v877 = vor.u32 %v875, %v876
  %v878 = vsel %vm854, %v873, %v877
  %v879 = vrot.slane %v146, 2
  %v880 = vrot.slane %v142, 3
  %v881 = vor.u32 %v879, %v880
  %v882 = vsel %vm854, %v877, %v881
  %v883 = vrot.slane %v154, 2
  %v884 = vrot.slane %v150, 3
  %v885 = vor.u32 %v883, %v884
  %v886 = vsel %vm854, %v881, %v885
  %v887 = vrot.slane %v162, 2
  %v888 = vrot.slane %v158, 3
  %v889 = vor.u32 %v887, %v888
  %v890 = vsel %vm854, %v885, %v889
  %v892 = vshrl.u32 %v853, 16
  %v894 = vrot.slane %v892, 2
  %v895 = vshll.u32 %v853, 16
  %v897 = vrot.slane %v895, 3
  %v898 = vor.u32 %v894, %v897
  %v899 = vsel %vm854, %v889, %v898
  %v908 = vunpack.c.l.b16 %v843
  %v909 = vunpack.c.l.b16 %v844
  %v910 = vunpack.c.l.b16 %v845
  %v911 = vunpack.c.l.b16 %v846
  %v912 = vunpack.c.l.b16 %v847
  %v913 = vunpack.c.l.b16 %v848
  %v914 = vunpack.c.l.b16 %v849
  %v915 = vunpack.c.l.b16 %v850
  %v916 = vpack.c.b16 %v909, %v908
  %v917 = vpack.c.b16 %v911, %v910
  %v918 = vpack.c.b16 %v913, %v912
  %v919 = vpack.c.b16 %v915, %v914
  %v925 = vsel %vm194, %v866, 0
  %v928 = vsel %vm194, %v870, 0
  %v931 = vsel %vm194, %v874, 0
  %v934 = vsel %vm194, %v878, 0
  %v937 = vsel %vm194, %v882, 0
  %v940 = vsel %vm194, %v886, 0
  %v943 = vsel %vm194, %v890, 0
  %v946 = vsel %vm194, %v899, 0
  %948 = vmatprep.subr.bf16.mxu0 0
  %949 = vmatpush1.bf16.msra.mxu0 %v916
  %950 = vmatprep.subr.bf16.mxu0 0
  %951 = vmatpush1.bf16.msra.mxu0 %v917
  %952 = vmatprep.subr.bf16.mxu0 0
  %953 = vmatpush1.bf16.msra.mxu0 %v918
  %954 = vmatprep.subr.bf16.mxu0 0
  %955 = vmatpush1.bf16.msra.mxu0 %v919
  %956 = vmatprep.subr.bf16.mxu0 0
  %957 = vmatpush1.bf16.msra.mxu0 0
  %958 = vmatprep.subr.bf16.mxu0 0
  %959 = vmatpush1.bf16.msra.mxu0 0
  %960 = vmatprep.subr.bf16.mxu0 0
  %961 = vmatpush1.bf16.msra.mxu0 0
  %962 = vmatprep.subr.bf16.mxu0 0
  %963 = vmatpush1.bf16.msra.mxu0 0
  %964 = vmatprep.subr.bf16.mxu0 0
  %965 = vmatpush1.bf16.msra.mxu0 0
  %966 = vmatprep.subr.bf16.mxu0 0
  %967 = vmatpush1.bf16.msra.mxu0 0
  %968 = vmatprep.subr.bf16.mxu0 0
  %969 = vmatpush1.bf16.msra.mxu0 0
  %970 = vmatprep.subr.bf16.mxu0 0
  %971 = vmatpush1.bf16.msra.mxu0 0
  %972 = vmatprep.subr.bf16.mxu0 0
  %973 = vmatpush1.bf16.msra.mxu0 0
  %974 = vmatprep.subr.bf16.mxu0 0
  %975 = vmatpush1.bf16.msra.mxu0 0
  %976 = vmatprep.subr.bf16.mxu0 0
  %977 = vmatpush1.bf16.msra.mxu0 0
  %978 = vmatprep.subr.bf16.mxu0 0
  %979 = vmatpush1.bf16.msra.mxu0 0
  %980 = vmatprep.mubr.bf16.mxu0 0
  %981 = vmatmul.mubr.bf16.gmra.mrb[0].mxu0 %v925
  %v982 = vpop.f32.mrb[0].mxu0
  %v983 = vadd.f32 0.0, %v982
  %v984 = vpop.f32.mrb[0].mxu0
  %v985 = vpop.f32.mrb[0].mxu0
  %v986 = vadd.f32 0.0, %v985
  %v987 = vpop.f32.mrb[0].mxu0
  %988 = vmatprep.mubr.bf16.mxu0 0
  %989 = vmatmul.mubr.bf16.gmra.mrb[0].mxu0 %v928
  %v990 = vpop.f32.mrb[0].mxu0
  %v991 = vadd.f32 0.0, %v990
  %v992 = vpop.f32.mrb[0].mxu0
  %v993 = vpop.f32.mrb[0].mxu0
  %v994 = vadd.f32 0.0, %v993
  %v995 = vpop.f32.mrb[0].mxu0
  %996 = vmatprep.mubr.bf16.mxu0 0
  %997 = vmatmul.mubr.bf16.gmra.mrb[0].mxu0 %v931
  %v998 = vpop.f32.mrb[0].mxu0
  %v999 = vadd.f32 0.0, %v998
  %v1000 = vpop.f32.mrb[0].mxu0
  %v1001 = vpop.f32.mrb[0].mxu0
  %v1002 = vadd.f32 0.0, %v1001
  %v1003 = vpop.f32.mrb[0].mxu0
  %1004 = vmatprep.mubr.bf16.mxu0 0
  %1005 = vmatmul.mubr.bf16.gmra.mrb[0].mxu0 %v934
  %v1006 = vpop.f32.mrb[0].mxu0
  %v1007 = vadd.f32 0.0, %v1006
  %v1008 = vpop.f32.mrb[0].mxu0
  %v1009 = vpop.f32.mrb[0].mxu0
  %v1010 = vadd.f32 0.0, %v1009
  %v1011 = vpop.f32.mrb[0].mxu0
  %1012 = vmatprep.mubr.bf16.mxu0 0
  %1013 = vmatmul.mubr.bf16.gmra.mrb[0].mxu0 %v937
  %v1014 = vpop.f32.mrb[0].mxu0
  %v1015 = vadd.f32 0.0, %v1014
  %v1016 = vpop.f32.mrb[0].mxu0
  %v1017 = vpop.f32.mrb[0].mxu0
  %v1018 = vadd.f32 0.0, %v1017
  %v1019 = vpop.f32.mrb[0].mxu0
  %1020 = vmatprep.mubr.bf16.mxu0 0
  %1021 = vmatmul.mubr.bf16.gmra.mrb[0].mxu0 %v940
  %v1022 = vpop.f32.mrb[0].mxu0
  %v1023 = vadd.f32 0.0, %v1022
  %v1024 = vpop.f32.mrb[0].mxu0
  %v1025 = vpop.f32.mrb[0].mxu0
  %v1026 = vadd.f32 0.0, %v1025
  %v1027 = vpop.f32.mrb[0].mxu0
  %1028 = vmatprep.mubr.bf16.mxu0 0
  %1029 = vmatmul.mubr.bf16.gmra.mrb[0].mxu0 %v943
  %v1030 = vpop.f32.mrb[0].mxu0
  %v1031 = vadd.f32 0.0, %v1030
  %v1032 = vpop.f32.mrb[0].mxu0
  %v1033 = vpop.f32.mrb[0].mxu0
  %v1034 = vadd.f32 0.0, %v1033
  %v1035 = vpop.f32.mrb[0].mxu0
  %1036 = vmatprep.mubr.bf16.mxu0 0
  %1037 = vmatmul.mubr.bf16.gmra.mrb[0].mxu0 %v946
  %v1038 = vpop.f32.mrb[0].mxu0
  %v1039 = vadd.f32 0.0, %v1038
  %v1040 = vpop.f32.mrb[0].mxu0
  %v1041 = vpop.f32.mrb[0].mxu0
  %v1042 = vadd.f32 0.0, %v1041
  %v1043 = vpop.f32.mrb[0].mxu0
  %1044 = vdwg.mxu0
  %v1045 = vadd.f32 %v825, %v983
  %v1046 = vadd.f32 %v826, %v986
  %v1047 = vadd.f32 %v827, %v991
  %v1048 = vadd.f32 %v828, %v994
  %v1049 = vadd.f32 %v829, %v999
  %v1050 = vadd.f32 %v830, %v1002
  %v1051 = vadd.f32 %v831, %v1007
  %v1052 = vadd.f32 %v832, %v1010
  %v1053 = vadd.f32 %v833, %v1015
  %v1054 = vadd.f32 %v834, %v1018
  %v1055 = vadd.f32 %v835, %v1023
  %v1056 = vadd.f32 %v836, %v1026
  %v1057 = vadd.f32 %v837, %v1031
  %v1058 = vadd.f32 %v838, %v1034
  %v1059 = vadd.f32 %v839, %v1039
  %v1060 = vadd.f32 %v840, %v1042
  %v1061 = vld [vmem:[%s0] sm:$0x8]
  %s1062 = scalar_lea.vmem %s1, 160
  %v1063 = vld [vmem:[%s1062] sm:$0xf]
  %v1064 = vld [vmem:[%s1062 + $0x4] sm:$0xf]
  %v1065 = vld [vmem:[%s1062 + $0x8] sm:$0xf]
  %v1066 = vld [vmem:[%s1062 + $0xc] sm:$0xf]
  %v1067 = vld [vmem:[%s1062 + $0x10] sm:$0xf]
  %v1068 = vld [vmem:[%s1062 + $0x14] sm:$0xf]
  %v1069 = vld [vmem:[%s1062 + $0x18] sm:$0xf]
  %v1070 = vld [vmem:[%s1062 + $0x1c] sm:$0xf]
  %v1072 = vunpack.c.l.b16 %v1061
  %v1073 = vpack.c.b16 %v76, %v1072
  %vm1074 = vcmask 1044480
  %v1075 = vrot.slane %v1073, 3
  %v1076 = vrot.slane %v93, 3
  %v1077 = vsel %vm1074, %v1075, %v1076
  %v1078 = vrot.slane %v94, 3
  %v1079 = vsel %vm1074, %v1076, %v1078
  %v1080 = vrot.slane %v95, 3
  %v1081 = vsel %vm1074, %v1078, %v1080
  %v1082 = vrot.slane %v96, 3
  %v1083 = vsel %vm1074, %v1080, %v1082
  %v1084 = vrot.slane %v97, 3
  %v1085 = vsel %vm1074, %v1082, %v1084
  %v1086 = vrot.slane %v98, 3
  %v1087 = vsel %vm1074, %v1084, %v1086
  %v1088 = vrot.slane %v99, 3
  %v1089 = vsel %vm1074, %v1086, %v1088
  %v1090 = vrot.slane %v853, 3
  %v1091 = vsel %vm1074, %v1088, %v1090
  %v1100 = vunpack.c.l.b16 %v1063
  %v1101 = vunpack.c.l.b16 %v1064
  %v1102 = vunpack.c.l.b16 %v1065
  %v1103 = vunpack.c.l.b16 %v1066
  %v1104 = vunpack.c.l.b16 %v1067
  %v1105 = vunpack.c.l.b16 %v1068
  %v1106 = vunpack.c.l.b16 %v1069
  %v1107 = vunpack.c.l.b16 %v1070
  %v1108 = vpack.c.b16 %v1101, %v1100
  %v1109 = vpack.c.b16 %v1103, %v1102
  %v1110 = vpack.c.b16 %v1105, %v1104
  %v1111 = vpack.c.b16 %v1107, %v1106
  %v1117 = vsel %vm194, %v1077, 0
  %v1120 = vsel %vm194, %v1079, 0
  %v1123 = vsel %vm194, %v1081, 0
  %v1126 = vsel %vm194, %v1083, 0
  %v1129 = vsel %vm194, %v1085, 0
  %v1132 = vsel %vm194, %v1087, 0
  %v1135 = vsel %vm194, %v1089, 0
  %v1138 = vsel %vm194, %v1091, 0
  %1140 = vmatprep.subr.bf16.mxu0 0
  %1141 = vmatpush1.bf16.msra.mxu0 %v1108
  %1142 = vmatprep.subr.bf16.mxu0 0
  %1143 = vmatpush1.bf16.msra.mxu0 %v1109
  %1144 = vmatprep.subr.bf16.mxu0 0
  %1145 = vmatpush1.bf16.msra.mxu0 %v1110
  %1146 = vmatprep.subr.bf16.mxu0 0
  %1147 = vmatpush1.bf16.msra.mxu0 %v1111
  %1148 = vmatprep.subr.bf16.mxu0 0
  %1149 = vmatpush1.bf16.msra.mxu0 0
  %1150 = vmatprep.subr.bf16.mxu0 0
  %1151 = vmatpush1.bf16.msra.mxu0 0
  %1152 = vmatprep.subr.bf16.mxu0 0
  %1153 = vmatpush1.bf16.msra.mxu0 0
  %1154 = vmatprep.subr.bf16.mxu0 0
  %1155 = vmatpush1.bf16.msra.mxu0 0
  %1156 = vmatprep.subr.bf16.mxu0 0
  %1157 = vmatpush1.bf16.msra.mxu0 0
  %1158 = vmatprep.subr.bf16.mxu0 0
  %1159 = vmatpush1.bf16.msra.mxu0 0
  %1160 = vmatprep.subr.bf16.mxu0 0
  %1161 = vmatpush1.bf16.msra.mxu0 0
  %1162 = vmatprep.subr.bf16.mxu0 0
  %1163 = vmatpush1.bf16.msra.mxu0 0
  %1164 = vmatprep.subr.bf16.mxu0 0
  %1165 = vmatpush1.bf16.msra.mxu0 0
  %1166 = vmatprep.subr.bf16.mxu0 0
  %1167 = vmatpush1.bf16.msra.mxu0 0
  %1168 = vmatprep.subr.bf16.mxu0 0
  %1169 = vmatpush1.bf16.msra.mxu0 0
  %1170 = vmatprep.subr.bf16.mxu0 0
  %1171 = vmatpush1.bf16.msra.mxu0 0
  %1172 = vmatprep.mubr.bf16.mxu0 0
  %1173 = vmatmul.mubr.bf16.gmra.mrb[0].mxu0 %v1117
  %v1174 = vpop.f32.mrb[0].mxu0
  %v1175 = vadd.f32 0.0, %v1174
  %v1176 = vpop.f32.mrb[0].mxu0
  %v1177 = vpop.f32.mrb[0].mxu0
  %v1178 = vadd.f32 0.0, %v1177
  %v1179 = vpop.f32.mrb[0].mxu0
  %1180 = vmatprep.mubr.bf16.mxu0 0
  %1181 = vmatmul.mubr.bf16.gmra.mrb[0].mxu0 %v1120
  %v1182 = vpop.f32.mrb[0].mxu0
  %v1183 = vadd.f32 0.0, %v1182
  %v1184 = vpop.f32.mrb[0].mxu0
  %v1185 = vpop.f32.mrb[0].mxu0
  %v1186 = vadd.f32 0.0, %v1185
  %v1187 = vpop.f32.mrb[0].mxu0
  %1188 = vmatprep.mubr.bf16.mxu0 0
  %1189 = vmatmul.mubr.bf16.gmra.mrb[0].mxu0 %v1123
  %v1190 = vpop.f32.mrb[0].mxu0
  %v1191 = vadd.f32 0.0, %v1190
  %v1192 = vpop.f32.mrb[0].mxu0
  %v1193 = vpop.f32.mrb[0].mxu0
  %v1194 = vadd.f32 0.0, %v1193
  %v1195 = vpop.f32.mrb[0].mxu0
  %1196 = vmatprep.mubr.bf16.mxu0 0
  %1197 = vmatmul.mubr.bf16.gmra.mrb[0].mxu0 %v1126
  %v1198 = vpop.f32.mrb[0].mxu0
  %v1199 = vadd.f32 0.0, %v1198
  %v1200 = vpop.f32.mrb[0].mxu0
  %v1201 = vpop.f32.mrb[0].mxu0
  %v1202 = vadd.f32 0.0, %v1201
  %v1203 = vpop.f32.mrb[0].mxu0
  %1204 = vmatprep.mubr.bf16.mxu0 0
  %1205 = vmatmul.mubr.bf16.gmra.mrb[0].mxu0 %v1129
  %v1206 = vpop.f32.mrb[0].mxu0
  %v1207 = vadd.f32 0.0, %v1206
  %v1208 = vpop.f32.mrb[0].mxu0
  %v1209 = vpop.f32.mrb[0].mxu0
  %v1210 = vadd.f32 0.0, %v1209
  %v1211 = vpop.f32.mrb[0].mxu0
  %1212 = vmatprep.mubr.bf16.mxu0 0
  %1213 = vmatmul.mubr.bf16.gmra.mrb[0].mxu0 %v1132
  %v1214 = vpop.f32.mrb[0].mxu0
  %v1215 = vadd.f32 0.0, %v1214
  %v1216 = vpop.f32.mrb[0].mxu0
  %v1217 = vpop.f32.mrb[0].mxu0
  %v1218 = vadd.f32 0.0, %v1217
  %v1219 = vpop.f32.mrb[0].mxu0
  %1220 = vmatprep.mubr.bf16.mxu0 0
  %1221 = vmatmul.mubr.bf16.gmra.mrb[0].mxu0 %v1135
  %v1222 = vpop.f32.mrb[0].mxu0
  %v1223 = vadd.f32 0.0, %v1222
  %v1224 = vpop.f32.mrb[0].mxu0
  %v1225 = vpop.f32.mrb[0].mxu0
  %v1226 = vadd.f32 0.0, %v1225
  %v1227 = vpop.f32.mrb[0].mxu0
  %1228 = vmatprep.mubr.bf16.mxu0 0
  %1229 = vmatmul.mubr.bf16.gmra.mrb[0].mxu0 %v1138
  %v1230 = vpop.f32.mrb[0].mxu0
  %v1231 = vadd.f32 0.0, %v1230
  %v1232 = vpop.f32.mrb[0].mxu0
  %v1233 = vpop.f32.mrb[0].mxu0
  %v1234 = vadd.f32 0.0, %v1233
  %v1235 = vpop.f32.mrb[0].mxu0
  %1236 = vdwg.mxu0
  %v1237 = vadd.f32 %v1045, %v1175
  %v1238 = vadd.f32 %v1046, %v1178
  %v1239 = vadd.f32 %v1047, %v1183
  %v1240 = vadd.f32 %v1048, %v1186
  %v1241 = vadd.f32 %v1049, %v1191
  %v1242 = vadd.f32 %v1050, %v1194
  %v1243 = vadd.f32 %v1051, %v1199
  %v1244 = vadd.f32 %v1052, %v1202
  %v1245 = vadd.f32 %v1053, %v1207
  %v1246 = vadd.f32 %v1054, %v1210
  %v1247 = vadd.f32 %v1055, %v1215
  %v1248 = vadd.f32 %v1056, %v1218
  %v1249 = vadd.f32 %v1057, %v1223
  %v1250 = vadd.f32 %v1058, %v1226
  %v1251 = vadd.f32 %v1059, %v1231
  %v1252 = vadd.f32 %v1060, %v1234
  %v1253 = vld [vmem:[%s0 + $0x40] sm:$0xf]
  %s1254 = scalar_lea.vmem %s1, 192
  %v1255 = vld [vmem:[%s1254] sm:$0xf]
  %v1256 = vld [vmem:[%s1254 + $0x4] sm:$0xf]
  %v1257 = vld [vmem:[%s1254 + $0x8] sm:$0xf]
  %v1258 = vld [vmem:[%s1254 + $0xc] sm:$0xf]
  %v1259 = vld [vmem:[%s1254 + $0x10] sm:$0xf]
  %v1260 = vld [vmem:[%s1254 + $0x14] sm:$0xf]
  %v1261 = vld [vmem:[%s1254 + $0x18] sm:$0xf]
  %v1262 = vld [vmem:[%s1254 + $0x1c] sm:$0xf]
  %v1264 = vunpack.c.l.b16 %v1253
  %v1265 = vpack.c.b16 %v77, %v76
  %v1266 = vpack.c.b16 %v79, %v78
  %v1267 = vpack.c.b16 %v81, %v80
  %v1268 = vpack.c.b16 %v83, %v82
  %v1269 = vpack.c.b16 %v85, %v84
  %v1270 = vpack.c.b16 %v87, %v86
  %v1271 = vpack.c.b16 %v89, %v88
  %v1272 = vpack.c.b16 %v1264, %v90
  %v1281 = vunpack.c.l.b16 %v1255
  %v1282 = vunpack.c.l.b16 %v1256
  %v1283 = vunpack.c.l.b16 %v1257
  %v1284 = vunpack.c.l.b16 %v1258
  %v1285 = vunpack.c.l.b16 %v1259
  %v1286 = vunpack.c.l.b16 %v1260
  %v1287 = vunpack.c.l.b16 %v1261
  %v1288 = vunpack.c.l.b16 %v1262
  %v1289 = vpack.c.b16 %v1282, %v1281
  %v1290 = vpack.c.b16 %v1284, %v1283
  %v1291 = vpack.c.b16 %v1286, %v1285
  %v1292 = vpack.c.b16 %v1288, %v1287
  %v1298 = vsel %vm194, %v1265, 0
  %v1301 = vsel %vm194, %v1266, 0
  %v1304 = vsel %vm194, %v1267, 0
  %v1307 = vsel %vm194, %v1268, 0
  %v1310 = vsel %vm194, %v1269, 0
  %v1313 = vsel %vm194, %v1270, 0
  %v1316 = vsel %vm194, %v1271, 0
  %v1319 = vsel %vm194, %v1272, 0
  %1321 = vmatprep.subr.bf16.mxu0 0
  %1322 = vmatpush1.bf16.msra.mxu0 %v1289
  %1323 = vmatprep.subr.bf16.mxu0 0
  %1324 = vmatpush1.bf16.msra.mxu0 %v1290
  %1325 = vmatprep.subr.bf16.mxu0 0
  %1326 = vmatpush1.bf16.msra.mxu0 %v1291
  %1327 = vmatprep.subr.bf16.mxu0 0
  %1328 = vmatpush1.bf16.msra.mxu0 %v1292
  %1329 = vmatprep.subr.bf16.mxu0 0
  %1330 = vmatpush1.bf16.msra.mxu0 0
  %1331 = vmatprep.subr.bf16.mxu0 0
  %1332 = vmatpush1.bf16.msra.mxu0 0
  %1333 = vmatprep.subr.bf16.mxu0 0
  %1334 = vmatpush1.bf16.msra.mxu0 0
  %1335 = vmatprep.subr.bf16.mxu0 0
  %1336 = vmatpush1.bf16.msra.mxu0 0
  %1337 = vmatprep.subr.bf16.mxu0 0
  %1338 = vmatpush1.bf16.msra.mxu0 0
  %1339 = vmatprep.subr.bf16.mxu0 0
  %1340 = vmatpush1.bf16.msra.mxu0 0
  %1341 = vmatprep.subr.bf16.mxu0 0
  %1342 = vmatpush1.bf16.msra.mxu0 0
  %1343 = vmatprep.subr.bf16.mxu0 0
  %1344 = vmatpush1.bf16.msra.mxu0 0
  %1345 = vmatprep.subr.bf16.mxu0 0
  %1346 = vmatpush1.bf16.msra.mxu0 0
  %1347 = vmatprep.subr.bf16.mxu0 0
  %1348 = vmatpush1.bf16.msra.mxu0 0
  %1349 = vmatprep.subr.bf16.mxu0 0
  %1350 = vmatpush1.bf16.msra.mxu0 0
  %1351 = vmatprep.subr.bf16.mxu0 0
  %1352 = vmatpush1.bf16.msra.mxu0 0
  %1353 = vmatprep.mubr.bf16.mxu0 0
  %1354 = vmatmul.mubr.bf16.gmra.mrb[0].mxu0 %v1298
  %v1355 = vpop.f32.mrb[0].mxu0
  %v1356 = vadd.f32 0.0, %v1355
  %v1357 = vpop.f32.mrb[0].mxu0
  %v1358 = vpop.f32.mrb[0].mxu0
  %v1359 = vadd.f32 0.0, %v1358
  %v1360 = vpop.f32.mrb[0].mxu0
  %1361 = vmatprep.mubr.bf16.mxu0 0
  %1362 = vmatmul.mubr.bf16.gmra.mrb[0].mxu0 %v1301
  %v1363 = vpop.f32.mrb[0].mxu0
  %v1364 = vadd.f32 0.0, %v1363
  %v1365 = vpop.f32.mrb[0].mxu0
  %v1366 = vpop.f32.mrb[0].mxu0
  %v1367 = vadd.f32 0.0, %v1366
  %v1368 = vpop.f32.mrb[0].mxu0
  %1369 = vmatprep.mubr.bf16.mxu0 0
  %1370 = vmatmul.mubr.bf16.gmra.mrb[0].mxu0 %v1304
  %v1371 = vpop.f32.mrb[0].mxu0
  %v1372 = vadd.f32 0.0, %v1371
  %v1373 = vpop.f32.mrb[0].mxu0
  %v1374 = vpop.f32.mrb[0].mxu0
  %v1375 = vadd.f32 0.0, %v1374
  %v1376 = vpop.f32.mrb[0].mxu0
  %1377 = vmatprep.mubr.bf16.mxu0 0
  %1378 = vmatmul.mubr.bf16.gmra.mrb[0].mxu0 %v1307
  %v1379 = vpop.f32.mrb[0].mxu0
  %v1380 = vadd.f32 0.0, %v1379
  %v1381 = vpop.f32.mrb[0].mxu0
  %v1382 = vpop.f32.mrb[0].mxu0
  %v1383 = vadd.f32 0.0, %v1382
  %v1384 = vpop.f32.mrb[0].mxu0
  %1385 = vmatprep.mubr.bf16.mxu0 0
  %1386 = vmatmul.mubr.bf16.gmra.mrb[0].mxu0 %v1310
  %v1387 = vpop.f32.mrb[0].mxu0
  %v1388 = vadd.f32 0.0, %v1387
  %v1389 = vpop.f32.mrb[0].mxu0
  %v1390 = vpop.f32.mrb[0].mxu0
  %v1391 = vadd.f32 0.0, %v1390
  %v1392 = vpop.f32.mrb[0].mxu0
  %1393 = vmatprep.mubr.bf16.mxu0 0
  %1394 = vmatmul.mubr.bf16.gmra.mrb[0].mxu0 %v1313
  %v1395 = vpop.f32.mrb[0].mxu0
  %v1396 = vadd.f32 0.0, %v1395
  %v1397 = vpop.f32.mrb[0].mxu0
  %v1398 = vpop.f32.mrb[0].mxu0
  %v1399 = vadd.f32 0.0, %v1398
  %v1400 = vpop.f32.mrb[0].mxu0
  %1401 = vmatprep.mubr.bf16.mxu0 0
  %1402 = vmatmul.mubr.bf16.gmra.mrb[0].mxu0 %v1316
  %v1403 = vpop.f32.mrb[0].mxu0
  %v1404 = vadd.f32 0.0, %v1403
  %v1405 = vpop.f32.mrb[0].mxu0
  %v1406 = vpop.f32.mrb[0].mxu0
  %v1407 = vadd.f32 0.0, %v1406
  %v1408 = vpop.f32.mrb[0].mxu0
  %1409 = vmatprep.mubr.bf16.mxu0 0
  %1410 = vmatmul.mubr.bf16.gmra.mrb[0].mxu0 %v1319
  %v1411 = vpop.f32.mrb[0].mxu0
  %v1412 = vadd.f32 0.0, %v1411
  %v1413 = vpop.f32.mrb[0].mxu0
  %v1414 = vpop.f32.mrb[0].mxu0
  %v1415 = vadd.f32 0.0, %v1414
  %v1416 = vpop.f32.mrb[0].mxu0
  %1417 = vdwg.mxu0
  %v1418 = vadd.f32 %v1237, %v1356
  %v1419 = vadd.f32 %v1238, %v1359
  %v1420 = vadd.f32 %v1239, %v1364
  %v1421 = vadd.f32 %v1240, %v1367
  %v1422 = vadd.f32 %v1241, %v1372
  %v1423 = vadd.f32 %v1242, %v1375
  %v1424 = vadd.f32 %v1243, %v1380
  %v1425 = vadd.f32 %v1244, %v1383
  %v1426 = vadd.f32 %v1245, %v1388
  %v1427 = vadd.f32 %v1246, %v1391
  %v1428 = vadd.f32 %v1247, %v1396
  %v1429 = vadd.f32 %v1248, %v1399
  %v1430 = vadd.f32 %v1249, %v1404
  %v1431 = vadd.f32 %v1250, %v1407
  %v1432 = vadd.f32 %v1251, %v1412
  %v1433 = vadd.f32 %v1252, %v1415
  %v1434 = vld [vmem:[%s0 + $0x4] sm:$0xf]
  %v1435 = vld [vmem:[%s0 + $0x8] sm:$0xf]
  %v1436 = vld [vmem:[%s0 + $0xc] sm:$0xf]
  %v1437 = vld [vmem:[%s0 + $0x10] sm:$0xf]
  %v1438 = vld [vmem:[%s0 + $0x14] sm:$0xf]
  %v1439 = vld [vmem:[%s0 + $0x18] sm:$0xf]
  %v1440 = vld [vmem:[%s0 + $0x1c] sm:$0xf]
  %v1441 = vld [vmem:[%s0 + $0x20] sm:$0xf]
  %v1442 = vld [vmem:[%s0 + $0x24] sm:$0xf]
  %v1443 = vld [vmem:[%s0 + $0x28] sm:$0xf]
  %v1444 = vld [vmem:[%s0 + $0x2c] sm:$0xf]
  %v1445 = vld [vmem:[%s0 + $0x30] sm:$0xf]
  %v1446 = vld [vmem:[%s0 + $0x34] sm:$0xf]
  %v1447 = vld [vmem:[%s0 + $0x38] sm:$0xf]
  %v1448 = vld [vmem:[%s0 + $0x3c] sm:$0xf]
  %v1449 = vld [vmem:[%s0 + $0x40] sm:$0xf]
  %v1450 = vld [vmem:[%s0 + $0x44] sm:$0x1]
  %s1451 = scalar_lea.vmem %s1, 224
  %v1452 = vld [vmem:[%s1451] sm:$0xf]
  %v1453 = vld [vmem:[%s1451 + $0x4] sm:$0xf]
  %v1454 = vld [vmem:[%s1451 + $0x8] sm:$0xf]
  %v1455 = vld [vmem:[%s1451 + $0xc] sm:$0xf]
  %v1456 = vld [vmem:[%s1451 + $0x10] sm:$0xf]
  %v1457 = vld [vmem:[%s1451 + $0x14] sm:$0xf]
  %v1458 = vld [vmem:[%s1451 + $0x18] sm:$0xf]
  %v1459 = vld [vmem:[%s1451 + $0x1c] sm:$0xf]
  %v1477 = vunpack.c.l.b16 %v1434
  %v1478 = vunpack.c.l.b16 %v1435
  %v1479 = vunpack.c.l.b16 %v1436
  %v1480 = vunpack.c.l.b16 %v1437
  %v1481 = vunpack.c.l.b16 %v1438
  %v1482 = vunpack.c.l.b16 %v1439
  %v1483 = vunpack.c.l.b16 %v1440
  %v1484 = vunpack.c.l.b16 %v1441
  %v1485 = vunpack.c.l.b16 %v1442
  %v1486 = vunpack.c.l.b16 %v1443
  %v1487 = vunpack.c.l.b16 %v1444
  %v1488 = vunpack.c.l.b16 %v1445
  %v1489 = vunpack.c.l.b16 %v1446
  %v1490 = vunpack.c.l.b16 %v1447
  %v1491 = vunpack.c.l.b16 %v1448
  %v1492 = vunpack.c.l.b16 %v1449
  %v1493 = vunpack.c.l.b16 %v1450
  %v1494 = vpack.c.b16 %v1478, %v1477
  %v1495 = vpack.c.b16 %v1480, %v1479
  %v1496 = vpack.c.b16 %v1482, %v1481
  %v1497 = vpack.c.b16 %v1484, %v1483
  %v1498 = vpack.c.b16 %v1486, %v1485
  %v1499 = vpack.c.b16 %v1488, %v1487
  %v1500 = vpack.c.b16 %v1490, %v1489
  %v1501 = vpack.c.b16 %v1492, %v1491
  %v1502 = vpack.c.b16 %v1493, %v1493
  %v1504 = vshrl.u32 %v1494, 16
  %v1506 = vshll.u32 %v1494, 16
  %v1508 = vrot.slane %v1506, 1
  %v1509 = vor.u32 %v1504, %v1508
  %v1511 = vshll.u32 %v1495, 16
  %v1513 = vrot.slane %v1511, 1
  %v1514 = vsel %vm101, %v1509, %v1513
  %v1515 = vshrl.u32 %v1495, 16
  %v1517 = vor.u32 %v1515, %v1513
  %v1519 = vshll.u32 %v1496, 16
  %v1521 = vrot.slane %v1519, 1
  %v1522 = vsel %vm101, %v1517, %v1521
  %v1523 = vshrl.u32 %v1496, 16
  %v1525 = vor.u32 %v1523, %v1521
  %v1527 = vshll.u32 %v1497, 16
  %v1529 = vrot.slane %v1527, 1
  %v1530 = vsel %vm101, %v1525, %v1529
  %v1531 = vshrl.u32 %v1497, 16
  %v1533 = vor.u32 %v1531, %v1529
  %v1535 = vshll.u32 %v1498, 16
  %v1537 = vrot.slane %v1535, 1
  %v1538 = vsel %vm101, %v1533, %v1537
  %v1539 = vshrl.u32 %v1498, 16
  %v1541 = vor.u32 %v1539, %v1537
  %v1543 = vshll.u32 %v1499, 16
  %v1545 = vrot.slane %v1543, 1
  %v1546 = vsel %vm101, %v1541, %v1545
  %v1547 = vshrl.u32 %v1499, 16
  %v1549 = vor.u32 %v1547, %v1545
  %v1551 = vshll.u32 %v1500, 16
  %v1553 = vrot.slane %v1551, 1
  %v1554 = vsel %vm101, %v1549, %v1553
  %v1555 = vshrl.u32 %v1500, 16
  %v1557 = vor.u32 %v1555, %v1553
  %v1559 = vshll.u32 %v1501, 16
  %v1561 = vrot.slane %v1559, 1
  %v1562 = vsel %vm101, %v1557, %v1561
  %v1563 = vshrl.u32 %v1501, 16
  %v1565 = vor.u32 %v1563, %v1561
  %v1567 = vshll.u32 %v1502, 16
  %v1569 = vrot.slane %v1567, 1
  %v1570 = vsel %vm101, %v1565, %v1569
  %v1579 = vunpack.c.l.b16 %v1452
  %v1580 = vunpack.c.l.b16 %v1453
  %v1581 = vunpack.c.l.b16 %v1454
  %v1582 = vunpack.c.l.b16 %v1455
  %v1583 = vunpack.c.l.b16 %v1456
  %v1584 = vunpack.c.l.b16 %v1457
  %v1585 = vunpack.c.l.b16 %v1458
  %v1586 = vunpack.c.l.b16 %v1459
  %v1587 = vpack.c.b16 %v1580, %v1579
  %v1588 = vpack.c.b16 %v1582, %v1581
  %v1589 = vpack.c.b16 %v1584, %v1583
  %v1590 = vpack.c.b16 %v1586, %v1585
  %v1596 = vsel %vm194, %v1514, 0
  %v1599 = vsel %vm194, %v1522, 0
  %v1602 = vsel %vm194, %v1530, 0
  %v1605 = vsel %vm194, %v1538, 0
  %v1608 = vsel %vm194, %v1546, 0
  %v1611 = vsel %vm194, %v1554, 0
  %v1614 = vsel %vm194, %v1562, 0
  %v1617 = vsel %vm194, %v1570, 0
  %1619 = vmatprep.subr.bf16.mxu0 0
  %1620 = vmatpush1.bf16.msra.mxu0 %v1587
  %1621 = vmatprep.subr.bf16.mxu0 0
  %1622 = vmatpush1.bf16.msra.mxu0 %v1588
  %1623 = vmatprep.subr.bf16.mxu0 0
  %1624 = vmatpush1.bf16.msra.mxu0 %v1589
  %1625 = vmatprep.subr.bf16.mxu0 0
  %1626 = vmatpush1.bf16.msra.mxu0 %v1590
  %1627 = vmatprep.subr.bf16.mxu0 0
  %1628 = vmatpush1.bf16.msra.mxu0 0
  %1629 = vmatprep.subr.bf16.mxu0 0
  %1630 = vmatpush1.bf16.msra.mxu0 0
  %1631 = vmatprep.subr.bf16.mxu0 0
  %1632 = vmatpush1.bf16.msra.mxu0 0
  %1633 = vmatprep.subr.bf16.mxu0 0
  %1634 = vmatpush1.bf16.msra.mxu0 0
  %1635 = vmatprep.subr.bf16.mxu0 0
  %1636 = vmatpush1.bf16.msra.mxu0 0
  %1637 = vmatprep.subr.bf16.mxu0 0
  %1638 = vmatpush1.bf16.msra.mxu0 0
  %1639 = vmatprep.subr.bf16.mxu0 0
  %1640 = vmatpush1.bf16.msra.mxu0 0
  %1641 = vmatprep.subr.bf16.mxu0 0
  %1642 = vmatpush1.bf16.msra.mxu0 0
  %1643 = vmatprep.subr.bf16.mxu0 0
  %1644 = vmatpush1.bf16.msra.mxu0 0
  %1645 = vmatprep.subr.bf16.mxu0 0
  %1646 = vmatpush1.bf16.msra.mxu0 0
  %1647 = vmatprep.subr.bf16.mxu0 0
  %1648 = vmatpush1.bf16.msra.mxu0 0
  %1649 = vmatprep.subr.bf16.mxu0 0
  %1650 = vmatpush1.bf16.msra.mxu0 0
  %1651 = vmatprep.mubr.bf16.mxu0 0
  %1652 = vmatmul.mubr.bf16.gmra.mrb[0].mxu0 %v1596
  %v1653 = vpop.f32.mrb[0].mxu0
  %v1654 = vadd.f32 0.0, %v1653
  %v1655 = vpop.f32.mrb[0].mxu0
  %v1656 = vpop.f32.mrb[0].mxu0
  %v1657 = vadd.f32 0.0, %v1656
  %v1658 = vpop.f32.mrb[0].mxu0
  %1659 = vmatprep.mubr.bf16.mxu0 0
  %1660 = vmatmul.mubr.bf16.gmra.mrb[0].mxu0 %v1599
  %v1661 = vpop.f32.mrb[0].mxu0
  %v1662 = vadd.f32 0.0, %v1661
  %v1663 = vpop.f32.mrb[0].mxu0
  %v1664 = vpop.f32.mrb[0].mxu0
  %v1665 = vadd.f32 0.0, %v1664
  %v1666 = vpop.f32.mrb[0].mxu0
  %1667 = vmatprep.mubr.bf16.mxu0 0
  %1668 = vmatmul.mubr.bf16.gmra.mrb[0].mxu0 %v1602
  %v1669 = vpop.f32.mrb[0].mxu0
  %v1670 = vadd.f32 0.0, %v1669
  %v1671 = vpop.f32.mrb[0].mxu0
  %v1672 = vpop.f32.mrb[0].mxu0
  %v1673 = vadd.f32 0.0, %v1672
  %v1674 = vpop.f32.mrb[0].mxu0
  %1675 = vmatprep.mubr.bf16.mxu0 0
  %1676 = vmatmul.mubr.bf16.gmra.mrb[0].mxu0 %v1605
  %v1677 = vpop.f32.mrb[0].mxu0
  %v1678 = vadd.f32 0.0, %v1677
  %v1679 = vpop.f32.mrb[0].mxu0
  %v1680 = vpop.f32.mrb[0].mxu0
  %v1681 = vadd.f32 0.0, %v1680
  %v1682 = vpop.f32.mrb[0].mxu0
  %1683 = vmatprep.mubr.bf16.mxu0 0
  %1684 = vmatmul.mubr.bf16.gmra.mrb[0].mxu0 %v1608
  %v1685 = vpop.f32.mrb[0].mxu0
  %v1686 = vadd.f32 0.0, %v1685
  %v1687 = vpop.f32.mrb[0].mxu0
  %v1688 = vpop.f32.mrb[0].mxu0
  %v1689 = vadd.f32 0.0, %v1688
  %v1690 = vpop.f32.mrb[0].mxu0
  %1691 = vmatprep.mubr.bf16.mxu0 0
  %1692 = vmatmul.mubr.bf16.gmra.mrb[0].mxu0 %v1611
  %v1693 = vpop.f32.mrb[0].mxu0
  %v1694 = vadd.f32 0.0, %v1693
  %v1695 = vpop.f32.mrb[0].mxu0
  %v1696 = vpop.f32.mrb[0].mxu0
  %v1697 = vadd.f32 0.0, %v1696
  %v1698 = vpop.f32.mrb[0].mxu0
  %1699 = vmatprep.mubr.bf16.mxu0 0
  %1700 = vmatmul.mubr.bf16.gmra.mrb[0].mxu0 %v1614
  %v1701 = vpop.f32.mrb[0].mxu0
  %v1702 = vadd.f32 0.0, %v1701
  %v1703 = vpop.f32.mrb[0].mxu0
  %v1704 = vpop.f32.mrb[0].mxu0
  %v1705 = vadd.f32 0.0, %v1704
  %v1706 = vpop.f32.mrb[0].mxu0
  %1707 = vmatprep.mubr.bf16.mxu0 0
  %1708 = vmatmul.mubr.bf16.gmra.mrb[0].mxu0 %v1617
  %v1709 = vpop.f32.mrb[0].mxu0
  %v1710 = vadd.f32 0.0, %v1709
  %v1711 = vpop.f32.mrb[0].mxu0
  %v1712 = vpop.f32.mrb[0].mxu0
  %v1713 = vadd.f32 0.0, %v1712
  %v1714 = vpop.f32.mrb[0].mxu0
  %1715 = vdwg.mxu0
  %v1716 = vadd.f32 %v1418, %v1654
  %v1717 = vadd.f32 %v1419, %v1657
  %v1718 = vadd.f32 %v1420, %v1662
  %v1719 = vadd.f32 %v1421, %v1665
  %v1720 = vadd.f32 %v1422, %v1670
  %v1721 = vadd.f32 %v1423, %v1673
  %v1722 = vadd.f32 %v1424, %v1678
  %v1723 = vadd.f32 %v1425, %v1681
  %v1724 = vadd.f32 %v1426, %v1686
  %v1725 = vadd.f32 %v1427, %v1689
  %v1726 = vadd.f32 %v1428, %v1694
  %v1727 = vadd.f32 %v1429, %v1697
  %v1728 = vadd.f32 %v1430, %v1702
  %v1729 = vadd.f32 %v1431, %v1705
  %v1730 = vadd.f32 %v1432, %v1710
  %v1731 = vadd.f32 %v1433, %v1713
  %v1732 = vld [vmem:[%s0 + $0x4] sm:$0xe]
  %s1733 = scalar_lea.vmem %s1, 256
  %v1734 = vld [vmem:[%s1733] sm:$0xf]
  %v1735 = vld [vmem:[%s1733 + $0x4] sm:$0xf]
  %v1736 = vld [vmem:[%s1733 + $0x8] sm:$0xf]
  %v1737 = vld [vmem:[%s1733 + $0xc] sm:$0xf]
  %v1738 = vld [vmem:[%s1733 + $0x10] sm:$0xf]
  %v1739 = vld [vmem:[%s1733 + $0x14] sm:$0xf]
  %v1740 = vld [vmem:[%s1733 + $0x18] sm:$0xf]
  %v1741 = vld [vmem:[%s1733 + $0x1c] sm:$0xf]
  %v1743 = vunpack.c.l.b16 %v1732
  %v1744 = vpack.c.b16 %v1478, %v1743
  %v1745 = vrot.slane %v1744, 1
  %v1746 = vrot.slane %v1495, 1
  %v1747 = vsel %vm466, %v1745, %v1746
  %v1748 = vrot.slane %v1496, 1
  %v1749 = vsel %vm466, %v1746, %v1748
  %v1750 = vrot.slane %v1497, 1
  %v1751 = vsel %vm466, %v1748, %v1750
  %v1752 = vrot.slane %v1498, 1
  %v1753 = vsel %vm466, %v1750, %v1752
  %v1754 = vrot.slane %v1499, 1
  %v1755 = vsel %vm466, %v1752, %v1754
  %v1756 = vrot.slane %v1500, 1
  %v1757 = vsel %vm466, %v1754, %v1756
  %v1758 = vrot.slane %v1501, 1
  %v1759 = vsel %vm466, %v1756, %v1758
  %v1760 = vrot.slane %v1502, 1
  %v1761 = vsel %vm466, %v1758, %v1760
  %v1770 = vunpack.c.l.b16 %v1734
  %v1771 = vunpack.c.l.b16 %v1735
  %v1772 = vunpack.c.l.b16 %v1736
  %v1773 = vunpack.c.l.b16 %v1737
  %v1774 = vunpack.c.l.b16 %v1738
  %v1775 = vunpack.c.l.b16 %v1739
  %v1776 = vunpack.c.l.b16 %v1740
  %v1777 = vunpack.c.l.b16 %v1741
  %v1778 = vpack.c.b16 %v1771, %v1770
  %v1779 = vpack.c.b16 %v1773, %v1772
  %v1780 = vpack.c.b16 %v1775, %v1774
  %v1781 = vpack.c.b16 %v1777, %v1776
  %v1787 = vsel %vm194, %v1747, 0
  %v1790 = vsel %vm194, %v1749, 0
  %v1793 = vsel %vm194, %v1751, 0
  %v1796 = vsel %vm194, %v1753, 0
  %v1799 = vsel %vm194, %v1755, 0
  %v1802 = vsel %vm194, %v1757, 0
  %v1805 = vsel %vm194, %v1759, 0
  %v1808 = vsel %vm194, %v1761, 0
  %1810 = vmatprep.subr.bf16.mxu0 0
  %1811 = vmatpush1.bf16.msra.mxu0 %v1778
  %1812 = vmatprep.subr.bf16.mxu0 0
  %1813 = vmatpush1.bf16.msra.mxu0 %v1779
  %1814 = vmatprep.subr.bf16.mxu0 0
  %1815 = vmatpush1.bf16.msra.mxu0 %v1780
  %1816 = vmatprep.subr.bf16.mxu0 0
  %1817 = vmatpush1.bf16.msra.mxu0 %v1781
  %1818 = vmatprep.subr.bf16.mxu0 0
  %1819 = vmatpush1.bf16.msra.mxu0 0
  %1820 = vmatprep.subr.bf16.mxu0 0
  %1821 = vmatpush1.bf16.msra.mxu0 0
  %1822 = vmatprep.subr.bf16.mxu0 0
  %1823 = vmatpush1.bf16.msra.mxu0 0
  %1824 = vmatprep.subr.bf16.mxu0 0
  %1825 = vmatpush1.bf16.msra.mxu0 0
  %1826 = vmatprep.subr.bf16.mxu0 0
  %1827 = vmatpush1.bf16.msra.mxu0 0
  %1828 = vmatprep.subr.bf16.mxu0 0
  %1829 = vmatpush1.bf16.msra.mxu0 0
  %1830 = vmatprep.subr.bf16.mxu0 0
  %1831 = vmatpush1.bf16.msra.mxu0 0
  %1832 = vmatprep.subr.bf16.mxu0 0
  %1833 = vmatpush1.bf16.msra.mxu0 0
  %1834 = vmatprep.subr.bf16.mxu0 0
  %1835 = vmatpush1.bf16.msra.mxu0 0
  %1836 = vmatprep.subr.bf16.mxu0 0
  %1837 = vmatpush1.bf16.msra.mxu0 0
  %1838 = vmatprep.subr.bf16.mxu0 0
  %1839 = vmatpush1.bf16.msra.mxu0 0
  %1840 = vmatprep.subr.bf16.mxu0 0
  %1841 = vmatpush1.bf16.msra.mxu0 0
  %1842 = vmatprep.mubr.bf16.mxu0 0
  %1843 = vmatmul.mubr.bf16.gmra.mrb[0].mxu0 %v1787
  %v1844 = vpop.f32.mrb[0].mxu0
  %v1845 = vadd.f32 0.0, %v1844
  %v1846 = vpop.f32.mrb[0].mxu0
  %v1847 = vpop.f32.mrb[0].mxu0
  %v1848 = vadd.f32 0.0, %v1847
  %v1849 = vpop.f32.mrb[0].mxu0
  %1850 = vmatprep.mubr.bf16.mxu0 0
  %1851 = vmatmul.mubr.bf16.gmra.mrb[0].mxu0 %v1790
  %v1852 = vpop.f32.mrb[0].mxu0
  %v1853 = vadd.f32 0.0, %v1852
  %v1854 = vpop.f32.mrb[0].mxu0
  %v1855 = vpop.f32.mrb[0].mxu0
  %v1856 = vadd.f32 0.0, %v1855
  %v1857 = vpop.f32.mrb[0].mxu0
  %1858 = vmatprep.mubr.bf16.mxu0 0
  %1859 = vmatmul.mubr.bf16.gmra.mrb[0].mxu0 %v1793
  %v1860 = vpop.f32.mrb[0].mxu0
  %v1861 = vadd.f32 0.0, %v1860
  %v1862 = vpop.f32.mrb[0].mxu0
  %v1863 = vpop.f32.mrb[0].mxu0
  %v1864 = vadd.f32 0.0, %v1863
  %v1865 = vpop.f32.mrb[0].mxu0
  %1866 = vmatprep.mubr.bf16.mxu0 0
  %1867 = vmatmul.mubr.bf16.gmra.mrb[0].mxu0 %v1796
  %v1868 = vpop.f32.mrb[0].mxu0
  %v1869 = vadd.f32 0.0, %v1868
  %v1870 = vpop.f32.mrb[0].mxu0
  %v1871 = vpop.f32.mrb[0].mxu0
  %v1872 = vadd.f32 0.0, %v1871
  %v1873 = vpop.f32.mrb[0].mxu0
  %1874 = vmatprep.mubr.bf16.mxu0 0
  %1875 = vmatmul.mubr.bf16.gmra.mrb[0].mxu0 %v1799
  %v1876 = vpop.f32.mrb[0].mxu0
  %v1877 = vadd.f32 0.0, %v1876
  %v1878 = vpop.f32.mrb[0].mxu0
  %v1879 = vpop.f32.mrb[0].mxu0
  %v1880 = vadd.f32 0.0, %v1879
  %v1881 = vpop.f32.mrb[0].mxu0
  %1882 = vmatprep.mubr.bf16.mxu0 0
  %1883 = vmatmul.mubr.bf16.gmra.mrb[0].mxu0 %v1802
  %v1884 = vpop.f32.mrb[0].mxu0
  %v1885 = vadd.f32 0.0, %v1884
  %v1886 = vpop.f32.mrb[0].mxu0
  %v1887 = vpop.f32.mrb[0].mxu0
  %v1888 = vadd.f32 0.0, %v1887
  %v1889 = vpop.f32.mrb[0].mxu0
  %1890 = vmatprep.mubr.bf16.mxu0 0
  %1891 = vmatmul.mubr.bf16.gmra.mrb[0].mxu0 %v1805
  %v1892 = vpop.f32.mrb[0].mxu0
  %v1893 = vadd.f32 0.0, %v1892
  %v1894 = vpop.f32.mrb[0].mxu0
  %v1895 = vpop.f32.mrb[0].mxu0
  %v1896 = vadd.f32 0.0, %v1895
  %v1897 = vpop.f32.mrb[0].mxu0
  %1898 = vmatprep.mubr.bf16.mxu0 0
  %1899 = vmatmul.mubr.bf16.gmra.mrb[0].mxu0 %v1808
  %v1900 = vpop.f32.mrb[0].mxu0
  %v1901 = vadd.f32 0.0, %v1900
  %v1902 = vpop.f32.mrb[0].mxu0
  %v1903 = vpop.f32.mrb[0].mxu0
  %v1904 = vadd.f32 0.0, %v1903
  %v1905 = vpop.f32.mrb[0].mxu0
  %1906 = vdwg.mxu0
  %v1907 = vadd.f32 %v1716, %v1845
  %v1908 = vadd.f32 %v1717, %v1848
  %v1909 = vadd.f32 %v1718, %v1853
  %v1910 = vadd.f32 %v1719, %v1856
  %v1911 = vadd.f32 %v1720, %v1861
  %v1912 = vadd.f32 %v1721, %v1864
  %v1913 = vadd.f32 %v1722, %v1869
  %v1914 = vadd.f32 %v1723, %v1872
  %v1915 = vadd.f32 %v1724, %v1877
  %v1916 = vadd.f32 %v1725, %v1880
  %v1917 = vadd.f32 %v1726, %v1885
  %v1918 = vadd.f32 %v1727, %v1888
  %v1919 = vadd.f32 %v1728, %v1893
  %v1920 = vadd.f32 %v1729, %v1896
  %v1921 = vadd.f32 %v1730, %v1901
  %v1922 = vadd.f32 %v1731, %v1904
  %v1923 = vld [vmem:[%s2] sm:$0x1]
  %v1925 = vlaneseq
  %v1926 = vshrl.u32 %v1925, 7
  %v1927 = vsub.s32 0, %v1926
  %v1928 = vrot.slane %v1923, %v1927
  %v1930 = vadd.f32 %v1907, %v1928
  %v1931 = vadd.f32 %v1908, %v1928
  %v1932 = vadd.f32 %v1909, %v1928
  %v1933 = vadd.f32 %v1910, %v1928
  %v1934 = vadd.f32 %v1911, %v1928
  %v1935 = vadd.f32 %v1912, %v1928
  %v1936 = vadd.f32 %v1913, %v1928
  %v1937 = vadd.f32 %v1914, %v1928
  %v1938 = vadd.f32 %v1915, %v1928
  %v1939 = vadd.f32 %v1916, %v1928
  %v1940 = vadd.f32 %v1917, %v1928
  %v1941 = vadd.f32 %v1918, %v1928
  %v1942 = vadd.f32 %v1919, %v1928
  %v1943 = vadd.f32 %v1920, %v1928
  %v1944 = vadd.f32 %v1921, %v1928
  %v1945 = vadd.f32 %v1922, %v1928
  %v1946 = vunpack.c.l.bf16 %v645
  %v1947 = vunpack.c.l.bf16 %v25
  %v1948 = vunpack.c.l.bf16 %v26
  %v1949 = vunpack.c.l.bf16 %v27
  %v1950 = vunpack.c.l.bf16 %v28
  %v1951 = vunpack.c.l.bf16 %v29
  %v1952 = vunpack.c.l.bf16 %v30
  %v1953 = vunpack.c.l.bf16 %v31
  %v1954 = vunpack.c.l.bf16 %v32
  %v1955 = vunpack.c.l.bf16 %v33
  %v1956 = vunpack.c.l.bf16 %v34
  %v1957 = vunpack.c.l.bf16 %v35
  %v1958 = vunpack.c.l.bf16 %v36
  %v1959 = vunpack.c.l.bf16 %v37
  %v1960 = vunpack.c.l.bf16 %v38
  %v1961 = vunpack.c.l.bf16 %v39
  %v1962 = vunpack.c.l.bf16 %v841
  %vm1980 = vcmask 1042432
  %v1981 = vrot.slane %v1946, 5
  %v1982 = vrot.slane %v1947, 5
  %v1983 = vsel %vm1980, %v1981, %v1982
  %v1984 = vrot.slane %v1948, 5
  %v1985 = vsel %vm1980, %v1982, %v1984
  %v1986 = vrot.slane %v1949, 5
  %v1987 = vsel %vm1980, %v1984, %v1986
  %v1988 = vrot.slane %v1950, 5
  %v1989 = vsel %vm1980, %v1986, %v1988
  %v1990 = vrot.slane %v1951, 5
  %v1991 = vsel %vm1980, %v1988, %v1990
  %v1992 = vrot.slane %v1952, 5
  %v1993 = vsel %vm1980, %v1990, %v1992
  %v1994 = vrot.slane %v1953, 5
  %v1995 = vsel %vm1980, %v1992, %v1994
  %v1996 = vrot.slane %v1954, 5
  %v1997 = vsel %vm1980, %v1994, %v1996
  %v1998 = vrot.slane %v1955, 5
  %v1999 = vsel %vm1980, %v1996, %v1998
  %v2000 = vrot.slane %v1956, 5
  %v2001 = vsel %vm1980, %v1998, %v2000
  %v2002 = vrot.slane %v1957, 5
  %v2003 = vsel %vm1980, %v2000, %v2002
  %v2004 = vrot.slane %v1958, 5
  %v2005 = vsel %vm1980, %v2002, %v2004
  %v2006 = vrot.slane %v1959, 5
  %v2007 = vsel %vm1980, %v2004, %v2006
  %v2008 = vrot.slane %v1960, 5
  %v2009 = vsel %vm1980, %v2006, %v2008
  %v2010 = vrot.slane %v1961, 5
  %v2011 = vsel %vm1980, %v2008, %v2010
  %v2012 = vrot.slane %v1962, 5
  %v2013 = vsel %vm1980, %v2010, %v2012
  %v2030 = vadd.f32 %v1930, %v1983
  %v2031 = vadd.f32 %v1931, %v1985
  %v2032 = vadd.f32 %v1932, %v1987
  %v2033 = vadd.f32 %v1933, %v1989
  %v2034 = vadd.f32 %v1934, %v1991
  %v2035 = vadd.f32 %v1935, %v1993
  %v2036 = vadd.f32 %v1936, %v1995
  %v2037 = vadd.f32 %v1937, %v1997
  %v2038 = vadd.f32 %v1938, %v1999
  %v2039 = vadd.f32 %v1939, %v2001
  %v2040 = vadd.f32 %v1940, %v2003
  %v2041 = vadd.f32 %v1941, %v2005
  %v2042 = vadd.f32 %v1942, %v2007
  %v2043 = vadd.f32 %v1943, %v2009
  %v2044 = vadd.f32 %v1944, %v2011
  %v2045 = vadd.f32 %v1945, %v2013
  %v2046 = vmax.f32 %v2030, 0.0
  %v2047 = vmax.f32 %v2031, 0.0
  %v2048 = vmax.f32 %v2032, 0.0
  %v2049 = vmax.f32 %v2033, 0.0
  %v2050 = vmax.f32 %v2034, 0.0
  %v2051 = vmax.f32 %v2035, 0.0
  %v2052 = vmax.f32 %v2036, 0.0
  %v2053 = vmax.f32 %v2037, 0.0
  %v2054 = vmax.f32 %v2038, 0.0
  %v2055 = vmax.f32 %v2039, 0.0
  %v2056 = vmax.f32 %v2040, 0.0
  %v2057 = vmax.f32 %v2041, 0.0
  %v2058 = vmax.f32 %v2042, 0.0
  %v2059 = vmax.f32 %v2043, 0.0
  %v2060 = vmax.f32 %v2044, 0.0
  %v2061 = vmax.f32 %v2045, 0.0
  %v2062 = vld [vmem:[%s5] sm:$0xff]
  %v2063 = vld [vmem:[%s5 + $0x8] sm:$0xff]
  %v2064 = vld [vmem:[%s5 + $0x10] sm:$0xff]
  %v2065 = vld [vmem:[%s5 + $0x18] sm:$0xff]
  %v2066 = vld [vmem:[%s5 + $0x20] sm:$0xff]
  %v2067 = vld [vmem:[%s5 + $0x28] sm:$0xff]
  %v2068 = vld [vmem:[%s5 + $0x30] sm:$0xff]
  %v2069 = vld [vmem:[%s5 + $0x38] sm:$0xff]
  %v2070 = vld [vmem:[%s5 + $0x40] sm:$0xff]
  %v2071 = vld [vmem:[%s5 + $0x48] sm:$0xff]
  %v2072 = vld [vmem:[%s5 + $0x50] sm:$0xff]
  %v2073 = vld [vmem:[%s5 + $0x58] sm:$0xff]
  %v2074 = vld [vmem:[%s5 + $0x60] sm:$0xff]
  %v2075 = vld [vmem:[%s5 + $0x68] sm:$0xff]
  %v2076 = vld [vmem:[%s5 + $0x70] sm:$0xff]
  %v2077 = vld [vmem:[%s5 + $0x78] sm:$0xff]
  %2079 = vset.pattern.permute.xlu0 0
  %2080 = vperm.xlu0 %2079, %v2062
  %v2081 = vpop.permute.xlu0 %2080
  %2084 = vset.pattern.permute.xlu0 0
  %2085 = vperm.xlu0 %2084, %v2063
  %v2086 = vpop.permute.xlu0 %2085
  %2089 = vset.pattern.permute.xlu0 0
  %2090 = vperm.xlu0 %2089, %v2064
  %v2091 = vpop.permute.xlu0 %2090
  %2094 = vset.pattern.permute.xlu0 0
  %2095 = vperm.xlu0 %2094, %v2065
  %v2096 = vpop.permute.xlu0 %2095
  %2099 = vset.pattern.permute.xlu0 0
  %2100 = vperm.xlu0 %2099, %v2066
  %v2101 = vpop.permute.xlu0 %2100
  %2104 = vset.pattern.permute.xlu0 0
  %2105 = vperm.xlu0 %2104, %v2067
  %v2106 = vpop.permute.xlu0 %2105
  %2109 = vset.pattern.permute.xlu0 0
  %2110 = vperm.xlu0 %2109, %v2068
  %v2111 = vpop.permute.xlu0 %2110
  %2114 = vset.pattern.permute.xlu0 0
  %2115 = vperm.xlu0 %2114, %v2069
  %v2116 = vpop.permute.xlu0 %2115
  %2119 = vset.pattern.permute.xlu0 0
  %2120 = vperm.xlu0 %2119, %v2070
  %v2121 = vpop.permute.xlu0 %2120
  %2124 = vset.pattern.permute.xlu0 0
  %2125 = vperm.xlu0 %2124, %v2071
  %v2126 = vpop.permute.xlu0 %2125
  %2129 = vset.pattern.permute.xlu0 0
  %2130 = vperm.xlu0 %2129, %v2072
  %v2131 = vpop.permute.xlu0 %2130
  %2134 = vset.pattern.permute.xlu0 0
  %2135 = vperm.xlu0 %2134, %v2073
  %v2136 = vpop.permute.xlu0 %2135
  %2139 = vset.pattern.permute.xlu0 0
  %2140 = vperm.xlu0 %2139, %v2074
  %v2141 = vpop.permute.xlu0 %2140
  %2144 = vset.pattern.permute.xlu0 0
  %2145 = vperm.xlu0 %2144, %v2075
  %v2146 = vpop.permute.xlu0 %2145
  %2149 = vset.pattern.permute.xlu0 0
  %2150 = vperm.xlu0 %2149, %v2076
  %v2151 = vpop.permute.xlu0 %2150
  %2154 = vset.pattern.permute.xlu0 0
  %2155 = vperm.xlu0 %2154, %v2077
  %v2156 = vpop.permute.xlu0 %2155
  %v2158 = vmul.f32 %v2046, %v2081
  %v2159 = vmul.f32 %v2047, %v2086
  %v2160 = vmul.f32 %v2048, %v2091
  %v2161 = vmul.f32 %v2049, %v2096
  %v2162 = vmul.f32 %v2050, %v2101
  %v2163 = vmul.f32 %v2051, %v2106
  %v2164 = vmul.f32 %v2052, %v2111
  %v2165 = vmul.f32 %v2053, %v2116
  %v2166 = vmul.f32 %v2054, %v2121
  %v2167 = vmul.f32 %v2055, %v2126
  %v2168 = vmul.f32 %v2056, %v2131
  %v2169 = vmul.f32 %v2057, %v2136
  %v2170 = vmul.f32 %v2058, %v2141
  %v2171 = vmul.f32 %v2059, %v2146
  %v2172 = vmul.f32 %v2060, %v2151
  %v2173 = vmul.f32 %v2061, %v2156
  %vm2174 = vcmask 519168
  %2175 = vst.msk [vmem:[#allocation2] sm:$0xf] %vm2174, 0
  %2176 = vst.msk [vmem:[#allocation2 + $0x4] sm:$0xf] %vm2174, 0
  %2177 = vst.msk [vmem:[#allocation2 + $0x8] sm:$0xf] %vm2174, 0
  %2178 = vst.msk [vmem:[#allocation2 + $0xc] sm:$0xf] %vm2174, 0
  %2179 = vst.msk [vmem:[#allocation2 + $0x10] sm:$0xf] %vm2174, 0
  %2180 = vst.msk [vmem:[#allocation2 + $0x14] sm:$0xf] %vm2174, 0
  %2181 = vst.msk [vmem:[#allocation2 + $0x18] sm:$0xf] %vm2174, 0
  %2182 = vst.msk [vmem:[#allocation2 + $0x1c] sm:$0xf] %vm2174, 0
  %2183 = vst.msk [vmem:[#allocation2 + $0x20] sm:$0xf] %vm2174, 0
  %2184 = vst.msk [vmem:[#allocation2 + $0x24] sm:$0xf] %vm2174, 0
  %2185 = vst.msk [vmem:[#allocation2 + $0x28] sm:$0xf] %vm2174, 0
  %2186 = vst.msk [vmem:[#allocation2 + $0x2c] sm:$0xf] %vm2174, 0
  %2187 = vst.msk [vmem:[#allocation2 + $0x30] sm:$0xf] %vm2174, 0
  %2188 = vst.msk [vmem:[#allocation2 + $0x34] sm:$0xf] %vm2174, 0
  %2189 = vst.msk [vmem:[#allocation2 + $0x38] sm:$0xf] %vm2174, 0
  %2190 = vst.msk [vmem:[#allocation2 + $0x3c] sm:$0xf] %vm2174, 0
  %2191 = vst.msk [vmem:[#allocation2 + $0x40] sm:$0xf] %vm2174, 0
  %vm2192 = vcmask 516096
  %2193 = vst.msk [vmem:[#allocation2 + $0x44] sm:$0x1] %vm2192, 0
  %v2194 = vpack.c.bf16 %v2159, %v2158
  %v2195 = vpack.c.bf16 %v2161, %v2160
  %v2196 = vpack.c.bf16 %v2163, %v2162
  %v2197 = vpack.c.bf16 %v2165, %v2164
  %v2198 = vpack.c.bf16 %v2167, %v2166
  %v2199 = vpack.c.bf16 %v2169, %v2168
  %v2200 = vpack.c.bf16 %v2171, %v2170
  %v2201 = vpack.c.bf16 %v2173, %v2172
  %v2210 = vunpack.c.l.b16 %v2194
  %v2211 = vunpack.c.h.b16 %v2194
  %v2212 = vunpack.c.l.b16 %v2195
  %v2213 = vunpack.c.h.b16 %v2195
  %v2214 = vunpack.c.l.b16 %v2196
  %v2215 = vunpack.c.h.b16 %v2196
  %v2216 = vunpack.c.l.b16 %v2197
  %v2217 = vunpack.c.h.b16 %v2197
  %v2218 = vunpack.c.l.b16 %v2198
  %v2219 = vunpack.c.h.b16 %v2198
  %v2220 = vunpack.c.l.b16 %v2199
  %v2221 = vunpack.c.h.b16 %v2199
  %v2222 = vunpack.c.l.b16 %v2200
  %v2223 = vunpack.c.h.b16 %v2200
  %v2224 = vunpack.c.l.b16 %v2201
  %v2225 = vunpack.c.h.b16 %v2201
  %v2226 = vpack.c.b16 %v2210, %v2210
  %v2227 = vpack.c.b16 %v2211, %v2211
  %v2228 = vpack.c.b16 %v2212, %v2212
  %v2229 = vpack.c.b16 %v2213, %v2213
  %v2230 = vpack.c.b16 %v2214, %v2214
  %v2231 = vpack.c.b16 %v2215, %v2215
  %v2232 = vpack.c.b16 %v2216, %v2216
  %v2233 = vpack.c.b16 %v2217, %v2217
  %v2234 = vpack.c.b16 %v2218, %v2218
  %v2235 = vpack.c.b16 %v2219, %v2219
  %v2236 = vpack.c.b16 %v2220, %v2220
  %v2237 = vpack.c.b16 %v2221, %v2221
  %v2238 = vpack.c.b16 %v2222, %v2222
  %v2239 = vpack.c.b16 %v2223, %v2223
  %v2240 = vpack.c.b16 %v2224, %v2224
  %v2241 = vpack.c.b16 %v2225, %v2225
  %vm2242 = vsmask.f32 2304
  %vm2243 = vsmask.f32 6416
  %vm2244 = vmor %vm2242, %vm2243
  %v2246 = vshrl.u32 %v2226, 16
  %v2248 = vrot.slane %v2246, 5
  %v2249 = vshll.u32 %v2226, 16
  %v2251 = vrot.slane %v2249, 6
  %v2252 = vor.u32 %v2248, %v2251
  %v2253 = vrot.slane %v2252, 4
  %v2255 = vshrl.u32 %v2227, 16
  %v2257 = vrot.slane %v2255, 5
  %v2258 = vshll.u32 %v2227, 16
  %v2260 = vrot.slane %v2258, 6
  %v2261 = vor.u32 %v2257, %v2260
  %v2262 = vsel %vm2244, %v2253, %v2261
  %v2263 = vrot.slane %v2261, 4
  %v2265 = vshrl.u32 %v2228, 16
  %v2267 = vrot.slane %v2265, 5
  %v2268 = vshll.u32 %v2228, 16
  %v2270 = vrot.slane %v2268, 6
  %v2271 = vor.u32 %v2267, %v2270
  %v2272 = vsel %vm2244, %v2263, %v2271
  %v2273 = vrot.slane %v2271, 4
  %v2275 = vshrl.u32 %v2229, 16
  %v2277 = vrot.slane %v2275, 5
  %v2278 = vshll.u32 %v2229, 16
  %v2280 = vrot.slane %v2278, 6
  %v2281 = vor.u32 %v2277, %v2280
  %v2282 = vsel %vm2244, %v2273, %v2281
  %v2283 = vrot.slane %v2281, 4
  %v2285 = vshrl.u32 %v2230, 16
  %v2287 = vrot.slane %v2285, 5
  %v2288 = vshll.u32 %v2230, 16
  %v2290 = vrot.slane %v2288, 6
  %v2291 = vor.u32 %v2287, %v2290
  %v2292 = vsel %vm2244, %v2283, %v2291
  %v2293 = vrot.slane %v2291, 4
  %v2295 = vshrl.u32 %v2231, 16
  %v2297 = vrot.slane %v2295, 5
  %v2298 = vshll.u32 %v2231, 16
  %v2300 = vrot.slane %v2298, 6
  %v2301 = vor.u32 %v2297, %v2300
  %v2302 = vsel %vm2244, %v2293, %v2301
  %v2303 = vrot.slane %v2301, 4
  %v2305 = vshrl.u32 %v2232, 16
  %v2307 = vrot.slane %v2305, 5
  %v2308 = vshll.u32 %v2232, 16
  %v2310 = vrot.slane %v2308, 6
  %v2311 = vor.u32 %v2307, %v2310
  %v2312 = vsel %vm2244, %v2303, %v2311
  %v2313 = vrot.slane %v2311, 4
  %v2315 = vshrl.u32 %v2233, 16
  %v2317 = vrot.slane %v2315, 5
  %v2318 = vshll.u32 %v2233, 16
  %v2320 = vrot.slane %v2318, 6
  %v2321 = vor.u32 %v2317, %v2320
  %v2322 = vsel %vm2244, %v2313, %v2321
  %v2323 = vrot.slane %v2321, 4
  %v2325 = vshrl.u32 %v2234, 16
  %v2327 = vrot.slane %v2325, 5
  %v2328 = vshll.u32 %v2234, 16
  %v2330 = vrot.slane %v2328, 6
  %v2331 = vor.u32 %v2327, %v2330
  %v2332 = vsel %vm2244, %v2323, %v2331
  %v2333 = vrot.slane %v2331, 4
  %v2335 = vshrl.u32 %v2235, 16
  %v2337 = vrot.slane %v2335, 5
  %v2338 = vshll.u32 %v2235, 16
  %v2340 = vrot.slane %v2338, 6
  %v2341 = vor.u32 %v2337, %v2340
  %v2342 = vsel %vm2244, %v2333, %v2341
  %v2343 = vrot.slane %v2341, 4
  %v2345 = vshrl.u32 %v2236, 16
  %v2347 = vrot.slane %v2345, 5
  %v2348 = vshll.u32 %v2236, 16
  %v2350 = vrot.slane %v2348, 6
  %v2351 = vor.u32 %v2347, %v2350
  %v2352 = vsel %vm2244, %v2343, %v2351
  %v2353 = vrot.slane %v2351, 4
  %v2355 = vshrl.u32 %v2237, 16
  %v2357 = vrot.slane %v2355, 5
  %v2358 = vshll.u32 %v2237, 16
  %v2360 = vrot.slane %v2358, 6
  %v2361 = vor.u32 %v2357, %v2360
  %v2362 = vsel %vm2244, %v2353, %v2361
  %v2363 = vrot.slane %v2361, 4
  %v2365 = vshrl.u32 %v2238, 16
  %v2367 = vrot.slane %v2365, 5
  %v2368 = vshll.u32 %v2238, 16
  %v2370 = vrot.slane %v2368, 6
  %v2371 = vor.u32 %v2367, %v2370
  %v2372 = vsel %vm2244, %v2363, %v2371
  %v2373 = vrot.slane %v2371, 4
  %v2375 = vshrl.u32 %v2239, 16
  %v2377 = vrot.slane %v2375, 5
  %v2378 = vshll.u32 %v2239, 16
  %v2380 = vrot.slane %v2378, 6
  %v2381 = vor.u32 %v2377, %v2380
  %v2382 = vsel %vm2244, %v2373, %v2381
  %v2383 = vrot.slane %v2381, 4
  %v2385 = vshrl.u32 %v2240, 16
  %v2387 = vrot.slane %v2385, 5
  %v2388 = vshll.u32 %v2240, 16
  %v2390 = vrot.slane %v2388, 6
  %v2391 = vor.u32 %v2387, %v2390
  %v2392 = vsel %vm2244, %v2383, %v2391
  %v2393 = vrot.slane %v2391, 4
  %v2395 = vshrl.u32 %v2241, 16
  %v2397 = vrot.slane %v2395, 5
  %v2398 = vshll.u32 %v2241, 16
  %v2400 = vrot.slane %v2398, 6
  %v2401 = vor.u32 %v2397, %v2400
  %v2402 = vsel %vm2244, %v2393, %v2401
  %v2403 = vrot.slane %v2401, 4
  %vm2421 = vcmask 519170
  %vm2422 = vsmask.f32 7946
  %vm2423 = vmand %vm2421, %vm2422
  %v2424 = vld [vmem:[#allocation2] sm:$0xc]
  %v2425 = vsel %vm2423, %v2252, %v2424
  %2426 = vst [vmem:[#allocation2] sm:$0xc] %v2425
  %2427 = vst.msk [vmem:[#allocation2 + $0x4] sm:$0xf] %vm2174, %v2262
  %2428 = vst.msk [vmem:[#allocation2 + $0x8] sm:$0xf] %vm2174, %v2272
  %2429 = vst.msk [vmem:[#allocation2 + $0xc] sm:$0xf] %vm2174, %v2282
  %2430 = vst.msk [vmem:[#allocation2 + $0x10] sm:$0xf] %vm2174, %v2292
  %2431 = vst.msk [vmem:[#allocation2 + $0x14] sm:$0xf] %vm2174, %v2302
  %2432 = vst.msk [vmem:[#allocation2 + $0x18] sm:$0xf] %vm2174, %v2312
  %2433 = vst.msk [vmem:[#allocation2 + $0x1c] sm:$0xf] %vm2174, %v2322
  %2434 = vst.msk [vmem:[#allocation2 + $0x20] sm:$0xf] %vm2174, %v2332
  %2435 = vst.msk [vmem:[#allocation2 + $0x24] sm:$0xf] %vm2174, %v2342
  %2436 = vst.msk [vmem:[#allocation2 + $0x28] sm:$0xf] %vm2174, %v2352
  %2437 = vst.msk [vmem:[#allocation2 + $0x2c] sm:$0xf] %vm2174, %v2362
  %2438 = vst.msk [vmem:[#allocation2 + $0x30] sm:$0xf] %vm2174, %v2372
  %2439 = vst.msk [vmem:[#allocation2 + $0x34] sm:$0xf] %vm2174, %v2382
  %2440 = vst.msk [vmem:[#allocation2 + $0x38] sm:$0xf] %vm2174, %v2392
  %2441 = vst.msk [vmem:[#allocation2 + $0x3c] sm:$0xf] %vm2174, %v2402
  %vm2442 = vcmask 518144
  %vm2443 = vmand %vm2442, %vm2242
  %v2444 = vld [vmem:[#allocation2 + $0x40] sm:$0x7]
  %v2445 = vsel %vm2443, %v2403, %v2444
  %2446 = vst [vmem:[#allocation2 + $0x40] sm:$0x7] %v2445
  %v2447 = vld [vmem:[#allocation2] sm:$0xf]
  %v2448 = vld [vmem:[#allocation2 + $0x4] sm:$0xf]
  %v2449 = vld [vmem:[#allocation2 + $0x8] sm:$0xf]
  %v2450 = vld [vmem:[#allocation2 + $0xc] sm:$0xf]
  %v2451 = vld [vmem:[#allocation2 + $0x10] sm:$0xf]
  %v2452 = vld [vmem:[#allocation2 + $0x14] sm:$0xf]
  %v2453 = vld [vmem:[#allocation2 + $0x18] sm:$0xf]
  %v2454 = vld [vmem:[#allocation2 + $0x1c] sm:$0xf]
  %v2455 = vld [vmem:[#allocation2 + $0x20] sm:$0xf]
  %v2456 = vld [vmem:[#allocation2 + $0x24] sm:$0xf]
  %v2457 = vld [vmem:[#allocation2 + $0x28] sm:$0xf]
  %v2458 = vld [vmem:[#allocation2 + $0x2c] sm:$0xf]
  %v2459 = vld [vmem:[#allocation2 + $0x30] sm:$0xf]
  %v2460 = vld [vmem:[#allocation2 + $0x34] sm:$0xf]
  %v2461 = vld [vmem:[#allocation2 + $0x38] sm:$0xf]
  %v2462 = vld [vmem:[#allocation2 + $0x3c] sm:$0xf]
  %v2463 = vld [vmem:[%s3] sm:$0xf]
  %v2464 = vld [vmem:[%s3 + $0x4] sm:$0xf]
  %v2465 = vld [vmem:[%s3 + $0x8] sm:$0xf]
  %v2466 = vld [vmem:[%s3 + $0xc] sm:$0xf]
  %v2467 = vld [vmem:[%s3 + $0x10] sm:$0xf]
  %v2468 = vld [vmem:[%s3 + $0x14] sm:$0xf]
  %v2469 = vld [vmem:[%s3 + $0x18] sm:$0xf]
  %v2470 = vld [vmem:[%s3 + $0x1c] sm:$0xf]
  %v2471 = vld [vmem:[#allocation2 + $0x40] sm:$0x1]
  %s2472 = scalar_lea.vmem %s3, 32
  %v2473 = vld [vmem:[%s2472] sm:$0xf]
  %v2474 = vld [vmem:[%s2472 + $0x4] sm:$0xf]
  %v2475 = vld [vmem:[%s2472 + $0x8] sm:$0xf]
  %v2476 = vld [vmem:[%s2472 + $0xc] sm:$0xf]
  %v2477 = vld [vmem:[%s2472 + $0x10] sm:$0xf]
  %v2478 = vld [vmem:[%s2472 + $0x14] sm:$0xf]
  %v2479 = vld [vmem:[%s2472 + $0x18] sm:$0xf]
  %v2480 = vld [vmem:[%s2472 + $0x1c] sm:$0xf]
  %v2498 = vunpack.c.l.b16 %v2447
  %v2499 = vunpack.c.l.b16 %v2448
  %v2500 = vunpack.c.l.b16 %v2449
  %v2501 = vunpack.c.l.b16 %v2450
  %v2502 = vunpack.c.l.b16 %v2451
  %v2503 = vunpack.c.l.b16 %v2452
  %v2504 = vunpack.c.l.b16 %v2453
  %v2505 = vunpack.c.l.b16 %v2454
  %v2506 = vunpack.c.l.b16 %v2455
  %v2507 = vunpack.c.l.b16 %v2456
  %v2508 = vunpack.c.l.b16 %v2457
  %v2509 = vunpack.c.l.b16 %v2458
  %v2510 = vunpack.c.l.b16 %v2459
  %v2511 = vunpack.c.l.b16 %v2460
  %v2512 = vunpack.c.l.b16 %v2461
  %v2513 = vunpack.c.l.b16 %v2462
  %v2514 = vunpack.c.l.b16 %v2471
  %v2515 = vpack.c.b16 %v2499, %v2498
  %v2516 = vpack.c.b16 %v2501, %v2500
  %v2517 = vpack.c.b16 %v2503, %v2502
  %v2518 = vpack.c.b16 %v2505, %v2504
  %v2519 = vpack.c.b16 %v2507, %v2506
  %v2520 = vpack.c.b16 %v2509, %v2508
  %v2521 = vpack.c.b16 %v2511, %v2510
  %v2522 = vpack.c.b16 %v2513, %v2512
  %v2523 = vpack.c.b16 %v2514, %v2514
  %v2525 = vshrl.u32 %v2515, 16
  %v2527 = vshll.u32 %v2515, 16
  %v2529 = vrot.slane %v2527, 1
  %v2530 = vor.u32 %v2525, %v2529
  %v2532 = vshll.u32 %v2516, 16
  %v2534 = vrot.slane %v2532, 1
  %v2535 = vsel %vm101, %v2530, %v2534
  %v2536 = vshrl.u32 %v2516, 16
  %v2538 = vor.u32 %v2536, %v2534
  %v2540 = vshll.u32 %v2517, 16
  %v2542 = vrot.slane %v2540, 1
  %v2543 = vsel %vm101, %v2538, %v2542
  %v2544 = vshrl.u32 %v2517, 16
  %v2546 = vor.u32 %v2544, %v2542
  %v2548 = vshll.u32 %v2518, 16
  %v2550 = vrot.slane %v2548, 1
  %v2551 = vsel %vm101, %v2546, %v2550
  %v2552 = vshrl.u32 %v2518, 16
  %v2554 = vor.u32 %v2552, %v2550
  %v2556 = vshll.u32 %v2519, 16
  %v2558 = vrot.slane %v2556, 1
  %v2559 = vsel %vm101, %v2554, %v2558
  %v2560 = vshrl.u32 %v2519, 16
  %v2562 = vor.u32 %v2560, %v2558
  %v2564 = vshll.u32 %v2520, 16
  %v2566 = vrot.slane %v2564, 1
  %v2567 = vsel %vm101, %v2562, %v2566
  %v2568 = vshrl.u32 %v2520, 16
  %v2570 = vor.u32 %v2568, %v2566
  %v2572 = vshll.u32 %v2521, 16
  %v2574 = vrot.slane %v2572, 1
  %v2575 = vsel %vm101, %v2570, %v2574
  %v2576 = vshrl.u32 %v2521, 16
  %v2578 = vor.u32 %v2576, %v2574
  %v2580 = vshll.u32 %v2522, 16
  %v2582 = vrot.slane %v2580, 1
  %v2583 = vsel %vm101, %v2578, %v2582
  %v2584 = vshrl.u32 %v2522, 16
  %v2586 = vor.u32 %v2584, %v2582
  %v2588 = vshll.u32 %v2523, 16
  %v2590 = vrot.slane %v2588, 1
  %v2591 = vsel %vm101, %v2586, %v2590
  %v2600 = vunpack.c.l.b16 %v2473
  %v2601 = vunpack.c.l.b16 %v2474
  %v2602 = vunpack.c.l.b16 %v2475
  %v2603 = vunpack.c.l.b16 %v2476
  %v2604 = vunpack.c.l.b16 %v2477
  %v2605 = vunpack.c.l.b16 %v2478
  %v2606 = vunpack.c.l.b16 %v2479
  %v2607 = vunpack.c.l.b16 %v2480
  %v2608 = vpack.c.b16 %v2601, %v2600
  %v2609 = vpack.c.b16 %v2603, %v2602
  %v2610 = vpack.c.b16 %v2605, %v2604
  %v2611 = vpack.c.b16 %v2607, %v2606
  %v2617 = vsel %vm194, %v2535, 0
  %v2620 = vsel %vm194, %v2543, 0
  %v2623 = vsel %vm194, %v2551, 0
  %v2626 = vsel %vm194, %v2559, 0
  %v2629 = vsel %vm194, %v2567, 0
  %v2632 = vsel %vm194, %v2575, 0
  %v2635 = vsel %vm194, %v2583, 0
  %v2638 = vsel %vm194, %v2591, 0
  %2640 = vmatprep.subr.bf16.mxu0 0
  %2641 = vmatpush1.bf16.msra.mxu0 %v2608
  %2642 = vmatprep.subr.bf16.mxu0 0
  %2643 = vmatpush1.bf16.msra.mxu0 %v2609
  %2644 = vmatprep.subr.bf16.mxu0 0
  %2645 = vmatpush1.bf16.msra.mxu0 %v2610
  %2646 = vmatprep.subr.bf16.mxu0 0
  %2647 = vmatpush1.bf16.msra.mxu0 %v2611
  %2648 = vmatprep.subr.bf16.mxu0 0
  %2649 = vmatpush1.bf16.msra.mxu0 0
  %2650 = vmatprep.subr.bf16.mxu0 0
  %2651 = vmatpush1.bf16.msra.mxu0 0
  %2652 = vmatprep.subr.bf16.mxu0 0
  %2653 = vmatpush1.bf16.msra.mxu0 0
  %2654 = vmatprep.subr.bf16.mxu0 0
  %2655 = vmatpush1.bf16.msra.mxu0 0
  %2656 = vmatprep.subr.bf16.mxu0 0
  %2657 = vmatpush1.bf16.msra.mxu0 0
  %2658 = vmatprep.subr.bf16.mxu0 0
  %2659 = vmatpush1.bf16.msra.mxu0 0
  %2660 = vmatprep.subr.bf16.mxu0 0
  %2661 = vmatpush1.bf16.msra.mxu0 0
  %2662 = vmatprep.subr.bf16.mxu0 0
  %2663 = vmatpush1.bf16.msra.mxu0 0
  %2664 = vmatprep.subr.bf16.mxu0 0
  %2665 = vmatpush1.bf16.msra.mxu0 0
  %2666 = vmatprep.subr.bf16.mxu0 0
  %2667 = vmatpush1.bf16.msra.mxu0 0
  %2668 = vmatprep.subr.bf16.mxu0 0
  %2669 = vmatpush1.bf16.msra.mxu0 0
  %2670 = vmatprep.subr.bf16.mxu0 0
  %2671 = vmatpush1.bf16.msra.mxu0 0
  %2672 = vmatprep.mubr.bf16.mxu0 0
  %2673 = vmatmul.mubr.bf16.gmra.mrb[0].mxu0 %v2617
  %v2674 = vpop.f32.mrb[0].mxu0
  %v2675 = vadd.f32 0.0, %v2674
  %v2676 = vpop.f32.mrb[0].mxu0
  %v2677 = vpop.f32.mrb[0].mxu0
  %v2678 = vadd.f32 0.0, %v2677
  %v2679 = vpop.f32.mrb[0].mxu0
  %2680 = vmatprep.mubr.bf16.mxu0 0
  %2681 = vmatmul.mubr.bf16.gmra.mrb[0].mxu0 %v2620
  %v2682 = vpop.f32.mrb[0].mxu0
  %v2683 = vadd.f32 0.0, %v2682
  %v2684 = vpop.f32.mrb[0].mxu0
  %v2685 = vpop.f32.mrb[0].mxu0
  %v2686 = vadd.f32 0.0, %v2685
  %v2687 = vpop.f32.mrb[0].mxu0
  %2688 = vmatprep.mubr.bf16.mxu0 0
  %2689 = vmatmul.mubr.bf16.gmra.mrb[0].mxu0 %v2623
  %v2690 = vpop.f32.mrb[0].mxu0
  %v2691 = vadd.f32 0.0, %v2690
  %v2692 = vpop.f32.mrb[0].mxu0
  %v2693 = vpop.f32.mrb[0].mxu0
  %v2694 = vadd.f32 0.0, %v2693
  %v2695 = vpop.f32.mrb[0].mxu0
  %2696 = vmatprep.mubr.bf16.mxu0 0
  %2697 = vmatmul.mubr.bf16.gmra.mrb[0].mxu0 %v2626
  %v2698 = vpop.f32.mrb[0].mxu0
  %v2699 = vadd.f32 0.0, %v2698
  %v2700 = vpop.f32.mrb[0].mxu0
  %v2701 = vpop.f32.mrb[0].mxu0
  %v2702 = vadd.f32 0.0, %v2701
  %v2703 = vpop.f32.mrb[0].mxu0
  %2704 = vmatprep.mubr.bf16.mxu0 0
  %2705 = vmatmul.mubr.bf16.gmra.mrb[0].mxu0 %v2629
  %v2706 = vpop.f32.mrb[0].mxu0
  %v2707 = vadd.f32 0.0, %v2706
  %v2708 = vpop.f32.mrb[0].mxu0
  %v2709 = vpop.f32.mrb[0].mxu0
  %v2710 = vadd.f32 0.0, %v2709
  %v2711 = vpop.f32.mrb[0].mxu0
  %2712 = vmatprep.mubr.bf16.mxu0 0
  %2713 = vmatmul.mubr.bf16.gmra.mrb[0].mxu0 %v2632
  %v2714 = vpop.f32.mrb[0].mxu0
  %v2715 = vadd.f32 0.0, %v2714
  %v2716 = vpop.f32.mrb[0].mxu0
  %v2717 = vpop.f32.mrb[0].mxu0
  %v2718 = vadd.f32 0.0, %v2717
  %v2719 = vpop.f32.mrb[0].mxu0
  %2720 = vmatprep.mubr.bf16.mxu0 0
  %2721 = vmatmul.mubr.bf16.gmra.mrb[0].mxu0 %v2635
  %v2722 = vpop.f32.mrb[0].mxu0
  %v2723 = vadd.f32 0.0, %v2722
  %v2724 = vpop.f32.mrb[0].mxu0
  %v2725 = vpop.f32.mrb[0].mxu0
  %v2726 = vadd.f32 0.0, %v2725
  %v2727 = vpop.f32.mrb[0].mxu0
  %2728 = vmatprep.mubr.bf16.mxu0 0
  %2729 = vmatmul.mubr.bf16.gmra.mrb[0].mxu0 %v2638
  %v2730 = vpop.f32.mrb[0].mxu0
  %v2731 = vadd.f32 0.0, %v2730
  %v2732 = vpop.f32.mrb[0].mxu0
  %v2733 = vpop.f32.mrb[0].mxu0
  %v2734 = vadd.f32 0.0, %v2733
  %v2735 = vpop.f32.mrb[0].mxu0
  %2736 = vdwg.mxu0
  %v2745 = vunpack.c.l.b16 %v2463
  %v2746 = vunpack.c.l.b16 %v2464
  %v2747 = vunpack.c.l.b16 %v2465
  %v2748 = vunpack.c.l.b16 %v2466
  %v2749 = vunpack.c.l.b16 %v2467
  %v2750 = vunpack.c.l.b16 %v2468
  %v2751 = vunpack.c.l.b16 %v2469
  %v2752 = vunpack.c.l.b16 %v2470
  %v2753 = vpack.c.b16 %v2746, %v2745
  %v2754 = vpack.c.b16 %v2748, %v2747
  %v2755 = vpack.c.b16 %v2750, %v2749
  %v2756 = vpack.c.b16 %v2752, %v2751
  %v2761 = vsel %vm194, %v2515, 0
  %v2763 = vsel %vm194, %v2516, 0
  %v2765 = vsel %vm194, %v2517, 0
  %v2767 = vsel %vm194, %v2518, 0
  %v2769 = vsel %vm194, %v2519, 0
  %v2771 = vsel %vm194, %v2520, 0
  %v2773 = vsel %vm194, %v2521, 0
  %v2775 = vsel %vm194, %v2522, 0
  %2777 = vmatprep.subr.bf16.mxu0 0
  %2778 = vmatpush1.bf16.msra.mxu0 %v2753
  %2779 = vmatprep.subr.bf16.mxu0 0
  %2780 = vmatpush1.bf16.msra.mxu0 %v2754
  %2781 = vmatprep.subr.bf16.mxu0 0
  %2782 = vmatpush1.bf16.msra.mxu0 %v2755
  %2783 = vmatprep.subr.bf16.mxu0 0
  %2784 = vmatpush1.bf16.msra.mxu0 %v2756
  %2785 = vmatprep.subr.bf16.mxu0 0
  %2786 = vmatpush1.bf16.msra.mxu0 0
  %2787 = vmatprep.subr.bf16.mxu0 0
  %2788 = vmatpush1.bf16.msra.mxu0 0
  %2789 = vmatprep.subr.bf16.mxu0 0
  %2790 = vmatpush1.bf16.msra.mxu0 0
  %2791 = vmatprep.subr.bf16.mxu0 0
  %2792 = vmatpush1.bf16.msra.mxu0 0
  %2793 = vmatprep.subr.bf16.mxu0 0
  %2794 = vmatpush1.bf16.msra.mxu0 0
  %2795 = vmatprep.subr.bf16.mxu0 0
  %2796 = vmatpush1.bf16.msra.mxu0 0
  %2797 = vmatprep.subr.bf16.mxu0 0
  %2798 = vmatpush1.bf16.msra.mxu0 0
  %2799 = vmatprep.subr.bf16.mxu0 0
  %2800 = vmatpush1.bf16.msra.mxu0 0
  %2801 = vmatprep.subr.bf16.mxu0 0
  %2802 = vmatpush1.bf16.msra.mxu0 0
  %2803 = vmatprep.subr.bf16.mxu0 0
  %2804 = vmatpush1.bf16.msra.mxu0 0
  %2805 = vmatprep.subr.bf16.mxu0 0
  %2806 = vmatpush1.bf16.msra.mxu0 0
  %2807 = vmatprep.subr.bf16.mxu0 0
  %2808 = vmatpush1.bf16.msra.mxu0 0
  %2809 = vmatprep.mubr.bf16.mxu0 0
  %2810 = vmatmul.mubr.bf16.gmra.mrb[0].mxu0 %v2761
  %v2811 = vpop.f32.mrb[0].mxu0
  %v2812 = vadd.f32 %v2675, %v2811
  %v2813 = vpop.f32.mrb[0].mxu0
  %v2814 = vpop.f32.mrb[0].mxu0
  %v2815 = vadd.f32 %v2678, %v2814
  %v2816 = vpop.f32.mrb[0].mxu0
  %2817 = vmatprep.mubr.bf16.mxu0 0
  %2818 = vmatmul.mubr.bf16.gmra.mrb[0].mxu0 %v2763
  %v2819 = vpop.f32.mrb[0].mxu0
  %v2820 = vadd.f32 %v2683, %v2819
  %v2821 = vpop.f32.mrb[0].mxu0
  %v2822 = vpop.f32.mrb[0].mxu0
  %v2823 = vadd.f32 %v2686, %v2822
  %v2824 = vpop.f32.mrb[0].mxu0
  %2825 = vmatprep.mubr.bf16.mxu0 0
  %2826 = vmatmul.mubr.bf16.gmra.mrb[0].mxu0 %v2765
  %v2827 = vpop.f32.mrb[0].mxu0
  %v2828 = vadd.f32 %v2691, %v2827
  %v2829 = vpop.f32.mrb[0].mxu0
  %v2830 = vpop.f32.mrb[0].mxu0
  %v2831 = vadd.f32 %v2694, %v2830
  %v2832 = vpop.f32.mrb[0].mxu0
  %2833 = vmatprep.mubr.bf16.mxu0 0
  %2834 = vmatmul.mubr.bf16.gmra.mrb[0].mxu0 %v2767
  %v2835 = vpop.f32.mrb[0].mxu0
  %v2836 = vadd.f32 %v2699, %v2835
  %v2837 = vpop.f32.mrb[0].mxu0
  %v2838 = vpop.f32.mrb[0].mxu0
  %v2839 = vadd.f32 %v2702, %v2838
  %v2840 = vpop.f32.mrb[0].mxu0
  %2841 = vmatprep.mubr.bf16.mxu0 0
  %2842 = vmatmul.mubr.bf16.gmra.mrb[0].mxu0 %v2769
  %v2843 = vpop.f32.mrb[0].mxu0
  %v2844 = vadd.f32 %v2707, %v2843
  %v2845 = vpop.f32.mrb[0].mxu0
  %v2846 = vpop.f32.mrb[0].mxu0
  %v2847 = vadd.f32 %v2710, %v2846
  %v2848 = vpop.f32.mrb[0].mxu0
  %2849 = vmatprep.mubr.bf16.mxu0 0
  %2850 = vmatmul.mubr.bf16.gmra.mrb[0].mxu0 %v2771
  %v2851 = vpop.f32.mrb[0].mxu0
  %v2852 = vadd.f32 %v2715, %v2851
  %v2853 = vpop.f32.mrb[0].mxu0
  %v2854 = vpop.f32.mrb[0].mxu0
  %v2855 = vadd.f32 %v2718, %v2854
  %v2856 = vpop.f32.mrb[0].mxu0
  %2857 = vmatprep.mubr.bf16.mxu0 0
  %2858 = vmatmul.mubr.bf16.gmra.mrb[0].mxu0 %v2773
  %v2859 = vpop.f32.mrb[0].mxu0
  %v2860 = vadd.f32 %v2723, %v2859
  %v2861 = vpop.f32.mrb[0].mxu0
  %v2862 = vpop.f32.mrb[0].mxu0
  %v2863 = vadd.f32 %v2726, %v2862
  %v2864 = vpop.f32.mrb[0].mxu0
  %2865 = vmatprep.mubr.bf16.mxu0 0
  %2866 = vmatmul.mubr.bf16.gmra.mrb[0].mxu0 %v2775
  %v2867 = vpop.f32.mrb[0].mxu0
  %v2868 = vadd.f32 %v2731, %v2867
  %v2869 = vpop.f32.mrb[0].mxu0
  %v2870 = vpop.f32.mrb[0].mxu0
  %v2871 = vadd.f32 %v2734, %v2870
  %v2872 = vpop.f32.mrb[0].mxu0
  %2873 = vdwg.mxu0
  %v2874 = vld [vmem:[#allocation2] sm:$0xe]
  %s2875 = scalar_lea.vmem %s3, 64
  %v2876 = vld [vmem:[%s2875] sm:$0xf]
  %v2877 = vld [vmem:[%s2875 + $0x4] sm:$0xf]
  %v2878 = vld [vmem:[%s2875 + $0x8] sm:$0xf]
  %v2879 = vld [vmem:[%s2875 + $0xc] sm:$0xf]
  %v2880 = vld [vmem:[%s2875 + $0x10] sm:$0xf]
  %v2881 = vld [vmem:[%s2875 + $0x14] sm:$0xf]
  %v2882 = vld [vmem:[%s2875 + $0x18] sm:$0xf]
  %v2883 = vld [vmem:[%s2875 + $0x1c] sm:$0xf]
  %v2885 = vunpack.c.l.b16 %v2874
  %v2886 = vpack.c.b16 %v2499, %v2885
  %v2887 = vrot.slane %v2886, 1
  %v2888 = vrot.slane %v2516, 1
  %v2889 = vsel %vm466, %v2887, %v2888
  %v2890 = vrot.slane %v2517, 1
  %v2891 = vsel %vm466, %v2888, %v2890
  %v2892 = vrot.slane %v2518, 1
  %v2893 = vsel %vm466, %v2890, %v2892
  %v2894 = vrot.slane %v2519, 1
  %v2895 = vsel %vm466, %v2892, %v2894
  %v2896 = vrot.slane %v2520, 1
  %v2897 = vsel %vm466, %v2894, %v2896
  %v2898 = vrot.slane %v2521, 1
  %v2899 = vsel %vm466, %v2896, %v2898
  %v2900 = vrot.slane %v2522, 1
  %v2901 = vsel %vm466, %v2898, %v2900
  %v2902 = vrot.slane %v2523, 1
  %v2903 = vsel %vm466, %v2900, %v2902
  %v2912 = vunpack.c.l.b16 %v2876
  %v2913 = vunpack.c.l.b16 %v2877
  %v2914 = vunpack.c.l.b16 %v2878
  %v2915 = vunpack.c.l.b16 %v2879
  %v2916 = vunpack.c.l.b16 %v2880
  %v2917 = vunpack.c.l.b16 %v2881
  %v2918 = vunpack.c.l.b16 %v2882
  %v2919 = vunpack.c.l.b16 %v2883
  %v2920 = vpack.c.b16 %v2913, %v2912
  %v2921 = vpack.c.b16 %v2915, %v2914
  %v2922 = vpack.c.b16 %v2917, %v2916
  %v2923 = vpack.c.b16 %v2919, %v2918
  %v2929 = vsel %vm194, %v2889, 0
  %v2932 = vsel %vm194, %v2891, 0
  %v2935 = vsel %vm194, %v2893, 0
  %v2938 = vsel %vm194, %v2895, 0
  %v2941 = vsel %vm194, %v2897, 0
  %v2944 = vsel %vm194, %v2899, 0
  %v2947 = vsel %vm194, %v2901, 0
  %v2950 = vsel %vm194, %v2903, 0
  %2952 = vmatprep.subr.bf16.mxu0 0
  %2953 = vmatpush1.bf16.msra.mxu0 %v2920
  %2954 = vmatprep.subr.bf16.mxu0 0
  %2955 = vmatpush1.bf16.msra.mxu0 %v2921
  %2956 = vmatprep.subr.bf16.mxu0 0
  %2957 = vmatpush1.bf16.msra.mxu0 %v2922
  %2958 = vmatprep.subr.bf16.mxu0 0
  %2959 = vmatpush1.bf16.msra.mxu0 %v2923
  %2960 = vmatprep.subr.bf16.mxu0 0
  %2961 = vmatpush1.bf16.msra.mxu0 0
  %2962 = vmatprep.subr.bf16.mxu0 0
  %2963 = vmatpush1.bf16.msra.mxu0 0
  %2964 = vmatprep.subr.bf16.mxu0 0
  %2965 = vmatpush1.bf16.msra.mxu0 0
  %2966 = vmatprep.subr.bf16.mxu0 0
  %2967 = vmatpush1.bf16.msra.mxu0 0
  %2968 = vmatprep.subr.bf16.mxu0 0
  %2969 = vmatpush1.bf16.msra.mxu0 0
  %2970 = vmatprep.subr.bf16.mxu0 0
  %2971 = vmatpush1.bf16.msra.mxu0 0
  %2972 = vmatprep.subr.bf16.mxu0 0
  %2973 = vmatpush1.bf16.msra.mxu0 0
  %2974 = vmatprep.subr.bf16.mxu0 0
  %2975 = vmatpush1.bf16.msra.mxu0 0
  %2976 = vmatprep.subr.bf16.mxu0 0
  %2977 = vmatpush1.bf16.msra.mxu0 0
  %2978 = vmatprep.subr.bf16.mxu0 0
  %2979 = vmatpush1.bf16.msra.mxu0 0
  %2980 = vmatprep.subr.bf16.mxu0 0
  %2981 = vmatpush1.bf16.msra.mxu0 0
  %2982 = vmatprep.subr.bf16.mxu0 0
  %2983 = vmatpush1.bf16.msra.mxu0 0
  %2984 = vmatprep.mubr.bf16.mxu0 0
  %2985 = vmatmul.mubr.bf16.gmra.mrb[0].mxu0 %v2929
  %v2986 = vpop.f32.mrb[0].mxu0
  %v2987 = vadd.f32 0.0, %v2986
  %v2988 = vpop.f32.mrb[0].mxu0
  %v2989 = vpop.f32.mrb[0].mxu0
  %v2990 = vadd.f32 0.0, %v2989
  %v2991 = vpop.f32.mrb[0].mxu0
  %2992 = vmatprep.mubr.bf16.mxu0 0
  %2993 = vmatmul.mubr.bf16.gmra.mrb[0].mxu0 %v2932
  %v2994 = vpop.f32.mrb[0].mxu0
  %v2995 = vadd.f32 0.0, %v2994
  %v2996 = vpop.f32.mrb[0].mxu0
  %v2997 = vpop.f32.mrb[0].mxu0
  %v2998 = vadd.f32 0.0, %v2997
  %v2999 = vpop.f32.mrb[0].mxu0
  %3000 = vmatprep.mubr.bf16.mxu0 0
  %3001 = vmatmul.mubr.bf16.gmra.mrb[0].mxu0 %v2935
  %v3002 = vpop.f32.mrb[0].mxu0
  %v3003 = vadd.f32 0.0, %v3002
  %v3004 = vpop.f32.mrb[0].mxu0
  %v3005 = vpop.f32.mrb[0].mxu0
  %v3006 = vadd.f32 0.0, %v3005
  %v3007 = vpop.f32.mrb[0].mxu0
  %3008 = vmatprep.mubr.bf16.mxu0 0
  %3009 = vmatmul.mubr.bf16.gmra.mrb[0].mxu0 %v2938
  %v3010 = vpop.f32.mrb[0].mxu0
  %v3011 = vadd.f32 0.0, %v3010
  %v3012 = vpop.f32.mrb[0].mxu0
  %v3013 = vpop.f32.mrb[0].mxu0
  %v3014 = vadd.f32 0.0, %v3013
  %v3015 = vpop.f32.mrb[0].mxu0
  %3016 = vmatprep.mubr.bf16.mxu0 0
  %3017 = vmatmul.mubr.bf16.gmra.mrb[0].mxu0 %v2941
  %v3018 = vpop.f32.mrb[0].mxu0
  %v3019 = vadd.f32 0.0, %v3018
  %v3020 = vpop.f32.mrb[0].mxu0
  %v3021 = vpop.f32.mrb[0].mxu0
  %v3022 = vadd.f32 0.0, %v3021
  %v3023 = vpop.f32.mrb[0].mxu0
  %3024 = vmatprep.mubr.bf16.mxu0 0
  %3025 = vmatmul.mubr.bf16.gmra.mrb[0].mxu0 %v2944
  %v3026 = vpop.f32.mrb[0].mxu0
  %v3027 = vadd.f32 0.0, %v3026
  %v3028 = vpop.f32.mrb[0].mxu0
  %v3029 = vpop.f32.mrb[0].mxu0
  %v3030 = vadd.f32 0.0, %v3029
  %v3031 = vpop.f32.mrb[0].mxu0
  %3032 = vmatprep.mubr.bf16.mxu0 0
  %3033 = vmatmul.mubr.bf16.gmra.mrb[0].mxu0 %v2947
  %v3034 = vpop.f32.mrb[0].mxu0
  %v3035 = vadd.f32 0.0, %v3034
  %v3036 = vpop.f32.mrb[0].mxu0
  %v3037 = vpop.f32.mrb[0].mxu0
  %v3038 = vadd.f32 0.0, %v3037
  %v3039 = vpop.f32.mrb[0].mxu0
  %3040 = vmatprep.mubr.bf16.mxu0 0
  %3041 = vmatmul.mubr.bf16.gmra.mrb[0].mxu0 %v2950
  %v3042 = vpop.f32.mrb[0].mxu0
  %v3043 = vadd.f32 0.0, %v3042
  %v3044 = vpop.f32.mrb[0].mxu0
  %v3045 = vpop.f32.mrb[0].mxu0
  %v3046 = vadd.f32 0.0, %v3045
  %v3047 = vpop.f32.mrb[0].mxu0
  %3048 = vdwg.mxu0
  %v3049 = vadd.f32 %v2812, %v2987
  %v3050 = vadd.f32 %v2815, %v2990
  %v3051 = vadd.f32 %v2820, %v2995
  %v3052 = vadd.f32 %v2823, %v2998
  %v3053 = vadd.f32 %v2828, %v3003
  %v3054 = vadd.f32 %v2831, %v3006
  %v3055 = vadd.f32 %v2836, %v3011
  %v3056 = vadd.f32 %v2839, %v3014
  %v3057 = vadd.f32 %v2844, %v3019
  %v3058 = vadd.f32 %v2847, %v3022
  %v3059 = vadd.f32 %v2852, %v3027
  %v3060 = vadd.f32 %v2855, %v3030
  %v3061 = vadd.f32 %v2860, %v3035
  %v3062 = vadd.f32 %v2863, %v3038
  %v3063 = vadd.f32 %v2868, %v3043
  %v3064 = vadd.f32 %v2871, %v3046
  %v3065 = vld [vmem:[#allocation2] sm:$0xc]
  %v3066 = vld [vmem:[#allocation2 + $0x40] sm:$0x3]
  %s3067 = scalar_lea.vmem %s3, 96
  %v3068 = vld [vmem:[%s3067] sm:$0xf]
  %v3069 = vld [vmem:[%s3067 + $0x4] sm:$0xf]
  %v3070 = vld [vmem:[%s3067 + $0x8] sm:$0xf]
  %v3071 = vld [vmem:[%s3067 + $0xc] sm:$0xf]
  %v3072 = vld [vmem:[%s3067 + $0x10] sm:$0xf]
  %v3073 = vld [vmem:[%s3067 + $0x14] sm:$0xf]
  %v3074 = vld [vmem:[%s3067 + $0x18] sm:$0xf]
  %v3075 = vld [vmem:[%s3067 + $0x1c] sm:$0xf]
  %v3078 = vunpack.c.l.b16 %v3065
  %v3079 = vunpack.c.l.b16 %v3066
  %v3080 = vpack.c.b16 %v2499, %v3078
  %v3081 = vpack.c.b16 %v3079, %v3079
  %v3082 = vrot.slane %v3080, 2
  %v3083 = vrot.slane %v2516, 2
  %v3084 = vsel %vm662, %v3082, %v3083
  %v3085 = vrot.slane %v2517, 2
  %v3086 = vsel %vm662, %v3083, %v3085
  %v3087 = vrot.slane %v2518, 2
  %v3088 = vsel %vm662, %v3085, %v3087
  %v3089 = vrot.slane %v2519, 2
  %v3090 = vsel %vm662, %v3087, %v3089
  %v3091 = vrot.slane %v2520, 2
  %v3092 = vsel %vm662, %v3089, %v3091
  %v3093 = vrot.slane %v2521, 2
  %v3094 = vsel %vm662, %v3091, %v3093
  %v3095 = vrot.slane %v2522, 2
  %v3096 = vsel %vm662, %v3093, %v3095
  %v3097 = vrot.slane %v3081, 2
  %v3098 = vsel %vm662, %v3095, %v3097
  %v3107 = vunpack.c.l.b16 %v3068
  %v3108 = vunpack.c.l.b16 %v3069
  %v3109 = vunpack.c.l.b16 %v3070
  %v3110 = vunpack.c.l.b16 %v3071
  %v3111 = vunpack.c.l.b16 %v3072
  %v3112 = vunpack.c.l.b16 %v3073
  %v3113 = vunpack.c.l.b16 %v3074
  %v3114 = vunpack.c.l.b16 %v3075
  %v3115 = vpack.c.b16 %v3108, %v3107
  %v3116 = vpack.c.b16 %v3110, %v3109
  %v3117 = vpack.c.b16 %v3112, %v3111
  %v3118 = vpack.c.b16 %v3114, %v3113
  %v3124 = vsel %vm194, %v3084, 0
  %v3127 = vsel %vm194, %v3086, 0
  %v3130 = vsel %vm194, %v3088, 0
  %v3133 = vsel %vm194, %v3090, 0
  %v3136 = vsel %vm194, %v3092, 0
  %v3139 = vsel %vm194, %v3094, 0
  %v3142 = vsel %vm194, %v3096, 0
  %v3145 = vsel %vm194, %v3098, 0
  %3147 = vmatprep.subr.bf16.mxu0 0
  %3148 = vmatpush1.bf16.msra.mxu0 %v3115
  %3149 = vmatprep.subr.bf16.mxu0 0
  %3150 = vmatpush1.bf16.msra.mxu0 %v3116
  %3151 = vmatprep.subr.bf16.mxu0 0
  %3152 = vmatpush1.bf16.msra.mxu0 %v3117
  %3153 = vmatprep.subr.bf16.mxu0 0
  %3154 = vmatpush1.bf16.msra.mxu0 %v3118
  %3155 = vmatprep.subr.bf16.mxu0 0
  %3156 = vmatpush1.bf16.msra.mxu0 0
  %3157 = vmatprep.subr.bf16.mxu0 0
  %3158 = vmatpush1.bf16.msra.mxu0 0
  %3159 = vmatprep.subr.bf16.mxu0 0
  %3160 = vmatpush1.bf16.msra.mxu0 0
  %3161 = vmatprep.subr.bf16.mxu0 0
  %3162 = vmatpush1.bf16.msra.mxu0 0
  %3163 = vmatprep.subr.bf16.mxu0 0
  %3164 = vmatpush1.bf16.msra.mxu0 0
  %3165 = vmatprep.subr.bf16.mxu0 0
  %3166 = vmatpush1.bf16.msra.mxu0 0
  %3167 = vmatprep.subr.bf16.mxu0 0
  %3168 = vmatpush1.bf16.msra.mxu0 0
  %3169 = vmatprep.subr.bf16.mxu0 0
  %3170 = vmatpush1.bf16.msra.mxu0 0
  %3171 = vmatprep.subr.bf16.mxu0 0
  %3172 = vmatpush1.bf16.msra.mxu0 0
  %3173 = vmatprep.subr.bf16.mxu0 0
  %3174 = vmatpush1.bf16.msra.mxu0 0
  %3175 = vmatprep.subr.bf16.mxu0 0
  %3176 = vmatpush1.bf16.msra.mxu0 0
  %3177 = vmatprep.subr.bf16.mxu0 0
  %3178 = vmatpush1.bf16.msra.mxu0 0
  %3179 = vmatprep.mubr.bf16.mxu0 0
  %3180 = vmatmul.mubr.bf16.gmra.mrb[0].mxu0 %v3124
  %v3181 = vpop.f32.mrb[0].mxu0
  %v3182 = vadd.f32 0.0, %v3181
  %v3183 = vpop.f32.mrb[0].mxu0
  %v3184 = vpop.f32.mrb[0].mxu0
  %v3185 = vadd.f32 0.0, %v3184
  %v3186 = vpop.f32.mrb[0].mxu0
  %3187 = vmatprep.mubr.bf16.mxu0 0
  %3188 = vmatmul.mubr.bf16.gmra.mrb[0].mxu0 %v3127
  %v3189 = vpop.f32.mrb[0].mxu0
  %v3190 = vadd.f32 0.0, %v3189
  %v3191 = vpop.f32.mrb[0].mxu0
  %v3192 = vpop.f32.mrb[0].mxu0
  %v3193 = vadd.f32 0.0, %v3192
  %v3194 = vpop.f32.mrb[0].mxu0
  %3195 = vmatprep.mubr.bf16.mxu0 0
  %3196 = vmatmul.mubr.bf16.gmra.mrb[0].mxu0 %v3130
  %v3197 = vpop.f32.mrb[0].mxu0
  %v3198 = vadd.f32 0.0, %v3197
  %v3199 = vpop.f32.mrb[0].mxu0
  %v3200 = vpop.f32.mrb[0].mxu0
  %v3201 = vadd.f32 0.0, %v3200
  %v3202 = vpop.f32.mrb[0].mxu0
  %3203 = vmatprep.mubr.bf16.mxu0 0
  %3204 = vmatmul.mubr.bf16.gmra.mrb[0].mxu0 %v3133
  %v3205 = vpop.f32.mrb[0].mxu0
  %v3206 = vadd.f32 0.0, %v3205
  %v3207 = vpop.f32.mrb[0].mxu0
  %v3208 = vpop.f32.mrb[0].mxu0
  %v3209 = vadd.f32 0.0, %v3208
  %v3210 = vpop.f32.mrb[0].mxu0
  %3211 = vmatprep.mubr.bf16.mxu0 0
  %3212 = vmatmul.mubr.bf16.gmra.mrb[0].mxu0 %v3136
  %v3213 = vpop.f32.mrb[0].mxu0
  %v3214 = vadd.f32 0.0, %v3213
  %v3215 = vpop.f32.mrb[0].mxu0
  %v3216 = vpop.f32.mrb[0].mxu0
  %v3217 = vadd.f32 0.0, %v3216
  %v3218 = vpop.f32.mrb[0].mxu0
  %3219 = vmatprep.mubr.bf16.mxu0 0
  %3220 = vmatmul.mubr.bf16.gmra.mrb[0].mxu0 %v3139
  %v3221 = vpop.f32.mrb[0].mxu0
  %v3222 = vadd.f32 0.0, %v3221
  %v3223 = vpop.f32.mrb[0].mxu0
  %v3224 = vpop.f32.mrb[0].mxu0
  %v3225 = vadd.f32 0.0, %v3224
  %v3226 = vpop.f32.mrb[0].mxu0
  %3227 = vmatprep.mubr.bf16.mxu0 0
  %3228 = vmatmul.mubr.bf16.gmra.mrb[0].mxu0 %v3142
  %v3229 = vpop.f32.mrb[0].mxu0
  %v3230 = vadd.f32 0.0, %v3229
  %v3231 = vpop.f32.mrb[0].mxu0
  %v3232 = vpop.f32.mrb[0].mxu0
  %v3233 = vadd.f32 0.0, %v3232
  %v3234 = vpop.f32.mrb[0].mxu0
  %3235 = vmatprep.mubr.bf16.mxu0 0
  %3236 = vmatmul.mubr.bf16.gmra.mrb[0].mxu0 %v3145
  %v3237 = vpop.f32.mrb[0].mxu0
  %v3238 = vadd.f32 0.0, %v3237
  %v3239 = vpop.f32.mrb[0].mxu0
  %v3240 = vpop.f32.mrb[0].mxu0
  %v3241 = vadd.f32 0.0, %v3240
  %v3242 = vpop.f32.mrb[0].mxu0
  %3243 = vdwg.mxu0
  %v3244 = vadd.f32 %v3049, %v3182
  %v3245 = vadd.f32 %v3050, %v3185
  %v3246 = vadd.f32 %v3051, %v3190
  %v3247 = vadd.f32 %v3052, %v3193
  %v3248 = vadd.f32 %v3053, %v3198
  %v3249 = vadd.f32 %v3054, %v3201
  %v3250 = vadd.f32 %v3055, %v3206
  %v3251 = vadd.f32 %v3056, %v3209
  %v3252 = vadd.f32 %v3057, %v3214
  %v3253 = vadd.f32 %v3058, %v3217
  %v3254 = vadd.f32 %v3059, %v3222
  %v3255 = vadd.f32 %v3060, %v3225
  %v3256 = vadd.f32 %v3061, %v3230
  %v3257 = vadd.f32 %v3062, %v3233
  %v3258 = vadd.f32 %v3063, %v3238
  %v3259 = vadd.f32 %v3064, %v3241
  %v3260 = vld [vmem:[#allocation2 + $0x40] sm:$0x7]
  %s3261 = scalar_lea.vmem %s3, 128
  %v3262 = vld [vmem:[%s3261] sm:$0xf]
  %v3263 = vld [vmem:[%s3261 + $0x4] sm:$0xf]
  %v3264 = vld [vmem:[%s3261 + $0x8] sm:$0xf]
  %v3265 = vld [vmem:[%s3261 + $0xc] sm:$0xf]
  %v3266 = vld [vmem:[%s3261 + $0x10] sm:$0xf]
  %v3267 = vld [vmem:[%s3261 + $0x14] sm:$0xf]
  %v3268 = vld [vmem:[%s3261 + $0x18] sm:$0xf]
  %v3269 = vld [vmem:[%s3261 + $0x1c] sm:$0xf]
  %v3271 = vunpack.c.l.b16 %v3260
  %v3272 = vpack.c.b16 %v3271, %v3271
  %v3274 = vshrl.u32 %v3080, 16
  %v3276 = vrot.slane %v3274, 2
  %v3277 = vshll.u32 %v3080, 16
  %v3279 = vrot.slane %v3277, 3
  %v3280 = vor.u32 %v3276, %v3279
  %v3281 = vrot.slane %v2536, 2
  %v3282 = vrot.slane %v2532, 3
  %v3283 = vor.u32 %v3281, %v3282
  %v3284 = vsel %vm854, %v3280, %v3283
  %v3285 = vrot.slane %v2544, 2
  %v3286 = vrot.slane %v2540, 3
  %v3287 = vor.u32 %v3285, %v3286
  %v3288 = vsel %vm854, %v3283, %v3287
  %v3289 = vrot.slane %v2552, 2
  %v3290 = vrot.slane %v2548, 3
  %v3291 = vor.u32 %v3289, %v3290
  %v3292 = vsel %vm854, %v3287, %v3291
  %v3293 = vrot.slane %v2560, 2
  %v3294 = vrot.slane %v2556, 3
  %v3295 = vor.u32 %v3293, %v3294
  %v3296 = vsel %vm854, %v3291, %v3295
  %v3297 = vrot.slane %v2568, 2
  %v3298 = vrot.slane %v2564, 3
  %v3299 = vor.u32 %v3297, %v3298
  %v3300 = vsel %vm854, %v3295, %v3299
  %v3301 = vrot.slane %v2576, 2
  %v3302 = vrot.slane %v2572, 3
  %v3303 = vor.u32 %v3301, %v3302
  %v3304 = vsel %vm854, %v3299, %v3303
  %v3305 = vrot.slane %v2584, 2
  %v3306 = vrot.slane %v2580, 3
  %v3307 = vor.u32 %v3305, %v3306
  %v3308 = vsel %vm854, %v3303, %v3307
  %v3310 = vshrl.u32 %v3272, 16
  %v3312 = vrot.slane %v3310, 2
  %v3313 = vshll.u32 %v3272, 16
  %v3315 = vrot.slane %v3313, 3
  %v3316 = vor.u32 %v3312, %v3315
  %v3317 = vsel %vm854, %v3307, %v3316
  %v3326 = vunpack.c.l.b16 %v3262
  %v3327 = vunpack.c.l.b16 %v3263
  %v3328 = vunpack.c.l.b16 %v3264
  %v3329 = vunpack.c.l.b16 %v3265
  %v3330 = vunpack.c.l.b16 %v3266
  %v3331 = vunpack.c.l.b16 %v3267
  %v3332 = vunpack.c.l.b16 %v3268
  %v3333 = vunpack.c.l.b16 %v3269
  %v3334 = vpack.c.b16 %v3327, %v3326
  %v3335 = vpack.c.b16 %v3329, %v3328
  %v3336 = vpack.c.b16 %v3331, %v3330
  %v3337 = vpack.c.b16 %v3333, %v3332
  %v3343 = vsel %vm194, %v3284, 0
  %v3346 = vsel %vm194, %v3288, 0
  %v3349 = vsel %vm194, %v3292, 0
  %v3352 = vsel %vm194, %v3296, 0
  %v3355 = vsel %vm194, %v3300, 0
  %v3358 = vsel %vm194, %v3304, 0
  %v3361 = vsel %vm194, %v3308, 0
  %v3364 = vsel %vm194, %v3317, 0
  %3366 = vmatprep.subr.bf16.mxu0 0
  %3367 = vmatpush1.bf16.msra.mxu0 %v3334
  %3368 = vmatprep.subr.bf16.mxu0 0
  %3369 = vmatpush1.bf16.msra.mxu0 %v3335
  %3370 = vmatprep.subr.bf16.mxu0 0
  %3371 = vmatpush1.bf16.msra.mxu0 %v3336
  %3372 = vmatprep.subr.bf16.mxu0 0
  %3373 = vmatpush1.bf16.msra.mxu0 %v3337
  %3374 = vmatprep.subr.bf16.mxu0 0
  %3375 = vmatpush1.bf16.msra.mxu0 0
  %3376 = vmatprep.subr.bf16.mxu0 0
  %3377 = vmatpush1.bf16.msra.mxu0 0
  %3378 = vmatprep.subr.bf16.mxu0 0
  %3379 = vmatpush1.bf16.msra.mxu0 0
  %3380 = vmatprep.subr.bf16.mxu0 0
  %3381 = vmatpush1.bf16.msra.mxu0 0
  %3382 = vmatprep.subr.bf16.mxu0 0
  %3383 = vmatpush1.bf16.msra.mxu0 0
  %3384 = vmatprep.subr.bf16.mxu0 0
  %3385 = vmatpush1.bf16.msra.mxu0 0
  %3386 = vmatprep.subr.bf16.mxu0 0
  %3387 = vmatpush1.bf16.msra.mxu0 0
  %3388 = vmatprep.subr.bf16.mxu0 0
  %3389 = vmatpush1.bf16.msra.mxu0 0
  %3390 = vmatprep.subr.bf16.mxu0 0
  %3391 = vmatpush1.bf16.msra.mxu0 0
  %3392 = vmatprep.subr.bf16.mxu0 0
  %3393 = vmatpush1.bf16.msra.mxu0 0
  %3394 = vmatprep.subr.bf16.mxu0 0
  %3395 = vmatpush1.bf16.msra.mxu0 0
  %3396 = vmatprep.subr.bf16.mxu0 0
  %3397 = vmatpush1.bf16.msra.mxu0 0
  %3398 = vmatprep.mubr.bf16.mxu0 0
  %3399 = vmatmul.mubr.bf16.gmra.mrb[0].mxu0 %v3343
  %v3400 = vpop.f32.mrb[0].mxu0
  %v3401 = vadd.f32 0.0, %v3400
  %v3402 = vpop.f32.mrb[0].mxu0
  %v3403 = vpop.f32.mrb[0].mxu0
  %v3404 = vadd.f32 0.0, %v3403
  %v3405 = vpop.f32.mrb[0].mxu0
  %3406 = vmatprep.mubr.bf16.mxu0 0
  %3407 = vmatmul.mubr.bf16.gmra.mrb[0].mxu0 %v3346
  %v3408 = vpop.f32.mrb[0].mxu0
  %v3409 = vadd.f32 0.0, %v3408
  %v3410 = vpop.f32.mrb[0].mxu0
  %v3411 = vpop.f32.mrb[0].mxu0
  %v3412 = vadd.f32 0.0, %v3411
  %v3413 = vpop.f32.mrb[0].mxu0
  %3414 = vmatprep.mubr.bf16.mxu0 0
  %3415 = vmatmul.mubr.bf16.gmra.mrb[0].mxu0 %v3349
  %v3416 = vpop.f32.mrb[0].mxu0
  %v3417 = vadd.f32 0.0, %v3416
  %v3418 = vpop.f32.mrb[0].mxu0
  %v3419 = vpop.f32.mrb[0].mxu0
  %v3420 = vadd.f32 0.0, %v3419
  %v3421 = vpop.f32.mrb[0].mxu0
  %3422 = vmatprep.mubr.bf16.mxu0 0
  %3423 = vmatmul.mubr.bf16.gmra.mrb[0].mxu0 %v3352
  %v3424 = vpop.f32.mrb[0].mxu0
  %v3425 = vadd.f32 0.0, %v3424
  %v3426 = vpop.f32.mrb[0].mxu0
  %v3427 = vpop.f32.mrb[0].mxu0
  %v3428 = vadd.f32 0.0, %v3427
  %v3429 = vpop.f32.mrb[0].mxu0
  %3430 = vmatprep.mubr.bf16.mxu0 0
  %3431 = vmatmul.mubr.bf16.gmra.mrb[0].mxu0 %v3355
  %v3432 = vpop.f32.mrb[0].mxu0
  %v3433 = vadd.f32 0.0, %v3432
  %v3434 = vpop.f32.mrb[0].mxu0
  %v3435 = vpop.f32.mrb[0].mxu0
  %v3436 = vadd.f32 0.0, %v3435
  %v3437 = vpop.f32.mrb[0].mxu0
  %3438 = vmatprep.mubr.bf16.mxu0 0
  %3439 = vmatmul.mubr.bf16.gmra.mrb[0].mxu0 %v3358
  %v3440 = vpop.f32.mrb[0].mxu0
  %v3441 = vadd.f32 0.0, %v3440
  %v3442 = vpop.f32.mrb[0].mxu0
  %v3443 = vpop.f32.mrb[0].mxu0
  %v3444 = vadd.f32 0.0, %v3443
  %v3445 = vpop.f32.mrb[0].mxu0
  %3446 = vmatprep.mubr.bf16.mxu0 0
  %3447 = vmatmul.mubr.bf16.gmra.mrb[0].mxu0 %v3361
  %v3448 = vpop.f32.mrb[0].mxu0
  %v3449 = vadd.f32 0.0, %v3448
  %v3450 = vpop.f32.mrb[0].mxu0
  %v3451 = vpop.f32.mrb[0].mxu0
  %v3452 = vadd.f32 0.0, %v3451
  %v3453 = vpop.f32.mrb[0].mxu0
  %3454 = vmatprep.mubr.bf16.mxu0 0
  %3455 = vmatmul.mubr.bf16.gmra.mrb[0].mxu0 %v3364
  %v3456 = vpop.f32.mrb[0].mxu0
  %v3457 = vadd.f32 0.0, %v3456
  %v3458 = vpop.f32.mrb[0].mxu0
  %v3459 = vpop.f32.mrb[0].mxu0
  %v3460 = vadd.f32 0.0, %v3459
  %v3461 = vpop.f32.mrb[0].mxu0
  %3462 = vdwg.mxu0
  %v3463 = vadd.f32 %v3244, %v3401
  %v3464 = vadd.f32 %v3245, %v3404
  %v3465 = vadd.f32 %v3246, %v3409
  %v3466 = vadd.f32 %v3247, %v3412
  %v3467 = vadd.f32 %v3248, %v3417
  %v3468 = vadd.f32 %v3249, %v3420
  %v3469 = vadd.f32 %v3250, %v3425
  %v3470 = vadd.f32 %v3251, %v3428
  %v3471 = vadd.f32 %v3252, %v3433
  %v3472 = vadd.f32 %v3253, %v3436
  %v3473 = vadd.f32 %v3254, %v3441
  %v3474 = vadd.f32 %v3255, %v3444
  %v3475 = vadd.f32 %v3256, %v3449
  %v3476 = vadd.f32 %v3257, %v3452
  %v3477 = vadd.f32 %v3258, %v3457
  %v3478 = vadd.f32 %v3259, %v3460
  %v3479 = vld [vmem:[#allocation2] sm:$0x8]
  %s3480 = scalar_lea.vmem %s3, 160
  %v3481 = vld [vmem:[%s3480] sm:$0xf]
  %v3482 = vld [vmem:[%s3480 + $0x4] sm:$0xf]
  %v3483 = vld [vmem:[%s3480 + $0x8] sm:$0xf]
  %v3484 = vld [vmem:[%s3480 + $0xc] sm:$0xf]
  %v3485 = vld [vmem:[%s3480 + $0x10] sm:$0xf]
  %v3486 = vld [vmem:[%s3480 + $0x14] sm:$0xf]
  %v3487 = vld [vmem:[%s3480 + $0x18] sm:$0xf]
  %v3488 = vld [vmem:[%s3480 + $0x1c] sm:$0xf]
  %v3490 = vunpack.c.l.b16 %v3479
  %v3491 = vpack.c.b16 %v2499, %v3490
  %v3492 = vrot.slane %v3491, 3
  %v3493 = vrot.slane %v2516, 3
  %v3494 = vsel %vm1074, %v3492, %v3493
  %v3495 = vrot.slane %v2517, 3
  %v3496 = vsel %vm1074, %v3493, %v3495
  %v3497 = vrot.slane %v2518, 3
  %v3498 = vsel %vm1074, %v3495, %v3497
  %v3499 = vrot.slane %v2519, 3
  %v3500 = vsel %vm1074, %v3497, %v3499
  %v3501 = vrot.slane %v2520, 3
  %v3502 = vsel %vm1074, %v3499, %v3501
  %v3503 = vrot.slane %v2521, 3
  %v3504 = vsel %vm1074, %v3501, %v3503
  %v3505 = vrot.slane %v2522, 3
  %v3506 = vsel %vm1074, %v3503, %v3505
  %v3507 = vrot.slane %v3272, 3
  %v3508 = vsel %vm1074, %v3505, %v3507
  %v3517 = vunpack.c.l.b16 %v3481
  %v3518 = vunpack.c.l.b16 %v3482
  %v3519 = vunpack.c.l.b16 %v3483
  %v3520 = vunpack.c.l.b16 %v3484
  %v3521 = vunpack.c.l.b16 %v3485
  %v3522 = vunpack.c.l.b16 %v3486
  %v3523 = vunpack.c.l.b16 %v3487
  %v3524 = vunpack.c.l.b16 %v3488
  %v3525 = vpack.c.b16 %v3518, %v3517
  %v3526 = vpack.c.b16 %v3520, %v3519
  %v3527 = vpack.c.b16 %v3522, %v3521
  %v3528 = vpack.c.b16 %v3524, %v3523
  %v3534 = vsel %vm194, %v3494, 0
  %v3537 = vsel %vm194, %v3496, 0
  %v3540 = vsel %vm194, %v3498, 0
  %v3543 = vsel %vm194, %v3500, 0
  %v3546 = vsel %vm194, %v3502, 0
  %v3549 = vsel %vm194, %v3504, 0
  %v3552 = vsel %vm194, %v3506, 0
  %v3555 = vsel %vm194, %v3508, 0
  %3557 = vmatprep.subr.bf16.mxu0 0
  %3558 = vmatpush1.bf16.msra.mxu0 %v3525
  %3559 = vmatprep.subr.bf16.mxu0 0
  %3560 = vmatpush1.bf16.msra.mxu0 %v3526
  %3561 = vmatprep.subr.bf16.mxu0 0
  %3562 = vmatpush1.bf16.msra.mxu0 %v3527
  %3563 = vmatprep.subr.bf16.mxu0 0
  %3564 = vmatpush1.bf16.msra.mxu0 %v3528
  %3565 = vmatprep.subr.bf16.mxu0 0
  %3566 = vmatpush1.bf16.msra.mxu0 0
  %3567 = vmatprep.subr.bf16.mxu0 0
  %3568 = vmatpush1.bf16.msra.mxu0 0
  %3569 = vmatprep.subr.bf16.mxu0 0
  %3570 = vmatpush1.bf16.msra.mxu0 0
  %3571 = vmatprep.subr.bf16.mxu0 0
  %3572 = vmatpush1.bf16.msra.mxu0 0
  %3573 = vmatprep.subr.bf16.mxu0 0
  %3574 = vmatpush1.bf16.msra.mxu0 0
  %3575 = vmatprep.subr.bf16.mxu0 0
  %3576 = vmatpush1.bf16.msra.mxu0 0
  %3577 = vmatprep.subr.bf16.mxu0 0
  %3578 = vmatpush1.bf16.msra.mxu0 0
  %3579 = vmatprep.subr.bf16.mxu0 0
  %3580 = vmatpush1.bf16.msra.mxu0 0
  %3581 = vmatprep.subr.bf16.mxu0 0
  %3582 = vmatpush1.bf16.msra.mxu0 0
  %3583 = vmatprep.subr.bf16.mxu0 0
  %3584 = vmatpush1.bf16.msra.mxu0 0
  %3585 = vmatprep.subr.bf16.mxu0 0
  %3586 = vmatpush1.bf16.msra.mxu0 0
  %3587 = vmatprep.subr.bf16.mxu0 0
  %3588 = vmatpush1.bf16.msra.mxu0 0
  %3589 = vmatprep.mubr.bf16.mxu0 0
  %3590 = vmatmul.mubr.bf16.gmra.mrb[0].mxu0 %v3534
  %v3591 = vpop.f32.mrb[0].mxu0
  %v3592 = vadd.f32 0.0, %v3591
  %v3593 = vpop.f32.mrb[0].mxu0
  %v3594 = vpop.f32.mrb[0].mxu0
  %v3595 = vadd.f32 0.0, %v3594
  %v3596 = vpop.f32.mrb[0].mxu0
  %3597 = vmatprep.mubr.bf16.mxu0 0
  %3598 = vmatmul.mubr.bf16.gmra.mrb[0].mxu0 %v3537
  %v3599 = vpop.f32.mrb[0].mxu0
  %v3600 = vadd.f32 0.0, %v3599
  %v3601 = vpop.f32.mrb[0].mxu0
  %v3602 = vpop.f32.mrb[0].mxu0
  %v3603 = vadd.f32 0.0, %v3602
  %v3604 = vpop.f32.mrb[0].mxu0
  %3605 = vmatprep.mubr.bf16.mxu0 0
  %3606 = vmatmul.mubr.bf16.gmra.mrb[0].mxu0 %v3540
  %v3607 = vpop.f32.mrb[0].mxu0
  %v3608 = vadd.f32 0.0, %v3607
  %v3609 = vpop.f32.mrb[0].mxu0
  %v3610 = vpop.f32.mrb[0].mxu0
  %v3611 = vadd.f32 0.0, %v3610
  %v3612 = vpop.f32.mrb[0].mxu0
  %3613 = vmatprep.mubr.bf16.mxu0 0
  %3614 = vmatmul.mubr.bf16.gmra.mrb[0].mxu0 %v3543
  %v3615 = vpop.f32.mrb[0].mxu0
  %v3616 = vadd.f32 0.0, %v3615
  %v3617 = vpop.f32.mrb[0].mxu0
  %v3618 = vpop.f32.mrb[0].mxu0
  %v3619 = vadd.f32 0.0, %v3618
  %v3620 = vpop.f32.mrb[0].mxu0
  %3621 = vmatprep.mubr.bf16.mxu0 0
  %3622 = vmatmul.mubr.bf16.gmra.mrb[0].mxu0 %v3546
  %v3623 = vpop.f32.mrb[0].mxu0
  %v3624 = vadd.f32 0.0, %v3623
  %v3625 = vpop.f32.mrb[0].mxu0
  %v3626 = vpop.f32.mrb[0].mxu0
  %v3627 = vadd.f32 0.0, %v3626
  %v3628 = vpop.f32.mrb[0].mxu0
  %3629 = vmatprep.mubr.bf16.mxu0 0
  %3630 = vmatmul.mubr.bf16.gmra.mrb[0].mxu0 %v3549
  %v3631 = vpop.f32.mrb[0].mxu0
  %v3632 = vadd.f32 0.0, %v3631
  %v3633 = vpop.f32.mrb[0].mxu0
  %v3634 = vpop.f32.mrb[0].mxu0
  %v3635 = vadd.f32 0.0, %v3634
  %v3636 = vpop.f32.mrb[0].mxu0
  %3637 = vmatprep.mubr.bf16.mxu0 0
  %3638 = vmatmul.mubr.bf16.gmra.mrb[0].mxu0 %v3552
  %v3639 = vpop.f32.mrb[0].mxu0
  %v3640 = vadd.f32 0.0, %v3639
  %v3641 = vpop.f32.mrb[0].mxu0
  %v3642 = vpop.f32.mrb[0].mxu0
  %v3643 = vadd.f32 0.0, %v3642
  %v3644 = vpop.f32.mrb[0].mxu0
  %3645 = vmatprep.mubr.bf16.mxu0 0
  %3646 = vmatmul.mubr.bf16.gmra.mrb[0].mxu0 %v3555
  %v3647 = vpop.f32.mrb[0].mxu0
  %v3648 = vadd.f32 0.0, %v3647
  %v3649 = vpop.f32.mrb[0].mxu0
  %v3650 = vpop.f32.mrb[0].mxu0
  %v3651 = vadd.f32 0.0, %v3650
  %v3652 = vpop.f32.mrb[0].mxu0
  %3653 = vdwg.mxu0
  %v3654 = vadd.f32 %v3463, %v3592
  %v3655 = vadd.f32 %v3464, %v3595
  %v3656 = vadd.f32 %v3465, %v3600
  %v3657 = vadd.f32 %v3466, %v3603
  %v3658 = vadd.f32 %v3467, %v3608
  %v3659 = vadd.f32 %v3468, %v3611
  %v3660 = vadd.f32 %v3469, %v3616
  %v3661 = vadd.f32 %v3470, %v3619
  %v3662 = vadd.f32 %v3471, %v3624
  %v3663 = vadd.f32 %v3472, %v3627
  %v3664 = vadd.f32 %v3473, %v3632
  %v3665 = vadd.f32 %v3474, %v3635
  %v3666 = vadd.f32 %v3475, %v3640
  %v3667 = vadd.f32 %v3476, %v3643
  %v3668 = vadd.f32 %v3477, %v3648
  %v3669 = vadd.f32 %v3478, %v3651
  %v3670 = vld [vmem:[#allocation2 + $0x40] sm:$0xf]
  %s3671 = scalar_lea.vmem %s3, 192
  %v3672 = vld [vmem:[%s3671] sm:$0xf]
  %v3673 = vld [vmem:[%s3671 + $0x4] sm:$0xf]
  %v3674 = vld [vmem:[%s3671 + $0x8] sm:$0xf]
  %v3675 = vld [vmem:[%s3671 + $0xc] sm:$0xf]
  %v3676 = vld [vmem:[%s3671 + $0x10] sm:$0xf]
  %v3677 = vld [vmem:[%s3671 + $0x14] sm:$0xf]
  %v3678 = vld [vmem:[%s3671 + $0x18] sm:$0xf]
  %v3679 = vld [vmem:[%s3671 + $0x1c] sm:$0xf]
  %v3681 = vunpack.c.l.b16 %v3670
  %v3682 = vpack.c.b16 %v2500, %v2499
  %v3683 = vpack.c.b16 %v2502, %v2501
  %v3684 = vpack.c.b16 %v2504, %v2503
  %v3685 = vpack.c.b16 %v2506, %v2505
  %v3686 = vpack.c.b16 %v2508, %v2507
  %v3687 = vpack.c.b16 %v2510, %v2509
  %v3688 = vpack.c.b16 %v2512, %v2511
  %v3689 = vpack.c.b16 %v3681, %v2513
  %v3698 = vunpack.c.l.b16 %v3672
  %v3699 = vunpack.c.l.b16 %v3673
  %v3700 = vunpack.c.l.b16 %v3674
  %v3701 = vunpack.c.l.b16 %v3675
  %v3702 = vunpack.c.l.b16 %v3676
  %v3703 = vunpack.c.l.b16 %v3677
  %v3704 = vunpack.c.l.b16 %v3678
  %v3705 = vunpack.c.l.b16 %v3679
  %v3706 = vpack.c.b16 %v3699, %v3698
  %v3707 = vpack.c.b16 %v3701, %v3700
  %v3708 = vpack.c.b16 %v3703, %v3702
  %v3709 = vpack.c.b16 %v3705, %v3704
  %v3715 = vsel %vm194, %v3682, 0
  %v3718 = vsel %vm194, %v3683, 0
  %v3721 = vsel %vm194, %v3684, 0
  %v3724 = vsel %vm194, %v3685, 0
  %v3727 = vsel %vm194, %v3686, 0
  %v3730 = vsel %vm194, %v3687, 0
  %v3733 = vsel %vm194, %v3688, 0
  %v3736 = vsel %vm194, %v3689, 0
  %3738 = vmatprep.subr.bf16.mxu0 0
  %3739 = vmatpush1.bf16.msra.mxu0 %v3706
  %3740 = vmatprep.subr.bf16.mxu0 0
  %3741 = vmatpush1.bf16.msra.mxu0 %v3707
  %3742 = vmatprep.subr.bf16.mxu0 0
  %3743 = vmatpush1.bf16.msra.mxu0 %v3708
  %3744 = vmatprep.subr.bf16.mxu0 0
  %3745 = vmatpush1.bf16.msra.mxu0 %v3709
  %3746 = vmatprep.subr.bf16.mxu0 0
  %3747 = vmatpush1.bf16.msra.mxu0 0
  %3748 = vmatprep.subr.bf16.mxu0 0
  %3749 = vmatpush1.bf16.msra.mxu0 0
  %3750 = vmatprep.subr.bf16.mxu0 0
  %3751 = vmatpush1.bf16.msra.mxu0 0
  %3752 = vmatprep.subr.bf16.mxu0 0
  %3753 = vmatpush1.bf16.msra.mxu0 0
  %3754 = vmatprep.subr.bf16.mxu0 0
  %3755 = vmatpush1.bf16.msra.mxu0 0
  %3756 = vmatprep.subr.bf16.mxu0 0
  %3757 = vmatpush1.bf16.msra.mxu0 0
  %3758 = vmatprep.subr.bf16.mxu0 0
  %3759 = vmatpush1.bf16.msra.mxu0 0
  %3760 = vmatprep.subr.bf16.mxu0 0
  %3761 = vmatpush1.bf16.msra.mxu0 0
  %3762 = vmatprep.subr.bf16.mxu0 0
  %3763 = vmatpush1.bf16.msra.mxu0 0
  %3764 = vmatprep.subr.bf16.mxu0 0
  %3765 = vmatpush1.bf16.msra.mxu0 0
  %3766 = vmatprep.subr.bf16.mxu0 0
  %3767 = vmatpush1.bf16.msra.mxu0 0
  %3768 = vmatprep.subr.bf16.mxu0 0
  %3769 = vmatpush1.bf16.msra.mxu0 0
  %3770 = vmatprep.mubr.bf16.mxu0 0
  %3771 = vmatmul.mubr.bf16.gmra.mrb[0].mxu0 %v3715
  %v3772 = vpop.f32.mrb[0].mxu0
  %v3773 = vadd.f32 0.0, %v3772
  %v3774 = vpop.f32.mrb[0].mxu0
  %v3775 = vpop.f32.mrb[0].mxu0
  %v3776 = vadd.f32 0.0, %v3775
  %v3777 = vpop.f32.mrb[0].mxu0
  %3778 = vmatprep.mubr.bf16.mxu0 0
  %3779 = vmatmul.mubr.bf16.gmra.mrb[0].mxu0 %v3718
  %v3780 = vpop.f32.mrb[0].mxu0
  %v3781 = vadd.f32 0.0, %v3780
  %v3782 = vpop.f32.mrb[0].mxu0
  %v3783 = vpop.f32.mrb[0].mxu0
  %v3784 = vadd.f32 0.0, %v3783
  %v3785 = vpop.f32.mrb[0].mxu0
  %3786 = vmatprep.mubr.bf16.mxu0 0
  %3787 = vmatmul.mubr.bf16.gmra.mrb[0].mxu0 %v3721
  %v3788 = vpop.f32.mrb[0].mxu0
  %v3789 = vadd.f32 0.0, %v3788
  %v3790 = vpop.f32.mrb[0].mxu0
  %v3791 = vpop.f32.mrb[0].mxu0
  %v3792 = vadd.f32 0.0, %v3791
  %v3793 = vpop.f32.mrb[0].mxu0
  %3794 = vmatprep.mubr.bf16.mxu0 0
  %3795 = vmatmul.mubr.bf16.gmra.mrb[0].mxu0 %v3724
  %v3796 = vpop.f32.mrb[0].mxu0
  %v3797 = vadd.f32 0.0, %v3796
  %v3798 = vpop.f32.mrb[0].mxu0
  %v3799 = vpop.f32.mrb[0].mxu0
  %v3800 = vadd.f32 0.0, %v3799
  %v3801 = vpop.f32.mrb[0].mxu0
  %3802 = vmatprep.mubr.bf16.mxu0 0
  %3803 = vmatmul.mubr.bf16.gmra.mrb[0].mxu0 %v3727
  %v3804 = vpop.f32.mrb[0].mxu0
  %v3805 = vadd.f32 0.0, %v3804
  %v3806 = vpop.f32.mrb[0].mxu0
  %v3807 = vpop.f32.mrb[0].mxu0
  %v3808 = vadd.f32 0.0, %v3807
  %v3809 = vpop.f32.mrb[0].mxu0
  %3810 = vmatprep.mubr.bf16.mxu0 0
  %3811 = vmatmul.mubr.bf16.gmra.mrb[0].mxu0 %v3730
  %v3812 = vpop.f32.mrb[0].mxu0
  %v3813 = vadd.f32 0.0, %v3812
  %v3814 = vpop.f32.mrb[0].mxu0
  %v3815 = vpop.f32.mrb[0].mxu0
  %v3816 = vadd.f32 0.0, %v3815
  %v3817 = vpop.f32.mrb[0].mxu0
  %3818 = vmatprep.mubr.bf16.mxu0 0
  %3819 = vmatmul.mubr.bf16.gmra.mrb[0].mxu0 %v3733
  %v3820 = vpop.f32.mrb[0].mxu0
  %v3821 = vadd.f32 0.0, %v3820
  %v3822 = vpop.f32.mrb[0].mxu0
  %v3823 = vpop.f32.mrb[0].mxu0
  %v3824 = vadd.f32 0.0, %v3823
  %v3825 = vpop.f32.mrb[0].mxu0
  %3826 = vmatprep.mubr.bf16.mxu0 0
  %3827 = vmatmul.mubr.bf16.gmra.mrb[0].mxu0 %v3736
  %v3828 = vpop.f32.mrb[0].mxu0
  %v3829 = vadd.f32 0.0, %v3828
  %v3830 = vpop.f32.mrb[0].mxu0
  %v3831 = vpop.f32.mrb[0].mxu0
  %v3832 = vadd.f32 0.0, %v3831
  %v3833 = vpop.f32.mrb[0].mxu0
  %3834 = vdwg.mxu0
  %v3835 = vadd.f32 %v3654, %v3773
  %v3836 = vadd.f32 %v3655, %v3776
  %v3837 = vadd.f32 %v3656, %v3781
  %v3838 = vadd.f32 %v3657, %v3784
  %v3839 = vadd.f32 %v3658, %v3789
  %v3840 = vadd.f32 %v3659, %v3792
  %v3841 = vadd.f32 %v3660, %v3797
  %v3842 = vadd.f32 %v3661, %v3800
  %v3843 = vadd.f32 %v3662, %v3805
  %v3844 = vadd.f32 %v3663, %v3808
  %v3845 = vadd.f32 %v3664, %v3813
  %v3846 = vadd.f32 %v3665, %v3816
  %v3847 = vadd.f32 %v3666, %v3821
  %v3848 = vadd.f32 %v3667, %v3824
  %v3849 = vadd.f32 %v3668, %v3829
  %v3850 = vadd.f32 %v3669, %v3832
  %v3851 = vld [vmem:[#allocation2 + $0x4] sm:$0xf]
  %v3852 = vld [vmem:[#allocation2 + $0x8] sm:$0xf]
  %v3853 = vld [vmem:[#allocation2 + $0xc] sm:$0xf]
  %v3854 = vld [vmem:[#allocation2 + $0x10] sm:$0xf]
  %v3855 = vld [vmem:[#allocation2 + $0x14] sm:$0xf]
  %v3856 = vld [vmem:[#allocation2 + $0x18] sm:$0xf]
  %v3857 = vld [vmem:[#allocation2 + $0x1c] sm:$0xf]
  %v3858 = vld [vmem:[#allocation2 + $0x20] sm:$0xf]
  %v3859 = vld [vmem:[#allocation2 + $0x24] sm:$0xf]
  %v3860 = vld [vmem:[#allocation2 + $0x28] sm:$0xf]
  %v3861 = vld [vmem:[#allocation2 + $0x2c] sm:$0xf]
  %v3862 = vld [vmem:[#allocation2 + $0x30] sm:$0xf]
  %v3863 = vld [vmem:[#allocation2 + $0x34] sm:$0xf]
  %v3864 = vld [vmem:[#allocation2 + $0x38] sm:$0xf]
  %v3865 = vld [vmem:[#allocation2 + $0x3c] sm:$0xf]
  %v3866 = vld [vmem:[#allocation2 + $0x40] sm:$0xf]
  %v3867 = vld [vmem:[#allocation2 + $0x44] sm:$0x1]
  %s3868 = scalar_lea.vmem %s3, 224
  %v3869 = vld [vmem:[%s3868] sm:$0xf]
  %v3870 = vld [vmem:[%s3868 + $0x4] sm:$0xf]
  %v3871 = vld [vmem:[%s3868 + $0x8] sm:$0xf]
  %v3872 = vld [vmem:[%s3868 + $0xc] sm:$0xf]
  %v3873 = vld [vmem:[%s3868 + $0x10] sm:$0xf]
  %v3874 = vld [vmem:[%s3868 + $0x14] sm:$0xf]
  %v3875 = vld [vmem:[%s3868 + $0x18] sm:$0xf]
  %v3876 = vld [vmem:[%s3868 + $0x1c] sm:$0xf]
  %v3894 = vunpack.c.l.b16 %v3851
  %v3895 = vunpack.c.l.b16 %v3852
  %v3896 = vunpack.c.l.b16 %v3853
  %v3897 = vunpack.c.l.b16 %v3854
  %v3898 = vunpack.c.l.b16 %v3855
  %v3899 = vunpack.c.l.b16 %v3856
  %v3900 = vunpack.c.l.b16 %v3857
  %v3901 = vunpack.c.l.b16 %v3858
  %v3902 = vunpack.c.l.b16 %v3859
  %v3903 = vunpack.c.l.b16 %v3860
  %v3904 = vunpack.c.l.b16 %v3861
  %v3905 = vunpack.c.l.b16 %v3862
  %v3906 = vunpack.c.l.b16 %v3863
  %v3907 = vunpack.c.l.b16 %v3864
  %v3908 = vunpack.c.l.b16 %v3865
  %v3909 = vunpack.c.l.b16 %v3866
  %v3910 = vunpack.c.l.b16 %v3867
  %v3911 = vpack.c.b16 %v3895, %v3894
  %v3912 = vpack.c.b16 %v3897, %v3896
  %v3913 = vpack.c.b16 %v3899, %v3898
  %v3914 = vpack.c.b16 %v3901, %v3900
  %v3915 = vpack.c.b16 %v3903, %v3902
  %v3916 = vpack.c.b16 %v3905, %v3904
  %v3917 = vpack.c.b16 %v3907, %v3906
  %v3918 = vpack.c.b16 %v3909, %v3908
  %v3919 = vpack.c.b16 %v3910, %v3910
  %v3921 = vshrl.u32 %v3911, 16
  %v3923 = vshll.u32 %v3911, 16
  %v3925 = vrot.slane %v3923, 1
  %v3926 = vor.u32 %v3921, %v3925
  %v3928 = vshll.u32 %v3912, 16
  %v3930 = vrot.slane %v3928, 1
  %v3931 = vsel %vm101, %v3926, %v3930
  %v3932 = vshrl.u32 %v3912, 16
  %v3934 = vor.u32 %v3932, %v3930
  %v3936 = vshll.u32 %v3913, 16
  %v3938 = vrot.slane %v3936, 1
  %v3939 = vsel %vm101, %v3934, %v3938
  %v3940 = vshrl.u32 %v3913, 16
  %v3942 = vor.u32 %v3940, %v3938
  %v3944 = vshll.u32 %v3914, 16
  %v3946 = vrot.slane %v3944, 1
  %v3947 = vsel %vm101, %v3942, %v3946
  %v3948 = vshrl.u32 %v3914, 16
  %v3950 = vor.u32 %v3948, %v3946
  %v3952 = vshll.u32 %v3915, 16
  %v3954 = vrot.slane %v3952, 1
  %v3955 = vsel %vm101, %v3950, %v3954
  %v3956 = vshrl.u32 %v3915, 16
  %v3958 = vor.u32 %v3956, %v3954
  %v3960 = vshll.u32 %v3916, 16
  %v3962 = vrot.slane %v3960, 1
  %v3963 = vsel %vm101, %v3958, %v3962
  %v3964 = vshrl.u32 %v3916, 16
  %v3966 = vor.u32 %v3964, %v3962
  %v3968 = vshll.u32 %v3917, 16
  %v3970 = vrot.slane %v3968, 1
  %v3971 = vsel %vm101, %v3966, %v3970
  %v3972 = vshrl.u32 %v3917, 16
  %v3974 = vor.u32 %v3972, %v3970
  %v3976 = vshll.u32 %v3918, 16
  %v3978 = vrot.slane %v3976, 1
  %v3979 = vsel %vm101, %v3974, %v3978
  %v3980 = vshrl.u32 %v3918, 16
  %v3982 = vor.u32 %v3980, %v3978
  %v3984 = vshll.u32 %v3919, 16
  %v3986 = vrot.slane %v3984, 1
  %v3987 = vsel %vm101, %v3982, %v3986
  %v3996 = vunpack.c.l.b16 %v3869
  %v3997 = vunpack.c.l.b16 %v3870
  %v3998 = vunpack.c.l.b16 %v3871
  %v3999 = vunpack.c.l.b16 %v3872
  %v4000 = vunpack.c.l.b16 %v3873
  %v4001 = vunpack.c.l.b16 %v3874
  %v4002 = vunpack.c.l.b16 %v3875
  %v4003 = vunpack.c.l.b16 %v3876
  %v4004 = vpack.c.b16 %v3997, %v3996
  %v4005 = vpack.c.b16 %v3999, %v3998
  %v4006 = vpack.c.b16 %v4001, %v4000
  %v4007 = vpack.c.b16 %v4003, %v4002
  %v4013 = vsel %vm194, %v3931, 0
  %v4016 = vsel %vm194, %v3939, 0
  %v4019 = vsel %vm194, %v3947, 0
  %v4022 = vsel %vm194, %v3955, 0
  %v4025 = vsel %vm194, %v3963, 0
  %v4028 = vsel %vm194, %v3971, 0
  %v4031 = vsel %vm194, %v3979, 0
  %v4034 = vsel %vm194, %v3987, 0
  %4036 = vmatprep.subr.bf16.mxu0 0
  %4037 = vmatpush1.bf16.msra.mxu0 %v4004
  %4038 = vmatprep.subr.bf16.mxu0 0
  %4039 = vmatpush1.bf16.msra.mxu0 %v4005
  %4040 = vmatprep.subr.bf16.mxu0 0
  %4041 = vmatpush1.bf16.msra.mxu0 %v4006
  %4042 = vmatprep.subr.bf16.mxu0 0
  %4043 = vmatpush1.bf16.msra.mxu0 %v4007
  %4044 = vmatprep.subr.bf16.mxu0 0
  %4045 = vmatpush1.bf16.msra.mxu0 0
  %4046 = vmatprep.subr.bf16.mxu0 0
  %4047 = vmatpush1.bf16.msra.mxu0 0
  %4048 = vmatprep.subr.bf16.mxu0 0
  %4049 = vmatpush1.bf16.msra.mxu0 0
  %4050 = vmatprep.subr.bf16.mxu0 0
  %4051 = vmatpush1.bf16.msra.mxu0 0
  %4052 = vmatprep.subr.bf16.mxu0 0
  %4053 = vmatpush1.bf16.msra.mxu0 0
  %4054 = vmatprep.subr.bf16.mxu0 0
  %4055 = vmatpush1.bf16.msra.mxu0 0
  %4056 = vmatprep.subr.bf16.mxu0 0
  %4057 = vmatpush1.bf16.msra.mxu0 0
  %4058 = vmatprep.subr.bf16.mxu0 0
  %4059 = vmatpush1.bf16.msra.mxu0 0
  %4060 = vmatprep.subr.bf16.mxu0 0
  %4061 = vmatpush1.bf16.msra.mxu0 0
  %4062 = vmatprep.subr.bf16.mxu0 0
  %4063 = vmatpush1.bf16.msra.mxu0 0
  %4064 = vmatprep.subr.bf16.mxu0 0
  %4065 = vmatpush1.bf16.msra.mxu0 0
  %4066 = vmatprep.subr.bf16.mxu0 0
  %4067 = vmatpush1.bf16.msra.mxu0 0
  %4068 = vmatprep.mubr.bf16.mxu0 0
  %4069 = vmatmul.mubr.bf16.gmra.mrb[0].mxu0 %v4013
  %v4070 = vpop.f32.mrb[0].mxu0
  %v4071 = vadd.f32 0.0, %v4070
  %v4072 = vpop.f32.mrb[0].mxu0
  %v4073 = vpop.f32.mrb[0].mxu0
  %v4074 = vadd.f32 0.0, %v4073
  %v4075 = vpop.f32.mrb[0].mxu0
  %4076 = vmatprep.mubr.bf16.mxu0 0
  %4077 = vmatmul.mubr.bf16.gmra.mrb[0].mxu0 %v4016
  %v4078 = vpop.f32.mrb[0].mxu0
  %v4079 = vadd.f32 0.0, %v4078
  %v4080 = vpop.f32.mrb[0].mxu0
  %v4081 = vpop.f32.mrb[0].mxu0
  %v4082 = vadd.f32 0.0, %v4081
  %v4083 = vpop.f32.mrb[0].mxu0
  %4084 = vmatprep.mubr.bf16.mxu0 0
  %4085 = vmatmul.mubr.bf16.gmra.mrb[0].mxu0 %v4019
  %v4086 = vpop.f32.mrb[0].mxu0
  %v4087 = vadd.f32 0.0, %v4086
  %v4088 = vpop.f32.mrb[0].mxu0
  %v4089 = vpop.f32.mrb[0].mxu0
  %v4090 = vadd.f32 0.0, %v4089
  %v4091 = vpop.f32.mrb[0].mxu0
  %4092 = vmatprep.mubr.bf16.mxu0 0
  %4093 = vmatmul.mubr.bf16.gmra.mrb[0].mxu0 %v4022
  %v4094 = vpop.f32.mrb[0].mxu0
  %v4095 = vadd.f32 0.0, %v4094
  %v4096 = vpop.f32.mrb[0].mxu0
  %v4097 = vpop.f32.mrb[0].mxu0
  %v4098 = vadd.f32 0.0, %v4097
  %v4099 = vpop.f32.mrb[0].mxu0
  %4100 = vmatprep.mubr.bf16.mxu0 0
  %4101 = vmatmul.mubr.bf16.gmra.mrb[0].mxu0 %v4025
  %v4102 = vpop.f32.mrb[0].mxu0
  %v4103 = vadd.f32 0.0, %v4102
  %v4104 = vpop.f32.mrb[0].mxu0
  %v4105 = vpop.f32.mrb[0].mxu0
  %v4106 = vadd.f32 0.0, %v4105
  %v4107 = vpop.f32.mrb[0].mxu0
  %4108 = vmatprep.mubr.bf16.mxu0 0
  %4109 = vmatmul.mubr.bf16.gmra.mrb[0].mxu0 %v4028
  %v4110 = vpop.f32.mrb[0].mxu0
  %v4111 = vadd.f32 0.0, %v4110
  %v4112 = vpop.f32.mrb[0].mxu0
  %v4113 = vpop.f32.mrb[0].mxu0
  %v4114 = vadd.f32 0.0, %v4113
  %v4115 = vpop.f32.mrb[0].mxu0
  %4116 = vmatprep.mubr.bf16.mxu0 0
  %4117 = vmatmul.mubr.bf16.gmra.mrb[0].mxu0 %v4031
  %v4118 = vpop.f32.mrb[0].mxu0
  %v4119 = vadd.f32 0.0, %v4118
  %v4120 = vpop.f32.mrb[0].mxu0
  %v4121 = vpop.f32.mrb[0].mxu0
  %v4122 = vadd.f32 0.0, %v4121
  %v4123 = vpop.f32.mrb[0].mxu0
  %4124 = vmatprep.mubr.bf16.mxu0 0
  %4125 = vmatmul.mubr.bf16.gmra.mrb[0].mxu0 %v4034
  %v4126 = vpop.f32.mrb[0].mxu0
  %v4127 = vadd.f32 0.0, %v4126
  %v4128 = vpop.f32.mrb[0].mxu0
  %v4129 = vpop.f32.mrb[0].mxu0
  %v4130 = vadd.f32 0.0, %v4129
  %v4131 = vpop.f32.mrb[0].mxu0
  %4132 = vdwg.mxu0
  %v4133 = vadd.f32 %v3835, %v4071
  %v4134 = vadd.f32 %v3836, %v4074
  %v4135 = vadd.f32 %v3837, %v4079
  %v4136 = vadd.f32 %v3838, %v4082
  %v4137 = vadd.f32 %v3839, %v4087
  %v4138 = vadd.f32 %v3840, %v4090
  %v4139 = vadd.f32 %v3841, %v4095
  %v4140 = vadd.f32 %v3842, %v4098
  %v4141 = vadd.f32 %v3843, %v4103
  %v4142 = vadd.f32 %v3844, %v4106
  %v4143 = vadd.f32 %v3845, %v4111
  %v4144 = vadd.f32 %v3846, %v4114
  %v4145 = vadd.f32 %v3847, %v4119
  %v4146 = vadd.f32 %v3848, %v4122
  %v4147 = vadd.f32 %v3849, %v4127
  %v4148 = vadd.f32 %v3850, %v4130
  %v4149 = vld [vmem:[#allocation2 + $0x4] sm:$0xe]
  %s4150 = scalar_lea.vmem %s3, 256
  %v4151 = vld [vmem:[%s4150] sm:$0xf]
  %v4152 = vld [vmem:[%s4150 + $0x4] sm:$0xf]
  %v4153 = vld [vmem:[%s4150 + $0x8] sm:$0xf]
  %v4154 = vld [vmem:[%s4150 + $0xc] sm:$0xf]
  %v4155 = vld [vmem:[%s4150 + $0x10] sm:$0xf]
  %v4156 = vld [vmem:[%s4150 + $0x14] sm:$0xf]
  %v4157 = vld [vmem:[%s4150 + $0x18] sm:$0xf]
  %v4158 = vld [vmem:[%s4150 + $0x1c] sm:$0xf]
  %v4160 = vunpack.c.l.b16 %v4149
  %v4161 = vpack.c.b16 %v3895, %v4160
  %v4162 = vrot.slane %v4161, 1
  %v4163 = vrot.slane %v3912, 1
  %v4164 = vsel %vm466, %v4162, %v4163
  %v4165 = vrot.slane %v3913, 1
  %v4166 = vsel %vm466, %v4163, %v4165
  %v4167 = vrot.slane %v3914, 1
  %v4168 = vsel %vm466, %v4165, %v4167
  %v4169 = vrot.slane %v3915, 1
  %v4170 = vsel %vm466, %v4167, %v4169
  %v4171 = vrot.slane %v3916, 1
  %v4172 = vsel %vm466, %v4169, %v4171
  %v4173 = vrot.slane %v3917, 1
  %v4174 = vsel %vm466, %v4171, %v4173
  %v4175 = vrot.slane %v3918, 1
  %v4176 = vsel %vm466, %v4173, %v4175
  %v4177 = vrot.slane %v3919, 1
  %v4178 = vsel %vm466, %v4175, %v4177
  %v4187 = vunpack.c.l.b16 %v4151
  %v4188 = vunpack.c.l.b16 %v4152
  %v4189 = vunpack.c.l.b16 %v4153
  %v4190 = vunpack.c.l.b16 %v4154
  %v4191 = vunpack.c.l.b16 %v4155
  %v4192 = vunpack.c.l.b16 %v4156
  %v4193 = vunpack.c.l.b16 %v4157
  %v4194 = vunpack.c.l.b16 %v4158
  %v4195 = vpack.c.b16 %v4188, %v4187
  %v4196 = vpack.c.b16 %v4190, %v4189
  %v4197 = vpack.c.b16 %v4192, %v4191
  %v4198 = vpack.c.b16 %v4194, %v4193
  %v4204 = vsel %vm194, %v4164, 0
  %v4207 = vsel %vm194, %v4166, 0
  %v4210 = vsel %vm194, %v4168, 0
  %v4213 = vsel %vm194, %v4170, 0
  %v4216 = vsel %vm194, %v4172, 0
  %v4219 = vsel %vm194, %v4174, 0
  %v4222 = vsel %vm194, %v4176, 0
  %v4225 = vsel %vm194, %v4178, 0
  %4227 = vmatprep.subr.bf16.mxu0 0
  %4228 = vmatpush1.bf16.msra.mxu0 %v4195
  %4229 = vmatprep.subr.bf16.mxu0 0
  %4230 = vmatpush1.bf16.msra.mxu0 %v4196
  %4231 = vmatprep.subr.bf16.mxu0 0
  %4232 = vmatpush1.bf16.msra.mxu0 %v4197
  %4233 = vmatprep.subr.bf16.mxu0 0
  %4234 = vmatpush1.bf16.msra.mxu0 %v4198
  %4235 = vmatprep.subr.bf16.mxu0 0
  %4236 = vmatpush1.bf16.msra.mxu0 0
  %4237 = vmatprep.subr.bf16.mxu0 0
  %4238 = vmatpush1.bf16.msra.mxu0 0
  %4239 = vmatprep.subr.bf16.mxu0 0
  %4240 = vmatpush1.bf16.msra.mxu0 0
  %4241 = vmatprep.subr.bf16.mxu0 0
  %4242 = vmatpush1.bf16.msra.mxu0 0
  %4243 = vmatprep.subr.bf16.mxu0 0
  %4244 = vmatpush1.bf16.msra.mxu0 0
  %4245 = vmatprep.subr.bf16.mxu0 0
  %4246 = vmatpush1.bf16.msra.mxu0 0
  %4247 = vmatprep.subr.bf16.mxu0 0
  %4248 = vmatpush1.bf16.msra.mxu0 0
  %4249 = vmatprep.subr.bf16.mxu0 0
  %4250 = vmatpush1.bf16.msra.mxu0 0
  %4251 = vmatprep.subr.bf16.mxu0 0
  %4252 = vmatpush1.bf16.msra.mxu0 0
  %4253 = vmatprep.subr.bf16.mxu0 0
  %4254 = vmatpush1.bf16.msra.mxu0 0
  %4255 = vmatprep.subr.bf16.mxu0 0
  %4256 = vmatpush1.bf16.msra.mxu0 0
  %4257 = vmatprep.subr.bf16.mxu0 0
  %4258 = vmatpush1.bf16.msra.mxu0 0
  %4259 = vmatprep.mubr.bf16.mxu0 0
  %4260 = vmatmul.mubr.bf16.gmra.mrb[0].mxu0 %v4204
  %v4261 = vpop.f32.mrb[0].mxu0
  %v4262 = vadd.f32 0.0, %v4261
  %v4263 = vpop.f32.mrb[0].mxu0
  %v4264 = vpop.f32.mrb[0].mxu0
  %v4265 = vadd.f32 0.0, %v4264
  %v4266 = vpop.f32.mrb[0].mxu0
  %4267 = vmatprep.mubr.bf16.mxu0 0
  %4268 = vmatmul.mubr.bf16.gmra.mrb[0].mxu0 %v4207
  %v4269 = vpop.f32.mrb[0].mxu0
  %v4270 = vadd.f32 0.0, %v4269
  %v4271 = vpop.f32.mrb[0].mxu0
  %v4272 = vpop.f32.mrb[0].mxu0
  %v4273 = vadd.f32 0.0, %v4272
  %v4274 = vpop.f32.mrb[0].mxu0
  %4275 = vmatprep.mubr.bf16.mxu0 0
  %4276 = vmatmul.mubr.bf16.gmra.mrb[0].mxu0 %v4210
  %v4277 = vpop.f32.mrb[0].mxu0
  %v4278 = vadd.f32 0.0, %v4277
  %v4279 = vpop.f32.mrb[0].mxu0
  %v4280 = vpop.f32.mrb[0].mxu0
  %v4281 = vadd.f32 0.0, %v4280
  %v4282 = vpop.f32.mrb[0].mxu0
  %4283 = vmatprep.mubr.bf16.mxu0 0
  %4284 = vmatmul.mubr.bf16.gmra.mrb[0].mxu0 %v4213
  %v4285 = vpop.f32.mrb[0].mxu0
  %v4286 = vadd.f32 0.0, %v4285
  %v4287 = vpop.f32.mrb[0].mxu0
  %v4288 = vpop.f32.mrb[0].mxu0
  %v4289 = vadd.f32 0.0, %v4288
  %v4290 = vpop.f32.mrb[0].mxu0
  %4291 = vmatprep.mubr.bf16.mxu0 0
  %4292 = vmatmul.mubr.bf16.gmra.mrb[0].mxu0 %v4216
  %v4293 = vpop.f32.mrb[0].mxu0
  %v4294 = vadd.f32 0.0, %v4293
  %v4295 = vpop.f32.mrb[0].mxu0
  %v4296 = vpop.f32.mrb[0].mxu0
  %v4297 = vadd.f32 0.0, %v4296
  %v4298 = vpop.f32.mrb[0].mxu0
  %4299 = vmatprep.mubr.bf16.mxu0 0
  %4300 = vmatmul.mubr.bf16.gmra.mrb[0].mxu0 %v4219
  %v4301 = vpop.f32.mrb[0].mxu0
  %v4302 = vadd.f32 0.0, %v4301
  %v4303 = vpop.f32.mrb[0].mxu0
  %v4304 = vpop.f32.mrb[0].mxu0
  %v4305 = vadd.f32 0.0, %v4304
  %v4306 = vpop.f32.mrb[0].mxu0
  %4307 = vmatprep.mubr.bf16.mxu0 0
  %4308 = vmatmul.mubr.bf16.gmra.mrb[0].mxu0 %v4222
  %v4309 = vpop.f32.mrb[0].mxu0
  %v4310 = vadd.f32 0.0, %v4309
  %v4311 = vpop.f32.mrb[0].mxu0
  %v4312 = vpop.f32.mrb[0].mxu0
  %v4313 = vadd.f32 0.0, %v4312
  %v4314 = vpop.f32.mrb[0].mxu0
  %4315 = vmatprep.mubr.bf16.mxu0 0
  %4316 = vmatmul.mubr.bf16.gmra.mrb[0].mxu0 %v4225
  %v4317 = vpop.f32.mrb[0].mxu0
  %v4318 = vadd.f32 0.0, %v4317
  %v4319 = vpop.f32.mrb[0].mxu0
  %v4320 = vpop.f32.mrb[0].mxu0
  %v4321 = vadd.f32 0.0, %v4320
  %v4322 = vpop.f32.mrb[0].mxu0
  %4323 = vdwg.mxu0
  %v4324 = vadd.f32 %v4133, %v4262
  %v4325 = vadd.f32 %v4134, %v4265
  %v4326 = vadd.f32 %v4135, %v4270
  %v4327 = vadd.f32 %v4136, %v4273
  %v4328 = vadd.f32 %v4137, %v4278
  %v4329 = vadd.f32 %v4138, %v4281
  %v4330 = vadd.f32 %v4139, %v4286
  %v4331 = vadd.f32 %v4140, %v4289
  %v4332 = vadd.f32 %v4141, %v4294
  %v4333 = vadd.f32 %v4142, %v4297
  %v4334 = vadd.f32 %v4143, %v4302
  %v4335 = vadd.f32 %v4144, %v4305
  %v4336 = vadd.f32 %v4145, %v4310
  %v4337 = vadd.f32 %v4146, %v4313
  %v4338 = vadd.f32 %v4147, %v4318
  %v4339 = vadd.f32 %v4148, %v4321
  %v4340 = vld [vmem:[%s4] sm:$0x1]
  %v4342 = vlaneseq
  %v4343 = vshrl.u32 %v4342, 7
  %v4344 = vsub.s32 0, %v4343
  %v4345 = vrot.slane %v4340, %v4344
  %v4347 = vadd.f32 %v4324, %v4345
  %v4348 = vadd.f32 %v4325, %v4345
  %v4349 = vadd.f32 %v4326, %v4345
  %v4350 = vadd.f32 %v4327, %v4345
  %v4351 = vadd.f32 %v4328, %v4345
  %v4352 = vadd.f32 %v4329, %v4345
  %v4353 = vadd.f32 %v4330, %v4345
  %v4354 = vadd.f32 %v4331, %v4345
  %v4355 = vadd.f32 %v4332, %v4345
  %v4356 = vadd.f32 %v4333, %v4345
  %v4357 = vadd.f32 %v4334, %v4345
  %v4358 = vadd.f32 %v4335, %v4345
  %v4359 = vadd.f32 %v4336, %v4345
  %v4360 = vadd.f32 %v4337, %v4345
  %v4361 = vadd.f32 %v4338, %v4345
  %v4362 = vadd.f32 %v4339, %v4345
  %v4363 = vadd.f32 %v4347, %v2030
  %v4364 = vadd.f32 %v4348, %v2031
  %v4365 = vadd.f32 %v4349, %v2032
  %v4366 = vadd.f32 %v4350, %v2033
  %v4367 = vadd.f32 %v4351, %v2034
  %v4368 = vadd.f32 %v4352, %v2035
  %v4369 = vadd.f32 %v4353, %v2036
  %v4370 = vadd.f32 %v4354, %v2037
  %v4371 = vadd.f32 %v4355, %v2038
  %v4372 = vadd.f32 %v4356, %v2039
  %v4373 = vadd.f32 %v4357, %v2040
  %v4374 = vadd.f32 %v4358, %v2041
  %v4375 = vadd.f32 %v4359, %v2042
  %v4376 = vadd.f32 %v4360, %v2043
  %v4377 = vadd.f32 %v4361, %v2044
  %v4378 = vadd.f32 %v4362, %v2045
  %v4379 = vmax.f32 %v4363, 0.0
  %v4380 = vmax.f32 %v4364, 0.0
  %v4381 = vmax.f32 %v4365, 0.0
  %v4382 = vmax.f32 %v4366, 0.0
  %v4383 = vmax.f32 %v4367, 0.0
  %v4384 = vmax.f32 %v4368, 0.0
  %v4385 = vmax.f32 %v4369, 0.0
  %v4386 = vmax.f32 %v4370, 0.0
  %v4387 = vmax.f32 %v4371, 0.0
  %v4388 = vmax.f32 %v4372, 0.0
  %v4389 = vmax.f32 %v4373, 0.0
  %v4390 = vmax.f32 %v4374, 0.0
  %v4391 = vmax.f32 %v4375, 0.0
  %v4392 = vmax.f32 %v4376, 0.0
  %v4393 = vmax.f32 %v4377, 0.0
  %v4394 = vmax.f32 %v4378, 0.0
  %v4395 = vpack.c.bf16 %v4380, %v4379
  %v4396 = vpack.c.bf16 %v4382, %v4381
  %v4397 = vpack.c.bf16 %v4384, %v4383
  %v4398 = vpack.c.bf16 %v4386, %v4385
  %v4399 = vpack.c.bf16 %v4388, %v4387
  %v4400 = vpack.c.bf16 %v4390, %v4389
  %v4401 = vpack.c.bf16 %v4392, %v4391
  %v4402 = vpack.c.bf16 %v4394, %v4393
  %v4411 = vunpack.c.l.b16 %v4395
  %v4412 = vunpack.c.h.b16 %v4395
  %v4413 = vunpack.c.l.b16 %v4396
  %v4414 = vunpack.c.h.b16 %v4396
  %v4415 = vunpack.c.l.b16 %v4397
  %v4416 = vunpack.c.h.b16 %v4397
  %v4417 = vunpack.c.l.b16 %v4398
  %v4418 = vunpack.c.h.b16 %v4398
  %v4419 = vunpack.c.l.b16 %v4399
  %v4420 = vunpack.c.h.b16 %v4399
  %v4421 = vunpack.c.l.b16 %v4400
  %v4422 = vunpack.c.h.b16 %v4400
  %v4423 = vunpack.c.l.b16 %v4401
  %v4424 = vunpack.c.h.b16 %v4401
  %v4425 = vunpack.c.l.b16 %v4402
  %v4426 = vunpack.c.h.b16 %v4402
  %v4427 = vpack.c.b16 %v4411, %v4411
  %v4428 = vpack.c.b16 %v4412, %v4412
  %v4429 = vpack.c.b16 %v4413, %v4413
  %v4430 = vpack.c.b16 %v4414, %v4414
  %v4431 = vpack.c.b16 %v4415, %v4415
  %v4432 = vpack.c.b16 %v4416, %v4416
  %v4433 = vpack.c.b16 %v4417, %v4417
  %v4434 = vpack.c.b16 %v4418, %v4418
  %v4435 = vpack.c.b16 %v4419, %v4419
  %v4436 = vpack.c.b16 %v4420, %v4420
  %v4437 = vpack.c.b16 %v4421, %v4421
  %v4438 = vpack.c.b16 %v4422, %v4422
  %v4439 = vpack.c.b16 %v4423, %v4423
  %v4440 = vpack.c.b16 %v4424, %v4424
  %v4441 = vpack.c.b16 %v4425, %v4425
  %v4442 = vpack.c.b16 %v4426, %v4426
  %4459 = vst.msk [vmem:[%s6] sm:$0xf] %vm2174, %v4427
  %4460 = vst.msk [vmem:[%s6 + $0x4] sm:$0xf] %vm2174, %v4428
  %4461 = vst.msk [vmem:[%s6 + $0x8] sm:$0xf] %vm2174, %v4429
  %4462 = vst.msk [vmem:[%s6 + $0xc] sm:$0xf] %vm2174, %v4430
  %4463 = vst.msk [vmem:[%s6 + $0x10] sm:$0xf] %vm2174, %v4431
  %4464 = vst.msk [vmem:[%s6 + $0x14] sm:$0xf] %vm2174, %v4432
  %4465 = vst.msk [vmem:[%s6 + $0x18] sm:$0xf] %vm2174, %v4433
  %4466 = vst.msk [vmem:[%s6 + $0x1c] sm:$0xf] %vm2174, %v4434
  %4467 = vst.msk [vmem:[%s6 + $0x20] sm:$0xf] %vm2174, %v4435
  %4468 = vst.msk [vmem:[%s6 + $0x24] sm:$0xf] %vm2174, %v4436
  %4469 = vst.msk [vmem:[%s6 + $0x28] sm:$0xf] %vm2174, %v4437
  %4470 = vst.msk [vmem:[%s6 + $0x2c] sm:$0xf] %vm2174, %v4438
  %4471 = vst.msk [vmem:[%s6 + $0x30] sm:$0xf] %vm2174, %v4439
  %4472 = vst.msk [vmem:[%s6 + $0x34] sm:$0xf] %vm2174, %v4440
  %4473 = vst.msk [vmem:[%s6 + $0x38] sm:$0xf] %vm2174, %v4441
  %4474 = vst.msk [vmem:[%s6 + $0x3c] sm:$0xf] %vm2174, %v4442
  // Predicated region
  $region26: #{dmlab_pg_lstm_forward.9} parent=0 // pred_check
    _
  $region27: #{dmlab_pg_lstm_forward.9} parent=0 // pred_check_branch
    %4476 = sbr.rel (0) target = $region29
  $region28: #{dmlab_pg_lstm_forward.9} parent=0 // pred_region
    _
  $region29: #{dmlab_pg_lstm_forward.9} parent=0 // pred_fallthru
    _
  // Predicated region
  $region30: #{dmlab_pg_lstm_forward.9} parent=0 // pred_check
    _
  $region31: #{dmlab_pg_lstm_forward.9} parent=0 // pred_check_branch
    %4478 = sbr.rel (0) target = $region33
  $region32: #{dmlab_pg_lstm_forward.9} parent=0 // pred_region
    _
  $region33: #{dmlab_pg_lstm_forward.9} parent=0 // pred_fallthru
    _

// kernel: dmlab_pg_lstm_forward.11
$region0: #{dmlab_pg_lstm_forward.11}
  #allocation0 [shape = 'u32[]', space=smem, size = 0x4, offset = 0x4, fixed_abs, tag = 'smem constant byte address 0x4 - core index']
  #allocation1 [shape = 'u32[144,128]{1,0:T(1,128)}', space=vmem, size = 0x12000, scoped, tag = 'internal scratch']
  %s0 = inlined_call_operand.vmem [shape: bf16[8,128], index: 0, kind: input, shape index: {}]
  %s1 = inlined_call_operand.vmem [shape: bf16[128,512], index: 1, kind: input, shape index: {}]
  %s2 = inlined_call_operand.vmem [shape: f32[1,512], index: 2, kind: input, shape index: {}]
  %s3 = inlined_call_operand.vmem [shape: bf16[8,512], index: 3, kind: output, shape index: {}]
  %s4 = sld [smem:[#allocation0]]
  $region22: #{dmlab_pg_lstm_forward.11} parent=0
    _
  %s6 = ssub.s32 1, %s4
  %s7 = scalar_select 0, %s6, %s4
  // Predicated region
  $region2: #{dmlab_pg_lstm_forward.11} parent=0 // pred_check
    _
  $region3: #{dmlab_pg_lstm_forward.11} parent=0 // pred_check_branch
    %9 = sbr.rel (0) target = $region5
  $region4: #{dmlab_pg_lstm_forward.11} parent=0 // pred_region
    _
  $region5: #{dmlab_pg_lstm_forward.11} parent=0 // pred_fallthru
    _
  // Predicated region
  $region6: #{dmlab_pg_lstm_forward.11} parent=0 // pred_check
    _
  $region7: #{dmlab_pg_lstm_forward.11} parent=0 // pred_check_branch
    %11 = sbr.rel (0) target = $region9
  $region8: #{dmlab_pg_lstm_forward.11} parent=0 // pred_region
    _
  $region9: #{dmlab_pg_lstm_forward.11} parent=0 // pred_fallthru
    _
  // Predicated region
  $region10: #{dmlab_pg_lstm_forward.11} parent=0 // pred_check
    _
  $region11: #{dmlab_pg_lstm_forward.11} parent=0 // pred_check_branch
    %13 = sbr.rel (0) target = $region13
  $region12: #{dmlab_pg_lstm_forward.11} parent=0 // pred_region
    _
  $region13: #{dmlab_pg_lstm_forward.11} parent=0 // pred_fallthru
    _
  %v15 = vld [vmem:[%s0] sm:$0xf]
  %v16 = vld [vmem:[%s1] sm:$0xff]
  %v17 = vld [vmem:[%s1 + $0x8] sm:$0xff]
  %v18 = vld [vmem:[%s1 + $0x10] sm:$0xff]
  %v19 = vld [vmem:[%s1 + $0x18] sm:$0xff]
  %v20 = vld [vmem:[%s1 + $0x20] sm:$0xff]
  %v21 = vld [vmem:[%s1 + $0x28] sm:$0xff]
  %v22 = vld [vmem:[%s1 + $0x30] sm:$0xff]
  %v23 = vld [vmem:[%s1 + $0x38] sm:$0xff]
  %v24 = vld [vmem:[%s1 + $0x40] sm:$0xff]
  %v25 = vld [vmem:[%s1 + $0x48] sm:$0xff]
  %v26 = vld [vmem:[%s1 + $0x50] sm:$0xff]
  %v27 = vld [vmem:[%s1 + $0x58] sm:$0xff]
  %v28 = vld [vmem:[%s1 + $0x60] sm:$0xff]
  %v29 = vld [vmem:[%s1 + $0x68] sm:$0xff]
  %v30 = vld [vmem:[%s1 + $0x70] sm:$0xff]
  %v31 = vld [vmem:[%s1 + $0x78] sm:$0xff]
  %v32 = vld [vmem:[%s1 + $0x80] sm:$0xff]
  %v33 = vld [vmem:[%s1 + $0x88] sm:$0xff]
  %v34 = vld [vmem:[%s1 + $0x90] sm:$0xff]
  %v35 = vld [vmem:[%s1 + $0x98] sm:$0xff]
  %v36 = vld [vmem:[%s1 + $0xa0] sm:$0xff]
  %v37 = vld [vmem:[%s1 + $0xa8] sm:$0xff]
  %v38 = vld [vmem:[%s1 + $0xb0] sm:$0xff]
  %v39 = vld [vmem:[%s1 + $0xb8] sm:$0xff]
  %v40 = vld [vmem:[%s1 + $0xc0] sm:$0xff]
  %v41 = vld [vmem:[%s1 + $0xc8] sm:$0xff]
  %v42 = vld [vmem:[%s1 + $0xd0] sm:$0xff]
  %v43 = vld [vmem:[%s1 + $0xd8] sm:$0xff]
  %v44 = vld [vmem:[%s1 + $0xe0] sm:$0xff]
  %v45 = vld [vmem:[%s1 + $0xe8] sm:$0xff]
  %v46 = vld [vmem:[%s1 + $0xf0] sm:$0xff]
  %v47 = vld [vmem:[%s1 + $0xf8] sm:$0xff]
  %v48 = vld [vmem:[%s2] sm:$0xf]
  %v50 = vlaneseq
  %v51 = vshrl.u32 %v50, 7
  %v52 = vsub.s32 0, %v51
  %v53 = vrot.slane %v48, %v52
  %v54 = vlaneseq
  %v55 = vshrl.u32 %v54, 7
  %v56 = vsub.s32 1, %v55
  %v57 = vrot.slane %v48, %v56
  %v58 = vlaneseq
  %v59 = vshrl.u32 %v58, 7
  %v60 = vsub.s32 2, %v59
  %v61 = vrot.slane %v48, %v60
  %v62 = vlaneseq
  %v63 = vshrl.u32 %v62, 7
  %v64 = vsub.s32 3, %v63
  %v65 = vrot.slane %v48, %v64
  %v102 = vunpack.c.l.b16 %v16
  %v103 = vunpack.c.h.b16 %v16
  %v104 = vunpack.c.l.b16 %v17
  %v105 = vunpack.c.h.b16 %v17
  %v106 = vunpack.c.l.b16 %v18
  %v107 = vunpack.c.h.b16 %v18
  %v108 = vunpack.c.l.b16 %v19
  %v109 = vunpack.c.h.b16 %v19
  %v110 = vunpack.c.l.b16 %v20
  %v111 = vunpack.c.h.b16 %v20
  %v112 = vunpack.c.l.b16 %v21
  %v113 = vunpack.c.h.b16 %v21
  %v114 = vunpack.c.l.b16 %v22
  %v115 = vunpack.c.h.b16 %v22
  %v116 = vunpack.c.l.b16 %v23
  %v117 = vunpack.c.h.b16 %v23
  %v118 = vunpack.c.l.b16 %v24
  %v119 = vunpack.c.h.b16 %v24
  %v120 = vunpack.c.l.b16 %v25
  %v121 = vunpack.c.h.b16 %v25
  %v122 = vunpack.c.l.b16 %v26
  %v123 = vunpack.c.h.b16 %v26
  %v124 = vunpack.c.l.b16 %v27
  %v125 = vunpack.c.h.b16 %v27
  %v126 = vunpack.c.l.b16 %v28
  %v127 = vunpack.c.h.b16 %v28
  %v128 = vunpack.c.l.b16 %v29
  %v129 = vunpack.c.h.b16 %v29
  %v130 = vunpack.c.l.b16 %v30
  %v131 = vunpack.c.h.b16 %v30
  %v132 = vunpack.c.l.b16 %v31
  %v133 = vunpack.c.h.b16 %v31
  %v134 = vunpack.c.l.b16 %v32
  %v135 = vunpack.c.h.b16 %v32
  %v136 = vunpack.c.l.b16 %v33
  %v137 = vunpack.c.h.b16 %v33
  %v138 = vunpack.c.l.b16 %v34
  %v139 = vunpack.c.h.b16 %v34
  %v140 = vunpack.c.l.b16 %v35
  %v141 = vunpack.c.h.b16 %v35
  %v142 = vunpack.c.l.b16 %v36
  %v143 = vunpack.c.h.b16 %v36
  %v144 = vunpack.c.l.b16 %v37
  %v145 = vunpack.c.h.b16 %v37
  %v146 = vunpack.c.l.b16 %v38
  %v147 = vunpack.c.h.b16 %v38
  %v148 = vunpack.c.l.b16 %v39
  %v149 = vunpack.c.h.b16 %v39
  %v150 = vunpack.c.l.b16 %v40
  %v151 = vunpack.c.h.b16 %v40
  %v152 = vunpack.c.l.b16 %v41
  %v153 = vunpack.c.h.b16 %v41
  %v154 = vunpack.c.l.b16 %v42
  %v155 = vunpack.c.h.b16 %v42
  %v156 = vunpack.c.l.b16 %v43
  %v157 = vunpack.c.h.b16 %v43
  %v158 = vunpack.c.l.b16 %v44
  %v159 = vunpack.c.h.b16 %v44
  %v160 = vunpack.c.l.b16 %v45
  %v161 = vunpack.c.h.b16 %v45
  %v162 = vunpack.c.l.b16 %v46
  %v163 = vunpack.c.h.b16 %v46
  %v164 = vunpack.c.l.b16 %v47
  %v165 = vunpack.c.h.b16 %v47
  %v166 = vpack.c.b16 %v106, %v102
  %v167 = vpack.c.b16 %v107, %v103
  %v168 = vpack.c.b16 %v108, %v104
  %v169 = vpack.c.b16 %v109, %v105
  %v170 = vpack.c.b16 %v114, %v110
  %v171 = vpack.c.b16 %v115, %v111
  %v172 = vpack.c.b16 %v116, %v112
  %v173 = vpack.c.b16 %v117, %v113
  %v174 = vpack.c.b16 %v122, %v118
  %v175 = vpack.c.b16 %v123, %v119
  %v176 = vpack.c.b16 %v124, %v120
  %v177 = vpack.c.b16 %v125, %v121
  %v178 = vpack.c.b16 %v130, %v126
  %v179 = vpack.c.b16 %v131, %v127
  %v180 = vpack.c.b16 %v132, %v128
  %v181 = vpack.c.b16 %v133, %v129
  %v182 = vpack.c.b16 %v138, %v134
  %v183 = vpack.c.b16 %v139, %v135
  %v184 = vpack.c.b16 %v140, %v136
  %v185 = vpack.c.b16 %v141, %v137
  %v186 = vpack.c.b16 %v146, %v142
  %v187 = vpack.c.b16 %v147, %v143
  %v188 = vpack.c.b16 %v148, %v144
  %v189 = vpack.c.b16 %v149, %v145
  %v190 = vpack.c.b16 %v154, %v150
  %v191 = vpack.c.b16 %v155, %v151
  %v192 = vpack.c.b16 %v156, %v152
  %v193 = vpack.c.b16 %v157, %v153
  %v194 = vpack.c.b16 %v162, %v158
  %v195 = vpack.c.b16 %v163, %v159
  %v196 = vpack.c.b16 %v164, %v160
  %v197 = vpack.c.b16 %v165, %v161
  %230 = vmatprep.subr.bf16.mxu0 %v167
  %231 = vmatpush1.bf16.msra.mxu0 %v166
  %232 = vmatprep.subr.bf16.mxu0 %v171
  %233 = vmatpush1.bf16.msra.mxu0 %v170
  %234 = vmatprep.subr.bf16.mxu0 %v175
  %235 = vmatpush1.bf16.msra.mxu0 %v174
  %236 = vmatprep.subr.bf16.mxu0 %v179
  %237 = vmatpush1.bf16.msra.mxu0 %v178
  %238 = vmatprep.subr.bf16.mxu0 %v183
  %239 = vmatpush1.bf16.msra.mxu0 %v182
  %240 = vmatprep.subr.bf16.mxu0 %v187
  %241 = vmatpush1.bf16.msra.mxu0 %v186
  %242 = vmatprep.subr.bf16.mxu0 %v191
  %243 = vmatpush1.bf16.msra.mxu0 %v190
  %244 = vmatprep.subr.bf16.mxu0 %v195
  %245 = vmatpush1.bf16.msra.mxu0 %v194
  %246 = vmatprep.subr.bf16.mxu0 0
  %247 = vmatpush1.bf16.msra.mxu0 0
  %248 = vmatprep.subr.bf16.mxu0 0
  %249 = vmatpush1.bf16.msra.mxu0 0
  %250 = vmatprep.subr.bf16.mxu0 0
  %251 = vmatpush1.bf16.msra.mxu0 0
  %252 = vmatprep.subr.bf16.mxu0 0
  %253 = vmatpush1.bf16.msra.mxu0 0
  %254 = vmatprep.subr.bf16.mxu0 0
  %255 = vmatpush1.bf16.msra.mxu0 0
  %256 = vmatprep.subr.bf16.mxu0 0
  %257 = vmatpush1.bf16.msra.mxu0 0
  %258 = vmatprep.subr.bf16.mxu0 0
  %259 = vmatpush1.bf16.msra.mxu0 0
  %260 = vmatprep.subr.bf16.mxu0 0
  %261 = vmatpush1.bf16.msra.mxu0 0
  %262 = vmatprep.mubr.bf16.mxu0 0
  %263 = vmatmul.mubr.bf16.gmra.mrb[0].mxu0 %v15
  %v264 = vpop.f32.mrb[0].mxu0
  %v265 = vadd.f32 %v53, %v264
  %v266 = vpop.f32.mrb[0].mxu0
  %v267 = vadd.f32 %v57, %v266
  %v268 = vpop.f32.mrb[0].mxu0
  %v269 = vpop.f32.mrb[0].mxu0
  %270 = vdwg.mxu0
  %271 = vmatprep.subr.bf16.mxu0 %v169
  %272 = vmatpush1.bf16.msra.mxu0 %v168
  %273 = vmatprep.subr.bf16.mxu0 %v173
  %274 = vmatpush1.bf16.msra.mxu0 %v172
  %275 = vmatprep.subr.bf16.mxu0 %v177
  %276 = vmatpush1.bf16.msra.mxu0 %v176
  %277 = vmatprep.subr.bf16.mxu0 %v181
  %278 = vmatpush1.bf16.msra.mxu0 %v180
  %279 = vmatprep.subr.bf16.mxu0 %v185
  %280 = vmatpush1.bf16.msra.mxu0 %v184
  %281 = vmatprep.subr.bf16.mxu0 %v189
  %282 = vmatpush1.bf16.msra.mxu0 %v188
  %283 = vmatprep.subr.bf16.mxu0 %v193
  %284 = vmatpush1.bf16.msra.mxu0 %v192
  %285 = vmatprep.subr.bf16.mxu0 %v197
  %286 = vmatpush1.bf16.msra.mxu0 %v196
  %287 = vmatprep.subr.bf16.mxu0 0
  %288 = vmatpush1.bf16.msra.mxu0 0
  %289 = vmatprep.subr.bf16.mxu0 0
  %290 = vmatpush1.bf16.msra.mxu0 0
  %291 = vmatprep.subr.bf16.mxu0 0
  %292 = vmatpush1.bf16.msra.mxu0 0
  %293 = vmatprep.subr.bf16.mxu0 0
  %294 = vmatpush1.bf16.msra.mxu0 0
  %295 = vmatprep.subr.bf16.mxu0 0
  %296 = vmatpush1.bf16.msra.mxu0 0
  %297 = vmatprep.subr.bf16.mxu0 0
  %298 = vmatpush1.bf16.msra.mxu0 0
  %299 = vmatprep.subr.bf16.mxu0 0
  %300 = vmatpush1.bf16.msra.mxu0 0
  %301 = vmatprep.subr.bf16.mxu0 0
  %302 = vmatpush1.bf16.msra.mxu0 0
  %303 = vmatprep.mubr.bf16.mxu0 0
  %304 = vmatmul.mubr.bf16.gmra.mrb[0].mxu0 %v15
  %v305 = vpop.f32.mrb[0].mxu0
  %v306 = vadd.f32 %v61, %v305
  %v307 = vpop.f32.mrb[0].mxu0
  %v308 = vadd.f32 %v65, %v307
  %v309 = vpop.f32.mrb[0].mxu0
  %v310 = vpop.f32.mrb[0].mxu0
  %311 = vdwg.mxu0
  %v312 = vpack.c.bf16 %v265, %v265
  %v313 = vpack.c.bf16 %v267, %v267
  %v314 = vpack.c.bf16 %v306, %v306
  %v315 = vpack.c.bf16 %v308, %v308
  %v320 = vunpack.c.l.b16 %v312
  %v321 = vunpack.c.l.b16 %v313
  %v322 = vunpack.c.l.b16 %v314
  %v323 = vunpack.c.l.b16 %v315
  %v324 = vpack.c.b16 %v321, %v320
  %v325 = vpack.c.b16 %v323, %v322
  %328 = vst [vmem:[%s3] sm:$0xff] %v324
  %329 = vst [vmem:[%s3 + $0x8] sm:$0xff] %v325
  // Predicated region
  $region14: #{dmlab_pg_lstm_forward.11} parent=0 // pred_check
    _
  $region15: #{dmlab_pg_lstm_forward.11} parent=0 // pred_check_branch
    %331 = sbr.rel (0) target = $region17
  $region16: #{dmlab_pg_lstm_forward.11} parent=0 // pred_region
    _
  $region17: #{dmlab_pg_lstm_forward.11} parent=0 // pred_fallthru
    _
  // Predicated region
  $region18: #{dmlab_pg_lstm_forward.11} parent=0 // pred_check
    _
  $region19: #{dmlab_pg_lstm_forward.11} parent=0 // pred_check_branch
    %333 = sbr.rel (0) target = $region21
  $region20: #{dmlab_pg_lstm_forward.11} parent=0 // pred_region
    _
  $region21: #{dmlab_pg_lstm_forward.11} parent=0 // pred_fallthru
    _

// kernel: dmlab_pg_lstm_forward.12
$region0: #{dmlab_pg_lstm_forward.12}
  #allocation0 [shape = 'u32[]', space=smem, size = 0x4, offset = 0x4, fixed_abs, tag = 'smem constant byte address 0x4 - core index']
  #allocation1 [shape = 'u32[144,128]{1,0:T(1,128)}', space=vmem, size = 0x12000, scoped, tag = 'internal scratch']
  #allocation2 [shape = 'f32[8,128]{1,0:T(8,128)}', space=vmem, size = 0x1000, scoped, tag = 'scratch operand']
  #allocation3 [shape = 'f32[8,128]{1,0:T(8,128)}', space=vmem, size = 0x1000, scoped, tag = 'scratch operand']
  %s0 = inlined_call_operand.vmem [shape: bf16[4,8,512], index: 0, kind: input, shape index: {}]
  %s1 = inlined_call_operand.vmem [shape: bf16[128,512], index: 1, kind: input, shape index: {}]
  %s2 = inlined_call_operand.vmem [shape: f32[8,128], index: 2, kind: input, shape index: {}]
  %s3 = inlined_call_operand.vmem [shape: f32[8,128], index: 3, kind: input, shape index: {}]
  %s4 = inlined_call_operand.vmem [shape: bf16[4,8,128], index: 4, kind: output, shape index: {0}]
  %s5 = inlined_call_operand.vmem [shape: f32[8,128], index: 5, kind: output, shape index: {1}]
  %s6 = inlined_call_operand.vmem [shape: f32[8,128], index: 6, kind: output, shape index: {2}]
  %7 = xla_tuple %s4, %s5, %s6
  %s8 = sld [smem:[#allocation0]]
  $region57: #{dmlab_pg_lstm_forward.12} parent=0
    _
  %s10 = ssub.s32 1, %s8
  %s11 = scalar_select 0, %s10, %s8
  // Predicated region
  $region2: #{dmlab_pg_lstm_forward.12} parent=0 // pred_check
    _
  $region3: #{dmlab_pg_lstm_forward.12} parent=0 // pred_check_branch
    %13 = sbr.rel (0) target = $region5
  $region4: #{dmlab_pg_lstm_forward.12} parent=0 // pred_region
    _
  $region5: #{dmlab_pg_lstm_forward.12} parent=0 // pred_fallthru
    _
  // Predicated region
  $region6: #{dmlab_pg_lstm_forward.12} parent=0 // pred_check
    _
  $region7: #{dmlab_pg_lstm_forward.12} parent=0 // pred_check_branch
    %15 = sbr.rel (0) target = $region9
  $region8: #{dmlab_pg_lstm_forward.12} parent=0 // pred_region
    _
  $region9: #{dmlab_pg_lstm_forward.12} parent=0 // pred_fallthru
    _
  // Predicated region
  $region10: #{dmlab_pg_lstm_forward.12} parent=0 // pred_check
    _
  $region11: #{dmlab_pg_lstm_forward.12} parent=0 // pred_check_branch
    %17 = sbr.rel (0) target = $region13
  $region12: #{dmlab_pg_lstm_forward.12} parent=0 // pred_region
    _
  $region13: #{dmlab_pg_lstm_forward.12} parent=0 // pred_fallthru
    _
  // Predicated region
  $region14: #{dmlab_pg_lstm_forward.12} parent=0 // pred_check
    _
  $region15: #{dmlab_pg_lstm_forward.12} parent=0 // pred_check_branch
    %19 = sbr.rel (0) target = $region17
  $region16: #{dmlab_pg_lstm_forward.12} parent=0 // pred_region
    _
  $region17: #{dmlab_pg_lstm_forward.12} parent=0 // pred_fallthru
    _
  %p21 = scmp.eq.s32.totalorder 0, 0
  // Predicated region
  $region18: #{dmlab_pg_lstm_forward.12} parent=0 // pred_check
    %p22 = pneg %p21
  $region19: #{dmlab_pg_lstm_forward.12} parent=0 // pred_check_branch
    %24 = sbr.rel (%p22) target = $region21
  $region20: #{dmlab_pg_lstm_forward.12} parent=0 // pred_region
    %v25 = vld [vmem:[%s2] sm:$0xff]
    %26 = vst [vmem:[#allocation2] sm:$0xff] %v25
    %v27 = vld [vmem:[%s3] sm:$0xff]
    %28 = vst [vmem:[#allocation3] sm:$0xff] %v27
  $region21: #{dmlab_pg_lstm_forward.12} parent=0 // pred_fallthru
    _
  %v29 = vld [vmem:[%s1] sm:$0xff]
  %v30 = vld [vmem:[%s1 + $0x8] sm:$0xff]
  %v31 = vld [vmem:[%s1 + $0x10] sm:$0xff]
  %v32 = vld [vmem:[%s1 + $0x18] sm:$0xff]
  %v33 = vld [vmem:[%s1 + $0x20] sm:$0xff]
  %v34 = vld [vmem:[%s1 + $0x28] sm:$0xff]
  %v35 = vld [vmem:[%s1 + $0x30] sm:$0xff]
  %v36 = vld [vmem:[%s1 + $0x38] sm:$0xff]
  %v37 = vld [vmem:[%s1 + $0x40] sm:$0xff]
  %v38 = vld [vmem:[%s1 + $0x48] sm:$0xff]
  %v39 = vld [vmem:[%s1 + $0x50] sm:$0xff]
  %v40 = vld [vmem:[%s1 + $0x58] sm:$0xff]
  %v41 = vld [vmem:[%s1 + $0x60] sm:$0xff]
  %v42 = vld [vmem:[%s1 + $0x68] sm:$0xff]
  %v43 = vld [vmem:[%s1 + $0x70] sm:$0xff]
  %v44 = vld [vmem:[%s1 + $0x78] sm:$0xff]
  %v45 = vld [vmem:[%s1 + $0x80] sm:$0xff]
  %v46 = vld [vmem:[%s1 + $0x88] sm:$0xff]
  %v47 = vld [vmem:[%s1 + $0x90] sm:$0xff]
  %v48 = vld [vmem:[%s1 + $0x98] sm:$0xff]
  %v49 = vld [vmem:[%s1 + $0xa0] sm:$0xff]
  %v50 = vld [vmem:[%s1 + $0xa8] sm:$0xff]
  %v51 = vld [vmem:[%s1 + $0xb0] sm:$0xff]
  %v52 = vld [vmem:[%s1 + $0xb8] sm:$0xff]
  %v53 = vld [vmem:[%s1 + $0xc0] sm:$0xff]
  %v54 = vld [vmem:[%s1 + $0xc8] sm:$0xff]
  %v55 = vld [vmem:[%s1 + $0xd0] sm:$0xff]
  %v56 = vld [vmem:[%s1 + $0xd8] sm:$0xff]
  %v57 = vld [vmem:[%s1 + $0xe0] sm:$0xff]
  %v58 = vld [vmem:[%s1 + $0xe8] sm:$0xff]
  %v59 = vld [vmem:[%s1 + $0xf0] sm:$0xff]
  %v60 = vld [vmem:[%s1 + $0xf8] sm:$0xff]
  %v61 = vld [vmem:[#allocation2] sm:$0xff]
  %v62 = vld [vmem:[#allocation3] sm:$0xff]
  loop: start=0, step=1, limit=4
  $region22: #{dmlab_pg_lstm_forward.12} parent=0 // loop_pre_header
    _
  $region23: #{dmlab_pg_lstm_forward.12} parent=0 // loop_header
    %s64 = sphi 0, %s68
    %p65 = scmp.ge.s32.totalorder %s64, 4
    %v69 = vphi %v61, %v350
    %v70 = vphi %v62, %v348
  $region24: #{dmlab_pg_lstm_forward.12} parent=0 // loop_header_branch
    %67 = sbr.rel (%p65) target = $region28
  $region25: #{dmlab_pg_lstm_forward.12} parent=0 // loop_body
    %s71 = smul.u32 %s64, 4
    %s72 = smul.addr %s71, 4
    %s73 = scalar_lea.vmem %s0, %s72
    %v74 = vld [vmem:[%s73] sm:$0xff]
    %v75 = vld [vmem:[%s73 + $0x8] sm:$0xff]
    %v76 = vunpack.c.l.bf16 %v74
    %v77 = vunpack.c.h.bf16 %v74
    %v78 = vunpack.c.l.bf16 %v75
    %v79 = vunpack.c.h.bf16 %v75
    %v80 = vpack.c.bf16 %v69, %v69
    %v113 = vunpack.c.l.b16 %v29
    %v114 = vunpack.c.h.b16 %v29
    %v115 = vunpack.c.l.b16 %v30
    %v116 = vunpack.c.h.b16 %v30
    %v117 = vunpack.c.l.b16 %v31
    %v118 = vunpack.c.h.b16 %v31
    %v119 = vunpack.c.l.b16 %v32
    %v120 = vunpack.c.h.b16 %v32
    %v121 = vunpack.c.l.b16 %v33
    %v122 = vunpack.c.h.b16 %v33
    %v123 = vunpack.c.l.b16 %v34
    %v124 = vunpack.c.h.b16 %v34
    %v125 = vunpack.c.l.b16 %v35
    %v126 = vunpack.c.h.b16 %v35
    %v127 = vunpack.c.l.b16 %v36
    %v128 = vunpack.c.h.b16 %v36
    %v129 = vunpack.c.l.b16 %v37
    %v130 = vunpack.c.h.b16 %v37
    %v131 = vunpack.c.l.b16 %v38
    %v132 = vunpack.c.h.b16 %v38
    %v133 = vunpack.c.l.b16 %v39
    %v134 = vunpack.c.h.b16 %v39
    %v135 = vunpack.c.l.b16 %v40
    %v136 = vunpack.c.h.b16 %v40
    %v137 = vunpack.c.l.b16 %v41
    %v138 = vunpack.c.h.b16 %v41
    %v139 = vunpack.c.l.b16 %v42
    %v140 = vunpack.c.h.b16 %v42
    %v141 = vunpack.c.l.b16 %v43
    %v142 = vunpack.c.h.b16 %v43
    %v143 = vunpack.c.l.b16 %v44
    %v144 = vunpack.c.h.b16 %v44
    %v145 = vunpack.c.l.b16 %v45
    %v146 = vunpack.c.h.b16 %v45
    %v147 = vunpack.c.l.b16 %v46
    %v148 = vunpack.c.h.b16 %v46
    %v149 = vunpack.c.l.b16 %v47
    %v150 = vunpack.c.h.b16 %v47
    %v151 = vunpack.c.l.b16 %v48
    %v152 = vunpack.c.h.b16 %v48
    %v153 = vunpack.c.l.b16 %v49
    %v154 = vunpack.c.h.b16 %v49
    %v155 = vunpack.c.l.b16 %v50
    %v156 = vunpack.c.h.b16 %v50
    %v157 = vunpack.c.l.b16 %v51
    %v158 = vunpack.c.h.b16 %v51
    %v159 = vunpack.c.l.b16 %v52
    %v160 = vunpack.c.h.b16 %v52
    %v161 = vunpack.c.l.b16 %v53
    %v162 = vunpack.c.h.b16 %v53
    %v163 = vunpack.c.l.b16 %v54
    %v164 = vunpack.c.h.b16 %v54
    %v165 = vunpack.c.l.b16 %v55
    %v166 = vunpack.c.h.b16 %v55
    %v167 = vunpack.c.l.b16 %v56
    %v168 = vunpack.c.h.b16 %v56
    %v169 = vunpack.c.l.b16 %v57
    %v170 = vunpack.c.h.b16 %v57
    %v171 = vunpack.c.l.b16 %v58
    %v172 = vunpack.c.h.b16 %v58
    %v173 = vunpack.c.l.b16 %v59
    %v174 = vunpack.c.h.b16 %v59
    %v175 = vunpack.c.l.b16 %v60
    %v176 = vunpack.c.h.b16 %v60
    %v177 = vpack.c.b16 %v117, %v113
    %v178 = vpack.c.b16 %v118, %v114
    %v179 = vpack.c.b16 %v119, %v115
    %v180 = vpack.c.b16 %v120, %v116
    %v181 = vpack.c.b16 %v125, %v121
    %v182 = vpack.c.b16 %v126, %v122
    %v183 = vpack.c.b16 %v127, %v123
    %v184 = vpack.c.b16 %v128, %v124
    %v185 = vpack.c.b16 %v133, %v129
    %v186 = vpack.c.b16 %v134, %v130
    %v187 = vpack.c.b16 %v135, %v131
    %v188 = vpack.c.b16 %v136, %v132
    %v189 = vpack.c.b16 %v141, %v137
    %v190 = vpack.c.b16 %v142, %v138
    %v191 = vpack.c.b16 %v143, %v139
    %v192 = vpack.c.b16 %v144, %v140
    %v193 = vpack.c.b16 %v149, %v145
    %v194 = vpack.c.b16 %v150, %v146
    %v195 = vpack.c.b16 %v151, %v147
    %v196 = vpack.c.b16 %v152, %v148
    %v197 = vpack.c.b16 %v157, %v153
    %v198 = vpack.c.b16 %v158, %v154
    %v199 = vpack.c.b16 %v159, %v155
    %v200 = vpack.c.b16 %v160, %v156
    %v201 = vpack.c.b16 %v165, %v161
    %v202 = vpack.c.b16 %v166, %v162
    %v203 = vpack.c.b16 %v167, %v163
    %v204 = vpack.c.b16 %v168, %v164
    %v205 = vpack.c.b16 %v173, %v169
    %v206 = vpack.c.b16 %v174, %v170
    %v207 = vpack.c.b16 %v175, %v171
    %v208 = vpack.c.b16 %v176, %v172
    %241 = vmatprep.subr.bf16.mxu0 %v178
    %242 = vmatpush1.bf16.msra.mxu0 %v177
    %243 = vmatprep.subr.bf16.mxu0 %v182
    %244 = vmatpush1.bf16.msra.mxu0 %v181
    %245 = vmatprep.subr.bf16.mxu0 %v186
    %246 = vmatpush1.bf16.msra.mxu0 %v185
    %247 = vmatprep.subr.bf16.mxu0 %v190
    %248 = vmatpush1.bf16.msra.mxu0 %v189
    %249 = vmatprep.subr.bf16.mxu0 %v194
    %250 = vmatpush1.bf16.msra.mxu0 %v193
    %251 = vmatprep.subr.bf16.mxu0 %v198
    %252 = vmatpush1.bf16.msra.mxu0 %v197
    %253 = vmatprep.subr.bf16.mxu0 %v202
    %254 = vmatpush1.bf16.msra.mxu0 %v201
    %255 = vmatprep.subr.bf16.mxu0 %v206
    %256 = vmatpush1.bf16.msra.mxu0 %v205
    %257 = vmatprep.subr.bf16.mxu0 0
    %258 = vmatpush1.bf16.msra.mxu0 0
    %259 = vmatprep.subr.bf16.mxu0 0
    %260 = vmatpush1.bf16.msra.mxu0 0
    %261 = vmatprep.subr.bf16.mxu0 0
    %262 = vmatpush1.bf16.msra.mxu0 0
    %263 = vmatprep.subr.bf16.mxu0 0
    %264 = vmatpush1.bf16.msra.mxu0 0
    %265 = vmatprep.subr.bf16.mxu0 0
    %266 = vmatpush1.bf16.msra.mxu0 0
    %267 = vmatprep.subr.bf16.mxu0 0
    %268 = vmatpush1.bf16.msra.mxu0 0
    %269 = vmatprep.subr.bf16.mxu0 0
    %270 = vmatpush1.bf16.msra.mxu0 0
    %271 = vmatprep.subr.bf16.mxu0 0
    %272 = vmatpush1.bf16.msra.mxu0 0
    %273 = vmatprep.mubr.bf16.mxu0 0
    %274 = vmatmul.mubr.bf16.gmra.mrb[0].mxu0 %v80
    %v275 = vpop.f32.mrb[0].mxu0
    %v276 = vadd.f32 0.0, %v275
    %v277 = vpop.f32.mrb[0].mxu0
    %v278 = vadd.f32 0.0, %v277
    %v279 = vpop.f32.mrb[0].mxu0
    %v280 = vpop.f32.mrb[0].mxu0
    %281 = vdwg.mxu0
    %282 = vmatprep.subr.bf16.mxu0 %v180
    %283 = vmatpush1.bf16.msra.mxu0 %v179
    %284 = vmatprep.subr.bf16.mxu0 %v184
    %285 = vmatpush1.bf16.msra.mxu0 %v183
    %286 = vmatprep.subr.bf16.mxu0 %v188
    %287 = vmatpush1.bf16.msra.mxu0 %v187
    %288 = vmatprep.subr.bf16.mxu0 %v192
    %289 = vmatpush1.bf16.msra.mxu0 %v191
    %290 = vmatprep.subr.bf16.mxu0 %v196
    %291 = vmatpush1.bf16.msra.mxu0 %v195
    %292 = vmatprep.subr.bf16.mxu0 %v200
    %293 = vmatpush1.bf16.msra.mxu0 %v199
    %294 = vmatprep.subr.bf16.mxu0 %v204
    %295 = vmatpush1.bf16.msra.mxu0 %v203
    %296 = vmatprep.subr.bf16.mxu0 %v208
    %297 = vmatpush1.bf16.msra.mxu0 %v207
    %298 = vmatprep.subr.bf16.mxu0 0
    %299 = vmatpush1.bf16.msra.mxu0 0
    %300 = vmatprep.subr.bf16.mxu0 0
    %301 = vmatpush1.bf16.msra.mxu0 0
    %302 = vmatprep.subr.bf16.mxu0 0
    %303 = vmatpush1.bf16.msra.mxu0 0
    %304 = vmatprep.subr.bf16.mxu0 0
    %305 = vmatpush1.bf16.msra.mxu0 0
    %306 = vmatprep.subr.bf16.mxu0 0
    %307 = vmatpush1.bf16.msra.mxu0 0
    %308 = vmatprep.subr.bf16.mxu0 0
    %309 = vmatpush1.bf16.msra.mxu0 0
    %310 = vmatprep.subr.bf16.mxu0 0
    %311 = vmatpush1.bf16.msra.mxu0 0
    %312 = vmatprep.subr.bf16.mxu0 0
    %313 = vmatpush1.bf16.msra.mxu0 0
    %314 = vmatprep.mubr.bf16.mxu0 0
    %315 = vmatmul.mubr.bf16.gmra.mrb[0].mxu0 %v80
    %v316 = vpop.f32.mrb[0].mxu0
    %v317 = vadd.f32 0.0, %v316
    %v318 = vpop.f32.mrb[0].mxu0
    %v319 = vadd.f32 0.0, %v318
    %v320 = vpop.f32.mrb[0].mxu0
    %v321 = vpop.f32.mrb[0].mxu0
    %322 = vdwg.mxu0
    %v323 = vadd.f32 %v76, %v276
    %v324 = vadd.f32 %v77, %v278
    %v325 = vadd.f32 %v78, %v317
    %v326 = vadd.f32 %v79, %v319
    %v327 = vxor.u32 %v323, 2147483648
    %v328 = vmul.f32 %v327, 1.442695
    %v329 = vpow.pop %v328
    %v330 = vadd.f32 %v329, 1.0
    %v331 = vrcp.pop %v330
    %v332 = vmul.f32 1.0, %v331
    %v333 = vxor.u32 %v324, 2147483648
    %v334 = vmul.f32 %v333, 1.442695
    %v335 = vpow.pop %v334
    %v336 = vadd.f32 %v335, 1.0
    %v337 = vrcp.pop %v336
    %v338 = vmul.f32 1.0, %v337
    %v339 = vtanh.pop %v325
    %v340 = vxor.u32 %v326, 2147483648
    %v341 = vmul.f32 %v340, 1.442695
    %v342 = vpow.pop %v341
    %v343 = vadd.f32 %v342, 1.0
    %v344 = vrcp.pop %v343
    %v345 = vmul.f32 1.0, %v344
    %v346 = vmul.f32 %v338, %v70
    %v347 = vmul.f32 %v332, %v339
    %v348 = vadd.f32 %v346, %v347
    %v349 = vtanh.pop %v348
    %v350 = vmul.f32 %v345, %v349
    %v351 = vpack.c.bf16 %v350, %v350
    %s352 = smul.addr %s64, 4
    %s353 = scalar_lea.vmem %s4, %s352
    %354 = vst [vmem:[%s353] sm:$0xf] %v351
  $region26: #{dmlab_pg_lstm_forward.12} parent=0 // loop_footer
    %s68 = sadd.s32 1, %s64
  $region27: #{dmlab_pg_lstm_forward.12} parent=0 // loop_footer_branch
    %63 = sbr.rel target = $region23
  $region28: #{dmlab_pg_lstm_forward.12} parent=0 // loop_exit
    _
  %355 = vst [vmem:[#allocation2] sm:$0xff] %v69
  %356 = vst [vmem:[#allocation3] sm:$0xff] %v70
  // Predicated region
  $region29: #{dmlab_pg_lstm_forward.12} parent=0 // pred_check
    %p357 = pneg %p21
  $region30: #{dmlab_pg_lstm_forward.12} parent=0 // pred_check_branch
    %359 = sbr.rel (%p357) target = $region32
  $region31: #{dmlab_pg_lstm_forward.12} parent=0 // pred_region
    %360 = vst [vmem:[%s5] sm:$0xff] %v69
    %361 = vst [vmem:[%s6] sm:$0xff] %v70
  $region32: #{dmlab_pg_lstm_forward.12} parent=0 // pred_fallthru
    _
  // Predicated region
  $region33: #{dmlab_pg_lstm_forward.12} parent=0 // pred_check
    _
  $region34: #{dmlab_pg_lstm_forward.12} parent=0 // pred_check_branch
    %363 = sbr.rel (0) target = $region36
  $region35: #{dmlab_pg_lstm_forward.12} parent=0 // pred_region
    _
  $region36: #{dmlab_pg_lstm_forward.12} parent=0 // pred_fallthru
    _
  // Predicated region
  $region37: #{dmlab_pg_lstm_forward.12} parent=0 // pred_check
    _
  $region38: #{dmlab_pg_lstm_forward.12} parent=0 // pred_check_branch
    %365 = sbr.rel (0) target = $region40
  $region39: #{dmlab_pg_lstm_forward.12} parent=0 // pred_region
    _
  $region40: #{dmlab_pg_lstm_forward.12} parent=0 // pred_fallthru
    _
  // Predicated region
  $region41: #{dmlab_pg_lstm_forward.12} parent=0 // pred_check
    _
  $region42: #{dmlab_pg_lstm_forward.12} parent=0 // pred_check_branch
    %367 = sbr.rel (0) target = $region44
  $region43: #{dmlab_pg_lstm_forward.12} parent=0 // pred_region
    _
  $region44: #{dmlab_pg_lstm_forward.12} parent=0 // pred_fallthru
    _
  // Predicated region
  $region45: #{dmlab_pg_lstm_forward.12} parent=0 // pred_check
    _
  $region46: #{dmlab_pg_lstm_forward.12} parent=0 // pred_check_branch
    %369 = sbr.rel (0) target = $region48
  $region47: #{dmlab_pg_lstm_forward.12} parent=0 // pred_region
    _
  $region48: #{dmlab_pg_lstm_forward.12} parent=0 // pred_fallthru
    _
  // Predicated region
  $region49: #{dmlab_pg_lstm_forward.12} parent=0 // pred_check
    _
  $region50: #{dmlab_pg_lstm_forward.12} parent=0 // pred_check_branch
    %371 = sbr.rel (0) target = $region52
  $region51: #{dmlab_pg_lstm_forward.12} parent=0 // pred_region
    _
  $region52: #{dmlab_pg_lstm_forward.12} parent=0 // pred_fallthru
    _
  // Predicated region
  $region53: #{dmlab_pg_lstm_forward.12} parent=0 // pred_check
    _
  $region54: #{dmlab_pg_lstm_forward.12} parent=0 // pred_check_branch
    %373 = sbr.rel (0) target = $region56
  $region55: #{dmlab_pg_lstm_forward.12} parent=0 // pred_region
    _
  $region56: #{dmlab_pg_lstm_forward.12} parent=0 // pred_fallthru
    _

// kernel: squeeze.1
$region0: #{squeeze.1}
  %s0 = inlined_call_operand.vmem [shape: f32[8], index: 0, kind: input, shape index: {}]
  %s1 = inlined_call_operand.vmem [shape: f32[4,2], index: 1, kind: output, shape index: {}]
  $region1: #{squeeze.1} parent=0
    #allocation0 [shape = 'u8[4096]{0}', space=vmem, size = 0x1000, scoped, tag = 'scoped mem for output reshape']
    #allocation1 [shape = 'u8[4096]{0}', space=vmem, size = 0x1000, scoped, tag = 'scoped mem for input reshape']
    %s3 = sshllo.u32 0, 1
    %v4 = vld [vmem:[%s0] sm:%s3]
    %5 = vst [vmem:[#allocation1] sm:%s3] %v4
    %v6 = vld [vmem:[#allocation1] sm:$0x1]
    %vm7 = vcmask 15360
    %8 = vst.msk [vmem:[#allocation0] sm:$0x1] %vm7, %v6
    %v9 = vld [vmem:[#allocation1] sm:$0x1]
    %10 = vrot.lane.b32.xlu0 %v9, 126
    %v11 = vpop.permute.xlu0 %10
    %vm12 = vcmask 15360
    %s13 = scalar_lea.vmem [#allocation0], 1
    %14 = vst.msk [vmem:[%s13] sm:$0x1] %vm12, %v11
    %v15 = vld [vmem:[#allocation1] sm:$0x1]
    %16 = vrot.lane.b32.xlu0 %v15, 124
    %v17 = vpop.permute.xlu0 %16
    %vm18 = vcmask 15360
    %s19 = scalar_lea.vmem [#allocation0], 2
    %20 = vst.msk [vmem:[%s19] sm:$0x1] %vm18, %v17
    %v21 = vld [vmem:[#allocation1] sm:$0x1]
    %22 = vrot.lane.b32.xlu0 %v21, 122
    %v23 = vpop.permute.xlu0 %22
    %vm24 = vcmask 15360
    %s25 = scalar_lea.vmem [#allocation0], 3
    %26 = vst.msk [vmem:[%s25] sm:$0x1] %vm24, %v23
    %s28 = sshllo.u32 0, 4
    %v30 = vld [vmem:[#allocation0] sm:%s28]
    %s31 = sshllo.u32 0, 4
    %32 = vst [vmem:[%s1] sm:%s31] %v30

// kernel: dmlab_pg_lstm_forward.13
$region0: #{dmlab_pg_lstm_forward.13}
  #allocation0 [shape = 'u32[]', space=smem, size = 0x4, offset = 0x4, fixed_abs, tag = 'smem constant byte address 0x4 - core index']
  #allocation1 [shape = 'u32[144,128]{1,0:T(1,128)}', space=vmem, size = 0x12000, scoped, tag = 'internal scratch']
  %s0 = inlined_call_operand.vmem [shape: bf16[8,32], index: 0, kind: input, shape index: {}]
  %s1 = inlined_call_operand.vmem [shape: bf16[8,32], index: 1, kind: input, shape index: {}]
  %s2 = inlined_call_operand.vmem [shape: bf16[32,128], index: 2, kind: input, shape index: {}]
  %s3 = inlined_call_operand.vmem [shape: f32[1,128], index: 3, kind: input, shape index: {}]
  %s4 = inlined_call_operand.hbm [shape: f32[8,128], index: 4, kind: output, shape index: {0}]
  %s5 = inlined_call_operand.vmem [shape: f32[8,1], index: 5, kind: output, shape index: {1}]
  %6 = xla_tuple %s4, %s5
  %s7 = sld [smem:[#allocation0]]
  $region34: #{dmlab_pg_lstm_forward.13} parent=0
    _
  %s9 = ssub.s32 1, %s7
  %s10 = scalar_select 0, %s9, %s7
  $region1: #{dmlab_pg_lstm_forward.13} parent=0
    #allocation2 [shape = 'u8[4096]{0}', space=vmem, size = 0x1000, scoped, tag = 'output window, operand 0, single buffered']
    #allocation3 [shape = 's32[1]{0}', space=sflag, size = 0x4, scoped, tag = 'scoped memory for dmlab_pg_lstm_forward.13']
    %11 = vsyncpa [#allocation3], 0
    // Predicated region
    $region2: #{dmlab_pg_lstm_forward.13} parent=1 // pred_check
      _
    $region3: #{dmlab_pg_lstm_forward.13} parent=1 // pred_check_branch
      %13 = sbr.rel (0) target = $region5
    $region4: #{dmlab_pg_lstm_forward.13} parent=1 // pred_region
      _
    $region5: #{dmlab_pg_lstm_forward.13} parent=1 // pred_fallthru
      _
    // Predicated region
    $region6: #{dmlab_pg_lstm_forward.13} parent=1 // pred_check
      _
    $region7: #{dmlab_pg_lstm_forward.13} parent=1 // pred_check_branch
      %15 = sbr.rel (0) target = $region9
    $region8: #{dmlab_pg_lstm_forward.13} parent=1 // pred_region
      _
    $region9: #{dmlab_pg_lstm_forward.13} parent=1 // pred_fallthru
      _
    // Predicated region
    $region10: #{dmlab_pg_lstm_forward.13} parent=1 // pred_check
      _
    $region11: #{dmlab_pg_lstm_forward.13} parent=1 // pred_check_branch
      %17 = sbr.rel (0) target = $region13
    $region12: #{dmlab_pg_lstm_forward.13} parent=1 // pred_region
      _
    $region13: #{dmlab_pg_lstm_forward.13} parent=1 // pred_fallthru
      _
    // Predicated region
    $region14: #{dmlab_pg_lstm_forward.13} parent=1 // pred_check
      _
    $region15: #{dmlab_pg_lstm_forward.13} parent=1 // pred_check_branch
      %19 = sbr.rel (0) target = $region17
    $region16: #{dmlab_pg_lstm_forward.13} parent=1 // pred_region
      _
    $region17: #{dmlab_pg_lstm_forward.13} parent=1 // pred_fallthru
      _
    %v21 = vld [vmem:[%s0] sm:$0xf]
    %v22 = vld [vmem:[%s1] sm:$0xf]
    %v23 = vadd.bf16 %v21, %v22
    %v24 = vld [vmem:[%s2] sm:$0xf]
    %v25 = vld [vmem:[%s2 + $0x4] sm:$0xf]
    %v26 = vld [vmem:[%s2 + $0x8] sm:$0xf]
    %v27 = vld [vmem:[%s2 + $0xc] sm:$0xf]
    %v28 = vld [vmem:[%s3] sm:$0x1]
    %v30 = vlaneseq
    %v31 = vshrl.u32 %v30, 7
    %v32 = vsub.s32 0, %v31
    %v33 = vrot.slane %v28, %v32
    %v39 = vunpack.c.l.b16 %v24
    %v40 = vunpack.c.l.b16 %v25
    %v41 = vunpack.c.l.b16 %v26
    %v42 = vunpack.c.l.b16 %v27
    %v43 = vpack.c.b16 %v40, %v39
    %v44 = vpack.c.b16 %v42, %v41
    %vm47 = vcmask 261120
    %v49 = vsel %vm47, %v23, 0
    %51 = vmatprep.subr.bf16.mxu0 0
    %52 = vmatpush1.bf16.msra.mxu0 %v43
    %53 = vmatprep.subr.bf16.mxu0 0
    %54 = vmatpush1.bf16.msra.mxu0 %v44
    %55 = vmatprep.subr.bf16.mxu0 0
    %56 = vmatpush1.bf16.msra.mxu0 0
    %57 = vmatprep.subr.bf16.mxu0 0
    %58 = vmatpush1.bf16.msra.mxu0 0
    %59 = vmatprep.subr.bf16.mxu0 0
    %60 = vmatpush1.bf16.msra.mxu0 0
    %61 = vmatprep.subr.bf16.mxu0 0
    %62 = vmatpush1.bf16.msra.mxu0 0
    %63 = vmatprep.subr.bf16.mxu0 0
    %64 = vmatpush1.bf16.msra.mxu0 0
    %65 = vmatprep.subr.bf16.mxu0 0
    %66 = vmatpush1.bf16.msra.mxu0 0
    %67 = vmatprep.subr.bf16.mxu0 0
    %68 = vmatpush1.bf16.msra.mxu0 0
    %69 = vmatprep.subr.bf16.mxu0 0
    %70 = vmatpush1.bf16.msra.mxu0 0
    %71 = vmatprep.subr.bf16.mxu0 0
    %72 = vmatpush1.bf16.msra.mxu0 0
    %73 = vmatprep.subr.bf16.mxu0 0
    %74 = vmatpush1.bf16.msra.mxu0 0
    %75 = vmatprep.subr.bf16.mxu0 0
    %76 = vmatpush1.bf16.msra.mxu0 0
    %77 = vmatprep.subr.bf16.mxu0 0
    %78 = vmatpush1.bf16.msra.mxu0 0
    %79 = vmatprep.subr.bf16.mxu0 0
    %80 = vmatpush1.bf16.msra.mxu0 0
    %81 = vmatprep.subr.bf16.mxu0 0
    %82 = vmatpush1.bf16.msra.mxu0 0
    %83 = vmatprep.mubr.bf16.mxu0 0
    %84 = vmatmul.mubr.bf16.gmra.mrb[0].mxu0 %v49
    %v85 = vpop.f32.mrb[0].mxu0
    %v86 = vadd.f32 %v33, %v85
    %v87 = vpop.f32.mrb[0].mxu0
    %v88 = vpop.f32.mrb[0].mxu0
    %v89 = vpop.f32.mrb[0].mxu0
    %90 = vdwg.mxu0
    %92 = vrot.lane.b32.xlu0 %v86, 122
    %v93 = vpop.permute.xlu0 %92
    %vm95 = vcmask 7168
    %96 = vst.msk [vmem:[%s5] sm:$0xff] %vm95, %v93
    %v97 = vlaneseq
    %v98 = vand.u32 %v97, 127
    %vm99 = vcmp.lt.s32.totalorder %v98, 6
    %v100 = vsel %vm99, %v86, -1e+30
    %101 = vmax.xlane.f32.xlu0 %v100
    %v102 = vpop.xlane.xlu0 %101
    %v103 = vsub.f32 %v100, %v102
    %v104 = vmul.f32 %v103, 1.442695
    %v105 = vpow.pop %v104
    %106 = vadd.xlane.f32.xlu0 %v105
    %v107 = vpop.xlane.xlu0 %106
    %v108 = vrcp.pop %v107
    %v109 = vmul.f32 %v105, %v108
    %110 = vst [vmem:[#allocation2] sm:$0xff] %v109
    // Predicated region
    $region18: #{dmlab_pg_lstm_forward.13} parent=1 // pred_check
      _
    $region19: #{dmlab_pg_lstm_forward.13} parent=1 // pred_check_branch
      %112 = sbr.rel (0) target = $region21
    $region20: #{dmlab_pg_lstm_forward.13} parent=1 // pred_region
      %s114 = ssub.s32 128, 128
      %115 = vsyncadd [#allocation3], %s114
      %s117 = sshll.u32 [#allocation2], 4
      %s118 = int_to_ptr.vmem [resolvable:$true] %s117
      %120 = dma.vmem_to_hbm [thread:$0]  %s118, 128, %s4, [#allocation3]
    $region21: #{dmlab_pg_lstm_forward.13} parent=1 // pred_fallthru
      _
    // Predicated region
    $region22: #{dmlab_pg_lstm_forward.13} parent=1 // pred_check
      _
    $region23: #{dmlab_pg_lstm_forward.13} parent=1 // pred_check_branch
      %122 = sbr.rel (0) target = $region25
    $region24: #{dmlab_pg_lstm_forward.13} parent=1 // pred_region
      _
    $region25: #{dmlab_pg_lstm_forward.13} parent=1 // pred_fallthru
      _
    // Predicated region
    $region26: #{dmlab_pg_lstm_forward.13} parent=1 // pred_check
      _
    $region27: #{dmlab_pg_lstm_forward.13} parent=1 // pred_check_branch
      %124 = sbr.rel (0) target = $region29
    $region28: #{dmlab_pg_lstm_forward.13} parent=1 // pred_region
      %125 = dma.done [#allocation3], 128
    $region29: #{dmlab_pg_lstm_forward.13} parent=1 // pred_fallthru
      _
    // Predicated region
    $region30: #{dmlab_pg_lstm_forward.13} parent=1 // pred_check
      _
    $region31: #{dmlab_pg_lstm_forward.13} parent=1 // pred_check_branch
      %127 = sbr.rel (0) target = $region33
    $region32: #{dmlab_pg_lstm_forward.13} parent=1 // pred_region
      _
    $region33: #{dmlab_pg_lstm_forward.13} parent=1 // pred_fallthru
      _
    %128 = vsyncpa [#allocation3], 1

</llo_original>
